<compile_context>
chip_gen: v5e
topology: v5e:2x2
jax: 0.10.0
libtpu: 0.0.40
codegen_flags: <defaults>
</compile_context>

<pallas_src>
import numpy as np
import jax
import jax.numpy as jnp
from jax.experimental import pallas as pl
from jax.experimental.pallas import tpu as pltpu


_CHANNELS = [3, 8, 16, 32, 64, 128]
_N_CLASSES = 10


# ---------------------------------------------------------------------------
# In-kernel helpers (pure Python tracing helpers; all shapes static)
# ---------------------------------------------------------------------------

def _max3(a, b, c):
    return jnp.maximum(jnp.maximum(a, b), c)


def _conv_taps(src_load, w_ref, b_ref, H, W):
    """3x3 'same' conv over a zero-padded, row-major-flattened image.

    src_load(lo, hi) returns rows [lo, hi) of the flattened padded image
    [(H+2)*(W+2), Cin].  Returns a flat slab [L, Cout] with L = (H-1)*(W+2)+W;
    the conv output at (y, x) lives at slab row y*(W+2) + x (other rows are
    junk that is never read).
    """
    Wp = W + 2
    L = (H - 1) * Wp + W
    Cout = w_ref.shape[2]
    # When a spatial dim is 1, the off-center taps only see the zero halo -> skip.
    kys = range(3) if H > 1 else (1,)
    kxs = range(3) if W > 1 else (1,)
    acc = jnp.zeros((L, Cout), jnp.float32)
    for ky in kys:
        for kx in kxs:
            off = ky * Wp + kx
            tap = src_load(off, off + L)                        # [L, Cin]
            acc = acc + jnp.dot(tap, w_ref[ky * 3 + kx],
                                preferred_element_type=jnp.float32)
    return acc + b_ref[...]                                     # [L, Cout]


def _store_into_flat(dst_flat_ref, W_next):
    """Store a pooled output row (value [W_next, C]) into the next stage's
    zero-padded flat activation buffer at interior row oy."""
    Wpn = W_next + 2

    def store(oy, val):
        base = (oy + 1) * Wpn + 1
        dst_flat_ref[base:base + W_next, :] = val

    return store


def _pool_relu_store(conv_slab, ppad, cbuf, store_row, H, W):
    """ReLU + MaxPool2d(kernel=3, stride=2, padding=1), written at stride 2.

    conv_slab: [L, C] flat conv output (see _conv_taps).
    ppad:      [H+2, W+2, C] zero-initialized VMEM scratch.
    cbuf:      [H+2, W//2, C] VMEM scratch (column-pass result).
    store_row: consumes pooled row oy as a [W//2, C] value.

    ReLU-before-max with a zero halo equals ReLU(MaxPool_{-inf pad}(x)).
    """
    Wp = W + 2
    Ho, Wo = H // 2, W // 2
    # De-flatten the interior rows, fuse ReLU, write into the padded buffer.
    for y in range(H):
        ppad[y + 1, 1:W + 1, :] = jnp.maximum(
            conv_slab[y * Wp:y * Wp + W, :], 0.0)
    # Column pass: window 3 / stride 2 along W.
    for ox in range(Wo):
        c = 2 * ox
        cbuf[:, ox:ox + 1, :] = _max3(ppad[:, c:c + 1, :],
                                      ppad[:, c + 1:c + 2, :],
                                      ppad[:, c + 2:c + 3, :])
    # Row pass: window 3 / stride 2 along H -> emit pooled rows.
    for oy in range(Ho):
        r = 2 * oy
        store_row(oy, _max3(cbuf[r], cbuf[r + 1], cbuf[r + 2]))


# ---------------------------------------------------------------------------
# Fused kernel: conv0..conv4 + maxpool/relu + GAP + ReLU + Linear (per image)
# ---------------------------------------------------------------------------

def _fused_cnn_kernel(x_ref,
                      w0, b0, w1, b1, w2, b2, w3, b3, w4, b4,
                      fcw_ref, fcb_ref,
                      out_ref,
                      cpad1, cpad2, cpad3, cpad4,
                      ppad0, ppad1, ppad2, ppad3,
                      cbuf0, cbuf1, cbuf2, cbuf3):
    # Zero the padded activation buffers (halos must be zero; interiors are
    # fully overwritten each invocation, cbuf* are fully overwritten -> no init).
    for r in (cpad1, cpad2, cpad3, cpad4, ppad0, ppad1, ppad2, ppad3):
        r[...] = jnp.zeros_like(r)

    convs = ((w0, b0), (w1, b1), (w2, b2), (w3, b3))
    ppads = (ppad0, ppad1, ppad2, ppad3)
    cbufs = (cbuf0, cbuf1, cbuf2, cbuf3)
    next_cpads = (cpad1, cpad2, cpad3, cpad4)

    # Stage 0 reads the (already padded + flattened) input block.
    src_load = lambda lo, hi: x_ref[0, lo:hi, :]

    for i in range(4):
        ppad, cbuf, nxt = ppads[i], cbufs[i], next_cpads[i]
        H, W = ppad.shape[0] - 2, ppad.shape[1] - 2
        w_ref, b_ref = convs[i]
        slab = _conv_taps(src_load, w_ref, b_ref, H, W)          # conv_i + bias
        _pool_relu_store(slab, ppad, cbuf,
                         _store_into_flat(nxt, W // 2), H, W)    # pool + relu
        src_load = (lambda ref: (lambda lo, hi: ref[lo:hi, :]))(nxt)

    # conv4 (no pool), then GAP -> ReLU -> Linear.
    H4 = W4 = (ppad3.shape[0] - 2) // 2                          # 1 for 16x16 input
    Wp4 = W4 + 2
    slab4 = _conv_taps(src_load, w4, b4, H4, W4)                 # [L4, 128]

    gap = jnp.zeros((1, slab4.shape[1]), jnp.float32)
    for y in range(H4):
        gap = gap + jnp.sum(slab4[y * Wp4:y * Wp4 + W4, :], axis=0, keepdims=True)
    gap = gap * (1.0 / (H4 * W4))                                # AdaptiveAvgPool2d(1)
    hidden = jnp.maximum(gap, 0.0)                               # ReLU (after GAP)

    out_ref[0] = (jnp.dot(hidden, fcw_ref[...],
                          preferred_element_type=jnp.float32) + fcb_ref[...])


# ---------------------------------------------------------------------------
# Wrapper
# ---------------------------------------------------------------------------

def cnn_forward(x_nchw, params):
    # One layout transform at the boundary: NCHW -> NHWC, zero-pad, flatten rows.
    x = jnp.transpose(x_nchw, (0, 2, 3, 1)).astype(jnp.float32)
    N, H, W, Cin = x.shape
    assert H == W and H % 16 == 0, "expects square input, multiple of 16"
    Hp, Wp = H + 2, W + 2
    xpf = jnp.pad(x, ((0, 0), (1, 1), (1, 1), (0, 0))).reshape(N, Hp * Wp, Cin)

    ws, bs = [], []
    for i in range(5):
        w = params[f"conv{i}_w"]                       # [3, 3, Cin, Cout] (HWIO)
        ws.append(w.reshape(9, w.shape[2], w.shape[3]))
        bs.append(params[f"conv{i}_b"].reshape(1, -1))
    fcw = params["fc_w"]                               # [128, n_classes]
    fcb = params["fc_b"].reshape(1, -1)

    sizes = [H >> s for s in range(5)]                 # 16, 8, 4, 2, 1
    chans = _CHANNELS

    def full_spec(shape):
        return pl.BlockSpec(shape, lambda n, _r=len(shape): (0,) * _r)

    # Scratch: flat zero-padded conv inputs for stages 1..4, then pool pads and
    # column buffers for stages 0..3.
    scratch = []
    for s in range(1, 5):
        hs = sizes[s]
        scratch.append(pltpu.VMEM(((hs + 2) * (hs + 2), chans[s]), jnp.float32))
    for s in range(4):
        hs = sizes[s]
        scratch.append(pltpu.VMEM((hs + 2, hs + 2, chans[s + 1]), jnp.float32))
    for s in range(4):
        hs = sizes[s]
        scratch.append(pltpu.VMEM((hs + 2, hs // 2, chans[s + 1]), jnp.float32))

    in_specs = [pl.BlockSpec((1, Hp * Wp, Cin), lambda n: (n, 0, 0))]
    operands = [xpf]
    for i in range(5):
        in_specs += [full_spec(ws[i].shape), full_spec(bs[i].shape)]
        operands += [ws[i], bs[i]]
    in_specs += [full_spec(fcw.shape), full_spec(fcb.shape)]
    operands += [fcw, fcb]

    out = pl.pallas_call(
        _fused_cnn_kernel,
        out_shape=jax.ShapeDtypeStruct((N, 1, _N_CLASSES), jnp.float32),
        grid=(N,),
        in_specs=in_specs,
        out_specs=pl.BlockSpec((1, 1, _N_CLASSES), lambda n: (n, 0, 0)),
        scratch_shapes=scratch,
        compiler_params=pltpu.CompilerParams(
            dimension_semantics=("parallel",)),
    )(*operands)
    return out.reshape(N, _N_CLASSES)


# ---------------------------------------------------------------------------
# Parameter init + pure-JAX reference (correctness check only)
# ---------------------------------------------------------------------------

def init_params(key):
    params = {}
    keys = jax.random.split(key, 2 * len(_CHANNELS))
    for i in range(5):
        cin, cout = _CHANNELS[i], _CHANNELS[i + 1]
        bound = 1.0 / np.sqrt(cin * 9)
        params[f"conv{i}_w"] = jax.random.uniform(
            keys[2 * i], (3, 3, cin, cout), jnp.float32, -bound, bound)
        params[f"conv{i}_b"] = jax.random.uniform(
            keys[2 * i + 1], (cout,), jnp.float32, -bound, bound)
    bound = 1.0 / np.sqrt(_CHANNELS[-1])
    params["fc_w"] = jax.random.uniform(
        keys[10], (_CHANNELS[-1], _N_CLASSES), jnp.float32, -bound, bound)
    params["fc_b"] = jax.random.uniform(
        keys[11], (_N_CLASSES,), jnp.float32, -bound, bound)
    return params


def reference_forward(x_nchw, params):
    x = jnp.transpose(x_nchw, (0, 2, 3, 1)).astype(jnp.float32)

    def conv(x, w, b):
        y = jax.lax.conv_general_dilated(
            x, w, (1, 1), ((1, 1), (1, 1)),
            dimension_numbers=("NHWC", "HWIO", "NHWC"),
            precision=jax.lax.Precision.HIGHEST)
        return y + b

    def pool_relu(x):
        y = jax.lax.reduce_window(
            x, -jnp.inf, jax.lax.max, (1, 3, 3, 1), (1, 2, 2, 1),
            ((0, 0), (1, 1), (1, 1), (0, 0)))
        return jax.nn.relu(y)

    for i in range(4):
        x = pool_relu(conv(x, params[f"conv{i}_w"], params[f"conv{i}_b"]))
    x = conv(x, params["conv4_w"], params["conv4_b"])
    x = jax.nn.relu(jnp.mean(x, axis=(1, 2)))
    return jnp.dot(x, params["fc_w"],
                   precision=jax.lax.Precision.HIGHEST) + params["fc_b"]


if __name__ == "__main__":
    key = jax.random.PRNGKey(0)
    k_params, k_x = jax.random.split(key)

    params = init_params(k_params)
    # NCHW input, 3 channels, 16x16 spatial (consistent with the module).
    x = jax.random.normal(k_x, (2, 3, 16, 16), jnp.float32)

    out = jax.block_until_ready(jax.jit(cnn_forward)(x, params))
    assert out.shape == (2, _N_CLASSES)

    ref = jax.block_until_ready(jax.jit(reference_forward)(x, params))
    np.testing.assert_allclose(np.asarray(out), np.asarray(ref), rtol=1e-4, atol=1e-4)

    print("KERNEL_OK")
</pallas_src>

<mosaic_0001>
module attributes {stable_mosaic.version = 11 : i64} {
  func.func @_fused_cnn_kernel(%arg0: i32, %arg1: memref<1x324x3xf32, #tpu.memory_space<vmem>>, %arg2: memref<9x3x8xf32, #tpu.memory_space<vmem>>, %arg3: memref<1x8xf32, #tpu.memory_space<vmem>>, %arg4: memref<9x8x16xf32, #tpu.memory_space<vmem>>, %arg5: memref<1x16xf32, #tpu.memory_space<vmem>>, %arg6: memref<9x16x32xf32, #tpu.memory_space<vmem>>, %arg7: memref<1x32xf32, #tpu.memory_space<vmem>>, %arg8: memref<9x32x64xf32, #tpu.memory_space<vmem>>, %arg9: memref<1x64xf32, #tpu.memory_space<vmem>>, %arg10: memref<9x64x128xf32, #tpu.memory_space<vmem>>, %arg11: memref<1x128xf32, #tpu.memory_space<vmem>>, %arg12: memref<128x10xf32, #tpu.memory_space<vmem>>, %arg13: memref<1x10xf32, #tpu.memory_space<vmem>>, %arg14: memref<1x1x10xf32, #tpu.memory_space<vmem>>, %arg15: memref<100x8xf32, #tpu.memory_space<vmem>>, %arg16: memref<36x16xf32, #tpu.memory_space<vmem>>, %arg17: memref<16x32xf32, #tpu.memory_space<vmem>>, %arg18: memref<9x64xf32, #tpu.memory_space<vmem>>, %arg19: memref<18x18x8xf32, #tpu.memory_space<vmem>>, %arg20: memref<10x10x16xf32, #tpu.memory_space<vmem>>, %arg21: memref<6x6x32xf32, #tpu.memory_space<vmem>>, %arg22: memref<4x4x64xf32, #tpu.memory_space<vmem>>, %arg23: memref<18x8x8xf32, #tpu.memory_space<vmem>>, %arg24: memref<10x4x16xf32, #tpu.memory_space<vmem>>, %arg25: memref<6x2x32xf32, #tpu.memory_space<vmem>>, %arg26: memref<4x1x64xf32, #tpu.memory_space<vmem>>) attributes {dimension_semantics = [#tpu.dimension_semantics<parallel>], iteration_bounds = array<i64: 2>, scalar_prefetch = 0 : i64, scratch_operands = 12 : i64, tpu.core_type = #tpu.core_type<tc>, window_params = [{transform_indices = @transform_0, window_bounds = array<i64: 1, 324, 3>}, {pipeline_mode = #tpu.pipeline_mode<synchronous>, transform_indices = @transform_1, window_bounds = array<i64: 9, 3, 8>}, {pipeline_mode = #tpu.pipeline_mode<synchronous>, transform_indices = @transform_2, window_bounds = array<i64: 1, 8>}, {pipeline_mode = #tpu.pipeline_mode<synchronous>, transform_indices = @transform_3, window_bounds = array<i64: 9, 8, 16>}, {pipeline_mode = #tpu.pipeline_mode<synchronous>, transform_indices = @transform_4, window_bounds = array<i64: 1, 16>}, {pipeline_mode = #tpu.pipeline_mode<synchronous>, transform_indices = @transform_5, window_bounds = array<i64: 9, 16, 32>}, {pipeline_mode = #tpu.pipeline_mode<synchronous>, transform_indices = @transform_6, window_bounds = array<i64: 1, 32>}, {pipeline_mode = #tpu.pipeline_mode<synchronous>, transform_indices = @transform_7, window_bounds = array<i64: 9, 32, 64>}, {pipeline_mode = #tpu.pipeline_mode<synchronous>, transform_indices = @transform_8, window_bounds = array<i64: 1, 64>}, {pipeline_mode = #tpu.pipeline_mode<synchronous>, transform_indices = @transform_9, window_bounds = array<i64: 9, 64, 128>}, {pipeline_mode = #tpu.pipeline_mode<synchronous>, transform_indices = @transform_10, window_bounds = array<i64: 1, 128>}, {pipeline_mode = #tpu.pipeline_mode<synchronous>, transform_indices = @transform_11, window_bounds = array<i64: 128, 10>}, {pipeline_mode = #tpu.pipeline_mode<synchronous>, transform_indices = @transform_12, window_bounds = array<i64: 1, 10>}, {transform_indices = @transform_13, window_bounds = array<i64: 1, 1, 10>}]} {
    %cst = arith.constant 0.000000e+00 : f32
    %0 = vector.broadcast %cst : f32 to vector<100x8xf32>
    %c0 = arith.constant 0 : index
    %c0_0 = arith.constant 0 : index
    %1 = vector.load %arg15[%c0, %c0_0] : memref<100x8xf32, #tpu.memory_space<vmem>>, vector<100x8xf32>
    tpu.vector_store %arg15[%c0, %c0_0], %0 {strides = array<i32>} : memref<100x8xf32, #tpu.memory_space<vmem>>, vector<100x8xf32>,
    %cst_1 = arith.constant 0.000000e+00 : f32
    %2 = vector.broadcast %cst_1 : f32 to vector<36x16xf32>
    %c0_2 = arith.constant 0 : index
    %c0_3 = arith.constant 0 : index
    %3 = vector.load %arg16[%c0_2, %c0_3] : memref<36x16xf32, #tpu.memory_space<vmem>>, vector<36x16xf32>
    tpu.vector_store %arg16[%c0_2, %c0_3], %2 {strides = array<i32>} : memref<36x16xf32, #tpu.memory_space<vmem>>, vector<36x16xf32>,
    %cst_4 = arith.constant 0.000000e+00 : f32
    %4 = vector.broadcast %cst_4 : f32 to vector<16x32xf32>
    %c0_5 = arith.constant 0 : index
    %c0_6 = arith.constant 0 : index
    %5 = vector.load %arg17[%c0_5, %c0_6] : memref<16x32xf32, #tpu.memory_space<vmem>>, vector<16x32xf32>
    tpu.vector_store %arg17[%c0_5, %c0_6], %4 {strides = array<i32>} : memref<16x32xf32, #tpu.memory_space<vmem>>, vector<16x32xf32>,
    %cst_7 = arith.constant 0.000000e+00 : f32
    %6 = vector.broadcast %cst_7 : f32 to vector<9x64xf32>
    %c0_8 = arith.constant 0 : index
    %c0_9 = arith.constant 0 : index
    %7 = vector.load %arg18[%c0_8, %c0_9] : memref<9x64xf32, #tpu.memory_space<vmem>>, vector<9x64xf32>
    tpu.vector_store %arg18[%c0_8, %c0_9], %6 {strides = array<i32>} : memref<9x64xf32, #tpu.memory_space<vmem>>, vector<9x64xf32>,
    %cst_10 = arith.constant 0.000000e+00 : f32
    %8 = vector.broadcast %cst_10 : f32 to vector<18x18x8xf32>
    %c0_11 = arith.constant 0 : index
    %c0_12 = arith.constant 0 : index
    %c0_13 = arith.constant 0 : index
    %9 = vector.load %arg19[%c0_11, %c0_12, %c0_13] : memref<18x18x8xf32, #tpu.memory_space<vmem>>, vector<18x18x8xf32>
    tpu.vector_store %arg19[%c0_11, %c0_12, %c0_13], %8 {strides = array<i32>} : memref<18x18x8xf32, #tpu.memory_space<vmem>>, vector<18x18x8xf32>,
    %cst_14 = arith.constant 0.000000e+00 : f32
    %10 = vector.broadcast %cst_14 : f32 to vector<10x10x16xf32>
    %c0_15 = arith.constant 0 : index
    %c0_16 = arith.constant 0 : index
    %c0_17 = arith.constant 0 : index
    %11 = vector.load %arg20[%c0_15, %c0_16, %c0_17] : memref<10x10x16xf32, #tpu.memory_space<vmem>>, vector<10x10x16xf32>
    tpu.vector_store %arg20[%c0_15, %c0_16, %c0_17], %10 {strides = array<i32>} : memref<10x10x16xf32, #tpu.memory_space<vmem>>, vector<10x10x16xf32>,
    %cst_18 = arith.constant 0.000000e+00 : f32
    %12 = vector.broadcast %cst_18 : f32 to vector<6x6x32xf32>
    %c0_19 = arith.constant 0 : index
    %c0_20 = arith.constant 0 : index
    %c0_21 = arith.constant 0 : index
    %13 = vector.load %arg21[%c0_19, %c0_20, %c0_21] : memref<6x6x32xf32, #tpu.memory_space<vmem>>, vector<6x6x32xf32>
    tpu.vector_store %arg21[%c0_19, %c0_20, %c0_21], %12 {strides = array<i32>} : memref<6x6x32xf32, #tpu.memory_space<vmem>>, vector<6x6x32xf32>,
    %cst_22 = arith.constant 0.000000e+00 : f32
    %14 = vector.broadcast %cst_22 : f32 to vector<4x4x64xf32>
    %c0_23 = arith.constant 0 : index
    %c0_24 = arith.constant 0 : index
    %c0_25 = arith.constant 0 : index
    %15 = vector.load %arg22[%c0_23, %c0_24, %c0_25] : memref<4x4x64xf32, #tpu.memory_space<vmem>>, vector<4x4x64xf32>
    tpu.vector_store %arg22[%c0_23, %c0_24, %c0_25], %14 {strides = array<i32>} : memref<4x4x64xf32, #tpu.memory_space<vmem>>, vector<4x4x64xf32>,
    %cst_26 = arith.constant 0.000000e+00 : f32
    %16 = vector.broadcast %cst_26 : f32 to vector<286x8xf32>
    %c0_27 = arith.constant 0 : index
    %c0_28 = arith.constant 0 : index
    %c0_29 = arith.constant 0 : index
    %17 = vector.load %arg1[%c0_27, %c0_28, %c0_29] : memref<1x324x3xf32, #tpu.memory_space<vmem>>, vector<1x286x3xf32>
    %18 = vector.shape_cast %17 : vector<1x286x3xf32> to vector<286x3xf32>
    %c0_30 = arith.constant 0 : index
    %c0_31 = arith.constant 0 : index
    %c0_32 = arith.constant 0 : index
    %19 = vector.load %arg2[%c0_30, %c0_31, %c0_32] : memref<9x3x8xf32, #tpu.memory_space<vmem>>, vector<1x3x8xf32>
    %20 = vector.shape_cast %19 : vector<1x3x8xf32> to vector<3x8xf32>
    %cst_33 = arith.constant dense<0.000000e+00> : vector<286x8xf32>
    %21 = tpu.matmul %18, %20, %cst_33 {dimension_numbers = #tpu.dot_dimension_numbers<[1], [0], [0], [1], [0, 0, 1, 1], [], []>} : vector<286x3xf32>, vector<3x8xf32>, vector<286x8xf32> -> vector<286x8xf32>
    %22 = arith.addf %16, %21 : vector<286x8xf32>
    %c0_34 = arith.constant 0 : index
    %c1 = arith.constant 1 : index
    %c0_35 = arith.constant 0 : index
    %23 = vector.load %arg1[%c0_34, %c1, %c0_35] : memref<1x324x3xf32, #tpu.memory_space<vmem>>, vector<1x286x3xf32>
    %24 = vector.shape_cast %23 : vector<1x286x3xf32> to vector<286x3xf32>
    %c1_36 = arith.constant 1 : index
    %c0_37 = arith.constant 0 : index
    %c0_38 = arith.constant 0 : index
    %25 = vector.load %arg2[%c1_36, %c0_37, %c0_38] : memref<9x3x8xf32, #tpu.memory_space<vmem>>, vector<1x3x8xf32>
    %26 = vector.shape_cast %25 : vector<1x3x8xf32> to vector<3x8xf32>
    %cst_39 = arith.constant dense<0.000000e+00> : vector<286x8xf32>
    %27 = tpu.matmul %24, %26, %cst_39 {dimension_numbers = #tpu.dot_dimension_numbers<[1], [0], [0], [1], [0, 0, 1, 1], [], []>} : vector<286x3xf32>, vector<3x8xf32>, vector<286x8xf32> -> vector<286x8xf32>
    %28 = arith.addf %22, %27 : vector<286x8xf32>
    %c0_40 = arith.constant 0 : index
    %c2 = arith.constant 2 : index
    %c0_41 = arith.constant 0 : index
    %29 = vector.load %arg1[%c0_40, %c2, %c0_41] : memref<1x324x3xf32, #tpu.memory_space<vmem>>, vector<1x286x3xf32>
    %30 = vector.shape_cast %29 : vector<1x286x3xf32> to vector<286x3xf32>
    %c2_42 = arith.constant 2 : index
    %c0_43 = arith.constant 0 : index
    %c0_44 = arith.constant 0 : index
    %31 = vector.load %arg2[%c2_42, %c0_43, %c0_44] : memref<9x3x8xf32, #tpu.memory_space<vmem>>, vector<1x3x8xf32>
    %32 = vector.shape_cast %31 : vector<1x3x8xf32> to vector<3x8xf32>
    %cst_45 = arith.constant dense<0.000000e+00> : vector<286x8xf32>
    %33 = tpu.matmul %30, %32, %cst_45 {dimension_numbers = #tpu.dot_dimension_numbers<[1], [0], [0], [1], [0, 0, 1, 1], [], []>} : vector<286x3xf32>, vector<3x8xf32>, vector<286x8xf32> -> vector<286x8xf32>
    %34 = arith.addf %28, %33 : vector<286x8xf32>
    %c0_46 = arith.constant 0 : index
    %c18 = arith.constant 18 : index
    %c0_47 = arith.constant 0 : index
    %35 = vector.load %arg1[%c0_46, %c18, %c0_47] : memref<1x324x3xf32, #tpu.memory_space<vmem>>, vector<1x286x3xf32>
    %36 = vector.shape_cast %35 : vector<1x286x3xf32> to vector<286x3xf32>
    %c3 = arith.constant 3 : index
    %c0_48 = arith.constant 0 : index
    %c0_49 = arith.constant 0 : index
    %37 = vector.load %arg2[%c3, %c0_48, %c0_49] : memref<9x3x8xf32, #tpu.memory_space<vmem>>, vector<1x3x8xf32>
    %38 = vector.shape_cast %37 : vector<1x3x8xf32> to vector<3x8xf32>
    %cst_50 = arith.constant dense<0.000000e+00> : vector<286x8xf32>
    %39 = tpu.matmul %36, %38, %cst_50 {dimension_numbers = #tpu.dot_dimension_numbers<[1], [0], [0], [1], [0, 0, 1, 1], [], []>} : vector<286x3xf32>, vector<3x8xf32>, vector<286x8xf32> -> vector<286x8xf32>
    %40 = arith.addf %34, %39 : vector<286x8xf32>
    %c0_51 = arith.constant 0 : index
    %c19 = arith.constant 19 : index
    %c0_52 = arith.constant 0 : index
    %41 = vector.load %arg1[%c0_51, %c19, %c0_52] : memref<1x324x3xf32, #tpu.memory_space<vmem>>, vector<1x286x3xf32>
    %42 = vector.shape_cast %41 : vector<1x286x3xf32> to vector<286x3xf32>
    %c4 = arith.constant 4 : index
    %c0_53 = arith.constant 0 : index
    %c0_54 = arith.constant 0 : index
    %43 = vector.load %arg2[%c4, %c0_53, %c0_54] : memref<9x3x8xf32, #tpu.memory_space<vmem>>, vector<1x3x8xf32>
    %44 = vector.shape_cast %43 : vector<1x3x8xf32> to vector<3x8xf32>
    %cst_55 = arith.constant dense<0.000000e+00> : vector<286x8xf32>
    %45 = tpu.matmul %42, %44, %cst_55 {dimension_numbers = #tpu.dot_dimension_numbers<[1], [0], [0], [1], [0, 0, 1, 1], [], []>} : vector<286x3xf32>, vector<3x8xf32>, vector<286x8xf32> -> vector<286x8xf32>
    %46 = arith.addf %40, %45 : vector<286x8xf32>
    %c0_56 = arith.constant 0 : index
    %c20 = arith.constant 20 : index
    %c0_57 = arith.constant 0 : index
    %47 = vector.load %arg1[%c0_56, %c20, %c0_57] : memref<1x324x3xf32, #tpu.memory_space<vmem>>, vector<1x286x3xf32>
    %48 = vector.shape_cast %47 : vector<1x286x3xf32> to vector<286x3xf32>
    %c5 = arith.constant 5 : index
    %c0_58 = arith.constant 0 : index
    %c0_59 = arith.constant 0 : index
    %49 = vector.load %arg2[%c5, %c0_58, %c0_59] : memref<9x3x8xf32, #tpu.memory_space<vmem>>, vector<1x3x8xf32>
    %50 = vector.shape_cast %49 : vector<1x3x8xf32> to vector<3x8xf32>
    %cst_60 = arith.constant dense<0.000000e+00> : vector<286x8xf32>
    %51 = tpu.matmul %48, %50, %cst_60 {dimension_numbers = #tpu.dot_dimension_numbers<[1], [0], [0], [1], [0, 0, 1, 1], [], []>} : vector<286x3xf32>, vector<3x8xf32>, vector<286x8xf32> -> vector<286x8xf32>
    %52 = arith.addf %46, %51 : vector<286x8xf32>
    %c0_61 = arith.constant 0 : index
    %c36 = arith.constant 36 : index
    %c0_62 = arith.constant 0 : index
    %53 = vector.load %arg1[%c0_61, %c36, %c0_62] : memref<1x324x3xf32, #tpu.memory_space<vmem>>, vector<1x286x3xf32>
    %54 = vector.shape_cast %53 : vector<1x286x3xf32> to vector<286x3xf32>
    %c6 = arith.constant 6 : index
    %c0_63 = arith.constant 0 : index
    %c0_64 = arith.constant 0 : index
    %55 = vector.load %arg2[%c6, %c0_63, %c0_64] : memref<9x3x8xf32, #tpu.memory_space<vmem>>, vector<1x3x8xf32>
    %56 = vector.shape_cast %55 : vector<1x3x8xf32> to vector<3x8xf32>
    %cst_65 = arith.constant dense<0.000000e+00> : vector<286x8xf32>
    %57 = tpu.matmul %54, %56, %cst_65 {dimension_numbers = #tpu.dot_dimension_numbers<[1], [0], [0], [1], [0, 0, 1, 1], [], []>} : vector<286x3xf32>, vector<3x8xf32>, vector<286x8xf32> -> vector<286x8xf32>
    %58 = arith.addf %52, %57 : vector<286x8xf32>
    %c0_66 = arith.constant 0 : index
    %c37 = arith.constant 37 : index
    %c0_67 = arith.constant 0 : index
    %59 = vector.load %arg1[%c0_66, %c37, %c0_67] : memref<1x324x3xf32, #tpu.memory_space<vmem>>, vector<1x286x3xf32>
    %60 = vector.shape_cast %59 : vector<1x286x3xf32> to vector<286x3xf32>
    %c7 = arith.constant 7 : index
    %c0_68 = arith.constant 0 : index
    %c0_69 = arith.constant 0 : index
    %61 = vector.load %arg2[%c7, %c0_68, %c0_69] : memref<9x3x8xf32, #tpu.memory_space<vmem>>, vector<1x3x8xf32>
    %62 = vector.shape_cast %61 : vector<1x3x8xf32> to vector<3x8xf32>
    %cst_70 = arith.constant dense<0.000000e+00> : vector<286x8xf32>
    %63 = tpu.matmul %60, %62, %cst_70 {dimension_numbers = #tpu.dot_dimension_numbers<[1], [0], [0], [1], [0, 0, 1, 1], [], []>} : vector<286x3xf32>, vector<3x8xf32>, vector<286x8xf32> -> vector<286x8xf32>
    %64 = arith.addf %58, %63 : vector<286x8xf32>
    %c0_71 = arith.constant 0 : index
    %c38 = arith.constant 38 : index
    %c0_72 = arith.constant 0 : index
    %65 = vector.load %arg1[%c0_71, %c38, %c0_72] : memref<1x324x3xf32, #tpu.memory_space<vmem>>, vector<1x286x3xf32>
    %66 = vector.shape_cast %65 : vector<1x286x3xf32> to vector<286x3xf32>
    %c8 = arith.constant 8 : index
    %c0_73 = arith.constant 0 : index
    %c0_74 = arith.constant 0 : index
    %67 = vector.load %arg2[%c8, %c0_73, %c0_74] : memref<9x3x8xf32, #tpu.memory_space<vmem>>, vector<1x3x8xf32>
    %68 = vector.shape_cast %67 : vector<1x3x8xf32> to vector<3x8xf32>
    %cst_75 = arith.constant dense<0.000000e+00> : vector<286x8xf32>
    %69 = tpu.matmul %66, %68, %cst_75 {dimension_numbers = #tpu.dot_dimension_numbers<[1], [0], [0], [1], [0, 0, 1, 1], [], []>} : vector<286x3xf32>, vector<3x8xf32>, vector<286x8xf32> -> vector<286x8xf32>
    %70 = arith.addf %64, %69 : vector<286x8xf32>
    %c0_76 = arith.constant 0 : index
    %c0_77 = arith.constant 0 : index
    %71 = vector.load %arg3[%c0_76, %c0_77] : memref<1x8xf32, #tpu.memory_space<vmem>>, vector<1x8xf32>
    %72 = vector.broadcast %71 : vector<1x8xf32> to vector<286x8xf32>
    %73 = arith.addf %70, %72 : vector<286x8xf32>
    %74 = vector.extract_strided_slice %73 {offsets = [0, 0], sizes = [16, 8], strides = [1, 1]} : vector<286x8xf32> to vector<16x8xf32>
    %cst_78 = arith.constant 0.000000e+00 : f32
    %75 = vector.broadcast %cst_78 : f32 to vector<16x8xf32>
    %76 = arith.maximumf %74, %75 : vector<16x8xf32>
    %c1_79 = arith.constant 1 : index
    %c1_80 = arith.constant 1 : index
    %c0_81 = arith.constant 0 : index
    %77 = vector.load %arg19[%c1_79, %c1_80, %c0_81] : memref<18x18x8xf32, #tpu.memory_space<vmem>>, vector<1x16x8xf32>
    %78 = vector.shape_cast %77 : vector<1x16x8xf32> to vector<16x8xf32>
    %79 = vector.shape_cast %76 : vector<16x8xf32> to vector<1x16x8xf32>
    tpu.vector_store %arg19[%c1_79, %c1_80, %c0_81], %79 {strides = array<i32>} : memref<18x18x8xf32, #tpu.memory_space<vmem>>, vector<1x16x8xf32>,
    %80 = vector.extract_strided_slice %73 {offsets = [18, 0], sizes = [16, 8], strides = [1, 1]} : vector<286x8xf32> to vector<16x8xf32>
    %cst_82 = arith.constant 0.000000e+00 : f32
    %81 = vector.broadcast %cst_82 : f32 to vector<16x8xf32>
    %82 = arith.maximumf %80, %81 : vector<16x8xf32>
    %c2_83 = arith.constant 2 : index
    %c1_84 = arith.constant 1 : index
    %c0_85 = arith.constant 0 : index
    %83 = vector.load %arg19[%c2_83, %c1_84, %c0_85] : memref<18x18x8xf32, #tpu.memory_space<vmem>>, vector<1x16x8xf32>
    %84 = vector.shape_cast %83 : vector<1x16x8xf32> to vector<16x8xf32>
    %85 = vector.shape_cast %82 : vector<16x8xf32> to vector<1x16x8xf32>
    tpu.vector_store %arg19[%c2_83, %c1_84, %c0_85], %85 {strides = array<i32>} : memref<18x18x8xf32, #tpu.memory_space<vmem>>, vector<1x16x8xf32>,
    %86 = vector.extract_strided_slice %73 {offsets = [36, 0], sizes = [16, 8], strides = [1, 1]} : vector<286x8xf32> to vector<16x8xf32>
    %cst_86 = arith.constant 0.000000e+00 : f32
    %87 = vector.broadcast %cst_86 : f32 to vector<16x8xf32>
    %88 = arith.maximumf %86, %87 : vector<16x8xf32>
    %c3_87 = arith.constant 3 : index
    %c1_88 = arith.constant 1 : index
    %c0_89 = arith.constant 0 : index
    %89 = vector.load %arg19[%c3_87, %c1_88, %c0_89] : memref<18x18x8xf32, #tpu.memory_space<vmem>>, vector<1x16x8xf32>
    %90 = vector.shape_cast %89 : vector<1x16x8xf32> to vector<16x8xf32>
    %91 = vector.shape_cast %88 : vector<16x8xf32> to vector<1x16x8xf32>
    tpu.vector_store %arg19[%c3_87, %c1_88, %c0_89], %91 {strides = array<i32>} : memref<18x18x8xf32, #tpu.memory_space<vmem>>, vector<1x16x8xf32>,
    %92 = vector.extract_strided_slice %73 {offsets = [54, 0], sizes = [16, 8], strides = [1, 1]} : vector<286x8xf32> to vector<16x8xf32>
    %cst_90 = arith.constant 0.000000e+00 : f32
    %93 = vector.broadcast %cst_90 : f32 to vector<16x8xf32>
    %94 = arith.maximumf %92, %93 : vector<16x8xf32>
    %c4_91 = arith.constant 4 : index
    %c1_92 = arith.constant 1 : index
    %c0_93 = arith.constant 0 : index
    %95 = vector.load %arg19[%c4_91, %c1_92, %c0_93] : memref<18x18x8xf32, #tpu.memory_space<vmem>>, vector<1x16x8xf32>
    %96 = vector.shape_cast %95 : vector<1x16x8xf32> to vector<16x8xf32>
    %97 = vector.shape_cast %94 : vector<16x8xf32> to vector<1x16x8xf32>
    tpu.vector_store %arg19[%c4_91, %c1_92, %c0_93], %97 {strides = array<i32>} : memref<18x18x8xf32, #tpu.memory_space<vmem>>, vector<1x16x8xf32>,
    %98 = vector.extract_strided_slice %73 {offsets = [72, 0], sizes = [16, 8], strides = [1, 1]} : vector<286x8xf32> to vector<16x8xf32>
    %cst_94 = arith.constant 0.000000e+00 : f32
    %99 = vector.broadcast %cst_94 : f32 to vector<16x8xf32>
    %100 = arith.maximumf %98, %99 : vector<16x8xf32>
    %c5_95 = arith.constant 5 : index
    %c1_96 = arith.constant 1 : index
    %c0_97 = arith.constant 0 : index
    %101 = vector.load %arg19[%c5_95, %c1_96, %c0_97] : memref<18x18x8xf32, #tpu.memory_space<vmem>>, vector<1x16x8xf32>
    %102 = vector.shape_cast %101 : vector<1x16x8xf32> to vector<16x8xf32>
    %103 = vector.shape_cast %100 : vector<16x8xf32> to vector<1x16x8xf32>
    tpu.vector_store %arg19[%c5_95, %c1_96, %c0_97], %103 {strides = array<i32>} : memref<18x18x8xf32, #tpu.memory_space<vmem>>, vector<1x16x8xf32>,
    %104 = vector.extract_strided_slice %73 {offsets = [90, 0], sizes = [16, 8], strides = [1, 1]} : vector<286x8xf32> to vector<16x8xf32>
    %cst_98 = arith.constant 0.000000e+00 : f32
    %105 = vector.broadcast %cst_98 : f32 to vector<16x8xf32>
    %106 = arith.maximumf %104, %105 : vector<16x8xf32>
    %c6_99 = arith.constant 6 : index
    %c1_100 = arith.constant 1 : index
    %c0_101 = arith.constant 0 : index
    %107 = vector.load %arg19[%c6_99, %c1_100, %c0_101] : memref<18x18x8xf32, #tpu.memory_space<vmem>>, vector<1x16x8xf32>
    %108 = vector.shape_cast %107 : vector<1x16x8xf32> to vector<16x8xf32>
    %109 = vector.shape_cast %106 : vector<16x8xf32> to vector<1x16x8xf32>
    tpu.vector_store %arg19[%c6_99, %c1_100, %c0_101], %109 {strides = array<i32>} : memref<18x18x8xf32, #tpu.memory_space<vmem>>, vector<1x16x8xf32>,
    %110 = vector.extract_strided_slice %73 {offsets = [108, 0], sizes = [16, 8], strides = [1, 1]} : vector<286x8xf32> to vector<16x8xf32>
    %cst_102 = arith.constant 0.000000e+00 : f32
    %111 = vector.broadcast %cst_102 : f32 to vector<16x8xf32>
    %112 = arith.maximumf %110, %111 : vector<16x8xf32>
    %c7_103 = arith.constant 7 : index
    %c1_104 = arith.constant 1 : index
    %c0_105 = arith.constant 0 : index
    %113 = vector.load %arg19[%c7_103, %c1_104, %c0_105] : memref<18x18x8xf32, #tpu.memory_space<vmem>>, vector<1x16x8xf32>
    %114 = vector.shape_cast %113 : vector<1x16x8xf32> to vector<16x8xf32>
    %115 = vector.shape_cast %112 : vector<16x8xf32> to vector<1x16x8xf32>
    tpu.vector_store %arg19[%c7_103, %c1_104, %c0_105], %115 {strides = array<i32>} : memref<18x18x8xf32, #tpu.memory_space<vmem>>, vector<1x16x8xf32>,
    %116 = vector.extract_strided_slice %73 {offsets = [126, 0], sizes = [16, 8], strides = [1, 1]} : vector<286x8xf32> to vector<16x8xf32>
    %cst_106 = arith.constant 0.000000e+00 : f32
    %117 = vector.broadcast %cst_106 : f32 to vector<16x8xf32>
    %118 = arith.maximumf %116, %117 : vector<16x8xf32>
    %c8_107 = arith.constant 8 : index
    %c1_108 = arith.constant 1 : index
    %c0_109 = arith.constant 0 : index
    %119 = vector.load %arg19[%c8_107, %c1_108, %c0_109] : memref<18x18x8xf32, #tpu.memory_space<vmem>>, vector<1x16x8xf32>
    %120 = vector.shape_cast %119 : vector<1x16x8xf32> to vector<16x8xf32>
    %121 = vector.shape_cast %118 : vector<16x8xf32> to vector<1x16x8xf32>
    tpu.vector_store %arg19[%c8_107, %c1_108, %c0_109], %121 {strides = array<i32>} : memref<18x18x8xf32, #tpu.memory_space<vmem>>, vector<1x16x8xf32>,
    %122 = vector.extract_strided_slice %73 {offsets = [144, 0], sizes = [16, 8], strides = [1, 1]} : vector<286x8xf32> to vector<16x8xf32>
    %cst_110 = arith.constant 0.000000e+00 : f32
    %123 = vector.broadcast %cst_110 : f32 to vector<16x8xf32>
    %124 = arith.maximumf %122, %123 : vector<16x8xf32>
    %c9 = arith.constant 9 : index
    %c1_111 = arith.constant 1 : index
    %c0_112 = arith.constant 0 : index
    %125 = vector.load %arg19[%c9, %c1_111, %c0_112] : memref<18x18x8xf32, #tpu.memory_space<vmem>>, vector<1x16x8xf32>
    %126 = vector.shape_cast %125 : vector<1x16x8xf32> to vector<16x8xf32>
    %127 = vector.shape_cast %124 : vector<16x8xf32> to vector<1x16x8xf32>
    tpu.vector_store %arg19[%c9, %c1_111, %c0_112], %127 {strides = array<i32>} : memref<18x18x8xf32, #tpu.memory_space<vmem>>, vector<1x16x8xf32>,
    %128 = vector.extract_strided_slice %73 {offsets = [162, 0], sizes = [16, 8], strides = [1, 1]} : vector<286x8xf32> to vector<16x8xf32>
    %cst_113 = arith.constant 0.000000e+00 : f32
    %129 = vector.broadcast %cst_113 : f32 to vector<16x8xf32>
    %130 = arith.maximumf %128, %129 : vector<16x8xf32>
    %c10 = arith.constant 10 : index
    %c1_114 = arith.constant 1 : index
    %c0_115 = arith.constant 0 : index
    %131 = vector.load %arg19[%c10, %c1_114, %c0_115] : memref<18x18x8xf32, #tpu.memory_space<vmem>>, vector<1x16x8xf32>
    %132 = vector.shape_cast %131 : vector<1x16x8xf32> to vector<16x8xf32>
    %133 = vector.shape_cast %130 : vector<16x8xf32> to vector<1x16x8xf32>
    tpu.vector_store %arg19[%c10, %c1_114, %c0_115], %133 {strides = array<i32>} : memref<18x18x8xf32, #tpu.memory_space<vmem>>, vector<1x16x8xf32>,
    %134 = vector.extract_strided_slice %73 {offsets = [180, 0], sizes = [16, 8], strides = [1, 1]} : vector<286x8xf32> to vector<16x8xf32>
    %cst_116 = arith.constant 0.000000e+00 : f32
    %135 = vector.broadcast %cst_116 : f32 to vector<16x8xf32>
    %136 = arith.maximumf %134, %135 : vector<16x8xf32>
    %c11 = arith.constant 11 : index
    %c1_117 = arith.constant 1 : index
    %c0_118 = arith.constant 0 : index
    %137 = vector.load %arg19[%c11, %c1_117, %c0_118] : memref<18x18x8xf32, #tpu.memory_space<vmem>>, vector<1x16x8xf32>
    %138 = vector.shape_cast %137 : vector<1x16x8xf32> to vector<16x8xf32>
    %139 = vector.shape_cast %136 : vector<16x8xf32> to vector<1x16x8xf32>
    tpu.vector_store %arg19[%c11, %c1_117, %c0_118], %139 {strides = array<i32>} : memref<18x18x8xf32, #tpu.memory_space<vmem>>, vector<1x16x8xf32>,
    %140 = vector.extract_strided_slice %73 {offsets = [198, 0], sizes = [16, 8], strides = [1, 1]} : vector<286x8xf32> to vector<16x8xf32>
    %cst_119 = arith.constant 0.000000e+00 : f32
    %141 = vector.broadcast %cst_119 : f32 to vector<16x8xf32>
    %142 = arith.maximumf %140, %141 : vector<16x8xf32>
    %c12 = arith.constant 12 : index
    %c1_120 = arith.constant 1 : index
    %c0_121 = arith.constant 0 : index
    %143 = vector.load %arg19[%c12, %c1_120, %c0_121] : memref<18x18x8xf32, #tpu.memory_space<vmem>>, vector<1x16x8xf32>
    %144 = vector.shape_cast %143 : vector<1x16x8xf32> to vector<16x8xf32>
    %145 = vector.shape_cast %142 : vector<16x8xf32> to vector<1x16x8xf32>
    tpu.vector_store %arg19[%c12, %c1_120, %c0_121], %145 {strides = array<i32>} : memref<18x18x8xf32, #tpu.memory_space<vmem>>, vector<1x16x8xf32>,
    %146 = vector.extract_strided_slice %73 {offsets = [216, 0], sizes = [16, 8], strides = [1, 1]} : vector<286x8xf32> to vector<16x8xf32>
    %cst_122 = arith.constant 0.000000e+00 : f32
    %147 = vector.broadcast %cst_122 : f32 to vector<16x8xf32>
    %148 = arith.maximumf %146, %147 : vector<16x8xf32>
    %c13 = arith.constant 13 : index
    %c1_123 = arith.constant 1 : index
    %c0_124 = arith.constant 0 : index
    %149 = vector.load %arg19[%c13, %c1_123, %c0_124] : memref<18x18x8xf32, #tpu.memory_space<vmem>>, vector<1x16x8xf32>
    %150 = vector.shape_cast %149 : vector<1x16x8xf32> to vector<16x8xf32>
    %151 = vector.shape_cast %148 : vector<16x8xf32> to vector<1x16x8xf32>
    tpu.vector_store %arg19[%c13, %c1_123, %c0_124], %151 {strides = array<i32>} : memref<18x18x8xf32, #tpu.memory_space<vmem>>, vector<1x16x8xf32>,
    %152 = vector.extract_strided_slice %73 {offsets = [234, 0], sizes = [16, 8], strides = [1, 1]} : vector<286x8xf32> to vector<16x8xf32>
    %cst_125 = arith.constant 0.000000e+00 : f32
    %153 = vector.broadcast %cst_125 : f32 to vector<16x8xf32>
    %154 = arith.maximumf %152, %153 : vector<16x8xf32>
    %c14 = arith.constant 14 : index
    %c1_126 = arith.constant 1 : index
    %c0_127 = arith.constant 0 : index
    %155 = vector.load %arg19[%c14, %c1_126, %c0_127] : memref<18x18x8xf32, #tpu.memory_space<vmem>>, vector<1x16x8xf32>
    %156 = vector.shape_cast %155 : vector<1x16x8xf32> to vector<16x8xf32>
    %157 = vector.shape_cast %154 : vector<16x8xf32> to vector<1x16x8xf32>
    tpu.vector_store %arg19[%c14, %c1_126, %c0_127], %157 {strides = array<i32>} : memref<18x18x8xf32, #tpu.memory_space<vmem>>, vector<1x16x8xf32>,
    %158 = vector.extract_strided_slice %73 {offsets = [252, 0], sizes = [16, 8], strides = [1, 1]} : vector<286x8xf32> to vector<16x8xf32>
    %cst_128 = arith.constant 0.000000e+00 : f32
    %159 = vector.broadcast %cst_128 : f32 to vector<16x8xf32>
    %160 = arith.maximumf %158, %159 : vector<16x8xf32>
    %c15 = arith.constant 15 : index
    %c1_129 = arith.constant 1 : index
    %c0_130 = arith.constant 0 : index
    %161 = vector.load %arg19[%c15, %c1_129, %c0_130] : memref<18x18x8xf32, #tpu.memory_space<vmem>>, vector<1x16x8xf32>
    %162 = vector.shape_cast %161 : vector<1x16x8xf32> to vector<16x8xf32>
    %163 = vector.shape_cast %160 : vector<16x8xf32> to vector<1x16x8xf32>
    tpu.vector_store %arg19[%c15, %c1_129, %c0_130], %163 {strides = array<i32>} : memref<18x18x8xf32, #tpu.memory_space<vmem>>, vector<1x16x8xf32>,
    %164 = vector.extract_strided_slice %73 {offsets = [270, 0], sizes = [16, 8], strides = [1, 1]} : vector<286x8xf32> to vector<16x8xf32>
    %cst_131 = arith.constant 0.000000e+00 : f32
    %165 = vector.broadcast %cst_131 : f32 to vector<16x8xf32>
    %166 = arith.maximumf %164, %165 : vector<16x8xf32>
    %c16 = arith.constant 16 : index
    %c1_132 = arith.constant 1 : index
    %c0_133 = arith.constant 0 : index
    %167 = vector.load %arg19[%c16, %c1_132, %c0_133] : memref<18x18x8xf32, #tpu.memory_space<vmem>>, vector<1x16x8xf32>
    %168 = vector.shape_cast %167 : vector<1x16x8xf32> to vector<16x8xf32>
    %169 = vector.shape_cast %166 : vector<16x8xf32> to vector<1x16x8xf32>
    tpu.vector_store %arg19[%c16, %c1_132, %c0_133], %169 {strides = array<i32>} : memref<18x18x8xf32, #tpu.memory_space<vmem>>, vector<1x16x8xf32>,
    %c0_134 = arith.constant 0 : index
    %c0_135 = arith.constant 0 : index
    %c0_136 = arith.constant 0 : index
    %170 = vector.load %arg19[%c0_134, %c0_135, %c0_136] : memref<18x18x8xf32, #tpu.memory_space<vmem>>, vector<18x1x8xf32>
    %c0_137 = arith.constant 0 : index
    %c1_138 = arith.constant 1 : index
    %c0_139 = arith.constant 0 : index
    %171 = vector.load %arg19[%c0_137, %c1_138, %c0_139] : memref<18x18x8xf32, #tpu.memory_space<vmem>>, vector<18x1x8xf32>
    %c0_140 = arith.constant 0 : index
    %c2_141 = arith.constant 2 : index
    %c0_142 = arith.constant 0 : index
    %172 = vector.load %arg19[%c0_140, %c2_141, %c0_142] : memref<18x18x8xf32, #tpu.memory_space<vmem>>, vector<18x1x8xf32>
    %173 = arith.maximumf %170, %171 : vector<18x1x8xf32>
    %174 = arith.maximumf %173, %172 : vector<18x1x8xf32>
    %c0_143 = arith.constant 0 : index
    %c0_144 = arith.constant 0 : index
    %c0_145 = arith.constant 0 : index
    %175 = vector.load %arg23[%c0_143, %c0_144, %c0_145] : memref<18x8x8xf32, #tpu.memory_space<vmem>>, vector<18x1x8xf32>
    tpu.vector_store %arg23[%c0_143, %c0_144, %c0_145], %174 {strides = array<i32>} : memref<18x8x8xf32, #tpu.memory_space<vmem>>, vector<18x1x8xf32>,
    %c0_146 = arith.constant 0 : index
    %c2_147 = arith.constant 2 : index
    %c0_148 = arith.constant 0 : index
    %176 = vector.load %arg19[%c0_146, %c2_147, %c0_148] : memref<18x18x8xf32, #tpu.memory_space<vmem>>, vector<18x1x8xf32>
    %c0_149 = arith.constant 0 : index
    %c3_150 = arith.constant 3 : index
    %c0_151 = arith.constant 0 : index
    %177 = vector.load %arg19[%c0_149, %c3_150, %c0_151] : memref<18x18x8xf32, #tpu.memory_space<vmem>>, vector<18x1x8xf32>
    %c0_152 = arith.constant 0 : index
    %c4_153 = arith.constant 4 : index
    %c0_154 = arith.constant 0 : index
    %178 = vector.load %arg19[%c0_152, %c4_153, %c0_154] : memref<18x18x8xf32, #tpu.memory_space<vmem>>, vector<18x1x8xf32>
    %179 = arith.maximumf %176, %177 : vector<18x1x8xf32>
    %180 = arith.maximumf %179, %178 : vector<18x1x8xf32>
    %c0_155 = arith.constant 0 : index
    %c1_156 = arith.constant 1 : index
    %c0_157 = arith.constant 0 : index
    %181 = vector.load %arg23[%c0_155, %c1_156, %c0_157] : memref<18x8x8xf32, #tpu.memory_space<vmem>>, vector<18x1x8xf32>
    tpu.vector_store %arg23[%c0_155, %c1_156, %c0_157], %180 {strides = array<i32>} : memref<18x8x8xf32, #tpu.memory_space<vmem>>, vector<18x1x8xf32>,
    %c0_158 = arith.constant 0 : index
    %c4_159 = arith.constant 4 : index
    %c0_160 = arith.constant 0 : index
    %182 = vector.load %arg19[%c0_158, %c4_159, %c0_160] : memref<18x18x8xf32, #tpu.memory_space<vmem>>, vector<18x1x8xf32>
    %c0_161 = arith.constant 0 : index
    %c5_162 = arith.constant 5 : index
    %c0_163 = arith.constant 0 : index
    %183 = vector.load %arg19[%c0_161, %c5_162, %c0_163] : memref<18x18x8xf32, #tpu.memory_space<vmem>>, vector<18x1x8xf32>
    %c0_164 = arith.constant 0 : index
    %c6_165 = arith.constant 6 : index
    %c0_166 = arith.constant 0 : index
    %184 = vector.load %arg19[%c0_164, %c6_165, %c0_166] : memref<18x18x8xf32, #tpu.memory_space<vmem>>, vector<18x1x8xf32>
    %185 = arith.maximumf %182, %183 : vector<18x1x8xf32>
    %186 = arith.maximumf %185, %184 : vector<18x1x8xf32>
    %c0_167 = arith.constant 0 : index
    %c2_168 = arith.constant 2 : index
    %c0_169 = arith.constant 0 : index
    %187 = vector.load %arg23[%c0_167, %c2_168, %c0_169] : memref<18x8x8xf32, #tpu.memory_space<vmem>>, vector<18x1x8xf32>
    tpu.vector_store %arg23[%c0_167, %c2_168, %c0_169], %186 {strides = array<i32>} : memref<18x8x8xf32, #tpu.memory_space<vmem>>, vector<18x1x8xf32>,
    %c0_170 = arith.constant 0 : index
    %c6_171 = arith.constant 6 : index
    %c0_172 = arith.constant 0 : index
    %188 = vector.load %arg19[%c0_170, %c6_171, %c0_172] : memref<18x18x8xf32, #tpu.memory_space<vmem>>, vector<18x1x8xf32>
    %c0_173 = arith.constant 0 : index
    %c7_174 = arith.constant 7 : index
    %c0_175 = arith.constant 0 : index
    %189 = vector.load %arg19[%c0_173, %c7_174, %c0_175] : memref<18x18x8xf32, #tpu.memory_space<vmem>>, vector<18x1x8xf32>
    %c0_176 = arith.constant 0 : index
    %c8_177 = arith.constant 8 : index
    %c0_178 = arith.constant 0 : index
    %190 = vector.load %arg19[%c0_176, %c8_177, %c0_178] : memref<18x18x8xf32, #tpu.memory_space<vmem>>, vector<18x1x8xf32>
    %191 = arith.maximumf %188, %189 : vector<18x1x8xf32>
    %192 = arith.maximumf %191, %190 : vector<18x1x8xf32>
    %c0_179 = arith.constant 0 : index
    %c3_180 = arith.constant 3 : index
    %c0_181 = arith.constant 0 : index
    %193 = vector.load %arg23[%c0_179, %c3_180, %c0_181] : memref<18x8x8xf32, #tpu.memory_space<vmem>>, vector<18x1x8xf32>
    tpu.vector_store %arg23[%c0_179, %c3_180, %c0_181], %192 {strides = array<i32>} : memref<18x8x8xf32, #tpu.memory_space<vmem>>, vector<18x1x8xf32>,
    %c0_182 = arith.constant 0 : index
    %c8_183 = arith.constant 8 : index
    %c0_184 = arith.constant 0 : index
    %194 = vector.load %arg19[%c0_182, %c8_183, %c0_184] : memref<18x18x8xf32, #tpu.memory_space<vmem>>, vector<18x1x8xf32>
    %c0_185 = arith.constant 0 : index
    %c9_186 = arith.constant 9 : index
    %c0_187 = arith.constant 0 : index
    %195 = vector.load %arg19[%c0_185, %c9_186, %c0_187] : memref<18x18x8xf32, #tpu.memory_space<vmem>>, vector<18x1x8xf32>
    %c0_188 = arith.constant 0 : index
    %c10_189 = arith.constant 10 : index
    %c0_190 = arith.constant 0 : index
    %196 = vector.load %arg19[%c0_188, %c10_189, %c0_190] : memref<18x18x8xf32, #tpu.memory_space<vmem>>, vector<18x1x8xf32>
    %197 = arith.maximumf %194, %195 : vector<18x1x8xf32>
    %198 = arith.maximumf %197, %196 : vector<18x1x8xf32>
    %c0_191 = arith.constant 0 : index
    %c4_192 = arith.constant 4 : index
    %c0_193 = arith.constant 0 : index
    %199 = vector.load %arg23[%c0_191, %c4_192, %c0_193] : memref<18x8x8xf32, #tpu.memory_space<vmem>>, vector<18x1x8xf32>
    tpu.vector_store %arg23[%c0_191, %c4_192, %c0_193], %198 {strides = array<i32>} : memref<18x8x8xf32, #tpu.memory_space<vmem>>, vector<18x1x8xf32>,
    %c0_194 = arith.constant 0 : index
    %c10_195 = arith.constant 10 : index
    %c0_196 = arith.constant 0 : index
    %200 = vector.load %arg19[%c0_194, %c10_195, %c0_196] : memref<18x18x8xf32, #tpu.memory_space<vmem>>, vector<18x1x8xf32>
    %c0_197 = arith.constant 0 : index
    %c11_198 = arith.constant 11 : index
    %c0_199 = arith.constant 0 : index
    %201 = vector.load %arg19[%c0_197, %c11_198, %c0_199] : memref<18x18x8xf32, #tpu.memory_space<vmem>>, vector<18x1x8xf32>
    %c0_200 = arith.constant 0 : index
    %c12_201 = arith.constant 12 : index
    %c0_202 = arith.constant 0 : index
    %202 = vector.load %arg19[%c0_200, %c12_201, %c0_202] : memref<18x18x8xf32, #tpu.memory_space<vmem>>, vector<18x1x8xf32>
    %203 = arith.maximumf %200, %201 : vector<18x1x8xf32>
    %204 = arith.maximumf %203, %202 : vector<18x1x8xf32>
    %c0_203 = arith.constant 0 : index
    %c5_204 = arith.constant 5 : index
    %c0_205 = arith.constant 0 : index
    %205 = vector.load %arg23[%c0_203, %c5_204, %c0_205] : memref<18x8x8xf32, #tpu.memory_space<vmem>>, vector<18x1x8xf32>
    tpu.vector_store %arg23[%c0_203, %c5_204, %c0_205], %204 {strides = array<i32>} : memref<18x8x8xf32, #tpu.memory_space<vmem>>, vector<18x1x8xf32>,
    %c0_206 = arith.constant 0 : index
    %c12_207 = arith.constant 12 : index
    %c0_208 = arith.constant 0 : index
    %206 = vector.load %arg19[%c0_206, %c12_207, %c0_208] : memref<18x18x8xf32, #tpu.memory_space<vmem>>, vector<18x1x8xf32>
    %c0_209 = arith.constant 0 : index
    %c13_210 = arith.constant 13 : index
    %c0_211 = arith.constant 0 : index
    %207 = vector.load %arg19[%c0_209, %c13_210, %c0_211] : memref<18x18x8xf32, #tpu.memory_space<vmem>>, vector<18x1x8xf32>
    %c0_212 = arith.constant 0 : index
    %c14_213 = arith.constant 14 : index
    %c0_214 = arith.constant 0 : index
    %208 = vector.load %arg19[%c0_212, %c14_213, %c0_214] : memref<18x18x8xf32, #tpu.memory_space<vmem>>, vector<18x1x8xf32>
    %209 = arith.maximumf %206, %207 : vector<18x1x8xf32>
    %210 = arith.maximumf %209, %208 : vector<18x1x8xf32>
    %c0_215 = arith.constant 0 : index
    %c6_216 = arith.constant 6 : index
    %c0_217 = arith.constant 0 : index
    %211 = vector.load %arg23[%c0_215, %c6_216, %c0_217] : memref<18x8x8xf32, #tpu.memory_space<vmem>>, vector<18x1x8xf32>
    tpu.vector_store %arg23[%c0_215, %c6_216, %c0_217], %210 {strides = array<i32>} : memref<18x8x8xf32, #tpu.memory_space<vmem>>, vector<18x1x8xf32>,
    %c0_218 = arith.constant 0 : index
    %c14_219 = arith.constant 14 : index
    %c0_220 = arith.constant 0 : index
    %212 = vector.load %arg19[%c0_218, %c14_219, %c0_220] : memref<18x18x8xf32, #tpu.memory_space<vmem>>, vector<18x1x8xf32>
    %c0_221 = arith.constant 0 : index
    %c15_222 = arith.constant 15 : index
    %c0_223 = arith.constant 0 : index
    %213 = vector.load %arg19[%c0_221, %c15_222, %c0_223] : memref<18x18x8xf32, #tpu.memory_space<vmem>>, vector<18x1x8xf32>
    %c0_224 = arith.constant 0 : index
    %c16_225 = arith.constant 16 : index
    %c0_226 = arith.constant 0 : index
    %214 = vector.load %arg19[%c0_224, %c16_225, %c0_226] : memref<18x18x8xf32, #tpu.memory_space<vmem>>, vector<18x1x8xf32>
    %215 = arith.maximumf %212, %213 : vector<18x1x8xf32>
    %216 = arith.maximumf %215, %214 : vector<18x1x8xf32>
    %c0_227 = arith.constant 0 : index
    %c7_228 = arith.constant 7 : index
    %c0_229 = arith.constant 0 : index
    %217 = vector.load %arg23[%c0_227, %c7_228, %c0_229] : memref<18x8x8xf32, #tpu.memory_space<vmem>>, vector<18x1x8xf32>
    tpu.vector_store %arg23[%c0_227, %c7_228, %c0_229], %216 {strides = array<i32>} : memref<18x8x8xf32, #tpu.memory_space<vmem>>, vector<18x1x8xf32>,
    %c0_230 = arith.constant 0 : index
    %c0_231 = arith.constant 0 : index
    %c0_232 = arith.constant 0 : index
    %218 = vector.load %arg23[%c0_230, %c0_231, %c0_232] : memref<18x8x8xf32, #tpu.memory_space<vmem>>, vector<1x8x8xf32>
    %219 = vector.shape_cast %218 : vector<1x8x8xf32> to vector<8x8xf32>
    %c1_233 = arith.constant 1 : index
    %c0_234 = arith.constant 0 : index
    %c0_235 = arith.constant 0 : index
    %220 = vector.load %arg23[%c1_233, %c0_234, %c0_235] : memref<18x8x8xf32, #tpu.memory_space<vmem>>, vector<1x8x8xf32>
    %221 = vector.shape_cast %220 : vector<1x8x8xf32> to vector<8x8xf32>
    %c2_236 = arith.constant 2 : index
    %c0_237 = arith.constant 0 : index
    %c0_238 = arith.constant 0 : index
    %222 = vector.load %arg23[%c2_236, %c0_237, %c0_238] : memref<18x8x8xf32, #tpu.memory_space<vmem>>, vector<1x8x8xf32>
    %223 = vector.shape_cast %222 : vector<1x8x8xf32> to vector<8x8xf32>
    %224 = arith.maximumf %219, %221 : vector<8x8xf32>
    %225 = arith.maximumf %224, %223 : vector<8x8xf32>
    %c11_239 = arith.constant 11 : index
    %c0_240 = arith.constant 0 : index
    %226 = vector.load %arg15[%c11_239, %c0_240] : memref<100x8xf32, #tpu.memory_space<vmem>>, vector<8x8xf32>
    tpu.vector_store %arg15[%c11_239, %c0_240], %225 {strides = array<i32>} : memref<100x8xf32, #tpu.memory_space<vmem>>, vector<8x8xf32>,
    %c2_241 = arith.constant 2 : index
    %c0_242 = arith.constant 0 : index
    %c0_243 = arith.constant 0 : index
    %227 = vector.load %arg23[%c2_241, %c0_242, %c0_243] : memref<18x8x8xf32, #tpu.memory_space<vmem>>, vector<1x8x8xf32>
    %228 = vector.shape_cast %227 : vector<1x8x8xf32> to vector<8x8xf32>
    %c3_244 = arith.constant 3 : index
    %c0_245 = arith.constant 0 : index
    %c0_246 = arith.constant 0 : index
    %229 = vector.load %arg23[%c3_244, %c0_245, %c0_246] : memref<18x8x8xf32, #tpu.memory_space<vmem>>, vector<1x8x8xf32>
    %230 = vector.shape_cast %229 : vector<1x8x8xf32> to vector<8x8xf32>
    %c4_247 = arith.constant 4 : index
    %c0_248 = arith.constant 0 : index
    %c0_249 = arith.constant 0 : index
    %231 = vector.load %arg23[%c4_247, %c0_248, %c0_249] : memref<18x8x8xf32, #tpu.memory_space<vmem>>, vector<1x8x8xf32>
    %232 = vector.shape_cast %231 : vector<1x8x8xf32> to vector<8x8xf32>
    %233 = arith.maximumf %228, %230 : vector<8x8xf32>
    %234 = arith.maximumf %233, %232 : vector<8x8xf32>
    %c21 = arith.constant 21 : index
    %c0_250 = arith.constant 0 : index
    %235 = vector.load %arg15[%c21, %c0_250] : memref<100x8xf32, #tpu.memory_space<vmem>>, vector<8x8xf32>
    tpu.vector_store %arg15[%c21, %c0_250], %234 {strides = array<i32>} : memref<100x8xf32, #tpu.memory_space<vmem>>, vector<8x8xf32>,
    %c4_251 = arith.constant 4 : index
    %c0_252 = arith.constant 0 : index
    %c0_253 = arith.constant 0 : index
    %236 = vector.load %arg23[%c4_251, %c0_252, %c0_253] : memref<18x8x8xf32, #tpu.memory_space<vmem>>, vector<1x8x8xf32>
    %237 = vector.shape_cast %236 : vector<1x8x8xf32> to vector<8x8xf32>
    %c5_254 = arith.constant 5 : index
    %c0_255 = arith.constant 0 : index
    %c0_256 = arith.constant 0 : index
    %238 = vector.load %arg23[%c5_254, %c0_255, %c0_256] : memref<18x8x8xf32, #tpu.memory_space<vmem>>, vector<1x8x8xf32>
    %239 = vector.shape_cast %238 : vector<1x8x8xf32> to vector<8x8xf32>
    %c6_257 = arith.constant 6 : index
    %c0_258 = arith.constant 0 : index
    %c0_259 = arith.constant 0 : index
    %240 = vector.load %arg23[%c6_257, %c0_258, %c0_259] : memref<18x8x8xf32, #tpu.memory_space<vmem>>, vector<1x8x8xf32>
    %241 = vector.shape_cast %240 : vector<1x8x8xf32> to vector<8x8xf32>
    %242 = arith.maximumf %237, %239 : vector<8x8xf32>
    %243 = arith.maximumf %242, %241 : vector<8x8xf32>
    %c31 = arith.constant 31 : index
    %c0_260 = arith.constant 0 : index
    %244 = vector.load %arg15[%c31, %c0_260] : memref<100x8xf32, #tpu.memory_space<vmem>>, vector<8x8xf32>
    tpu.vector_store %arg15[%c31, %c0_260], %243 {strides = array<i32>} : memref<100x8xf32, #tpu.memory_space<vmem>>, vector<8x8xf32>,
    %c6_261 = arith.constant 6 : index
    %c0_262 = arith.constant 0 : index
    %c0_263 = arith.constant 0 : index
    %245 = vector.load %arg23[%c6_261, %c0_262, %c0_263] : memref<18x8x8xf32, #tpu.memory_space<vmem>>, vector<1x8x8xf32>
    %246 = vector.shape_cast %245 : vector<1x8x8xf32> to vector<8x8xf32>
    %c7_264 = arith.constant 7 : index
    %c0_265 = arith.constant 0 : index
    %c0_266 = arith.constant 0 : index
    %247 = vector.load %arg23[%c7_264, %c0_265, %c0_266] : memref<18x8x8xf32, #tpu.memory_space<vmem>>, vector<1x8x8xf32>
    %248 = vector.shape_cast %247 : vector<1x8x8xf32> to vector<8x8xf32>
    %c8_267 = arith.constant 8 : index
    %c0_268 = arith.constant 0 : index
    %c0_269 = arith.constant 0 : index
    %249 = vector.load %arg23[%c8_267, %c0_268, %c0_269] : memref<18x8x8xf32, #tpu.memory_space<vmem>>, vector<1x8x8xf32>
    %250 = vector.shape_cast %249 : vector<1x8x8xf32> to vector<8x8xf32>
    %251 = arith.maximumf %246, %248 : vector<8x8xf32>
    %252 = arith.maximumf %251, %250 : vector<8x8xf32>
    %c41 = arith.constant 41 : index
    %c0_270 = arith.constant 0 : index
    %253 = vector.load %arg15[%c41, %c0_270] : memref<100x8xf32, #tpu.memory_space<vmem>>, vector<8x8xf32>
    tpu.vector_store %arg15[%c41, %c0_270], %252 {strides = array<i32>} : memref<100x8xf32, #tpu.memory_space<vmem>>, vector<8x8xf32>,
    %c8_271 = arith.constant 8 : index
    %c0_272 = arith.constant 0 : index
    %c0_273 = arith.constant 0 : index
    %254 = vector.load %arg23[%c8_271, %c0_272, %c0_273] : memref<18x8x8xf32, #tpu.memory_space<vmem>>, vector<1x8x8xf32>
    %255 = vector.shape_cast %254 : vector<1x8x8xf32> to vector<8x8xf32>
    %c9_274 = arith.constant 9 : index
    %c0_275 = arith.constant 0 : index
    %c0_276 = arith.constant 0 : index
    %256 = vector.load %arg23[%c9_274, %c0_275, %c0_276] : memref<18x8x8xf32, #tpu.memory_space<vmem>>, vector<1x8x8xf32>
    %257 = vector.shape_cast %256 : vector<1x8x8xf32> to vector<8x8xf32>
    %c10_277 = arith.constant 10 : index
    %c0_278 = arith.constant 0 : index
    %c0_279 = arith.constant 0 : index
    %258 = vector.load %arg23[%c10_277, %c0_278, %c0_279] : memref<18x8x8xf32, #tpu.memory_space<vmem>>, vector<1x8x8xf32>
    %259 = vector.shape_cast %258 : vector<1x8x8xf32> to vector<8x8xf32>
    %260 = arith.maximumf %255, %257 : vector<8x8xf32>
    %261 = arith.maximumf %260, %259 : vector<8x8xf32>
    %c51 = arith.constant 51 : index
    %c0_280 = arith.constant 0 : index
    %262 = vector.load %arg15[%c51, %c0_280] : memref<100x8xf32, #tpu.memory_space<vmem>>, vector<8x8xf32>
    tpu.vector_store %arg15[%c51, %c0_280], %261 {strides = array<i32>} : memref<100x8xf32, #tpu.memory_space<vmem>>, vector<8x8xf32>,
    %c10_281 = arith.constant 10 : index
    %c0_282 = arith.constant 0 : index
    %c0_283 = arith.constant 0 : index
    %263 = vector.load %arg23[%c10_281, %c0_282, %c0_283] : memref<18x8x8xf32, #tpu.memory_space<vmem>>, vector<1x8x8xf32>
    %264 = vector.shape_cast %263 : vector<1x8x8xf32> to vector<8x8xf32>
    %c11_284 = arith.constant 11 : index
    %c0_285 = arith.constant 0 : index
    %c0_286 = arith.constant 0 : index
    %265 = vector.load %arg23[%c11_284, %c0_285, %c0_286] : memref<18x8x8xf32, #tpu.memory_space<vmem>>, vector<1x8x8xf32>
    %266 = vector.shape_cast %265 : vector<1x8x8xf32> to vector<8x8xf32>
    %c12_287 = arith.constant 12 : index
    %c0_288 = arith.constant 0 : index
    %c0_289 = arith.constant 0 : index
    %267 = vector.load %arg23[%c12_287, %c0_288, %c0_289] : memref<18x8x8xf32, #tpu.memory_space<vmem>>, vector<1x8x8xf32>
    %268 = vector.shape_cast %267 : vector<1x8x8xf32> to vector<8x8xf32>
    %269 = arith.maximumf %264, %266 : vector<8x8xf32>
    %270 = arith.maximumf %269, %268 : vector<8x8xf32>
    %c61 = arith.constant 61 : index
    %c0_290 = arith.constant 0 : index
    %271 = vector.load %arg15[%c61, %c0_290] : memref<100x8xf32, #tpu.memory_space<vmem>>, vector<8x8xf32>
    tpu.vector_store %arg15[%c61, %c0_290], %270 {strides = array<i32>} : memref<100x8xf32, #tpu.memory_space<vmem>>, vector<8x8xf32>,
    %c12_291 = arith.constant 12 : index
    %c0_292 = arith.constant 0 : index
    %c0_293 = arith.constant 0 : index
    %272 = vector.load %arg23[%c12_291, %c0_292, %c0_293] : memref<18x8x8xf32, #tpu.memory_space<vmem>>, vector<1x8x8xf32>
    %273 = vector.shape_cast %272 : vector<1x8x8xf32> to vector<8x8xf32>
    %c13_294 = arith.constant 13 : index
    %c0_295 = arith.constant 0 : index
    %c0_296 = arith.constant 0 : index
    %274 = vector.load %arg23[%c13_294, %c0_295, %c0_296] : memref<18x8x8xf32, #tpu.memory_space<vmem>>, vector<1x8x8xf32>
    %275 = vector.shape_cast %274 : vector<1x8x8xf32> to vector<8x8xf32>
    %c14_297 = arith.constant 14 : index
    %c0_298 = arith.constant 0 : index
    %c0_299 = arith.constant 0 : index
    %276 = vector.load %arg23[%c14_297, %c0_298, %c0_299] : memref<18x8x8xf32, #tpu.memory_space<vmem>>, vector<1x8x8xf32>
    %277 = vector.shape_cast %276 : vector<1x8x8xf32> to vector<8x8xf32>
    %278 = arith.maximumf %273, %275 : vector<8x8xf32>
    %279 = arith.maximumf %278, %277 : vector<8x8xf32>
    %c71 = arith.constant 71 : index
    %c0_300 = arith.constant 0 : index
    %280 = vector.load %arg15[%c71, %c0_300] : memref<100x8xf32, #tpu.memory_space<vmem>>, vector<8x8xf32>
    tpu.vector_store %arg15[%c71, %c0_300], %279 {strides = array<i32>} : memref<100x8xf32, #tpu.memory_space<vmem>>, vector<8x8xf32>,
    %c14_301 = arith.constant 14 : index
    %c0_302 = arith.constant 0 : index
    %c0_303 = arith.constant 0 : index
    %281 = vector.load %arg23[%c14_301, %c0_302, %c0_303] : memref<18x8x8xf32, #tpu.memory_space<vmem>>, vector<1x8x8xf32>
    %282 = vector.shape_cast %281 : vector<1x8x8xf32> to vector<8x8xf32>
    %c15_304 = arith.constant 15 : index
    %c0_305 = arith.constant 0 : index
    %c0_306 = arith.constant 0 : index
    %283 = vector.load %arg23[%c15_304, %c0_305, %c0_306] : memref<18x8x8xf32, #tpu.memory_space<vmem>>, vector<1x8x8xf32>
    %284 = vector.shape_cast %283 : vector<1x8x8xf32> to vector<8x8xf32>
    %c16_307 = arith.constant 16 : index
    %c0_308 = arith.constant 0 : index
    %c0_309 = arith.constant 0 : index
    %285 = vector.load %arg23[%c16_307, %c0_308, %c0_309] : memref<18x8x8xf32, #tpu.memory_space<vmem>>, vector<1x8x8xf32>
    %286 = vector.shape_cast %285 : vector<1x8x8xf32> to vector<8x8xf32>
    %287 = arith.maximumf %282, %284 : vector<8x8xf32>
    %288 = arith.maximumf %287, %286 : vector<8x8xf32>
    %c81 = arith.constant 81 : index
    %c0_310 = arith.constant 0 : index
    %289 = vector.load %arg15[%c81, %c0_310] : memref<100x8xf32, #tpu.memory_space<vmem>>, vector<8x8xf32>
    tpu.vector_store %arg15[%c81, %c0_310], %288 {strides = array<i32>} : memref<100x8xf32, #tpu.memory_space<vmem>>, vector<8x8xf32>,
    %cst_311 = arith.constant 0.000000e+00 : f32
    %290 = vector.broadcast %cst_311 : f32 to vector<78x16xf32>
    %c0_312 = arith.constant 0 : index
    %c0_313 = arith.constant 0 : index
    %291 = vector.load %arg15[%c0_312, %c0_313] : memref<100x8xf32, #tpu.memory_space<vmem>>, vector<78x8xf32>
    %c0_314 = arith.constant 0 : index
    %c0_315 = arith.constant 0 : index
    %c0_316 = arith.constant 0 : index
    %292 = vector.load %arg4[%c0_314, %c0_315, %c0_316] : memref<9x8x16xf32, #tpu.memory_space<vmem>>, vector<1x8x16xf32>
    %293 = vector.shape_cast %292 : vector<1x8x16xf32> to vector<8x16xf32>
    %cst_317 = arith.constant dense<0.000000e+00> : vector<78x16xf32>
    %294 = tpu.matmul %291, %293, %cst_317 {dimension_numbers = #tpu.dot_dimension_numbers<[1], [0], [0], [1], [0, 0, 1, 1], [], []>} : vector<78x8xf32>, vector<8x16xf32>, vector<78x16xf32> -> vector<78x16xf32>
    %295 = arith.addf %290, %294 : vector<78x16xf32>
    %c1_318 = arith.constant 1 : index
    %c0_319 = arith.constant 0 : index
    %296 = vector.load %arg15[%c1_318, %c0_319] : memref<100x8xf32, #tpu.memory_space<vmem>>, vector<78x8xf32>
    %c1_320 = arith.constant 1 : index
    %c0_321 = arith.constant 0 : index
    %c0_322 = arith.constant 0 : index
    %297 = vector.load %arg4[%c1_320, %c0_321, %c0_322] : memref<9x8x16xf32, #tpu.memory_space<vmem>>, vector<1x8x16xf32>
    %298 = vector.shape_cast %297 : vector<1x8x16xf32> to vector<8x16xf32>
    %cst_323 = arith.constant dense<0.000000e+00> : vector<78x16xf32>
    %299 = tpu.matmul %296, %298, %cst_323 {dimension_numbers = #tpu.dot_dimension_numbers<[1], [0], [0], [1], [0, 0, 1, 1], [], []>} : vector<78x8xf32>, vector<8x16xf32>, vector<78x16xf32> -> vector<78x16xf32>
    %300 = arith.addf %295, %299 : vector<78x16xf32>
    %c2_324 = arith.constant 2 : index
    %c0_325 = arith.constant 0 : index
    %301 = vector.load %arg15[%c2_324, %c0_325] : memref<100x8xf32, #tpu.memory_space<vmem>>, vector<78x8xf32>
    %c2_326 = arith.constant 2 : index
    %c0_327 = arith.constant 0 : index
    %c0_328 = arith.constant 0 : index
    %302 = vector.load %arg4[%c2_326, %c0_327, %c0_328] : memref<9x8x16xf32, #tpu.memory_space<vmem>>, vector<1x8x16xf32>
    %303 = vector.shape_cast %302 : vector<1x8x16xf32> to vector<8x16xf32>
    %cst_329 = arith.constant dense<0.000000e+00> : vector<78x16xf32>
    %304 = tpu.matmul %301, %303, %cst_329 {dimension_numbers = #tpu.dot_dimension_numbers<[1], [0], [0], [1], [0, 0, 1, 1], [], []>} : vector<78x8xf32>, vector<8x16xf32>, vector<78x16xf32> -> vector<78x16xf32>
    %305 = arith.addf %300, %304 : vector<78x16xf32>
    %c10_330 = arith.constant 10 : index
    %c0_331 = arith.constant 0 : index
    %306 = vector.load %arg15[%c10_330, %c0_331] : memref<100x8xf32, #tpu.memory_space<vmem>>, vector<78x8xf32>
    %c3_332 = arith.constant 3 : index
    %c0_333 = arith.constant 0 : index
    %c0_334 = arith.constant 0 : index
    %307 = vector.load %arg4[%c3_332, %c0_333, %c0_334] : memref<9x8x16xf32, #tpu.memory_space<vmem>>, vector<1x8x16xf32>
    %308 = vector.shape_cast %307 : vector<1x8x16xf32> to vector<8x16xf32>
    %cst_335 = arith.constant dense<0.000000e+00> : vector<78x16xf32>
    %309 = tpu.matmul %306, %308, %cst_335 {dimension_numbers = #tpu.dot_dimension_numbers<[1], [0], [0], [1], [0, 0, 1, 1], [], []>} : vector<78x8xf32>, vector<8x16xf32>, vector<78x16xf32> -> vector<78x16xf32>
    %310 = arith.addf %305, %309 : vector<78x16xf32>
    %c11_336 = arith.constant 11 : index
    %c0_337 = arith.constant 0 : index
    %311 = vector.load %arg15[%c11_336, %c0_337] : memref<100x8xf32, #tpu.memory_space<vmem>>, vector<78x8xf32>
    %c4_338 = arith.constant 4 : index
    %c0_339 = arith.constant 0 : index
    %c0_340 = arith.constant 0 : index
    %312 = vector.load %arg4[%c4_338, %c0_339, %c0_340] : memref<9x8x16xf32, #tpu.memory_space<vmem>>, vector<1x8x16xf32>
    %313 = vector.shape_cast %312 : vector<1x8x16xf32> to vector<8x16xf32>
    %cst_341 = arith.constant dense<0.000000e+00> : vector<78x16xf32>
    %314 = tpu.matmul %311, %313, %cst_341 {dimension_numbers = #tpu.dot_dimension_numbers<[1], [0], [0], [1], [0, 0, 1, 1], [], []>} : vector<78x8xf32>, vector<8x16xf32>, vector<78x16xf32> -> vector<78x16xf32>
    %315 = arith.addf %310, %314 : vector<78x16xf32>
    %c12_342 = arith.constant 12 : index
    %c0_343 = arith.constant 0 : index
    %316 = vector.load %arg15[%c12_342, %c0_343] : memref<100x8xf32, #tpu.memory_space<vmem>>, vector<78x8xf32>
    %c5_344 = arith.constant 5 : index
    %c0_345 = arith.constant 0 : index
    %c0_346 = arith.constant 0 : index
    %317 = vector.load %arg4[%c5_344, %c0_345, %c0_346] : memref<9x8x16xf32, #tpu.memory_space<vmem>>, vector<1x8x16xf32>
    %318 = vector.shape_cast %317 : vector<1x8x16xf32> to vector<8x16xf32>
    %cst_347 = arith.constant dense<0.000000e+00> : vector<78x16xf32>
    %319 = tpu.matmul %316, %318, %cst_347 {dimension_numbers = #tpu.dot_dimension_numbers<[1], [0], [0], [1], [0, 0, 1, 1], [], []>} : vector<78x8xf32>, vector<8x16xf32>, vector<78x16xf32> -> vector<78x16xf32>
    %320 = arith.addf %315, %319 : vector<78x16xf32>
    %c20_348 = arith.constant 20 : index
    %c0_349 = arith.constant 0 : index
    %321 = vector.load %arg15[%c20_348, %c0_349] : memref<100x8xf32, #tpu.memory_space<vmem>>, vector<78x8xf32>
    %c6_350 = arith.constant 6 : index
    %c0_351 = arith.constant 0 : index
    %c0_352 = arith.constant 0 : index
    %322 = vector.load %arg4[%c6_350, %c0_351, %c0_352] : memref<9x8x16xf32, #tpu.memory_space<vmem>>, vector<1x8x16xf32>
    %323 = vector.shape_cast %322 : vector<1x8x16xf32> to vector<8x16xf32>
    %cst_353 = arith.constant dense<0.000000e+00> : vector<78x16xf32>
    %324 = tpu.matmul %321, %323, %cst_353 {dimension_numbers = #tpu.dot_dimension_numbers<[1], [0], [0], [1], [0, 0, 1, 1], [], []>} : vector<78x8xf32>, vector<8x16xf32>, vector<78x16xf32> -> vector<78x16xf32>
    %325 = arith.addf %320, %324 : vector<78x16xf32>
    %c21_354 = arith.constant 21 : index
    %c0_355 = arith.constant 0 : index
    %326 = vector.load %arg15[%c21_354, %c0_355] : memref<100x8xf32, #tpu.memory_space<vmem>>, vector<78x8xf32>
    %c7_356 = arith.constant 7 : index
    %c0_357 = arith.constant 0 : index
    %c0_358 = arith.constant 0 : index
    %327 = vector.load %arg4[%c7_356, %c0_357, %c0_358] : memref<9x8x16xf32, #tpu.memory_space<vmem>>, vector<1x8x16xf32>
    %328 = vector.shape_cast %327 : vector<1x8x16xf32> to vector<8x16xf32>
    %cst_359 = arith.constant dense<0.000000e+00> : vector<78x16xf32>
    %329 = tpu.matmul %326, %328, %cst_359 {dimension_numbers = #tpu.dot_dimension_numbers<[1], [0], [0], [1], [0, 0, 1, 1], [], []>} : vector<78x8xf32>, vector<8x16xf32>, vector<78x16xf32> -> vector<78x16xf32>
    %330 = arith.addf %325, %329 : vector<78x16xf32>
    %c22 = arith.constant 22 : index
    %c0_360 = arith.constant 0 : index
    %331 = vector.load %arg15[%c22, %c0_360] : memref<100x8xf32, #tpu.memory_space<vmem>>, vector<78x8xf32>
    %c8_361 = arith.constant 8 : index
    %c0_362 = arith.constant 0 : index
    %c0_363 = arith.constant 0 : index
    %332 = vector.load %arg4[%c8_361, %c0_362, %c0_363] : memref<9x8x16xf32, #tpu.memory_space<vmem>>, vector<1x8x16xf32>
    %333 = vector.shape_cast %332 : vector<1x8x16xf32> to vector<8x16xf32>
    %cst_364 = arith.constant dense<0.000000e+00> : vector<78x16xf32>
    %334 = tpu.matmul %331, %333, %cst_364 {dimension_numbers = #tpu.dot_dimension_numbers<[1], [0], [0], [1], [0, 0, 1, 1], [], []>} : vector<78x8xf32>, vector<8x16xf32>, vector<78x16xf32> -> vector<78x16xf32>
    %335 = arith.addf %330, %334 : vector<78x16xf32>
    %c0_365 = arith.constant 0 : index
    %c0_366 = arith.constant 0 : index
    %336 = vector.load %arg5[%c0_365, %c0_366] : memref<1x16xf32, #tpu.memory_space<vmem>>, vector<1x16xf32>
    %337 = vector.broadcast %336 : vector<1x16xf32> to vector<78x16xf32>
    %338 = arith.addf %335, %337 : vector<78x16xf32>
    %339 = vector.extract_strided_slice %338 {offsets = [0, 0], sizes = [8, 16], strides = [1, 1]} : vector<78x16xf32> to vector<8x16xf32>
    %cst_367 = arith.constant 0.000000e+00 : f32
    %340 = vector.broadcast %cst_367 : f32 to vector<8x16xf32>
    %341 = arith.maximumf %339, %340 : vector<8x16xf32>
    %c1_368 = arith.constant 1 : index
    %c1_369 = arith.constant 1 : index
    %c0_370 = arith.constant 0 : index
    %342 = vector.load %arg20[%c1_368, %c1_369, %c0_370] : memref<10x10x16xf32, #tpu.memory_space<vmem>>, vector<1x8x16xf32>
    %343 = vector.shape_cast %342 : vector<1x8x16xf32> to vector<8x16xf32>
    %344 = vector.shape_cast %341 : vector<8x16xf32> to vector<1x8x16xf32>
    tpu.vector_store %arg20[%c1_368, %c1_369, %c0_370], %344 {strides = array<i32>} : memref<10x10x16xf32, #tpu.memory_space<vmem>>, vector<1x8x16xf32>,
    %345 = vector.extract_strided_slice %338 {offsets = [10, 0], sizes = [8, 16], strides = [1, 1]} : vector<78x16xf32> to vector<8x16xf32>
    %cst_371 = arith.constant 0.000000e+00 : f32
    %346 = vector.broadcast %cst_371 : f32 to vector<8x16xf32>
    %347 = arith.maximumf %345, %346 : vector<8x16xf32>
    %c2_372 = arith.constant 2 : index
    %c1_373 = arith.constant 1 : index
    %c0_374 = arith.constant 0 : index
    %348 = vector.load %arg20[%c2_372, %c1_373, %c0_374] : memref<10x10x16xf32, #tpu.memory_space<vmem>>, vector<1x8x16xf32>
    %349 = vector.shape_cast %348 : vector<1x8x16xf32> to vector<8x16xf32>
    %350 = vector.shape_cast %347 : vector<8x16xf32> to vector<1x8x16xf32>
    tpu.vector_store %arg20[%c2_372, %c1_373, %c0_374], %350 {strides = array<i32>} : memref<10x10x16xf32, #tpu.memory_space<vmem>>, vector<1x8x16xf32>,
    %351 = vector.extract_strided_slice %338 {offsets = [20, 0], sizes = [8, 16], strides = [1, 1]} : vector<78x16xf32> to vector<8x16xf32>
    %cst_375 = arith.constant 0.000000e+00 : f32
    %352 = vector.broadcast %cst_375 : f32 to vector<8x16xf32>
    %353 = arith.maximumf %351, %352 : vector<8x16xf32>
    %c3_376 = arith.constant 3 : index
    %c1_377 = arith.constant 1 : index
    %c0_378 = arith.constant 0 : index
    %354 = vector.load %arg20[%c3_376, %c1_377, %c0_378] : memref<10x10x16xf32, #tpu.memory_space<vmem>>, vector<1x8x16xf32>
    %355 = vector.shape_cast %354 : vector<1x8x16xf32> to vector<8x16xf32>
    %356 = vector.shape_cast %353 : vector<8x16xf32> to vector<1x8x16xf32>
    tpu.vector_store %arg20[%c3_376, %c1_377, %c0_378], %356 {strides = array<i32>} : memref<10x10x16xf32, #tpu.memory_space<vmem>>, vector<1x8x16xf32>,
    %357 = vector.extract_strided_slice %338 {offsets = [30, 0], sizes = [8, 16], strides = [1, 1]} : vector<78x16xf32> to vector<8x16xf32>
    %cst_379 = arith.constant 0.000000e+00 : f32
    %358 = vector.broadcast %cst_379 : f32 to vector<8x16xf32>
    %359 = arith.maximumf %357, %358 : vector<8x16xf32>
    %c4_380 = arith.constant 4 : index
    %c1_381 = arith.constant 1 : index
    %c0_382 = arith.constant 0 : index
    %360 = vector.load %arg20[%c4_380, %c1_381, %c0_382] : memref<10x10x16xf32, #tpu.memory_space<vmem>>, vector<1x8x16xf32>
    %361 = vector.shape_cast %360 : vector<1x8x16xf32> to vector<8x16xf32>
    %362 = vector.shape_cast %359 : vector<8x16xf32> to vector<1x8x16xf32>
    tpu.vector_store %arg20[%c4_380, %c1_381, %c0_382], %362 {strides = array<i32>} : memref<10x10x16xf32, #tpu.memory_space<vmem>>, vector<1x8x16xf32>,
    %363 = vector.extract_strided_slice %338 {offsets = [40, 0], sizes = [8, 16], strides = [1, 1]} : vector<78x16xf32> to vector<8x16xf32>
    %cst_383 = arith.constant 0.000000e+00 : f32
    %364 = vector.broadcast %cst_383 : f32 to vector<8x16xf32>
    %365 = arith.maximumf %363, %364 : vector<8x16xf32>
    %c5_384 = arith.constant 5 : index
    %c1_385 = arith.constant 1 : index
    %c0_386 = arith.constant 0 : index
    %366 = vector.load %arg20[%c5_384, %c1_385, %c0_386] : memref<10x10x16xf32, #tpu.memory_space<vmem>>, vector<1x8x16xf32>
    %367 = vector.shape_cast %366 : vector<1x8x16xf32> to vector<8x16xf32>
    %368 = vector.shape_cast %365 : vector<8x16xf32> to vector<1x8x16xf32>
    tpu.vector_store %arg20[%c5_384, %c1_385, %c0_386], %368 {strides = array<i32>} : memref<10x10x16xf32, #tpu.memory_space<vmem>>, vector<1x8x16xf32>,
    %369 = vector.extract_strided_slice %338 {offsets = [50, 0], sizes = [8, 16], strides = [1, 1]} : vector<78x16xf32> to vector<8x16xf32>
    %cst_387 = arith.constant 0.000000e+00 : f32
    %370 = vector.broadcast %cst_387 : f32 to vector<8x16xf32>
    %371 = arith.maximumf %369, %370 : vector<8x16xf32>
    %c6_388 = arith.constant 6 : index
    %c1_389 = arith.constant 1 : index
    %c0_390 = arith.constant 0 : index
    %372 = vector.load %arg20[%c6_388, %c1_389, %c0_390] : memref<10x10x16xf32, #tpu.memory_space<vmem>>, vector<1x8x16xf32>
    %373 = vector.shape_cast %372 : vector<1x8x16xf32> to vector<8x16xf32>
    %374 = vector.shape_cast %371 : vector<8x16xf32> to vector<1x8x16xf32>
    tpu.vector_store %arg20[%c6_388, %c1_389, %c0_390], %374 {strides = array<i32>} : memref<10x10x16xf32, #tpu.memory_space<vmem>>, vector<1x8x16xf32>,
    %375 = vector.extract_strided_slice %338 {offsets = [60, 0], sizes = [8, 16], strides = [1, 1]} : vector<78x16xf32> to vector<8x16xf32>
    %cst_391 = arith.constant 0.000000e+00 : f32
    %376 = vector.broadcast %cst_391 : f32 to vector<8x16xf32>
    %377 = arith.maximumf %375, %376 : vector<8x16xf32>
    %c7_392 = arith.constant 7 : index
    %c1_393 = arith.constant 1 : index
    %c0_394 = arith.constant 0 : index
    %378 = vector.load %arg20[%c7_392, %c1_393, %c0_394] : memref<10x10x16xf32, #tpu.memory_space<vmem>>, vector<1x8x16xf32>
    %379 = vector.shape_cast %378 : vector<1x8x16xf32> to vector<8x16xf32>
    %380 = vector.shape_cast %377 : vector<8x16xf32> to vector<1x8x16xf32>
    tpu.vector_store %arg20[%c7_392, %c1_393, %c0_394], %380 {strides = array<i32>} : memref<10x10x16xf32, #tpu.memory_space<vmem>>, vector<1x8x16xf32>,
    %381 = vector.extract_strided_slice %338 {offsets = [70, 0], sizes = [8, 16], strides = [1, 1]} : vector<78x16xf32> to vector<8x16xf32>
    %cst_395 = arith.constant 0.000000e+00 : f32
    %382 = vector.broadcast %cst_395 : f32 to vector<8x16xf32>
    %383 = arith.maximumf %381, %382 : vector<8x16xf32>
    %c8_396 = arith.constant 8 : index
    %c1_397 = arith.constant 1 : index
    %c0_398 = arith.constant 0 : index
    %384 = vector.load %arg20[%c8_396, %c1_397, %c0_398] : memref<10x10x16xf32, #tpu.memory_space<vmem>>, vector<1x8x16xf32>
    %385 = vector.shape_cast %384 : vector<1x8x16xf32> to vector<8x16xf32>
    %386 = vector.shape_cast %383 : vector<8x16xf32> to vector<1x8x16xf32>
    tpu.vector_store %arg20[%c8_396, %c1_397, %c0_398], %386 {strides = array<i32>} : memref<10x10x16xf32, #tpu.memory_space<vmem>>, vector<1x8x16xf32>,
    %c0_399 = arith.constant 0 : index
    %c0_400 = arith.constant 0 : index
    %c0_401 = arith.constant 0 : index
    %387 = vector.load %arg20[%c0_399, %c0_400, %c0_401] : memref<10x10x16xf32, #tpu.memory_space<vmem>>, vector<10x1x16xf32>
    %c0_402 = arith.constant 0 : index
    %c1_403 = arith.constant 1 : index
    %c0_404 = arith.constant 0 : index
    %388 = vector.load %arg20[%c0_402, %c1_403, %c0_404] : memref<10x10x16xf32, #tpu.memory_space<vmem>>, vector<10x1x16xf32>
    %c0_405 = arith.constant 0 : index
    %c2_406 = arith.constant 2 : index
    %c0_407 = arith.constant 0 : index
    %389 = vector.load %arg20[%c0_405, %c2_406, %c0_407] : memref<10x10x16xf32, #tpu.memory_space<vmem>>, vector<10x1x16xf32>
    %390 = arith.maximumf %387, %388 : vector<10x1x16xf32>
    %391 = arith.maximumf %390, %389 : vector<10x1x16xf32>
    %c0_408 = arith.constant 0 : index
    %c0_409 = arith.constant 0 : index
    %c0_410 = arith.constant 0 : index
    %392 = vector.load %arg24[%c0_408, %c0_409, %c0_410] : memref<10x4x16xf32, #tpu.memory_space<vmem>>, vector<10x1x16xf32>
    tpu.vector_store %arg24[%c0_408, %c0_409, %c0_410], %391 {strides = array<i32>} : memref<10x4x16xf32, #tpu.memory_space<vmem>>, vector<10x1x16xf32>,
    %c0_411 = arith.constant 0 : index
    %c2_412 = arith.constant 2 : index
    %c0_413 = arith.constant 0 : index
    %393 = vector.load %arg20[%c0_411, %c2_412, %c0_413] : memref<10x10x16xf32, #tpu.memory_space<vmem>>, vector<10x1x16xf32>
    %c0_414 = arith.constant 0 : index
    %c3_415 = arith.constant 3 : index
    %c0_416 = arith.constant 0 : index
    %394 = vector.load %arg20[%c0_414, %c3_415, %c0_416] : memref<10x10x16xf32, #tpu.memory_space<vmem>>, vector<10x1x16xf32>
    %c0_417 = arith.constant 0 : index
    %c4_418 = arith.constant 4 : index
    %c0_419 = arith.constant 0 : index
    %395 = vector.load %arg20[%c0_417, %c4_418, %c0_419] : memref<10x10x16xf32, #tpu.memory_space<vmem>>, vector<10x1x16xf32>
    %396 = arith.maximumf %393, %394 : vector<10x1x16xf32>
    %397 = arith.maximumf %396, %395 : vector<10x1x16xf32>
    %c0_420 = arith.constant 0 : index
    %c1_421 = arith.constant 1 : index
    %c0_422 = arith.constant 0 : index
    %398 = vector.load %arg24[%c0_420, %c1_421, %c0_422] : memref<10x4x16xf32, #tpu.memory_space<vmem>>, vector<10x1x16xf32>
    tpu.vector_store %arg24[%c0_420, %c1_421, %c0_422], %397 {strides = array<i32>} : memref<10x4x16xf32, #tpu.memory_space<vmem>>, vector<10x1x16xf32>,
    %c0_423 = arith.constant 0 : index
    %c4_424 = arith.constant 4 : index
    %c0_425 = arith.constant 0 : index
    %399 = vector.load %arg20[%c0_423, %c4_424, %c0_425] : memref<10x10x16xf32, #tpu.memory_space<vmem>>, vector<10x1x16xf32>
    %c0_426 = arith.constant 0 : index
    %c5_427 = arith.constant 5 : index
    %c0_428 = arith.constant 0 : index
    %400 = vector.load %arg20[%c0_426, %c5_427, %c0_428] : memref<10x10x16xf32, #tpu.memory_space<vmem>>, vector<10x1x16xf32>
    %c0_429 = arith.constant 0 : index
    %c6_430 = arith.constant 6 : index
    %c0_431 = arith.constant 0 : index
    %401 = vector.load %arg20[%c0_429, %c6_430, %c0_431] : memref<10x10x16xf32, #tpu.memory_space<vmem>>, vector<10x1x16xf32>
    %402 = arith.maximumf %399, %400 : vector<10x1x16xf32>
    %403 = arith.maximumf %402, %401 : vector<10x1x16xf32>
    %c0_432 = arith.constant 0 : index
    %c2_433 = arith.constant 2 : index
    %c0_434 = arith.constant 0 : index
    %404 = vector.load %arg24[%c0_432, %c2_433, %c0_434] : memref<10x4x16xf32, #tpu.memory_space<vmem>>, vector<10x1x16xf32>
    tpu.vector_store %arg24[%c0_432, %c2_433, %c0_434], %403 {strides = array<i32>} : memref<10x4x16xf32, #tpu.memory_space<vmem>>, vector<10x1x16xf32>,
    %c0_435 = arith.constant 0 : index
    %c6_436 = arith.constant 6 : index
    %c0_437 = arith.constant 0 : index
    %405 = vector.load %arg20[%c0_435, %c6_436, %c0_437] : memref<10x10x16xf32, #tpu.memory_space<vmem>>, vector<10x1x16xf32>
    %c0_438 = arith.constant 0 : index
    %c7_439 = arith.constant 7 : index
    %c0_440 = arith.constant 0 : index
    %406 = vector.load %arg20[%c0_438, %c7_439, %c0_440] : memref<10x10x16xf32, #tpu.memory_space<vmem>>, vector<10x1x16xf32>
    %c0_441 = arith.constant 0 : index
    %c8_442 = arith.constant 8 : index
    %c0_443 = arith.constant 0 : index
    %407 = vector.load %arg20[%c0_441, %c8_442, %c0_443] : memref<10x10x16xf32, #tpu.memory_space<vmem>>, vector<10x1x16xf32>
    %408 = arith.maximumf %405, %406 : vector<10x1x16xf32>
    %409 = arith.maximumf %408, %407 : vector<10x1x16xf32>
    %c0_444 = arith.constant 0 : index
    %c3_445 = arith.constant 3 : index
    %c0_446 = arith.constant 0 : index
    %410 = vector.load %arg24[%c0_444, %c3_445, %c0_446] : memref<10x4x16xf32, #tpu.memory_space<vmem>>, vector<10x1x16xf32>
    tpu.vector_store %arg24[%c0_444, %c3_445, %c0_446], %409 {strides = array<i32>} : memref<10x4x16xf32, #tpu.memory_space<vmem>>, vector<10x1x16xf32>,
    %c0_447 = arith.constant 0 : index
    %c0_448 = arith.constant 0 : index
    %c0_449 = arith.constant 0 : index
    %411 = vector.load %arg24[%c0_447, %c0_448, %c0_449] : memref<10x4x16xf32, #tpu.memory_space<vmem>>, vector<1x4x16xf32>
    %412 = vector.shape_cast %411 : vector<1x4x16xf32> to vector<4x16xf32>
    %c1_450 = arith.constant 1 : index
    %c0_451 = arith.constant 0 : index
    %c0_452 = arith.constant 0 : index
    %413 = vector.load %arg24[%c1_450, %c0_451, %c0_452] : memref<10x4x16xf32, #tpu.memory_space<vmem>>, vector<1x4x16xf32>
    %414 = vector.shape_cast %413 : vector<1x4x16xf32> to vector<4x16xf32>
    %c2_453 = arith.constant 2 : index
    %c0_454 = arith.constant 0 : index
    %c0_455 = arith.constant 0 : index
    %415 = vector.load %arg24[%c2_453, %c0_454, %c0_455] : memref<10x4x16xf32, #tpu.memory_space<vmem>>, vector<1x4x16xf32>
    %416 = vector.shape_cast %415 : vector<1x4x16xf32> to vector<4x16xf32>
    %417 = arith.maximumf %412, %414 : vector<4x16xf32>
    %418 = arith.maximumf %417, %416 : vector<4x16xf32>
    %c7_456 = arith.constant 7 : index
    %c0_457 = arith.constant 0 : index
    %419 = vector.load %arg16[%c7_456, %c0_457] : memref<36x16xf32, #tpu.memory_space<vmem>>, vector<4x16xf32>
    tpu.vector_store %arg16[%c7_456, %c0_457], %418 {strides = array<i32>} : memref<36x16xf32, #tpu.memory_space<vmem>>, vector<4x16xf32>,
    %c2_458 = arith.constant 2 : index
    %c0_459 = arith.constant 0 : index
    %c0_460 = arith.constant 0 : index
    %420 = vector.load %arg24[%c2_458, %c0_459, %c0_460] : memref<10x4x16xf32, #tpu.memory_space<vmem>>, vector<1x4x16xf32>
    %421 = vector.shape_cast %420 : vector<1x4x16xf32> to vector<4x16xf32>
    %c3_461 = arith.constant 3 : index
    %c0_462 = arith.constant 0 : index
    %c0_463 = arith.constant 0 : index
    %422 = vector.load %arg24[%c3_461, %c0_462, %c0_463] : memref<10x4x16xf32, #tpu.memory_space<vmem>>, vector<1x4x16xf32>
    %423 = vector.shape_cast %422 : vector<1x4x16xf32> to vector<4x16xf32>
    %c4_464 = arith.constant 4 : index
    %c0_465 = arith.constant 0 : index
    %c0_466 = arith.constant 0 : index
    %424 = vector.load %arg24[%c4_464, %c0_465, %c0_466] : memref<10x4x16xf32, #tpu.memory_space<vmem>>, vector<1x4x16xf32>
    %425 = vector.shape_cast %424 : vector<1x4x16xf32> to vector<4x16xf32>
    %426 = arith.maximumf %421, %423 : vector<4x16xf32>
    %427 = arith.maximumf %426, %425 : vector<4x16xf32>
    %c13_467 = arith.constant 13 : index
    %c0_468 = arith.constant 0 : index
    %428 = vector.load %arg16[%c13_467, %c0_468] : memref<36x16xf32, #tpu.memory_space<vmem>>, vector<4x16xf32>
    tpu.vector_store %arg16[%c13_467, %c0_468], %427 {strides = array<i32>} : memref<36x16xf32, #tpu.memory_space<vmem>>, vector<4x16xf32>,
    %c4_469 = arith.constant 4 : index
    %c0_470 = arith.constant 0 : index
    %c0_471 = arith.constant 0 : index
    %429 = vector.load %arg24[%c4_469, %c0_470, %c0_471] : memref<10x4x16xf32, #tpu.memory_space<vmem>>, vector<1x4x16xf32>
    %430 = vector.shape_cast %429 : vector<1x4x16xf32> to vector<4x16xf32>
    %c5_472 = arith.constant 5 : index
    %c0_473 = arith.constant 0 : index
    %c0_474 = arith.constant 0 : index
    %431 = vector.load %arg24[%c5_472, %c0_473, %c0_474] : memref<10x4x16xf32, #tpu.memory_space<vmem>>, vector<1x4x16xf32>
    %432 = vector.shape_cast %431 : vector<1x4x16xf32> to vector<4x16xf32>
    %c6_475 = arith.constant 6 : index
    %c0_476 = arith.constant 0 : index
    %c0_477 = arith.constant 0 : index
    %433 = vector.load %arg24[%c6_475, %c0_476, %c0_477] : memref<10x4x16xf32, #tpu.memory_space<vmem>>, vector<1x4x16xf32>
    %434 = vector.shape_cast %433 : vector<1x4x16xf32> to vector<4x16xf32>
    %435 = arith.maximumf %430, %432 : vector<4x16xf32>
    %436 = arith.maximumf %435, %434 : vector<4x16xf32>
    %c19_478 = arith.constant 19 : index
    %c0_479 = arith.constant 0 : index
    %437 = vector.load %arg16[%c19_478, %c0_479] : memref<36x16xf32, #tpu.memory_space<vmem>>, vector<4x16xf32>
    tpu.vector_store %arg16[%c19_478, %c0_479], %436 {strides = array<i32>} : memref<36x16xf32, #tpu.memory_space<vmem>>, vector<4x16xf32>,
    %c6_480 = arith.constant 6 : index
    %c0_481 = arith.constant 0 : index
    %c0_482 = arith.constant 0 : index
    %438 = vector.load %arg24[%c6_480, %c0_481, %c0_482] : memref<10x4x16xf32, #tpu.memory_space<vmem>>, vector<1x4x16xf32>
    %439 = vector.shape_cast %438 : vector<1x4x16xf32> to vector<4x16xf32>
    %c7_483 = arith.constant 7 : index
    %c0_484 = arith.constant 0 : index
    %c0_485 = arith.constant 0 : index
    %440 = vector.load %arg24[%c7_483, %c0_484, %c0_485] : memref<10x4x16xf32, #tpu.memory_space<vmem>>, vector<1x4x16xf32>
    %441 = vector.shape_cast %440 : vector<1x4x16xf32> to vector<4x16xf32>
    %c8_486 = arith.constant 8 : index
    %c0_487 = arith.constant 0 : index
    %c0_488 = arith.constant 0 : index
    %442 = vector.load %arg24[%c8_486, %c0_487, %c0_488] : memref<10x4x16xf32, #tpu.memory_space<vmem>>, vector<1x4x16xf32>
    %443 = vector.shape_cast %442 : vector<1x4x16xf32> to vector<4x16xf32>
    %444 = arith.maximumf %439, %441 : vector<4x16xf32>
    %445 = arith.maximumf %444, %443 : vector<4x16xf32>
    %c25 = arith.constant 25 : index
    %c0_489 = arith.constant 0 : index
    %446 = vector.load %arg16[%c25, %c0_489] : memref<36x16xf32, #tpu.memory_space<vmem>>, vector<4x16xf32>
    tpu.vector_store %arg16[%c25, %c0_489], %445 {strides = array<i32>} : memref<36x16xf32, #tpu.memory_space<vmem>>, vector<4x16xf32>,
    %cst_490 = arith.constant 0.000000e+00 : f32
    %447 = vector.broadcast %cst_490 : f32 to vector<22x32xf32>
    %c0_491 = arith.constant 0 : index
    %c0_492 = arith.constant 0 : index
    %448 = vector.load %arg16[%c0_491, %c0_492] : memref<36x16xf32, #tpu.memory_space<vmem>>, vector<22x16xf32>
    %c0_493 = arith.constant 0 : index
    %c0_494 = arith.constant 0 : index
    %c0_495 = arith.constant 0 : index
    %449 = vector.load %arg6[%c0_493, %c0_494, %c0_495] : memref<9x16x32xf32, #tpu.memory_space<vmem>>, vector<1x16x32xf32>
    %450 = vector.shape_cast %449 : vector<1x16x32xf32> to vector<16x32xf32>
    %cst_496 = arith.constant dense<0.000000e+00> : vector<22x32xf32>
    %451 = tpu.matmul %448, %450, %cst_496 {dimension_numbers = #tpu.dot_dimension_numbers<[1], [0], [0], [1], [0, 0, 1, 1], [], []>} : vector<22x16xf32>, vector<16x32xf32>, vector<22x32xf32> -> vector<22x32xf32>
    %452 = arith.addf %447, %451 : vector<22x32xf32>
    %c1_497 = arith.constant 1 : index
    %c0_498 = arith.constant 0 : index
    %453 = vector.load %arg16[%c1_497, %c0_498] : memref<36x16xf32, #tpu.memory_space<vmem>>, vector<22x16xf32>
    %c1_499 = arith.constant 1 : index
    %c0_500 = arith.constant 0 : index
    %c0_501 = arith.constant 0 : index
    %454 = vector.load %arg6[%c1_499, %c0_500, %c0_501] : memref<9x16x32xf32, #tpu.memory_space<vmem>>, vector<1x16x32xf32>
    %455 = vector.shape_cast %454 : vector<1x16x32xf32> to vector<16x32xf32>
    %cst_502 = arith.constant dense<0.000000e+00> : vector<22x32xf32>
    %456 = tpu.matmul %453, %455, %cst_502 {dimension_numbers = #tpu.dot_dimension_numbers<[1], [0], [0], [1], [0, 0, 1, 1], [], []>} : vector<22x16xf32>, vector<16x32xf32>, vector<22x32xf32> -> vector<22x32xf32>
    %457 = arith.addf %452, %456 : vector<22x32xf32>
    %c2_503 = arith.constant 2 : index
    %c0_504 = arith.constant 0 : index
    %458 = vector.load %arg16[%c2_503, %c0_504] : memref<36x16xf32, #tpu.memory_space<vmem>>, vector<22x16xf32>
    %c2_505 = arith.constant 2 : index
    %c0_506 = arith.constant 0 : index
    %c0_507 = arith.constant 0 : index
    %459 = vector.load %arg6[%c2_505, %c0_506, %c0_507] : memref<9x16x32xf32, #tpu.memory_space<vmem>>, vector<1x16x32xf32>
    %460 = vector.shape_cast %459 : vector<1x16x32xf32> to vector<16x32xf32>
    %cst_508 = arith.constant dense<0.000000e+00> : vector<22x32xf32>
    %461 = tpu.matmul %458, %460, %cst_508 {dimension_numbers = #tpu.dot_dimension_numbers<[1], [0], [0], [1], [0, 0, 1, 1], [], []>} : vector<22x16xf32>, vector<16x32xf32>, vector<22x32xf32> -> vector<22x32xf32>
    %462 = arith.addf %457, %461 : vector<22x32xf32>
    %c6_509 = arith.constant 6 : index
    %c0_510 = arith.constant 0 : index
    %463 = vector.load %arg16[%c6_509, %c0_510] : memref<36x16xf32, #tpu.memory_space<vmem>>, vector<22x16xf32>
    %c3_511 = arith.constant 3 : index
    %c0_512 = arith.constant 0 : index
    %c0_513 = arith.constant 0 : index
    %464 = vector.load %arg6[%c3_511, %c0_512, %c0_513] : memref<9x16x32xf32, #tpu.memory_space<vmem>>, vector<1x16x32xf32>
    %465 = vector.shape_cast %464 : vector<1x16x32xf32> to vector<16x32xf32>
    %cst_514 = arith.constant dense<0.000000e+00> : vector<22x32xf32>
    %466 = tpu.matmul %463, %465, %cst_514 {dimension_numbers = #tpu.dot_dimension_numbers<[1], [0], [0], [1], [0, 0, 1, 1], [], []>} : vector<22x16xf32>, vector<16x32xf32>, vector<22x32xf32> -> vector<22x32xf32>
    %467 = arith.addf %462, %466 : vector<22x32xf32>
    %c7_515 = arith.constant 7 : index
    %c0_516 = arith.constant 0 : index
    %468 = vector.load %arg16[%c7_515, %c0_516] : memref<36x16xf32, #tpu.memory_space<vmem>>, vector<22x16xf32>
    %c4_517 = arith.constant 4 : index
    %c0_518 = arith.constant 0 : index
    %c0_519 = arith.constant 0 : index
    %469 = vector.load %arg6[%c4_517, %c0_518, %c0_519] : memref<9x16x32xf32, #tpu.memory_space<vmem>>, vector<1x16x32xf32>
    %470 = vector.shape_cast %469 : vector<1x16x32xf32> to vector<16x32xf32>
    %cst_520 = arith.constant dense<0.000000e+00> : vector<22x32xf32>
    %471 = tpu.matmul %468, %470, %cst_520 {dimension_numbers = #tpu.dot_dimension_numbers<[1], [0], [0], [1], [0, 0, 1, 1], [], []>} : vector<22x16xf32>, vector<16x32xf32>, vector<22x32xf32> -> vector<22x32xf32>
    %472 = arith.addf %467, %471 : vector<22x32xf32>
    %c8_521 = arith.constant 8 : index
    %c0_522 = arith.constant 0 : index
    %473 = vector.load %arg16[%c8_521, %c0_522] : memref<36x16xf32, #tpu.memory_space<vmem>>, vector<22x16xf32>
    %c5_523 = arith.constant 5 : index
    %c0_524 = arith.constant 0 : index
    %c0_525 = arith.constant 0 : index
    %474 = vector.load %arg6[%c5_523, %c0_524, %c0_525] : memref<9x16x32xf32, #tpu.memory_space<vmem>>, vector<1x16x32xf32>
    %475 = vector.shape_cast %474 : vector<1x16x32xf32> to vector<16x32xf32>
    %cst_526 = arith.constant dense<0.000000e+00> : vector<22x32xf32>
    %476 = tpu.matmul %473, %475, %cst_526 {dimension_numbers = #tpu.dot_dimension_numbers<[1], [0], [0], [1], [0, 0, 1, 1], [], []>} : vector<22x16xf32>, vector<16x32xf32>, vector<22x32xf32> -> vector<22x32xf32>
    %477 = arith.addf %472, %476 : vector<22x32xf32>
    %c12_527 = arith.constant 12 : index
    %c0_528 = arith.constant 0 : index
    %478 = vector.load %arg16[%c12_527, %c0_528] : memref<36x16xf32, #tpu.memory_space<vmem>>, vector<22x16xf32>
    %c6_529 = arith.constant 6 : index
    %c0_530 = arith.constant 0 : index
    %c0_531 = arith.constant 0 : index
    %479 = vector.load %arg6[%c6_529, %c0_530, %c0_531] : memref<9x16x32xf32, #tpu.memory_space<vmem>>, vector<1x16x32xf32>
    %480 = vector.shape_cast %479 : vector<1x16x32xf32> to vector<16x32xf32>
    %cst_532 = arith.constant dense<0.000000e+00> : vector<22x32xf32>
    %481 = tpu.matmul %478, %480, %cst_532 {dimension_numbers = #tpu.dot_dimension_numbers<[1], [0], [0], [1], [0, 0, 1, 1], [], []>} : vector<22x16xf32>, vector<16x32xf32>, vector<22x32xf32> -> vector<22x32xf32>
    %482 = arith.addf %477, %481 : vector<22x32xf32>
    %c13_533 = arith.constant 13 : index
    %c0_534 = arith.constant 0 : index
    %483 = vector.load %arg16[%c13_533, %c0_534] : memref<36x16xf32, #tpu.memory_space<vmem>>, vector<22x16xf32>
    %c7_535 = arith.constant 7 : index
    %c0_536 = arith.constant 0 : index
    %c0_537 = arith.constant 0 : index
    %484 = vector.load %arg6[%c7_535, %c0_536, %c0_537] : memref<9x16x32xf32, #tpu.memory_space<vmem>>, vector<1x16x32xf32>
    %485 = vector.shape_cast %484 : vector<1x16x32xf32> to vector<16x32xf32>
    %cst_538 = arith.constant dense<0.000000e+00> : vector<22x32xf32>
    %486 = tpu.matmul %483, %485, %cst_538 {dimension_numbers = #tpu.dot_dimension_numbers<[1], [0], [0], [1], [0, 0, 1, 1], [], []>} : vector<22x16xf32>, vector<16x32xf32>, vector<22x32xf32> -> vector<22x32xf32>
    %487 = arith.addf %482, %486 : vector<22x32xf32>
    %c14_539 = arith.constant 14 : index
    %c0_540 = arith.constant 0 : index
    %488 = vector.load %arg16[%c14_539, %c0_540] : memref<36x16xf32, #tpu.memory_space<vmem>>, vector<22x16xf32>
    %c8_541 = arith.constant 8 : index
    %c0_542 = arith.constant 0 : index
    %c0_543 = arith.constant 0 : index
    %489 = vector.load %arg6[%c8_541, %c0_542, %c0_543] : memref<9x16x32xf32, #tpu.memory_space<vmem>>, vector<1x16x32xf32>
    %490 = vector.shape_cast %489 : vector<1x16x32xf32> to vector<16x32xf32>
    %cst_544 = arith.constant dense<0.000000e+00> : vector<22x32xf32>
    %491 = tpu.matmul %488, %490, %cst_544 {dimension_numbers = #tpu.dot_dimension_numbers<[1], [0], [0], [1], [0, 0, 1, 1], [], []>} : vector<22x16xf32>, vector<16x32xf32>, vector<22x32xf32> -> vector<22x32xf32>
    %492 = arith.addf %487, %491 : vector<22x32xf32>
    %c0_545 = arith.constant 0 : index
    %c0_546 = arith.constant 0 : index
    %493 = vector.load %arg7[%c0_545, %c0_546] : memref<1x32xf32, #tpu.memory_space<vmem>>, vector<1x32xf32>
    %494 = vector.broadcast %493 : vector<1x32xf32> to vector<22x32xf32>
    %495 = arith.addf %492, %494 : vector<22x32xf32>
    %496 = vector.extract_strided_slice %495 {offsets = [0, 0], sizes = [4, 32], strides = [1, 1]} : vector<22x32xf32> to vector<4x32xf32>
    %cst_547 = arith.constant 0.000000e+00 : f32
    %497 = vector.broadcast %cst_547 : f32 to vector<4x32xf32>
    %498 = arith.maximumf %496, %497 : vector<4x32xf32>
    %c1_548 = arith.constant 1 : index
    %c1_549 = arith.constant 1 : index
    %c0_550 = arith.constant 0 : index
    %499 = vector.load %arg21[%c1_548, %c1_549, %c0_550] : memref<6x6x32xf32, #tpu.memory_space<vmem>>, vector<1x4x32xf32>
    %500 = vector.shape_cast %499 : vector<1x4x32xf32> to vector<4x32xf32>
    %501 = vector.shape_cast %498 : vector<4x32xf32> to vector<1x4x32xf32>
    tpu.vector_store %arg21[%c1_548, %c1_549, %c0_550], %501 {strides = array<i32>} : memref<6x6x32xf32, #tpu.memory_space<vmem>>, vector<1x4x32xf32>,
    %502 = vector.extract_strided_slice %495 {offsets = [6, 0], sizes = [4, 32], strides = [1, 1]} : vector<22x32xf32> to vector<4x32xf32>
    %cst_551 = arith.constant 0.000000e+00 : f32
    %503 = vector.broadcast %cst_551 : f32 to vector<4x32xf32>
    %504 = arith.maximumf %502, %503 : vector<4x32xf32>
    %c2_552 = arith.constant 2 : index
    %c1_553 = arith.constant 1 : index
    %c0_554 = arith.constant 0 : index
    %505 = vector.load %arg21[%c2_552, %c1_553, %c0_554] : memref<6x6x32xf32, #tpu.memory_space<vmem>>, vector<1x4x32xf32>
    %506 = vector.shape_cast %505 : vector<1x4x32xf32> to vector<4x32xf32>
    %507 = vector.shape_cast %504 : vector<4x32xf32> to vector<1x4x32xf32>
    tpu.vector_store %arg21[%c2_552, %c1_553, %c0_554], %507 {strides = array<i32>} : memref<6x6x32xf32, #tpu.memory_space<vmem>>, vector<1x4x32xf32>,
    %508 = vector.extract_strided_slice %495 {offsets = [12, 0], sizes = [4, 32], strides = [1, 1]} : vector<22x32xf32> to vector<4x32xf32>
    %cst_555 = arith.constant 0.000000e+00 : f32
    %509 = vector.broadcast %cst_555 : f32 to vector<4x32xf32>
    %510 = arith.maximumf %508, %509 : vector<4x32xf32>
    %c3_556 = arith.constant 3 : index
    %c1_557 = arith.constant 1 : index
    %c0_558 = arith.constant 0 : index
    %511 = vector.load %arg21[%c3_556, %c1_557, %c0_558] : memref<6x6x32xf32, #tpu.memory_space<vmem>>, vector<1x4x32xf32>
    %512 = vector.shape_cast %511 : vector<1x4x32xf32> to vector<4x32xf32>
    %513 = vector.shape_cast %510 : vector<4x32xf32> to vector<1x4x32xf32>
    tpu.vector_store %arg21[%c3_556, %c1_557, %c0_558], %513 {strides = array<i32>} : memref<6x6x32xf32, #tpu.memory_space<vmem>>, vector<1x4x32xf32>,
    %514 = vector.extract_strided_slice %495 {offsets = [18, 0], sizes = [4, 32], strides = [1, 1]} : vector<22x32xf32> to vector<4x32xf32>
    %cst_559 = arith.constant 0.000000e+00 : f32
    %515 = vector.broadcast %cst_559 : f32 to vector<4x32xf32>
    %516 = arith.maximumf %514, %515 : vector<4x32xf32>
    %c4_560 = arith.constant 4 : index
    %c1_561 = arith.constant 1 : index
    %c0_562 = arith.constant 0 : index
    %517 = vector.load %arg21[%c4_560, %c1_561, %c0_562] : memref<6x6x32xf32, #tpu.memory_space<vmem>>, vector<1x4x32xf32>
    %518 = vector.shape_cast %517 : vector<1x4x32xf32> to vector<4x32xf32>
    %519 = vector.shape_cast %516 : vector<4x32xf32> to vector<1x4x32xf32>
    tpu.vector_store %arg21[%c4_560, %c1_561, %c0_562], %519 {strides = array<i32>} : memref<6x6x32xf32, #tpu.memory_space<vmem>>, vector<1x4x32xf32>,
    %c0_563 = arith.constant 0 : index
    %c0_564 = arith.constant 0 : index
    %c0_565 = arith.constant 0 : index
    %520 = vector.load %arg21[%c0_563, %c0_564, %c0_565] : memref<6x6x32xf32, #tpu.memory_space<vmem>>, vector<6x1x32xf32>
    %c0_566 = arith.constant 0 : index
    %c1_567 = arith.constant 1 : index
    %c0_568 = arith.constant 0 : index
    %521 = vector.load %arg21[%c0_566, %c1_567, %c0_568] : memref<6x6x32xf32, #tpu.memory_space<vmem>>, vector<6x1x32xf32>
    %c0_569 = arith.constant 0 : index
    %c2_570 = arith.constant 2 : index
    %c0_571 = arith.constant 0 : index
    %522 = vector.load %arg21[%c0_569, %c2_570, %c0_571] : memref<6x6x32xf32, #tpu.memory_space<vmem>>, vector<6x1x32xf32>
    %523 = arith.maximumf %520, %521 : vector<6x1x32xf32>
    %524 = arith.maximumf %523, %522 : vector<6x1x32xf32>
    %c0_572 = arith.constant 0 : index
    %c0_573 = arith.constant 0 : index
    %c0_574 = arith.constant 0 : index
    %525 = vector.load %arg25[%c0_572, %c0_573, %c0_574] : memref<6x2x32xf32, #tpu.memory_space<vmem>>, vector<6x1x32xf32>
    tpu.vector_store %arg25[%c0_572, %c0_573, %c0_574], %524 {strides = array<i32>} : memref<6x2x32xf32, #tpu.memory_space<vmem>>, vector<6x1x32xf32>,
    %c0_575 = arith.constant 0 : index
    %c2_576 = arith.constant 2 : index
    %c0_577 = arith.constant 0 : index
    %526 = vector.load %arg21[%c0_575, %c2_576, %c0_577] : memref<6x6x32xf32, #tpu.memory_space<vmem>>, vector<6x1x32xf32>
    %c0_578 = arith.constant 0 : index
    %c3_579 = arith.constant 3 : index
    %c0_580 = arith.constant 0 : index
    %527 = vector.load %arg21[%c0_578, %c3_579, %c0_580] : memref<6x6x32xf32, #tpu.memory_space<vmem>>, vector<6x1x32xf32>
    %c0_581 = arith.constant 0 : index
    %c4_582 = arith.constant 4 : index
    %c0_583 = arith.constant 0 : index
    %528 = vector.load %arg21[%c0_581, %c4_582, %c0_583] : memref<6x6x32xf32, #tpu.memory_space<vmem>>, vector<6x1x32xf32>
    %529 = arith.maximumf %526, %527 : vector<6x1x32xf32>
    %530 = arith.maximumf %529, %528 : vector<6x1x32xf32>
    %c0_584 = arith.constant 0 : index
    %c1_585 = arith.constant 1 : index
    %c0_586 = arith.constant 0 : index
    %531 = vector.load %arg25[%c0_584, %c1_585, %c0_586] : memref<6x2x32xf32, #tpu.memory_space<vmem>>, vector<6x1x32xf32>
    tpu.vector_store %arg25[%c0_584, %c1_585, %c0_586], %530 {strides = array<i32>} : memref<6x2x32xf32, #tpu.memory_space<vmem>>, vector<6x1x32xf32>,
    %c0_587 = arith.constant 0 : index
    %c0_588 = arith.constant 0 : index
    %c0_589 = arith.constant 0 : index
    %532 = vector.load %arg25[%c0_587, %c0_588, %c0_589] : memref<6x2x32xf32, #tpu.memory_space<vmem>>, vector<1x2x32xf32>
    %533 = vector.shape_cast %532 : vector<1x2x32xf32> to vector<2x32xf32>
    %c1_590 = arith.constant 1 : index
    %c0_591 = arith.constant 0 : index
    %c0_592 = arith.constant 0 : index
    %534 = vector.load %arg25[%c1_590, %c0_591, %c0_592] : memref<6x2x32xf32, #tpu.memory_space<vmem>>, vector<1x2x32xf32>
    %535 = vector.shape_cast %534 : vector<1x2x32xf32> to vector<2x32xf32>
    %c2_593 = arith.constant 2 : index
    %c0_594 = arith.constant 0 : index
    %c0_595 = arith.constant 0 : index
    %536 = vector.load %arg25[%c2_593, %c0_594, %c0_595] : memref<6x2x32xf32, #tpu.memory_space<vmem>>, vector<1x2x32xf32>
    %537 = vector.shape_cast %536 : vector<1x2x32xf32> to vector<2x32xf32>
    %538 = arith.maximumf %533, %535 : vector<2x32xf32>
    %539 = arith.maximumf %538, %537 : vector<2x32xf32>
    %c5_596 = arith.constant 5 : index
    %c0_597 = arith.constant 0 : index
    %540 = vector.load %arg17[%c5_596, %c0_597] : memref<16x32xf32, #tpu.memory_space<vmem>>, vector<2x32xf32>
    tpu.vector_store %arg17[%c5_596, %c0_597], %539 {strides = array<i32>} : memref<16x32xf32, #tpu.memory_space<vmem>>, vector<2x32xf32>,
    %c2_598 = arith.constant 2 : index
    %c0_599 = arith.constant 0 : index
    %c0_600 = arith.constant 0 : index
    %541 = vector.load %arg25[%c2_598, %c0_599, %c0_600] : memref<6x2x32xf32, #tpu.memory_space<vmem>>, vector<1x2x32xf32>
    %542 = vector.shape_cast %541 : vector<1x2x32xf32> to vector<2x32xf32>
    %c3_601 = arith.constant 3 : index
    %c0_602 = arith.constant 0 : index
    %c0_603 = arith.constant 0 : index
    %543 = vector.load %arg25[%c3_601, %c0_602, %c0_603] : memref<6x2x32xf32, #tpu.memory_space<vmem>>, vector<1x2x32xf32>
    %544 = vector.shape_cast %543 : vector<1x2x32xf32> to vector<2x32xf32>
    %c4_604 = arith.constant 4 : index
    %c0_605 = arith.constant 0 : index
    %c0_606 = arith.constant 0 : index
    %545 = vector.load %arg25[%c4_604, %c0_605, %c0_606] : memref<6x2x32xf32, #tpu.memory_space<vmem>>, vector<1x2x32xf32>
    %546 = vector.shape_cast %545 : vector<1x2x32xf32> to vector<2x32xf32>
    %547 = arith.maximumf %542, %544 : vector<2x32xf32>
    %548 = arith.maximumf %547, %546 : vector<2x32xf32>
    %c9_607 = arith.constant 9 : index
    %c0_608 = arith.constant 0 : index
    %549 = vector.load %arg17[%c9_607, %c0_608] : memref<16x32xf32, #tpu.memory_space<vmem>>, vector<2x32xf32>
    tpu.vector_store %arg17[%c9_607, %c0_608], %548 {strides = array<i32>} : memref<16x32xf32, #tpu.memory_space<vmem>>, vector<2x32xf32>,
    %cst_609 = arith.constant 0.000000e+00 : f32
    %550 = vector.broadcast %cst_609 : f32 to vector<6x64xf32>
    %c0_610 = arith.constant 0 : index
    %c0_611 = arith.constant 0 : index
    %551 = vector.load %arg17[%c0_610, %c0_611] : memref<16x32xf32, #tpu.memory_space<vmem>>, vector<6x32xf32>
    %c0_612 = arith.constant 0 : index
    %c0_613 = arith.constant 0 : index
    %c0_614 = arith.constant 0 : index
    %552 = vector.load %arg8[%c0_612, %c0_613, %c0_614] : memref<9x32x64xf32, #tpu.memory_space<vmem>>, vector<1x32x64xf32>
    %553 = vector.shape_cast %552 : vector<1x32x64xf32> to vector<32x64xf32>
    %cst_615 = arith.constant dense<0.000000e+00> : vector<6x64xf32>
    %554 = tpu.matmul %551, %553, %cst_615 {dimension_numbers = #tpu.dot_dimension_numbers<[1], [0], [0], [1], [0, 0, 1, 1], [], []>} : vector<6x32xf32>, vector<32x64xf32>, vector<6x64xf32> -> vector<6x64xf32>
    %555 = arith.addf %550, %554 : vector<6x64xf32>
    %c1_616 = arith.constant 1 : index
    %c0_617 = arith.constant 0 : index
    %556 = vector.load %arg17[%c1_616, %c0_617] : memref<16x32xf32, #tpu.memory_space<vmem>>, vector<6x32xf32>
    %c1_618 = arith.constant 1 : index
    %c0_619 = arith.constant 0 : index
    %c0_620 = arith.constant 0 : index
    %557 = vector.load %arg8[%c1_618, %c0_619, %c0_620] : memref<9x32x64xf32, #tpu.memory_space<vmem>>, vector<1x32x64xf32>
    %558 = vector.shape_cast %557 : vector<1x32x64xf32> to vector<32x64xf32>
    %cst_621 = arith.constant dense<0.000000e+00> : vector<6x64xf32>
    %559 = tpu.matmul %556, %558, %cst_621 {dimension_numbers = #tpu.dot_dimension_numbers<[1], [0], [0], [1], [0, 0, 1, 1], [], []>} : vector<6x32xf32>, vector<32x64xf32>, vector<6x64xf32> -> vector<6x64xf32>
    %560 = arith.addf %555, %559 : vector<6x64xf32>
    %c2_622 = arith.constant 2 : index
    %c0_623 = arith.constant 0 : index
    %561 = vector.load %arg17[%c2_622, %c0_623] : memref<16x32xf32, #tpu.memory_space<vmem>>, vector<6x32xf32>
    %c2_624 = arith.constant 2 : index
    %c0_625 = arith.constant 0 : index
    %c0_626 = arith.constant 0 : index
    %562 = vector.load %arg8[%c2_624, %c0_625, %c0_626] : memref<9x32x64xf32, #tpu.memory_space<vmem>>, vector<1x32x64xf32>
    %563 = vector.shape_cast %562 : vector<1x32x64xf32> to vector<32x64xf32>
    %cst_627 = arith.constant dense<0.000000e+00> : vector<6x64xf32>
    %564 = tpu.matmul %561, %563, %cst_627 {dimension_numbers = #tpu.dot_dimension_numbers<[1], [0], [0], [1], [0, 0, 1, 1], [], []>} : vector<6x32xf32>, vector<32x64xf32>, vector<6x64xf32> -> vector<6x64xf32>
    %565 = arith.addf %560, %564 : vector<6x64xf32>
    %c4_628 = arith.constant 4 : index
    %c0_629 = arith.constant 0 : index
    %566 = vector.load %arg17[%c4_628, %c0_629] : memref<16x32xf32, #tpu.memory_space<vmem>>, vector<6x32xf32>
    %c3_630 = arith.constant 3 : index
    %c0_631 = arith.constant 0 : index
    %c0_632 = arith.constant 0 : index
    %567 = vector.load %arg8[%c3_630, %c0_631, %c0_632] : memref<9x32x64xf32, #tpu.memory_space<vmem>>, vector<1x32x64xf32>
    %568 = vector.shape_cast %567 : vector<1x32x64xf32> to vector<32x64xf32>
    %cst_633 = arith.constant dense<0.000000e+00> : vector<6x64xf32>
    %569 = tpu.matmul %566, %568, %cst_633 {dimension_numbers = #tpu.dot_dimension_numbers<[1], [0], [0], [1], [0, 0, 1, 1], [], []>} : vector<6x32xf32>, vector<32x64xf32>, vector<6x64xf32> -> vector<6x64xf32>
    %570 = arith.addf %565, %569 : vector<6x64xf32>
    %c5_634 = arith.constant 5 : index
    %c0_635 = arith.constant 0 : index
    %571 = vector.load %arg17[%c5_634, %c0_635] : memref<16x32xf32, #tpu.memory_space<vmem>>, vector<6x32xf32>
    %c4_636 = arith.constant 4 : index
    %c0_637 = arith.constant 0 : index
    %c0_638 = arith.constant 0 : index
    %572 = vector.load %arg8[%c4_636, %c0_637, %c0_638] : memref<9x32x64xf32, #tpu.memory_space<vmem>>, vector<1x32x64xf32>
    %573 = vector.shape_cast %572 : vector<1x32x64xf32> to vector<32x64xf32>
    %cst_639 = arith.constant dense<0.000000e+00> : vector<6x64xf32>
    %574 = tpu.matmul %571, %573, %cst_639 {dimension_numbers = #tpu.dot_dimension_numbers<[1], [0], [0], [1], [0, 0, 1, 1], [], []>} : vector<6x32xf32>, vector<32x64xf32>, vector<6x64xf32> -> vector<6x64xf32>
    %575 = arith.addf %570, %574 : vector<6x64xf32>
    %c6_640 = arith.constant 6 : index
    %c0_641 = arith.constant 0 : index
    %576 = vector.load %arg17[%c6_640, %c0_641] : memref<16x32xf32, #tpu.memory_space<vmem>>, vector<6x32xf32>
    %c5_642 = arith.constant 5 : index
    %c0_643 = arith.constant 0 : index
    %c0_644 = arith.constant 0 : index
    %577 = vector.load %arg8[%c5_642, %c0_643, %c0_644] : memref<9x32x64xf32, #tpu.memory_space<vmem>>, vector<1x32x64xf32>
    %578 = vector.shape_cast %577 : vector<1x32x64xf32> to vector<32x64xf32>
    %cst_645 = arith.constant dense<0.000000e+00> : vector<6x64xf32>
    %579 = tpu.matmul %576, %578, %cst_645 {dimension_numbers = #tpu.dot_dimension_numbers<[1], [0], [0], [1], [0, 0, 1, 1], [], []>} : vector<6x32xf32>, vector<32x64xf32>, vector<6x64xf32> -> vector<6x64xf32>
    %580 = arith.addf %575, %579 : vector<6x64xf32>
    %c8_646 = arith.constant 8 : index
    %c0_647 = arith.constant 0 : index
    %581 = vector.load %arg17[%c8_646, %c0_647] : memref<16x32xf32, #tpu.memory_space<vmem>>, vector<6x32xf32>
    %c6_648 = arith.constant 6 : index
    %c0_649 = arith.constant 0 : index
    %c0_650 = arith.constant 0 : index
    %582 = vector.load %arg8[%c6_648, %c0_649, %c0_650] : memref<9x32x64xf32, #tpu.memory_space<vmem>>, vector<1x32x64xf32>
    %583 = vector.shape_cast %582 : vector<1x32x64xf32> to vector<32x64xf32>
    %cst_651 = arith.constant dense<0.000000e+00> : vector<6x64xf32>
    %584 = tpu.matmul %581, %583, %cst_651 {dimension_numbers = #tpu.dot_dimension_numbers<[1], [0], [0], [1], [0, 0, 1, 1], [], []>} : vector<6x32xf32>, vector<32x64xf32>, vector<6x64xf32> -> vector<6x64xf32>
    %585 = arith.addf %580, %584 : vector<6x64xf32>
    %c9_652 = arith.constant 9 : index
    %c0_653 = arith.constant 0 : index
    %586 = vector.load %arg17[%c9_652, %c0_653] : memref<16x32xf32, #tpu.memory_space<vmem>>, vector<6x32xf32>
    %c7_654 = arith.constant 7 : index
    %c0_655 = arith.constant 0 : index
    %c0_656 = arith.constant 0 : index
    %587 = vector.load %arg8[%c7_654, %c0_655, %c0_656] : memref<9x32x64xf32, #tpu.memory_space<vmem>>, vector<1x32x64xf32>
    %588 = vector.shape_cast %587 : vector<1x32x64xf32> to vector<32x64xf32>
    %cst_657 = arith.constant dense<0.000000e+00> : vector<6x64xf32>
    %589 = tpu.matmul %586, %588, %cst_657 {dimension_numbers = #tpu.dot_dimension_numbers<[1], [0], [0], [1], [0, 0, 1, 1], [], []>} : vector<6x32xf32>, vector<32x64xf32>, vector<6x64xf32> -> vector<6x64xf32>
    %590 = arith.addf %585, %589 : vector<6x64xf32>
    %c10_658 = arith.constant 10 : index
    %c0_659 = arith.constant 0 : index
    %591 = vector.load %arg17[%c10_658, %c0_659] : memref<16x32xf32, #tpu.memory_space<vmem>>, vector<6x32xf32>
    %c8_660 = arith.constant 8 : index
    %c0_661 = arith.constant 0 : index
    %c0_662 = arith.constant 0 : index
    %592 = vector.load %arg8[%c8_660, %c0_661, %c0_662] : memref<9x32x64xf32, #tpu.memory_space<vmem>>, vector<1x32x64xf32>
    %593 = vector.shape_cast %592 : vector<1x32x64xf32> to vector<32x64xf32>
    %cst_663 = arith.constant dense<0.000000e+00> : vector<6x64xf32>
    %594 = tpu.matmul %591, %593, %cst_663 {dimension_numbers = #tpu.dot_dimension_numbers<[1], [0], [0], [1], [0, 0, 1, 1], [], []>} : vector<6x32xf32>, vector<32x64xf32>, vector<6x64xf32> -> vector<6x64xf32>
    %595 = arith.addf %590, %594 : vector<6x64xf32>
    %c0_664 = arith.constant 0 : index
    %c0_665 = arith.constant 0 : index
    %596 = vector.load %arg9[%c0_664, %c0_665] : memref<1x64xf32, #tpu.memory_space<vmem>>, vector<1x64xf32>
    %597 = vector.broadcast %596 : vector<1x64xf32> to vector<6x64xf32>
    %598 = arith.addf %595, %597 : vector<6x64xf32>
    %599 = vector.extract_strided_slice %598 {offsets = [0, 0], sizes = [2, 64], strides = [1, 1]} : vector<6x64xf32> to vector<2x64xf32>
    %cst_666 = arith.constant 0.000000e+00 : f32
    %600 = vector.broadcast %cst_666 : f32 to vector<2x64xf32>
    %601 = arith.maximumf %599, %600 : vector<2x64xf32>
    %c1_667 = arith.constant 1 : index
    %c1_668 = arith.constant 1 : index
    %c0_669 = arith.constant 0 : index
    %602 = vector.load %arg22[%c1_667, %c1_668, %c0_669] : memref<4x4x64xf32, #tpu.memory_space<vmem>>, vector<1x2x64xf32>
    %603 = vector.shape_cast %602 : vector<1x2x64xf32> to vector<2x64xf32>
    %604 = vector.shape_cast %601 : vector<2x64xf32> to vector<1x2x64xf32>
    tpu.vector_store %arg22[%c1_667, %c1_668, %c0_669], %604 {strides = array<i32>} : memref<4x4x64xf32, #tpu.memory_space<vmem>>, vector<1x2x64xf32>,
    %605 = vector.extract_strided_slice %598 {offsets = [4, 0], sizes = [2, 64], strides = [1, 1]} : vector<6x64xf32> to vector<2x64xf32>
    %cst_670 = arith.constant 0.000000e+00 : f32
    %606 = vector.broadcast %cst_670 : f32 to vector<2x64xf32>
    %607 = arith.maximumf %605, %606 : vector<2x64xf32>
    %c2_671 = arith.constant 2 : index
    %c1_672 = arith.constant 1 : index
    %c0_673 = arith.constant 0 : index
    %608 = vector.load %arg22[%c2_671, %c1_672, %c0_673] : memref<4x4x64xf32, #tpu.memory_space<vmem>>, vector<1x2x64xf32>
    %609 = vector.shape_cast %608 : vector<1x2x64xf32> to vector<2x64xf32>
    %610 = vector.shape_cast %607 : vector<2x64xf32> to vector<1x2x64xf32>
    tpu.vector_store %arg22[%c2_671, %c1_672, %c0_673], %610 {strides = array<i32>} : memref<4x4x64xf32, #tpu.memory_space<vmem>>, vector<1x2x64xf32>,
    %c0_674 = arith.constant 0 : index
    %c0_675 = arith.constant 0 : index
    %c0_676 = arith.constant 0 : index
    %611 = vector.load %arg22[%c0_674, %c0_675, %c0_676] : memref<4x4x64xf32, #tpu.memory_space<vmem>>, vector<4x1x64xf32>
    %c0_677 = arith.constant 0 : index
    %c1_678 = arith.constant 1 : index
    %c0_679 = arith.constant 0 : index
    %612 = vector.load %arg22[%c0_677, %c1_678, %c0_679] : memref<4x4x64xf32, #tpu.memory_space<vmem>>, vector<4x1x64xf32>
    %c0_680 = arith.constant 0 : index
    %c2_681 = arith.constant 2 : index
    %c0_682 = arith.constant 0 : index
    %613 = vector.load %arg22[%c0_680, %c2_681, %c0_682] : memref<4x4x64xf32, #tpu.memory_space<vmem>>, vector<4x1x64xf32>
    %614 = arith.maximumf %611, %612 : vector<4x1x64xf32>
    %615 = arith.maximumf %614, %613 : vector<4x1x64xf32>
    %c0_683 = arith.constant 0 : index
    %c0_684 = arith.constant 0 : index
    %c0_685 = arith.constant 0 : index
    %616 = vector.load %arg26[%c0_683, %c0_684, %c0_685] : memref<4x1x64xf32, #tpu.memory_space<vmem>>, vector<4x1x64xf32>
    tpu.vector_store %arg26[%c0_683, %c0_684, %c0_685], %615 {strides = array<i32>} : memref<4x1x64xf32, #tpu.memory_space<vmem>>, vector<4x1x64xf32>,
    %c0_686 = arith.constant 0 : index
    %c0_687 = arith.constant 0 : index
    %c0_688 = arith.constant 0 : index
    %617 = vector.load %arg26[%c0_686, %c0_687, %c0_688] : memref<4x1x64xf32, #tpu.memory_space<vmem>>, vector<1x1x64xf32>
    %618 = vector.shape_cast %617 : vector<1x1x64xf32> to vector<1x64xf32>
    %c1_689 = arith.constant 1 : index
    %c0_690 = arith.constant 0 : index
    %c0_691 = arith.constant 0 : index
    %619 = vector.load %arg26[%c1_689, %c0_690, %c0_691] : memref<4x1x64xf32, #tpu.memory_space<vmem>>, vector<1x1x64xf32>
    %620 = vector.shape_cast %619 : vector<1x1x64xf32> to vector<1x64xf32>
    %c2_692 = arith.constant 2 : index
    %c0_693 = arith.constant 0 : index
    %c0_694 = arith.constant 0 : index
    %621 = vector.load %arg26[%c2_692, %c0_693, %c0_694] : memref<4x1x64xf32, #tpu.memory_space<vmem>>, vector<1x1x64xf32>
    %622 = vector.shape_cast %621 : vector<1x1x64xf32> to vector<1x64xf32>
    %623 = arith.maximumf %618, %620 : vector<1x64xf32>
    %624 = arith.maximumf %623, %622 : vector<1x64xf32>
    %c4_695 = arith.constant 4 : index
    %c0_696 = arith.constant 0 : index
    %625 = vector.load %arg18[%c4_695, %c0_696] : memref<9x64xf32, #tpu.memory_space<vmem>>, vector<1x64xf32>
    tpu.vector_store %arg18[%c4_695, %c0_696], %624 {strides = array<i32>} : memref<9x64xf32, #tpu.memory_space<vmem>>, vector<1x64xf32>,
    %cst_697 = arith.constant 0.000000e+00 : f32
    %626 = vector.broadcast %cst_697 : f32 to vector<1x128xf32>
    %c4_698 = arith.constant 4 : index
    %c0_699 = arith.constant 0 : index
    %627 = vector.load %arg18[%c4_698, %c0_699] : memref<9x64xf32, #tpu.memory_space<vmem>>, vector<1x64xf32>
    %c4_700 = arith.constant 4 : index
    %c0_701 = arith.constant 0 : index
    %c0_702 = arith.constant 0 : index
    %628 = vector.load %arg10[%c4_700, %c0_701, %c0_702] : memref<9x64x128xf32, #tpu.memory_space<vmem>>, vector<1x64x128xf32>
    %629 = vector.shape_cast %628 : vector<1x64x128xf32> to vector<64x128xf32>
    %cst_703 = arith.constant dense<0.000000e+00> : vector<1x128xf32>
    %630 = tpu.matmul %627, %629, %cst_703 {dimension_numbers = #tpu.dot_dimension_numbers<[1], [0], [0], [1], [0, 0, 1, 1], [], []>} : vector<1x64xf32>, vector<64x128xf32>, vector<1x128xf32> -> vector<1x128xf32>
    %631 = arith.addf %626, %630 : vector<1x128xf32>
    %c0_704 = arith.constant 0 : index
    %c0_705 = arith.constant 0 : index
    %632 = vector.load %arg11[%c0_704, %c0_705] : memref<1x128xf32, #tpu.memory_space<vmem>>, vector<1x128xf32>
    %633 = arith.addf %631, %632 : vector<1x128xf32>
    %cst_706 = arith.constant 0.000000e+00 : f32
    %634 = vector.broadcast %cst_706 : f32 to vector<1x128xf32>
    %cst_707 = arith.constant dense<0.000000e+00> : vector<128xf32>
    %635 = vector.multi_reduction <add>, %633, %cst_707 [0] : vector<1x128xf32> to vector<128xf32>
    %636 = vector.shape_cast %635 : vector<128xf32> to vector<1x128xf32>
    %637 = arith.addf %634, %636 : vector<1x128xf32>
    %cst_708 = arith.constant 1.000000e+00 : f32
    %638 = vector.broadcast %cst_708 : f32 to vector<1x128xf32>
    %639 = arith.mulf %637, %638 : vector<1x128xf32>
    %cst_709 = arith.constant 0.000000e+00 : f32
    %640 = vector.broadcast %cst_709 : f32 to vector<1x128xf32>
    %641 = arith.maximumf %639, %640 : vector<1x128xf32>
    %c0_710 = arith.constant 0 : index
    %c0_711 = arith.constant 0 : index
    %642 = vector.load %arg12[%c0_710, %c0_711] : memref<128x10xf32, #tpu.memory_space<vmem>>, vector<128x10xf32>
    %cst_712 = arith.constant dense<0.000000e+00> : vector<1x10xf32>
    %643 = tpu.matmul %641, %642, %cst_712 {dimension_numbers = #tpu.dot_dimension_numbers<[1], [0], [0], [1], [0, 0, 1, 1], [], []>} : vector<1x128xf32>, vector<128x10xf32>, vector<1x10xf32> -> vector<1x10xf32>
    %c0_713 = arith.constant 0 : index
    %c0_714 = arith.constant 0 : index
    %644 = vector.load %arg13[%c0_713, %c0_714] : memref<1x10xf32, #tpu.memory_space<vmem>>, vector<1x10xf32>
    %645 = arith.addf %643, %644 : vector<1x10xf32>
    %c0_715 = arith.constant 0 : index
    %c0_716 = arith.constant 0 : index
    %c0_717 = arith.constant 0 : index
    %646 = vector.load %arg14[%c0_715, %c0_716, %c0_717] : memref<1x1x10xf32, #tpu.memory_space<vmem>>, vector<1x1x10xf32>
    %647 = vector.shape_cast %646 : vector<1x1x10xf32> to vector<1x10xf32>
    %648 = vector.shape_cast %645 : vector<1x10xf32> to vector<1x1x10xf32>
    tpu.vector_store %arg14[%c0_715, %c0_716, %c0_717], %648 {strides = array<i32>} : memref<1x1x10xf32, #tpu.memory_space<vmem>>, vector<1x1x10xf32>,
    return
  }
  func.func @transform_0(%arg0: i32) -> (i32, i32, i32) {
    %c0_i32 = arith.constant 0 : i32
    %c0_i32_0 = arith.constant 0 : i32
    %c0_i32_1 = arith.constant 0 : i32
    return %arg0, %c0_i32, %c0_i32_0 : i32, i32, i32
  }
  func.func @transform_1(%arg0: i32) -> (i32, i32, i32) {
    %c0_i32 = arith.constant 0 : i32
    %c0_i32_0 = arith.constant 0 : i32
    %c0_i32_1 = arith.constant 0 : i32
    %c0_i32_2 = arith.constant 0 : i32
    return %c0_i32, %c0_i32_0, %c0_i32_1 : i32, i32, i32
  }
  func.func @transform_2(%arg0: i32) -> (i32, i32) {
    %c0_i32 = arith.constant 0 : i32
    %c0_i32_0 = arith.constant 0 : i32
    %c0_i32_1 = arith.constant 0 : i32
    return %c0_i32, %c0_i32_0 : i32, i32
  }
  func.func @transform_3(%arg0: i32) -> (i32, i32, i32) {
    %c0_i32 = arith.constant 0 : i32
    %c0_i32_0 = arith.constant 0 : i32
    %c0_i32_1 = arith.constant 0 : i32
    %c0_i32_2 = arith.constant 0 : i32
    return %c0_i32, %c0_i32_0, %c0_i32_1 : i32, i32, i32
  }
  func.func @transform_4(%arg0: i32) -> (i32, i32) {
    %c0_i32 = arith.constant 0 : i32
    %c0_i32_0 = arith.constant 0 : i32
    %c0_i32_1 = arith.constant 0 : i32
    return %c0_i32, %c0_i32_0 : i32, i32
  }
  func.func @transform_5(%arg0: i32) -> (i32, i32, i32) {
    %c0_i32 = arith.constant 0 : i32
    %c0_i32_0 = arith.constant 0 : i32
    %c0_i32_1 = arith.constant 0 : i32
    %c0_i32_2 = arith.constant 0 : i32
    return %c0_i32, %c0_i32_0, %c0_i32_1 : i32, i32, i32
  }
  func.func @transform_6(%arg0: i32) -> (i32, i32) {
    %c0_i32 = arith.constant 0 : i32
    %c0_i32_0 = arith.constant 0 : i32
    %c0_i32_1 = arith.constant 0 : i32
    return %c0_i32, %c0_i32_0 : i32, i32
  }
  func.func @transform_7(%arg0: i32) -> (i32, i32, i32) {
    %c0_i32 = arith.constant 0 : i32
    %c0_i32_0 = arith.constant 0 : i32
    %c0_i32_1 = arith.constant 0 : i32
    %c0_i32_2 = arith.constant 0 : i32
    return %c0_i32, %c0_i32_0, %c0_i32_1 : i32, i32, i32
  }
  func.func @transform_8(%arg0: i32) -> (i32, i32) {
    %c0_i32 = arith.constant 0 : i32
    %c0_i32_0 = arith.constant 0 : i32
    %c0_i32_1 = arith.constant 0 : i32
    return %c0_i32, %c0_i32_0 : i32, i32
  }
  func.func @transform_9(%arg0: i32) -> (i32, i32, i32) {
    %c0_i32 = arith.constant 0 : i32
    %c0_i32_0 = arith.constant 0 : i32
    %c0_i32_1 = arith.constant 0 : i32
    %c0_i32_2 = arith.constant 0 : i32
    return %c0_i32, %c0_i32_0, %c0_i32_1 : i32, i32, i32
  }
  func.func @transform_10(%arg0: i32) -> (i32, i32) {
    %c0_i32 = arith.constant 0 : i32
    %c0_i32_0 = arith.constant 0 : i32
    %c0_i32_1 = arith.constant 0 : i32
    return %c0_i32, %c0_i32_0 : i32, i32
  }
  func.func @transform_11(%arg0: i32) -> (i32, i32) {
    %c0_i32 = arith.constant 0 : i32
    %c0_i32_0 = arith.constant 0 : i32
    %c0_i32_1 = arith.constant 0 : i32
    return %c0_i32, %c0_i32_0 : i32, i32
  }
  func.func @transform_12(%arg0: i32) -> (i32, i32) {
    %c0_i32 = arith.constant 0 : i32
    %c0_i32_0 = arith.constant 0 : i32
    %c0_i32_1 = arith.constant 0 : i32
    return %c0_i32, %c0_i32_0 : i32, i32
  }
  func.func @transform_13(%arg0: i32) -> (i32, i32, i32) {
    %c0_i32 = arith.constant 0 : i32
    %c0_i32_0 = arith.constant 0 : i32
    %c0_i32_1 = arith.constant 0 : i32
    return %arg0, %c0_i32, %c0_i32_0 : i32, i32, i32
  }
}

</mosaic_0001>

<llo_original>
// kernel: cnn_forward.1
$region0: #{cnn_forward.1}
  #allocation0 [shape = 'u32[]', space=smem, size = 0x4, offset = 0x4, fixed_abs, tag = 'smem constant byte address 0x4 - core index']
  #allocation1 [shape = 'u32[72,128]{1,0:T(1,128)}', space=vmem, size = 0x9000, scoped, tag = 'internal scratch']
  #allocation2 [shape = 'f32[100,8]{1,0:T(8,128)}', space=vmem, size = 0xd000, scoped, tag = 'scratch operand']
  #allocation3 [shape = 'f32[36,16]{1,0:T(8,128)}', space=vmem, size = 0x5000, scoped, tag = 'scratch operand']
  #allocation4 [shape = 'f32[16,32]{1,0:T(8,128)}', space=vmem, size = 0x2000, scoped, tag = 'scratch operand']
  #allocation5 [shape = 'f32[9,64]{1,0:T(8,128)}', space=vmem, size = 0x2000, scoped, tag = 'scratch operand']
  #allocation6 [shape = 'f32[18,18,8]{2,1,0:T(8,128)}', space=vmem, size = 0x36000, scoped, tag = 'scratch operand']
  #allocation7 [shape = 'f32[10,10,16]{2,1,0:T(8,128)}', space=vmem, size = 0x14000, scoped, tag = 'scratch operand']
  #allocation8 [shape = 'f32[6,6,32]{2,1,0:T(8,128)}', space=vmem, size = 0x6000, scoped, tag = 'scratch operand']
  #allocation9 [shape = 'f32[4,4,64]{2,1,0:T(4,128)}', space=vmem, size = 0x2000, scoped, tag = 'scratch operand']
  #allocation10 [shape = 'f32[18,8,8]{2,1,0:T(8,128)}', space=vmem, size = 0x12000, scoped, tag = 'scratch operand']
  #allocation11 [shape = 'f32[10,4,16]{2,1,0:T(4,128)}', space=vmem, size = 0x5000, scoped, tag = 'scratch operand']
  #allocation12 [shape = 'f32[6,2,32]{2,1,0:T(2,128)}', space=vmem, size = 0x1800, scoped, tag = 'scratch operand']
  #allocation13 [shape = 'f32[4,1,64]{2,1,0:T(1,128)}', space=vmem, size = 0x800, scoped, tag = 'scratch operand']
  %s0 = inlined_call_operand.vmem [shape: f32[2,324,3], index: 0, kind: input, shape index: {}]
  %s1 = inlined_call_operand.vmem [shape: f32[9,3,8], index: 1, kind: input, shape index: {}]
  %s2 = inlined_call_operand.vmem [shape: f32[1,8], index: 2, kind: input, shape index: {}]
  %s3 = inlined_call_operand.vmem [shape: f32[9,8,16], index: 3, kind: input, shape index: {}]
  %s4 = inlined_call_operand.vmem [shape: f32[1,16], index: 4, kind: input, shape index: {}]
  %s5 = inlined_call_operand.vmem [shape: f32[9,16,32], index: 5, kind: input, shape index: {}]
  %s6 = inlined_call_operand.vmem [shape: f32[1,32], index: 6, kind: input, shape index: {}]
  %s7 = inlined_call_operand.vmem [shape: f32[9,32,64], index: 7, kind: input, shape index: {}]
  %s8 = inlined_call_operand.vmem [shape: f32[1,64], index: 8, kind: input, shape index: {}]
  %s9 = inlined_call_operand.vmem [shape: f32[9,64,128], index: 9, kind: input, shape index: {}]
  %s10 = inlined_call_operand.vmem [shape: f32[1,128], index: 10, kind: input, shape index: {}]
  %s11 = inlined_call_operand.vmem [shape: f32[128,10], index: 11, kind: input, shape index: {}]
  %s12 = inlined_call_operand.vmem [shape: f32[1,10], index: 12, kind: input, shape index: {}]
  %s13 = inlined_call_operand.hbm [shape: f32[2,1,10], index: 13, kind: output, shape index: {}]
  %s14 = sld [smem:[#allocation0]]
  $region85: #{cnn_forward.1} parent=0
    _
  %s16 = ssub.s32 1, %s14
  %s17 = scalar_select 0, %s16, %s14
  $region1: #{cnn_forward.1} parent=0
    #allocation14 [shape = 'u8[1024]{0}', space=vmem, size = 0x400, scoped, tag = 'output window, operand 0']
    #allocation15 [shape = 's32[2]{0}', space=sflag, size = 0x8, scoped, tag = 'scoped memory for cnn_forward.1']
    %18 = vsyncpa [#allocation15], 0
    %s19 = scalar_lea.sflag [#allocation15], 1
    %20 = vsyncpa %s19, 0
    loop: start=0, step=1, limit=4
    $region2: #{cnn_forward.1} parent=1 // loop_pre_header
      _
    $region3: #{cnn_forward.1} parent=1 // loop_header
      %s22 = sphi 0, %s26
      %p23 = scmp.ge.s32.totalorder %s22, 4
      %s32 = sphi 0, %s34
      %s35 = sphi 0, %s32
      %s36 = sphi 0, %s35
      %s52 = sphi 0, %s36
      %s56 = sphi 0, %s56
      %s58 = sphi 0, %s56
      %s59 = sphi 0, %s58
      %s73 = sphi 0, %s59
      %s77 = sphi 0, %s77
      %s79 = sphi 0, %s77
      %s80 = sphi 0, %s79
      %s94 = sphi 0, %s80
      %s98 = sphi 0, %s98
      %s100 = sphi 0, %s98
      %s101 = sphi 0, %s100
      %s115 = sphi 0, %s101
      %s119 = sphi 0, %s119
      %s121 = sphi 0, %s119
      %s122 = sphi 0, %s121
      %s136 = sphi 0, %s122
      %s140 = sphi 0, %s140
      %s142 = sphi 0, %s140
      %s143 = sphi 0, %s142
      %s157 = sphi 0, %s143
      %s161 = sphi 0, %s161
      %s163 = sphi 0, %s161
      %s164 = sphi 0, %s163
      %s178 = sphi 0, %s164
      %s182 = sphi 0, %s182
      %s184 = sphi 0, %s182
      %s185 = sphi 0, %s184
      %s199 = sphi 0, %s185
      %s203 = sphi 0, %s203
      %s205 = sphi 0, %s203
      %s206 = sphi 0, %s205
      %s220 = sphi 0, %s206
      %s224 = sphi 0, %s224
      %s226 = sphi 0, %s224
      %s227 = sphi 0, %s226
      %s241 = sphi 0, %s227
      %s245 = sphi 0, %s245
      %s247 = sphi 0, %s245
      %s248 = sphi 0, %s247
      %s262 = sphi 0, %s248
      %s266 = sphi 0, %s266
      %s268 = sphi 0, %s266
      %s269 = sphi 0, %s268
      %s283 = sphi 0, %s269
      %s287 = sphi 0, %s287
      %s289 = sphi 0, %s287
      %s290 = sphi 0, %s289
      %s304 = sphi 0, %s290
      %s310 = sphi 0, %s312
      %s313 = sphi 0, %s310
      %s314 = sphi 0, %s313
      %s330 = sphi 0, %s314
    $region4: #{cnn_forward.1} parent=1 // loop_header_branch
      %25 = sbr.rel (%p23) target = $region8
    $region5: #{cnn_forward.1} parent=1 // loop_body
      %s27 = ssub.s32 %s22, 1
      %s28 = ssub.s32 %s22, 2
      %s29 = sadd.s32 %s22, 1
      %s30 = ssub.s32 %s22, %s29
      %p31 = scmp.eq.s32.totalorder %s30, 0
      %s33 = sadd.s32 %s32, 1
      %s34 = scalar_select %p31, %s32, %s33
      %p37 = pneg %p31
      %p38 = scmp.eq.s32.totalorder %s22, 1
      %p39 = por %p37, %p38
      %p40 = scmp.ne.s32.totalorder %s32, %s35
      %p41 = scmp.eq.s32.totalorder %s22, 0
      %p42 = por %p40, %p41
      %p43 = scmp.ne.s32.totalorder %s32, %s35
      %p44 = scmp.eq.s32.totalorder %s27, 1
      %p45 = por %p43, %p44
      %p46 = scmp.ne.s32.totalorder %s35, %s36
      %p47 = scmp.eq.s32.totalorder %s27, 0
      %p48 = por %p46, %p47
      %p49 = scmp.ne.s32.totalorder %s35, %s36
      %p50 = scmp.eq.s32.totalorder %s28, 1
      %p51 = por %p49, %p50
      %p53 = scmp.ne.s32.totalorder %s36, %s52
      %p54 = scmp.eq.s32.totalorder %s28, 0
      %p55 = por %p53, %p54
      %s57 = sadd.s32 %s56, 1
      %p60 = scmp.eq.s32.totalorder %s22, 1
      %p61 = scmp.ne.s32.totalorder %s56, %s58
      %p62 = scmp.eq.s32.totalorder %s22, 0
      %p63 = por %p61, %p62
      %p64 = scmp.ne.s32.totalorder %s56, %s58
      %p65 = scmp.eq.s32.totalorder %s27, 1
      %p66 = por %p64, %p65
      %p67 = scmp.ne.s32.totalorder %s58, %s59
      %p68 = scmp.eq.s32.totalorder %s27, 0
      %p69 = por %p67, %p68
      %p70 = scmp.ne.s32.totalorder %s58, %s59
      %p71 = scmp.eq.s32.totalorder %s28, 1
      %p72 = por %p70, %p71
      %p74 = scmp.ne.s32.totalorder %s59, %s73
      %p75 = scmp.eq.s32.totalorder %s28, 0
      %p76 = por %p74, %p75
      %s78 = sadd.s32 %s77, 1
      %p81 = scmp.eq.s32.totalorder %s22, 1
      %p82 = scmp.ne.s32.totalorder %s77, %s79
      %p83 = scmp.eq.s32.totalorder %s22, 0
      %p84 = por %p82, %p83
      %p85 = scmp.ne.s32.totalorder %s77, %s79
      %p86 = scmp.eq.s32.totalorder %s27, 1
      %p87 = por %p85, %p86
      %p88 = scmp.ne.s32.totalorder %s79, %s80
      %p89 = scmp.eq.s32.totalorder %s27, 0
      %p90 = por %p88, %p89
      %p91 = scmp.ne.s32.totalorder %s79, %s80
      %p92 = scmp.eq.s32.totalorder %s28, 1
      %p93 = por %p91, %p92
      %p95 = scmp.ne.s32.totalorder %s80, %s94
      %p96 = scmp.eq.s32.totalorder %s28, 0
      %p97 = por %p95, %p96
      %s99 = sadd.s32 %s98, 1
      %p102 = scmp.eq.s32.totalorder %s22, 1
      %p103 = scmp.ne.s32.totalorder %s98, %s100
      %p104 = scmp.eq.s32.totalorder %s22, 0
      %p105 = por %p103, %p104
      %p106 = scmp.ne.s32.totalorder %s98, %s100
      %p107 = scmp.eq.s32.totalorder %s27, 1
      %p108 = por %p106, %p107
      %p109 = scmp.ne.s32.totalorder %s100, %s101
      %p110 = scmp.eq.s32.totalorder %s27, 0
      %p111 = por %p109, %p110
      %p112 = scmp.ne.s32.totalorder %s100, %s101
      %p113 = scmp.eq.s32.totalorder %s28, 1
      %p114 = por %p112, %p113
      %p116 = scmp.ne.s32.totalorder %s101, %s115
      %p117 = scmp.eq.s32.totalorder %s28, 0
      %p118 = por %p116, %p117
      %s120 = sadd.s32 %s119, 1
      %p123 = scmp.eq.s32.totalorder %s22, 1
      %p124 = scmp.ne.s32.totalorder %s119, %s121
      %p125 = scmp.eq.s32.totalorder %s22, 0
      %p126 = por %p124, %p125
      %p127 = scmp.ne.s32.totalorder %s119, %s121
      %p128 = scmp.eq.s32.totalorder %s27, 1
      %p129 = por %p127, %p128
      %p130 = scmp.ne.s32.totalorder %s121, %s122
      %p131 = scmp.eq.s32.totalorder %s27, 0
      %p132 = por %p130, %p131
      %p133 = scmp.ne.s32.totalorder %s121, %s122
      %p134 = scmp.eq.s32.totalorder %s28, 1
      %p135 = por %p133, %p134
      %p137 = scmp.ne.s32.totalorder %s122, %s136
      %p138 = scmp.eq.s32.totalorder %s28, 0
      %p139 = por %p137, %p138
      %s141 = sadd.s32 %s140, 1
      %p144 = scmp.eq.s32.totalorder %s22, 1
      %p145 = scmp.ne.s32.totalorder %s140, %s142
      %p146 = scmp.eq.s32.totalorder %s22, 0
      %p147 = por %p145, %p146
      %p148 = scmp.ne.s32.totalorder %s140, %s142
      %p149 = scmp.eq.s32.totalorder %s27, 1
      %p150 = por %p148, %p149
      %p151 = scmp.ne.s32.totalorder %s142, %s143
      %p152 = scmp.eq.s32.totalorder %s27, 0
      %p153 = por %p151, %p152
      %p154 = scmp.ne.s32.totalorder %s142, %s143
      %p155 = scmp.eq.s32.totalorder %s28, 1
      %p156 = por %p154, %p155
      %p158 = scmp.ne.s32.totalorder %s143, %s157
      %p159 = scmp.eq.s32.totalorder %s28, 0
      %p160 = por %p158, %p159
      %s162 = sadd.s32 %s161, 1
      %p165 = scmp.eq.s32.totalorder %s22, 1
      %p166 = scmp.ne.s32.totalorder %s161, %s163
      %p167 = scmp.eq.s32.totalorder %s22, 0
      %p168 = por %p166, %p167
      %p169 = scmp.ne.s32.totalorder %s161, %s163
      %p170 = scmp.eq.s32.totalorder %s27, 1
      %p171 = por %p169, %p170
      %p172 = scmp.ne.s32.totalorder %s163, %s164
      %p173 = scmp.eq.s32.totalorder %s27, 0
      %p174 = por %p172, %p173
      %p175 = scmp.ne.s32.totalorder %s163, %s164
      %p176 = scmp.eq.s32.totalorder %s28, 1
      %p177 = por %p175, %p176
      %p179 = scmp.ne.s32.totalorder %s164, %s178
      %p180 = scmp.eq.s32.totalorder %s28, 0
      %p181 = por %p179, %p180
      %s183 = sadd.s32 %s182, 1
      %p186 = scmp.eq.s32.totalorder %s22, 1
      %p187 = scmp.ne.s32.totalorder %s182, %s184
      %p188 = scmp.eq.s32.totalorder %s22, 0
      %p189 = por %p187, %p188
      %p190 = scmp.ne.s32.totalorder %s182, %s184
      %p191 = scmp.eq.s32.totalorder %s27, 1
      %p192 = por %p190, %p191
      %p193 = scmp.ne.s32.totalorder %s184, %s185
      %p194 = scmp.eq.s32.totalorder %s27, 0
      %p195 = por %p193, %p194
      %p196 = scmp.ne.s32.totalorder %s184, %s185
      %p197 = scmp.eq.s32.totalorder %s28, 1
      %p198 = por %p196, %p197
      %p200 = scmp.ne.s32.totalorder %s185, %s199
      %p201 = scmp.eq.s32.totalorder %s28, 0
      %p202 = por %p200, %p201
      %s204 = sadd.s32 %s203, 1
      %p207 = scmp.eq.s32.totalorder %s22, 1
      %p208 = scmp.ne.s32.totalorder %s203, %s205
      %p209 = scmp.eq.s32.totalorder %s22, 0
      %p210 = por %p208, %p209
      %p211 = scmp.ne.s32.totalorder %s203, %s205
      %p212 = scmp.eq.s32.totalorder %s27, 1
      %p213 = por %p211, %p212
      %p214 = scmp.ne.s32.totalorder %s205, %s206
      %p215 = scmp.eq.s32.totalorder %s27, 0
      %p216 = por %p214, %p215
      %p217 = scmp.ne.s32.totalorder %s205, %s206
      %p218 = scmp.eq.s32.totalorder %s28, 1
      %p219 = por %p217, %p218
      %p221 = scmp.ne.s32.totalorder %s206, %s220
      %p222 = scmp.eq.s32.totalorder %s28, 0
      %p223 = por %p221, %p222
      %s225 = sadd.s32 %s224, 1
      %p228 = scmp.eq.s32.totalorder %s22, 1
      %p229 = scmp.ne.s32.totalorder %s224, %s226
      %p230 = scmp.eq.s32.totalorder %s22, 0
      %p231 = por %p229, %p230
      %p232 = scmp.ne.s32.totalorder %s224, %s226
      %p233 = scmp.eq.s32.totalorder %s27, 1
      %p234 = por %p232, %p233
      %p235 = scmp.ne.s32.totalorder %s226, %s227
      %p236 = scmp.eq.s32.totalorder %s27, 0
      %p237 = por %p235, %p236
      %p238 = scmp.ne.s32.totalorder %s226, %s227
      %p239 = scmp.eq.s32.totalorder %s28, 1
      %p240 = por %p238, %p239
      %p242 = scmp.ne.s32.totalorder %s227, %s241
      %p243 = scmp.eq.s32.totalorder %s28, 0
      %p244 = por %p242, %p243
      %s246 = sadd.s32 %s245, 1
      %p249 = scmp.eq.s32.totalorder %s22, 1
      %p250 = scmp.ne.s32.totalorder %s245, %s247
      %p251 = scmp.eq.s32.totalorder %s22, 0
      %p252 = por %p250, %p251
      %p253 = scmp.ne.s32.totalorder %s245, %s247
      %p254 = scmp.eq.s32.totalorder %s27, 1
      %p255 = por %p253, %p254
      %p256 = scmp.ne.s32.totalorder %s247, %s248
      %p257 = scmp.eq.s32.totalorder %s27, 0
      %p258 = por %p256, %p257
      %p259 = scmp.ne.s32.totalorder %s247, %s248
      %p260 = scmp.eq.s32.totalorder %s28, 1
      %p261 = por %p259, %p260
      %p263 = scmp.ne.s32.totalorder %s248, %s262
      %p264 = scmp.eq.s32.totalorder %s28, 0
      %p265 = por %p263, %p264
      %s267 = sadd.s32 %s266, 1
      %p270 = scmp.eq.s32.totalorder %s22, 1
      %p271 = scmp.ne.s32.totalorder %s266, %s268
      %p272 = scmp.eq.s32.totalorder %s22, 0
      %p273 = por %p271, %p272
      %p274 = scmp.ne.s32.totalorder %s266, %s268
      %p275 = scmp.eq.s32.totalorder %s27, 1
      %p276 = por %p274, %p275
      %p277 = scmp.ne.s32.totalorder %s268, %s269
      %p278 = scmp.eq.s32.totalorder %s27, 0
      %p279 = por %p277, %p278
      %p280 = scmp.ne.s32.totalorder %s268, %s269
      %p281 = scmp.eq.s32.totalorder %s28, 1
      %p282 = por %p280, %p281
      %p284 = scmp.ne.s32.totalorder %s269, %s283
      %p285 = scmp.eq.s32.totalorder %s28, 0
      %p286 = por %p284, %p285
      %s288 = sadd.s32 %s287, 1
      %p291 = scmp.eq.s32.totalorder %s22, 1
      %p292 = scmp.ne.s32.totalorder %s287, %s289
      %p293 = scmp.eq.s32.totalorder %s22, 0
      %p294 = por %p292, %p293
      %p295 = scmp.ne.s32.totalorder %s287, %s289
      %p296 = scmp.eq.s32.totalorder %s27, 1
      %p297 = por %p295, %p296
      %p298 = scmp.ne.s32.totalorder %s289, %s290
      %p299 = scmp.eq.s32.totalorder %s27, 0
      %p300 = por %p298, %p299
      %p301 = scmp.ne.s32.totalorder %s289, %s290
      %p302 = scmp.eq.s32.totalorder %s28, 1
      %p303 = por %p301, %p302
      %p305 = scmp.ne.s32.totalorder %s290, %s304
      %p306 = scmp.eq.s32.totalorder %s28, 0
      %p307 = por %p305, %p306
      %s308 = ssub.s32 %s22, %s29
      %p309 = scmp.eq.s32.totalorder %s308, 0
      %s311 = sadd.s32 %s310, 1
      %s312 = scalar_select %p309, %s310, %s311
      %p315 = pneg %p309
      %p316 = scmp.eq.s32.totalorder %s22, 1
      %p317 = por %p315, %p316
      %p318 = scmp.ne.s32.totalorder %s310, %s313
      %p319 = scmp.eq.s32.totalorder %s22, 0
      %p320 = por %p318, %p319
      %p321 = scmp.ne.s32.totalorder %s310, %s313
      %p322 = scmp.eq.s32.totalorder %s27, 1
      %p323 = por %p321, %p322
      %p324 = scmp.ne.s32.totalorder %s313, %s314
      %p325 = scmp.eq.s32.totalorder %s27, 0
      %p326 = por %p324, %p325
      %p327 = scmp.ne.s32.totalorder %s313, %s314
      %p328 = scmp.eq.s32.totalorder %s28, 1
      %p329 = por %p327, %p328
      %p331 = scmp.ne.s32.totalorder %s314, %s330
      %p332 = scmp.eq.s32.totalorder %s28, 0
      %p333 = por %p331, %p332
      %p334 = scmp.le.s32.totalorder 1, %s22
      %p335 = scmp.lt.s32.totalorder %s22, 3
      %p336 = pnand %p334, %p335
      %p337 = pneg %p336
      // Predicated region
      $region9: #{cnn_forward.1} parent=5 // pred_check
        _
      $region10: #{cnn_forward.1} parent=5 // pred_check_branch
        %339 = sbr.rel (%p336) target = $region12
      $region11: #{cnn_forward.1} parent=5 // pred_region
        %s340 = ssub.s32 %s22, 1
        // Predicated region
        $region13: #{cnn_forward.1} parent=11 // pred_check
          %p341 = pneg %p69
        $region14: #{cnn_forward.1} parent=11 // pred_check_branch
          %343 = sbr.rel (%p341) target = $region16
        $region15: #{cnn_forward.1} parent=11 // pred_region
          _
        $region16: #{cnn_forward.1} parent=11 // pred_fallthru
          _
        // Predicated region
        $region17: #{cnn_forward.1} parent=11 // pred_check
          %p344 = pneg %p90
        $region18: #{cnn_forward.1} parent=11 // pred_check_branch
          %346 = sbr.rel (%p344) target = $region20
        $region19: #{cnn_forward.1} parent=11 // pred_region
          _
        $region20: #{cnn_forward.1} parent=11 // pred_fallthru
          _
        // Predicated region
        $region21: #{cnn_forward.1} parent=11 // pred_check
          %p347 = pneg %p111
        $region22: #{cnn_forward.1} parent=11 // pred_check_branch
          %349 = sbr.rel (%p347) target = $region24
        $region23: #{cnn_forward.1} parent=11 // pred_region
          _
        $region24: #{cnn_forward.1} parent=11 // pred_fallthru
          _
        // Predicated region
        $region25: #{cnn_forward.1} parent=11 // pred_check
          %p350 = pneg %p132
        $region26: #{cnn_forward.1} parent=11 // pred_check_branch
          %352 = sbr.rel (%p350) target = $region28
        $region27: #{cnn_forward.1} parent=11 // pred_region
          _
        $region28: #{cnn_forward.1} parent=11 // pred_fallthru
          _
        // Predicated region
        $region29: #{cnn_forward.1} parent=11 // pred_check
          %p353 = pneg %p153
        $region30: #{cnn_forward.1} parent=11 // pred_check_branch
          %355 = sbr.rel (%p353) target = $region32
        $region31: #{cnn_forward.1} parent=11 // pred_region
          _
        $region32: #{cnn_forward.1} parent=11 // pred_fallthru
          _
        // Predicated region
        $region33: #{cnn_forward.1} parent=11 // pred_check
          %p356 = pneg %p174
        $region34: #{cnn_forward.1} parent=11 // pred_check_branch
          %358 = sbr.rel (%p356) target = $region36
        $region35: #{cnn_forward.1} parent=11 // pred_region
          _
        $region36: #{cnn_forward.1} parent=11 // pred_fallthru
          _
        // Predicated region
        $region37: #{cnn_forward.1} parent=11 // pred_check
          %p359 = pneg %p195
        $region38: #{cnn_forward.1} parent=11 // pred_check_branch
          %361 = sbr.rel (%p359) target = $region40
        $region39: #{cnn_forward.1} parent=11 // pred_region
          _
        $region40: #{cnn_forward.1} parent=11 // pred_fallthru
          _
        // Predicated region
        $region41: #{cnn_forward.1} parent=11 // pred_check
          %p362 = pneg %p216
        $region42: #{cnn_forward.1} parent=11 // pred_check_branch
          %364 = sbr.rel (%p362) target = $region44
        $region43: #{cnn_forward.1} parent=11 // pred_region
          _
        $region44: #{cnn_forward.1} parent=11 // pred_fallthru
          _
        // Predicated region
        $region45: #{cnn_forward.1} parent=11 // pred_check
          %p365 = pneg %p237
        $region46: #{cnn_forward.1} parent=11 // pred_check_branch
          %367 = sbr.rel (%p365) target = $region48
        $region47: #{cnn_forward.1} parent=11 // pred_region
          _
        $region48: #{cnn_forward.1} parent=11 // pred_fallthru
          _
        // Predicated region
        $region49: #{cnn_forward.1} parent=11 // pred_check
          %p368 = pneg %p258
        $region50: #{cnn_forward.1} parent=11 // pred_check_branch
          %370 = sbr.rel (%p368) target = $region52
        $region51: #{cnn_forward.1} parent=11 // pred_region
          _
        $region52: #{cnn_forward.1} parent=11 // pred_fallthru
          _
        // Predicated region
        $region53: #{cnn_forward.1} parent=11 // pred_check
          %p371 = pneg %p279
        $region54: #{cnn_forward.1} parent=11 // pred_check_branch
          %373 = sbr.rel (%p371) target = $region56
        $region55: #{cnn_forward.1} parent=11 // pred_region
          _
        $region56: #{cnn_forward.1} parent=11 // pred_fallthru
          _
        // Predicated region
        $region57: #{cnn_forward.1} parent=11 // pred_check
          %p374 = pneg %p300
        $region58: #{cnn_forward.1} parent=11 // pred_check_branch
          %376 = sbr.rel (%p374) target = $region60
        $region59: #{cnn_forward.1} parent=11 // pred_region
          _
        $region60: #{cnn_forward.1} parent=11 // pred_fallthru
          _
      $region12: #{cnn_forward.1} parent=5 // pred_fallthru
        _
      %p377 = scmp.lt.s32.totalorder %s22, 2
      // Predicated region
      $region61: #{cnn_forward.1} parent=5 // pred_check
        %p378 = pneg %p377
      $region62: #{cnn_forward.1} parent=5 // pred_check_branch
        %380 = sbr.rel (%p378) target = $region64
      $region63: #{cnn_forward.1} parent=5 // pred_region
        // Predicated region
        $region65: #{cnn_forward.1} parent=63 // pred_check
          %p381 = pneg %p42
        $region66: #{cnn_forward.1} parent=63 // pred_check_branch
          %383 = sbr.rel (%p381) target = $region68
        $region67: #{cnn_forward.1} parent=63 // pred_region
          %p384 = scmp.lt.s32.totalorder %s22, 1
          %s385 = scalar_select %p384, %s22, 1
          %s386 = smul.addr %s385, 41
          %s387 = smul.addr %s386, 8
          %s388 = scalar_lea.vmem %s0, %s387
        $region68: #{cnn_forward.1} parent=63 // pred_fallthru
          _
      $region64: #{cnn_forward.1} parent=5 // pred_fallthru
        _
      %p389 = scmp.le.s32.totalorder 1, %s22
      %p390 = scmp.lt.s32.totalorder %s22, 3
      %p391 = pnand %p389, %p390
      %p392 = pneg %p391
      // Predicated region
      $region69: #{cnn_forward.1} parent=5 // pred_check
        _
      $region70: #{cnn_forward.1} parent=5 // pred_check_branch
        %394 = sbr.rel (%p391) target = $region72
      $region71: #{cnn_forward.1} parent=5 // pred_region
        %s395 = ssub.s32 %s22, 1
        %p396 = scmp.lt.s32.totalorder %s27, 1
        %s397 = scalar_select %p396, %s27, 1
        %s398 = smul.addr %s397, 41
        %s399 = smul.addr %s398, 8
        %s400 = scalar_lea.vmem %s0, %s399
        %p401 = pneg %p48
        %p402 = pneg %p45
        %p403 = pneg %p69
        %p404 = pneg %p66
        %p405 = pneg %p90
        %p406 = pneg %p87
        %p407 = pneg %p111
        %p408 = pneg %p108
        %p409 = pneg %p132
        %p410 = pneg %p129
        %p411 = pneg %p153
        %p412 = pneg %p150
        %p413 = pneg %p174
        %p414 = pneg %p171
        %p415 = pneg %p195
        %p416 = pneg %p192
        %p417 = pneg %p216
        %p418 = pneg %p213
        %p419 = pneg %p237
        %p420 = pneg %p234
        %p421 = pneg %p258
        %p422 = pneg %p255
        %p423 = pneg %p279
        %p424 = pneg %p276
        %p425 = pneg %p300
        %p426 = pneg %p297
        %p427 = pneg %p326
        %p428 = pneg %p323
        %s429 = sand.u32 %s313, 1
        %s430 = scalar_lea.sflag [#allocation15], %s429
        %s431 = sand.u32 %s313, 1
        %s432 = scalar_lea.vmem [#allocation14], %s431
        %p433 = scmp.lt.s32.totalorder %s27, 1
        %s434 = scalar_select %p433, %s27, 1
        %s435 = smul.addr %s434, 41
        %s436 = smul.addr %s435, 8
        %s437 = scalar_lea.vmem %s0, %s436
        %vm438 = vcmask 64512
        %439 = vst.msk [vmem:[#allocation2] sm:$0xff] %vm438, 0.0
        %440 = vst.msk [vmem:[#allocation2 + $0x8] sm:$0xff] %vm438, 0.0
        %441 = vst.msk [vmem:[#allocation2 + $0x10] sm:$0xff] %vm438, 0.0
        %442 = vst.msk [vmem:[#allocation2 + $0x18] sm:$0xff] %vm438, 0.0
        %443 = vst.msk [vmem:[#allocation2 + $0x20] sm:$0xff] %vm438, 0.0
        %444 = vst.msk [vmem:[#allocation2 + $0x28] sm:$0xff] %vm438, 0.0
        %445 = vst.msk [vmem:[#allocation2 + $0x30] sm:$0xff] %vm438, 0.0
        %446 = vst.msk [vmem:[#allocation2 + $0x38] sm:$0xff] %vm438, 0.0
        %447 = vst.msk [vmem:[#allocation2 + $0x40] sm:$0xff] %vm438, 0.0
        %448 = vst.msk [vmem:[#allocation2 + $0x48] sm:$0xff] %vm438, 0.0
        %449 = vst.msk [vmem:[#allocation2 + $0x50] sm:$0xff] %vm438, 0.0
        %450 = vst.msk [vmem:[#allocation2 + $0x58] sm:$0xff] %vm438, 0.0
        %vm451 = vcmask 60416
        %452 = vst.msk [vmem:[#allocation2 + $0x60] sm:$0xf] %vm451, 0.0
        %vm453 = vcmask 130048
        %454 = vst.msk [vmem:[#allocation3] sm:$0xff] %vm453, 0.0
        %455 = vst.msk [vmem:[#allocation3 + $0x8] sm:$0xff] %vm453, 0.0
        %456 = vst.msk [vmem:[#allocation3 + $0x10] sm:$0xff] %vm453, 0.0
        %457 = vst.msk [vmem:[#allocation3 + $0x18] sm:$0xff] %vm453, 0.0
        %vm458 = vcmask 125952
        %459 = vst.msk [vmem:[#allocation3 + $0x20] sm:$0xf] %vm458, 0.0
        %vm460 = vcmask 261120
        %461 = vst.msk [vmem:[#allocation4] sm:$0xff] %vm460, 0.0
        %462 = vst.msk [vmem:[#allocation4 + $0x8] sm:$0xff] %vm460, 0.0
        %vm463 = vcmask 523264
        %464 = vst.msk [vmem:[#allocation5] sm:$0xff] %vm463, 0.0
        %vm465 = vcmask 516096
        %466 = vst.msk [vmem:[#allocation5 + $0x8] sm:$0x1] %vm465, 0.0
        %467 = vst.msk [vmem:[#allocation6] sm:$0xff] %vm438, 0.0
        %468 = vst.msk [vmem:[#allocation6 + $0x8] sm:$0xff] %vm438, 0.0
        %vm469 = vcmask 58368
        %470 = vst.msk [vmem:[#allocation6 + $0x10] sm:$0x3] %vm469, 0.0
        %471 = vst.msk [vmem:[#allocation6 + $0x18] sm:$0xff] %vm438, 0.0
        %472 = vst.msk [vmem:[#allocation6 + $0x20] sm:$0xff] %vm438, 0.0
        %473 = vst.msk [vmem:[#allocation6 + $0x28] sm:$0x3] %vm469, 0.0
        %474 = vst.msk [vmem:[#allocation6 + $0x30] sm:$0xff] %vm438, 0.0
        %475 = vst.msk [vmem:[#allocation6 + $0x38] sm:$0xff] %vm438, 0.0
        %476 = vst.msk [vmem:[#allocation6 + $0x40] sm:$0x3] %vm469, 0.0
        %477 = vst.msk [vmem:[#allocation6 + $0x48] sm:$0xff] %vm438, 0.0
        %478 = vst.msk [vmem:[#allocation6 + $0x50] sm:$0xff] %vm438, 0.0
        %479 = vst.msk [vmem:[#allocation6 + $0x58] sm:$0x3] %vm469, 0.0
        %480 = vst.msk [vmem:[#allocation6 + $0x60] sm:$0xff] %vm438, 0.0
        %481 = vst.msk [vmem:[#allocation6 + $0x68] sm:$0xff] %vm438, 0.0
        %482 = vst.msk [vmem:[#allocation6 + $0x70] sm:$0x3] %vm469, 0.0
        %483 = vst.msk [vmem:[#allocation6 + $0x78] sm:$0xff] %vm438, 0.0
        %484 = vst.msk [vmem:[#allocation6 + $0x80] sm:$0xff] %vm438, 0.0
        %485 = vst.msk [vmem:[#allocation6 + $0x88] sm:$0x3] %vm469, 0.0
        %486 = vst.msk [vmem:[#allocation6 + $0x90] sm:$0xff] %vm438, 0.0
        %487 = vst.msk [vmem:[#allocation6 + $0x98] sm:$0xff] %vm438, 0.0
        %488 = vst.msk [vmem:[#allocation6 + $0xa0] sm:$0x3] %vm469, 0.0
        %489 = vst.msk [vmem:[#allocation6 + $0xa8] sm:$0xff] %vm438, 0.0
        %490 = vst.msk [vmem:[#allocation6 + $0xb0] sm:$0xff] %vm438, 0.0
        %491 = vst.msk [vmem:[#allocation6 + $0xb8] sm:$0x3] %vm469, 0.0
        %492 = vst.msk [vmem:[#allocation6 + $0xc0] sm:$0xff] %vm438, 0.0
        %493 = vst.msk [vmem:[#allocation6 + $0xc8] sm:$0xff] %vm438, 0.0
        %494 = vst.msk [vmem:[#allocation6 + $0xd0] sm:$0x3] %vm469, 0.0
        %495 = vst.msk [vmem:[#allocation6 + $0xd8] sm:$0xff] %vm438, 0.0
        %496 = vst.msk [vmem:[#allocation6 + $0xe0] sm:$0xff] %vm438, 0.0
        %497 = vst.msk [vmem:[#allocation6 + $0xe8] sm:$0x3] %vm469, 0.0
        %498 = vst.msk [vmem:[#allocation6 + $0xf0] sm:$0xff] %vm438, 0.0
        %499 = vst.msk [vmem:[#allocation6 + $0xf8] sm:$0xff] %vm438, 0.0
        %500 = vst.msk [vmem:[#allocation6 + $0x100] sm:$0x3] %vm469, 0.0
        %501 = vst.msk [vmem:[#allocation6 + $0x108] sm:$0xff] %vm438, 0.0
        %502 = vst.msk [vmem:[#allocation6 + $0x110] sm:$0xff] %vm438, 0.0
        %503 = vst.msk [vmem:[#allocation6 + $0x118] sm:$0x3] %vm469, 0.0
        %504 = vst.msk [vmem:[#allocation6 + $0x120] sm:$0xff] %vm438, 0.0
        %505 = vst.msk [vmem:[#allocation6 + $0x128] sm:$0xff] %vm438, 0.0
        %506 = vst.msk [vmem:[#allocation6 + $0x130] sm:$0x3] %vm469, 0.0
        %507 = vst.msk [vmem:[#allocation6 + $0x138] sm:$0xff] %vm438, 0.0
        %508 = vst.msk [vmem:[#allocation6 + $0x140] sm:$0xff] %vm438, 0.0
        %509 = vst.msk [vmem:[#allocation6 + $0x148] sm:$0x3] %vm469, 0.0
        %510 = vst.msk [vmem:[#allocation6 + $0x150] sm:$0xff] %vm438, 0.0
        %511 = vst.msk [vmem:[#allocation6 + $0x158] sm:$0xff] %vm438, 0.0
        %512 = vst.msk [vmem:[#allocation6 + $0x160] sm:$0x3] %vm469, 0.0
        %513 = vst.msk [vmem:[#allocation6 + $0x168] sm:$0xff] %vm438, 0.0
        %514 = vst.msk [vmem:[#allocation6 + $0x170] sm:$0xff] %vm438, 0.0
        %515 = vst.msk [vmem:[#allocation6 + $0x178] sm:$0x3] %vm469, 0.0
        %516 = vst.msk [vmem:[#allocation6 + $0x180] sm:$0xff] %vm438, 0.0
        %517 = vst.msk [vmem:[#allocation6 + $0x188] sm:$0xff] %vm438, 0.0
        %518 = vst.msk [vmem:[#allocation6 + $0x190] sm:$0x3] %vm469, 0.0
        %519 = vst.msk [vmem:[#allocation6 + $0x198] sm:$0xff] %vm438, 0.0
        %520 = vst.msk [vmem:[#allocation6 + $0x1a0] sm:$0xff] %vm438, 0.0
        %521 = vst.msk [vmem:[#allocation6 + $0x1a8] sm:$0x3] %vm469, 0.0
        %522 = vst.msk [vmem:[#allocation7] sm:$0xff] %vm453, 0.0
        %vm523 = vcmask 123904
        %524 = vst.msk [vmem:[#allocation7 + $0x8] sm:$0x3] %vm523, 0.0
        %525 = vst.msk [vmem:[#allocation7 + $0x10] sm:$0xff] %vm453, 0.0
        %526 = vst.msk [vmem:[#allocation7 + $0x18] sm:$0x3] %vm523, 0.0
        %527 = vst.msk [vmem:[#allocation7 + $0x20] sm:$0xff] %vm453, 0.0
        %528 = vst.msk [vmem:[#allocation7 + $0x28] sm:$0x3] %vm523, 0.0
        %529 = vst.msk [vmem:[#allocation7 + $0x30] sm:$0xff] %vm453, 0.0
        %530 = vst.msk [vmem:[#allocation7 + $0x38] sm:$0x3] %vm523, 0.0
        %531 = vst.msk [vmem:[#allocation7 + $0x40] sm:$0xff] %vm453, 0.0
        %532 = vst.msk [vmem:[#allocation7 + $0x48] sm:$0x3] %vm523, 0.0
        %533 = vst.msk [vmem:[#allocation7 + $0x50] sm:$0xff] %vm453, 0.0
        %534 = vst.msk [vmem:[#allocation7 + $0x58] sm:$0x3] %vm523, 0.0
        %535 = vst.msk [vmem:[#allocation7 + $0x60] sm:$0xff] %vm453, 0.0
        %536 = vst.msk [vmem:[#allocation7 + $0x68] sm:$0x3] %vm523, 0.0
        %537 = vst.msk [vmem:[#allocation7 + $0x70] sm:$0xff] %vm453, 0.0
        %538 = vst.msk [vmem:[#allocation7 + $0x78] sm:$0x3] %vm523, 0.0
        %539 = vst.msk [vmem:[#allocation7 + $0x80] sm:$0xff] %vm453, 0.0
        %540 = vst.msk [vmem:[#allocation7 + $0x88] sm:$0x3] %vm523, 0.0
        %541 = vst.msk [vmem:[#allocation7 + $0x90] sm:$0xff] %vm453, 0.0
        %542 = vst.msk [vmem:[#allocation7 + $0x98] sm:$0x3] %vm523, 0.0
        %vm543 = vcmask 259072
        %544 = vst.msk [vmem:[#allocation8] sm:$0x3f] %vm543, 0.0
        %545 = vst.msk [vmem:[#allocation8 + $0x8] sm:$0x3f] %vm543, 0.0
        %546 = vst.msk [vmem:[#allocation8 + $0x10] sm:$0x3f] %vm543, 0.0
        %547 = vst.msk [vmem:[#allocation8 + $0x18] sm:$0x3f] %vm543, 0.0
        %548 = vst.msk [vmem:[#allocation8 + $0x20] sm:$0x3f] %vm543, 0.0
        %549 = vst.msk [vmem:[#allocation8 + $0x28] sm:$0x3f] %vm543, 0.0
        %vm550 = vcmask 519168
        %551 = vst.msk [vmem:[#allocation9] sm:$0xf] %vm550, 0.0
        %552 = vst.msk [vmem:[#allocation9 + $0x4] sm:$0xf] %vm550, 0.0
        %553 = vst.msk [vmem:[#allocation9 + $0x8] sm:$0xf] %vm550, 0.0
        %554 = vst.msk [vmem:[#allocation9 + $0xc] sm:$0xf] %vm550, 0.0
        %v555 = vld [vmem:[%s437] sm:$0xff]
        %v556 = vld [vmem:[%s437 + $0x8] sm:$0xff]
        %v557 = vld [vmem:[%s437 + $0x10] sm:$0xff]
        %v558 = vld [vmem:[%s437 + $0x18] sm:$0xff]
        %v559 = vld [vmem:[%s437 + $0x20] sm:$0xff]
        %v560 = vld [vmem:[%s437 + $0x28] sm:$0xff]
        %v561 = vld [vmem:[%s437 + $0x30] sm:$0xff]
        %v562 = vld [vmem:[%s437 + $0x38] sm:$0xff]
        %v563 = vld [vmem:[%s437 + $0x40] sm:$0xff]
        %v564 = vld [vmem:[%s437 + $0x48] sm:$0xff]
        %v565 = vld [vmem:[%s437 + $0x50] sm:$0xff]
        %v566 = vld [vmem:[%s437 + $0x58] sm:$0xff]
        %v567 = vld [vmem:[%s437 + $0x60] sm:$0xff]
        %v568 = vld [vmem:[%s437 + $0x68] sm:$0xff]
        %v569 = vld [vmem:[%s437 + $0x70] sm:$0xff]
        %v570 = vld [vmem:[%s437 + $0x78] sm:$0xff]
        %v571 = vld [vmem:[%s437 + $0x80] sm:$0xff]
        %v572 = vld [vmem:[%s437 + $0x88] sm:$0xff]
        %v573 = vld [vmem:[%s437 + $0x90] sm:$0xff]
        %v574 = vld [vmem:[%s437 + $0x98] sm:$0xff]
        %v575 = vld [vmem:[%s437 + $0xa0] sm:$0xff]
        %v576 = vld [vmem:[%s437 + $0xa8] sm:$0xff]
        %v577 = vld [vmem:[%s437 + $0xb0] sm:$0xff]
        %v578 = vld [vmem:[%s437 + $0xb8] sm:$0xff]
        %v579 = vld [vmem:[%s437 + $0xc0] sm:$0xff]
        %v580 = vld [vmem:[%s437 + $0xc8] sm:$0xff]
        %v581 = vld [vmem:[%s437 + $0xd0] sm:$0xff]
        %v582 = vld [vmem:[%s437 + $0xd8] sm:$0xff]
        %v583 = vld [vmem:[%s437 + $0xe0] sm:$0xff]
        %v584 = vld [vmem:[%s437 + $0xe8] sm:$0xff]
        %v585 = vld [vmem:[%s437 + $0xf0] sm:$0xff]
        %v586 = vld [vmem:[%s437 + $0xf8] sm:$0xff]
        %v587 = vld [vmem:[%s437 + $0x100] sm:$0xff]
        %v588 = vld [vmem:[%s437 + $0x108] sm:$0xff]
        %v589 = vld [vmem:[%s437 + $0x110] sm:$0xff]
        %v590 = vld [vmem:[%s437 + $0x118] sm:$0x3f]
        %v591 = vld [vmem:[%s1] sm:$0x7]
        %v592 = vld [vmem:[%s437 + $0x1] sm:$0xff]
        %v593 = vld [vmem:[%s437 + $0x9] sm:$0xff]
        %v594 = vld [vmem:[%s437 + $0x11] sm:$0xff]
        %v595 = vld [vmem:[%s437 + $0x19] sm:$0xff]
        %v596 = vld [vmem:[%s437 + $0x21] sm:$0xff]
        %v597 = vld [vmem:[%s437 + $0x29] sm:$0xff]
        %v598 = vld [vmem:[%s437 + $0x31] sm:$0xff]
        %v599 = vld [vmem:[%s437 + $0x39] sm:$0xff]
        %v600 = vld [vmem:[%s437 + $0x41] sm:$0xff]
        %v601 = vld [vmem:[%s437 + $0x49] sm:$0xff]
        %v602 = vld [vmem:[%s437 + $0x51] sm:$0xff]
        %v603 = vld [vmem:[%s437 + $0x59] sm:$0xff]
        %v604 = vld [vmem:[%s437 + $0x61] sm:$0xff]
        %v605 = vld [vmem:[%s437 + $0x69] sm:$0xff]
        %v606 = vld [vmem:[%s437 + $0x71] sm:$0xff]
        %v607 = vld [vmem:[%s437 + $0x79] sm:$0xff]
        %v608 = vld [vmem:[%s437 + $0x81] sm:$0xff]
        %v609 = vld [vmem:[%s437 + $0x89] sm:$0xff]
        %v610 = vld [vmem:[%s437 + $0x91] sm:$0xff]
        %v611 = vld [vmem:[%s437 + $0x99] sm:$0xff]
        %v612 = vld [vmem:[%s437 + $0xa1] sm:$0xff]
        %v613 = vld [vmem:[%s437 + $0xa9] sm:$0xff]
        %v614 = vld [vmem:[%s437 + $0xb1] sm:$0xff]
        %v615 = vld [vmem:[%s437 + $0xb9] sm:$0xff]
        %v616 = vld [vmem:[%s437 + $0xc1] sm:$0xff]
        %v617 = vld [vmem:[%s437 + $0xc9] sm:$0xff]
        %v618 = vld [vmem:[%s437 + $0xd1] sm:$0xff]
        %v619 = vld [vmem:[%s437 + $0xd9] sm:$0xff]
        %v620 = vld [vmem:[%s437 + $0xe1] sm:$0xff]
        %v621 = vld [vmem:[%s437 + $0xe9] sm:$0xff]
        %v622 = vld [vmem:[%s437 + $0xf1] sm:$0xff]
        %v623 = vld [vmem:[%s437 + $0xf9] sm:$0xff]
        %v624 = vld [vmem:[%s437 + $0x101] sm:$0xff]
        %v625 = vld [vmem:[%s437 + $0x109] sm:$0xff]
        %v626 = vld [vmem:[%s437 + $0x111] sm:$0xff]
        %v627 = vld [vmem:[%s437 + $0x119] sm:$0x3f]
        %s628 = scalar_lea.vmem %s1, 4
        %v629 = vld [vmem:[%s628] sm:$0x7]
        %vm630 = vcmask 23552
        %v632 = vsel %vm630, %v592, 0
        %v635 = vsel %vm630, %v593, 0
        %v638 = vsel %vm630, %v594, 0
        %v641 = vsel %vm630, %v595, 0
        %v644 = vsel %vm630, %v596, 0
        %v647 = vsel %vm630, %v597, 0
        %v650 = vsel %vm630, %v598, 0
        %v653 = vsel %vm630, %v599, 0
        %v656 = vsel %vm630, %v600, 0
        %v659 = vsel %vm630, %v601, 0
        %v662 = vsel %vm630, %v602, 0
        %v665 = vsel %vm630, %v603, 0
        %v668 = vsel %vm630, %v604, 0
        %v671 = vsel %vm630, %v605, 0
        %v674 = vsel %vm630, %v606, 0
        %v677 = vsel %vm630, %v607, 0
        %v680 = vsel %vm630, %v608, 0
        %v683 = vsel %vm630, %v609, 0
        %v686 = vsel %vm630, %v610, 0
        %v689 = vsel %vm630, %v611, 0
        %v692 = vsel %vm630, %v612, 0
        %v695 = vsel %vm630, %v613, 0
        %v698 = vsel %vm630, %v614, 0
        %v701 = vsel %vm630, %v615, 0
        %v704 = vsel %vm630, %v616, 0
        %v707 = vsel %vm630, %v617, 0
        %v710 = vsel %vm630, %v618, 0
        %v713 = vsel %vm630, %v619, 0
        %v716 = vsel %vm630, %v620, 0
        %v719 = vsel %vm630, %v621, 0
        %v722 = vsel %vm630, %v622, 0
        %v725 = vsel %vm630, %v623, 0
        %v728 = vsel %vm630, %v624, 0
        %v731 = vsel %vm630, %v625, 0
        %v734 = vsel %vm630, %v626, 0
        %v737 = vsel %vm630, %v627, 0
        %vm739 = vcmask 1042432
        %v741 = vsel %vm739, %v629, 0
        %743 = vmatpush.msra.mxu0 0.0
        %744 = vmatpush.msra.mxu0 0.0
        %745 = vmatpush.msra.mxu0 0.0
        %746 = vmatpush.msra.mxu0 0.0
        %747 = vmatpush.msra.mxu0 0.0
        %748 = vmatpush.msra.mxu0 0.0
        %749 = vmatpush.msra.mxu0 0.0
        %750 = vmatpush.msra.mxu0 0.0
        %751 = vmatpush.msra.mxu0 0.0
        %752 = vmatpush.msra.mxu0 0.0
        %753 = vmatpush.msra.mxu0 0.0
        %754 = vmatpush.msra.mxu0 0.0
        %755 = vmatpush.msra.mxu0 0.0
        %756 = vmatpush.msra.mxu0 0.0
        %757 = vmatpush.msra.mxu0 0.0
        %758 = vmatpush.msra.mxu0 %v741
        %759 = vmatmul.f32.gmra.mxu0 %v632
        %v760 = vpop.f32.mrf.mxu0
        %v761 = vadd.f32 0.0, %v760
        %762 = vmatmul.f32.gmra.mxu0 %v635
        %v763 = vpop.f32.mrf.mxu0
        %v764 = vadd.f32 0.0, %v763
        %765 = vmatmul.f32.gmra.mxu0 %v638
        %v766 = vpop.f32.mrf.mxu0
        %v767 = vadd.f32 0.0, %v766
        %768 = vmatmul.f32.gmra.mxu0 %v641
        %v769 = vpop.f32.mrf.mxu0
        %v770 = vadd.f32 0.0, %v769
        %771 = vmatmul.f32.gmra.mxu0 %v644
        %v772 = vpop.f32.mrf.mxu0
        %v773 = vadd.f32 0.0, %v772
        %774 = vmatmul.f32.gmra.mxu0 %v647
        %v775 = vpop.f32.mrf.mxu0
        %v776 = vadd.f32 0.0, %v775
        %777 = vmatmul.f32.gmra.mxu0 %v650
        %v778 = vpop.f32.mrf.mxu0
        %v779 = vadd.f32 0.0, %v778
        %780 = vmatmul.f32.gmra.mxu0 %v653
        %v781 = vpop.f32.mrf.mxu0
        %v782 = vadd.f32 0.0, %v781
        %783 = vmatmul.f32.gmra.mxu0 %v656
        %v784 = vpop.f32.mrf.mxu0
        %v785 = vadd.f32 0.0, %v784
        %786 = vmatmul.f32.gmra.mxu0 %v659
        %v787 = vpop.f32.mrf.mxu0
        %v788 = vadd.f32 0.0, %v787
        %789 = vmatmul.f32.gmra.mxu0 %v662
        %v790 = vpop.f32.mrf.mxu0
        %v791 = vadd.f32 0.0, %v790
        %792 = vmatmul.f32.gmra.mxu0 %v665
        %v793 = vpop.f32.mrf.mxu0
        %v794 = vadd.f32 0.0, %v793
        %795 = vmatmul.f32.gmra.mxu0 %v668
        %v796 = vpop.f32.mrf.mxu0
        %v797 = vadd.f32 0.0, %v796
        %798 = vmatmul.f32.gmra.mxu0 %v671
        %v799 = vpop.f32.mrf.mxu0
        %v800 = vadd.f32 0.0, %v799
        %801 = vmatmul.f32.gmra.mxu0 %v674
        %v802 = vpop.f32.mrf.mxu0
        %v803 = vadd.f32 0.0, %v802
        %804 = vmatmul.f32.gmra.mxu0 %v677
        %v805 = vpop.f32.mrf.mxu0
        %v806 = vadd.f32 0.0, %v805
        %807 = vmatmul.f32.gmra.mxu0 %v680
        %v808 = vpop.f32.mrf.mxu0
        %v809 = vadd.f32 0.0, %v808
        %810 = vmatmul.f32.gmra.mxu0 %v683
        %v811 = vpop.f32.mrf.mxu0
        %v812 = vadd.f32 0.0, %v811
        %813 = vmatmul.f32.gmra.mxu0 %v686
        %v814 = vpop.f32.mrf.mxu0
        %v815 = vadd.f32 0.0, %v814
        %816 = vmatmul.f32.gmra.mxu0 %v689
        %v817 = vpop.f32.mrf.mxu0
        %v818 = vadd.f32 0.0, %v817
        %819 = vmatmul.f32.gmra.mxu0 %v692
        %v820 = vpop.f32.mrf.mxu0
        %v821 = vadd.f32 0.0, %v820
        %822 = vmatmul.f32.gmra.mxu0 %v695
        %v823 = vpop.f32.mrf.mxu0
        %v824 = vadd.f32 0.0, %v823
        %825 = vmatmul.f32.gmra.mxu0 %v698
        %v826 = vpop.f32.mrf.mxu0
        %v827 = vadd.f32 0.0, %v826
        %828 = vmatmul.f32.gmra.mxu0 %v701
        %v829 = vpop.f32.mrf.mxu0
        %v830 = vadd.f32 0.0, %v829
        %831 = vmatmul.f32.gmra.mxu0 %v704
        %v832 = vpop.f32.mrf.mxu0
        %v833 = vadd.f32 0.0, %v832
        %834 = vmatmul.f32.gmra.mxu0 %v707
        %v835 = vpop.f32.mrf.mxu0
        %v836 = vadd.f32 0.0, %v835
        %837 = vmatmul.f32.gmra.mxu0 %v710
        %v838 = vpop.f32.mrf.mxu0
        %v839 = vadd.f32 0.0, %v838
        %840 = vmatmul.f32.gmra.mxu0 %v713
        %v841 = vpop.f32.mrf.mxu0
        %v842 = vadd.f32 0.0, %v841
        %843 = vmatmul.f32.gmra.mxu0 %v716
        %v844 = vpop.f32.mrf.mxu0
        %v845 = vadd.f32 0.0, %v844
        %846 = vmatmul.f32.gmra.mxu0 %v719
        %v847 = vpop.f32.mrf.mxu0
        %v848 = vadd.f32 0.0, %v847
        %849 = vmatmul.f32.gmra.mxu0 %v722
        %v850 = vpop.f32.mrf.mxu0
        %v851 = vadd.f32 0.0, %v850
        %852 = vmatmul.f32.gmra.mxu0 %v725
        %v853 = vpop.f32.mrf.mxu0
        %v854 = vadd.f32 0.0, %v853
        %855 = vmatmul.f32.gmra.mxu0 %v728
        %v856 = vpop.f32.mrf.mxu0
        %v857 = vadd.f32 0.0, %v856
        %858 = vmatmul.f32.gmra.mxu0 %v731
        %v859 = vpop.f32.mrf.mxu0
        %v860 = vadd.f32 0.0, %v859
        %861 = vmatmul.f32.gmra.mxu0 %v734
        %v862 = vpop.f32.mrf.mxu0
        %v863 = vadd.f32 0.0, %v862
        %864 = vmatmul.f32.gmra.mxu0 %v737
        %v865 = vpop.f32.mrf.mxu0
        %v866 = vadd.f32 0.0, %v865
        %867 = vdwg.mxu0
        %v869 = vsel %vm630, %v555, 0
        %v872 = vsel %vm630, %v556, 0
        %v875 = vsel %vm630, %v557, 0
        %v878 = vsel %vm630, %v558, 0
        %v881 = vsel %vm630, %v559, 0
        %v884 = vsel %vm630, %v560, 0
        %v887 = vsel %vm630, %v561, 0
        %v890 = vsel %vm630, %v562, 0
        %v893 = vsel %vm630, %v563, 0
        %v896 = vsel %vm630, %v564, 0
        %v899 = vsel %vm630, %v565, 0
        %v902 = vsel %vm630, %v566, 0
        %v905 = vsel %vm630, %v567, 0
        %v908 = vsel %vm630, %v568, 0
        %v911 = vsel %vm630, %v569, 0
        %v914 = vsel %vm630, %v570, 0
        %v917 = vsel %vm630, %v571, 0
        %v920 = vsel %vm630, %v572, 0
        %v923 = vsel %vm630, %v573, 0
        %v926 = vsel %vm630, %v574, 0
        %v929 = vsel %vm630, %v575, 0
        %v932 = vsel %vm630, %v576, 0
        %v935 = vsel %vm630, %v577, 0
        %v938 = vsel %vm630, %v578, 0
        %v941 = vsel %vm630, %v579, 0
        %v944 = vsel %vm630, %v580, 0
        %v947 = vsel %vm630, %v581, 0
        %v950 = vsel %vm630, %v582, 0
        %v953 = vsel %vm630, %v583, 0
        %v956 = vsel %vm630, %v584, 0
        %v959 = vsel %vm630, %v585, 0
        %v962 = vsel %vm630, %v586, 0
        %v965 = vsel %vm630, %v587, 0
        %v968 = vsel %vm630, %v588, 0
        %v971 = vsel %vm630, %v589, 0
        %v974 = vsel %vm630, %v590, 0
        %v977 = vsel %vm739, %v591, 0
        %979 = vmatpush.msra.mxu0 0.0
        %980 = vmatpush.msra.mxu0 0.0
        %981 = vmatpush.msra.mxu0 0.0
        %982 = vmatpush.msra.mxu0 0.0
        %983 = vmatpush.msra.mxu0 0.0
        %984 = vmatpush.msra.mxu0 0.0
        %985 = vmatpush.msra.mxu0 0.0
        %986 = vmatpush.msra.mxu0 0.0
        %987 = vmatpush.msra.mxu0 0.0
        %988 = vmatpush.msra.mxu0 0.0
        %989 = vmatpush.msra.mxu0 0.0
        %990 = vmatpush.msra.mxu0 0.0
        %991 = vmatpush.msra.mxu0 0.0
        %992 = vmatpush.msra.mxu0 0.0
        %993 = vmatpush.msra.mxu0 0.0
        %994 = vmatpush.msra.mxu0 %v977
        %995 = vmatmul.f32.gmra.mxu0 %v869
        %v996 = vpop.f32.mrf.mxu0
        %v997 = vadd.f32 %v761, %v996
        %998 = vmatmul.f32.gmra.mxu0 %v872
        %v999 = vpop.f32.mrf.mxu0
        %v1000 = vadd.f32 %v764, %v999
        %1001 = vmatmul.f32.gmra.mxu0 %v875
        %v1002 = vpop.f32.mrf.mxu0
        %v1003 = vadd.f32 %v767, %v1002
        %1004 = vmatmul.f32.gmra.mxu0 %v878
        %v1005 = vpop.f32.mrf.mxu0
        %v1006 = vadd.f32 %v770, %v1005
        %1007 = vmatmul.f32.gmra.mxu0 %v881
        %v1008 = vpop.f32.mrf.mxu0
        %v1009 = vadd.f32 %v773, %v1008
        %1010 = vmatmul.f32.gmra.mxu0 %v884
        %v1011 = vpop.f32.mrf.mxu0
        %v1012 = vadd.f32 %v776, %v1011
        %1013 = vmatmul.f32.gmra.mxu0 %v887
        %v1014 = vpop.f32.mrf.mxu0
        %v1015 = vadd.f32 %v779, %v1014
        %1016 = vmatmul.f32.gmra.mxu0 %v890
        %v1017 = vpop.f32.mrf.mxu0
        %v1018 = vadd.f32 %v782, %v1017
        %1019 = vmatmul.f32.gmra.mxu0 %v893
        %v1020 = vpop.f32.mrf.mxu0
        %v1021 = vadd.f32 %v785, %v1020
        %1022 = vmatmul.f32.gmra.mxu0 %v896
        %v1023 = vpop.f32.mrf.mxu0
        %v1024 = vadd.f32 %v788, %v1023
        %1025 = vmatmul.f32.gmra.mxu0 %v899
        %v1026 = vpop.f32.mrf.mxu0
        %v1027 = vadd.f32 %v791, %v1026
        %1028 = vmatmul.f32.gmra.mxu0 %v902
        %v1029 = vpop.f32.mrf.mxu0
        %v1030 = vadd.f32 %v794, %v1029
        %1031 = vmatmul.f32.gmra.mxu0 %v905
        %v1032 = vpop.f32.mrf.mxu0
        %v1033 = vadd.f32 %v797, %v1032
        %1034 = vmatmul.f32.gmra.mxu0 %v908
        %v1035 = vpop.f32.mrf.mxu0
        %v1036 = vadd.f32 %v800, %v1035
        %1037 = vmatmul.f32.gmra.mxu0 %v911
        %v1038 = vpop.f32.mrf.mxu0
        %v1039 = vadd.f32 %v803, %v1038
        %1040 = vmatmul.f32.gmra.mxu0 %v914
        %v1041 = vpop.f32.mrf.mxu0
        %v1042 = vadd.f32 %v806, %v1041
        %1043 = vmatmul.f32.gmra.mxu0 %v917
        %v1044 = vpop.f32.mrf.mxu0
        %v1045 = vadd.f32 %v809, %v1044
        %1046 = vmatmul.f32.gmra.mxu0 %v920
        %v1047 = vpop.f32.mrf.mxu0
        %v1048 = vadd.f32 %v812, %v1047
        %1049 = vmatmul.f32.gmra.mxu0 %v923
        %v1050 = vpop.f32.mrf.mxu0
        %v1051 = vadd.f32 %v815, %v1050
        %1052 = vmatmul.f32.gmra.mxu0 %v926
        %v1053 = vpop.f32.mrf.mxu0
        %v1054 = vadd.f32 %v818, %v1053
        %1055 = vmatmul.f32.gmra.mxu0 %v929
        %v1056 = vpop.f32.mrf.mxu0
        %v1057 = vadd.f32 %v821, %v1056
        %1058 = vmatmul.f32.gmra.mxu0 %v932
        %v1059 = vpop.f32.mrf.mxu0
        %v1060 = vadd.f32 %v824, %v1059
        %1061 = vmatmul.f32.gmra.mxu0 %v935
        %v1062 = vpop.f32.mrf.mxu0
        %v1063 = vadd.f32 %v827, %v1062
        %1064 = vmatmul.f32.gmra.mxu0 %v938
        %v1065 = vpop.f32.mrf.mxu0
        %v1066 = vadd.f32 %v830, %v1065
        %1067 = vmatmul.f32.gmra.mxu0 %v941
        %v1068 = vpop.f32.mrf.mxu0
        %v1069 = vadd.f32 %v833, %v1068
        %1070 = vmatmul.f32.gmra.mxu0 %v944
        %v1071 = vpop.f32.mrf.mxu0
        %v1072 = vadd.f32 %v836, %v1071
        %1073 = vmatmul.f32.gmra.mxu0 %v947
        %v1074 = vpop.f32.mrf.mxu0
        %v1075 = vadd.f32 %v839, %v1074
        %1076 = vmatmul.f32.gmra.mxu0 %v950
        %v1077 = vpop.f32.mrf.mxu0
        %v1078 = vadd.f32 %v842, %v1077
        %1079 = vmatmul.f32.gmra.mxu0 %v953
        %v1080 = vpop.f32.mrf.mxu0
        %v1081 = vadd.f32 %v845, %v1080
        %1082 = vmatmul.f32.gmra.mxu0 %v956
        %v1083 = vpop.f32.mrf.mxu0
        %v1084 = vadd.f32 %v848, %v1083
        %1085 = vmatmul.f32.gmra.mxu0 %v959
        %v1086 = vpop.f32.mrf.mxu0
        %v1087 = vadd.f32 %v851, %v1086
        %1088 = vmatmul.f32.gmra.mxu0 %v962
        %v1089 = vpop.f32.mrf.mxu0
        %v1090 = vadd.f32 %v854, %v1089
        %1091 = vmatmul.f32.gmra.mxu0 %v965
        %v1092 = vpop.f32.mrf.mxu0
        %v1093 = vadd.f32 %v857, %v1092
        %1094 = vmatmul.f32.gmra.mxu0 %v968
        %v1095 = vpop.f32.mrf.mxu0
        %v1096 = vadd.f32 %v860, %v1095
        %1097 = vmatmul.f32.gmra.mxu0 %v971
        %v1098 = vpop.f32.mrf.mxu0
        %v1099 = vadd.f32 %v863, %v1098
        %1100 = vmatmul.f32.gmra.mxu0 %v974
        %v1101 = vpop.f32.mrf.mxu0
        %v1102 = vadd.f32 %v866, %v1101
        %1103 = vdwg.mxu0
        %v1104 = vld [vmem:[%s437 + $0x2] sm:$0xff]
        %v1105 = vld [vmem:[%s437 + $0xa] sm:$0xff]
        %v1106 = vld [vmem:[%s437 + $0x12] sm:$0xff]
        %v1107 = vld [vmem:[%s437 + $0x1a] sm:$0xff]
        %v1108 = vld [vmem:[%s437 + $0x22] sm:$0xff]
        %v1109 = vld [vmem:[%s437 + $0x2a] sm:$0xff]
        %v1110 = vld [vmem:[%s437 + $0x32] sm:$0xff]
        %v1111 = vld [vmem:[%s437 + $0x3a] sm:$0xff]
        %v1112 = vld [vmem:[%s437 + $0x42] sm:$0xff]
        %v1113 = vld [vmem:[%s437 + $0x4a] sm:$0xff]
        %v1114 = vld [vmem:[%s437 + $0x52] sm:$0xff]
        %v1115 = vld [vmem:[%s437 + $0x5a] sm:$0xff]
        %v1116 = vld [vmem:[%s437 + $0x62] sm:$0xff]
        %v1117 = vld [vmem:[%s437 + $0x6a] sm:$0xff]
        %v1118 = vld [vmem:[%s437 + $0x72] sm:$0xff]
        %v1119 = vld [vmem:[%s437 + $0x7a] sm:$0xff]
        %v1120 = vld [vmem:[%s437 + $0x82] sm:$0xff]
        %v1121 = vld [vmem:[%s437 + $0x8a] sm:$0xff]
        %v1122 = vld [vmem:[%s437 + $0x92] sm:$0xff]
        %v1123 = vld [vmem:[%s437 + $0x9a] sm:$0xff]
        %v1124 = vld [vmem:[%s437 + $0xa2] sm:$0xff]
        %v1125 = vld [vmem:[%s437 + $0xaa] sm:$0xff]
        %v1126 = vld [vmem:[%s437 + $0xb2] sm:$0xff]
        %v1127 = vld [vmem:[%s437 + $0xba] sm:$0xff]
        %v1128 = vld [vmem:[%s437 + $0xc2] sm:$0xff]
        %v1129 = vld [vmem:[%s437 + $0xca] sm:$0xff]
        %v1130 = vld [vmem:[%s437 + $0xd2] sm:$0xff]
        %v1131 = vld [vmem:[%s437 + $0xda] sm:$0xff]
        %v1132 = vld [vmem:[%s437 + $0xe2] sm:$0xff]
        %v1133 = vld [vmem:[%s437 + $0xea] sm:$0xff]
        %v1134 = vld [vmem:[%s437 + $0xf2] sm:$0xff]
        %v1135 = vld [vmem:[%s437 + $0xfa] sm:$0xff]
        %v1136 = vld [vmem:[%s437 + $0x102] sm:$0xff]
        %v1137 = vld [vmem:[%s437 + $0x10a] sm:$0xff]
        %v1138 = vld [vmem:[%s437 + $0x112] sm:$0xff]
        %v1139 = vld [vmem:[%s437 + $0x11a] sm:$0x3f]
        %s1140 = scalar_lea.vmem %s1, 8
        %v1141 = vld [vmem:[%s1140] sm:$0x7]
        %v1143 = vsel %vm630, %v1104, 0
        %v1146 = vsel %vm630, %v1105, 0
        %v1149 = vsel %vm630, %v1106, 0
        %v1152 = vsel %vm630, %v1107, 0
        %v1155 = vsel %vm630, %v1108, 0
        %v1158 = vsel %vm630, %v1109, 0
        %v1161 = vsel %vm630, %v1110, 0
        %v1164 = vsel %vm630, %v1111, 0
        %v1167 = vsel %vm630, %v1112, 0
        %v1170 = vsel %vm630, %v1113, 0
        %v1173 = vsel %vm630, %v1114, 0
        %v1176 = vsel %vm630, %v1115, 0
        %v1179 = vsel %vm630, %v1116, 0
        %v1182 = vsel %vm630, %v1117, 0
        %v1185 = vsel %vm630, %v1118, 0
        %v1188 = vsel %vm630, %v1119, 0
        %v1191 = vsel %vm630, %v1120, 0
        %v1194 = vsel %vm630, %v1121, 0
        %v1197 = vsel %vm630, %v1122, 0
        %v1200 = vsel %vm630, %v1123, 0
        %v1203 = vsel %vm630, %v1124, 0
        %v1206 = vsel %vm630, %v1125, 0
        %v1209 = vsel %vm630, %v1126, 0
        %v1212 = vsel %vm630, %v1127, 0
        %v1215 = vsel %vm630, %v1128, 0
        %v1218 = vsel %vm630, %v1129, 0
        %v1221 = vsel %vm630, %v1130, 0
        %v1224 = vsel %vm630, %v1131, 0
        %v1227 = vsel %vm630, %v1132, 0
        %v1230 = vsel %vm630, %v1133, 0
        %v1233 = vsel %vm630, %v1134, 0
        %v1236 = vsel %vm630, %v1135, 0
        %v1239 = vsel %vm630, %v1136, 0
        %v1242 = vsel %vm630, %v1137, 0
        %v1245 = vsel %vm630, %v1138, 0
        %v1248 = vsel %vm630, %v1139, 0
        %v1251 = vsel %vm739, %v1141, 0
        %1253 = vmatpush.msra.mxu0 0.0
        %1254 = vmatpush.msra.mxu0 0.0
        %1255 = vmatpush.msra.mxu0 0.0
        %1256 = vmatpush.msra.mxu0 0.0
        %1257 = vmatpush.msra.mxu0 0.0
        %1258 = vmatpush.msra.mxu0 0.0
        %1259 = vmatpush.msra.mxu0 0.0
        %1260 = vmatpush.msra.mxu0 0.0
        %1261 = vmatpush.msra.mxu0 0.0
        %1262 = vmatpush.msra.mxu0 0.0
        %1263 = vmatpush.msra.mxu0 0.0
        %1264 = vmatpush.msra.mxu0 0.0
        %1265 = vmatpush.msra.mxu0 0.0
        %1266 = vmatpush.msra.mxu0 0.0
        %1267 = vmatpush.msra.mxu0 0.0
        %1268 = vmatpush.msra.mxu0 %v1251
        %1269 = vmatmul.f32.gmra.mxu0 %v1143
        %v1270 = vpop.f32.mrf.mxu0
        %v1271 = vadd.f32 0.0, %v1270
        %1272 = vmatmul.f32.gmra.mxu0 %v1146
        %v1273 = vpop.f32.mrf.mxu0
        %v1274 = vadd.f32 0.0, %v1273
        %1275 = vmatmul.f32.gmra.mxu0 %v1149
        %v1276 = vpop.f32.mrf.mxu0
        %v1277 = vadd.f32 0.0, %v1276
        %1278 = vmatmul.f32.gmra.mxu0 %v1152
        %v1279 = vpop.f32.mrf.mxu0
        %v1280 = vadd.f32 0.0, %v1279
        %1281 = vmatmul.f32.gmra.mxu0 %v1155
        %v1282 = vpop.f32.mrf.mxu0
        %v1283 = vadd.f32 0.0, %v1282
        %1284 = vmatmul.f32.gmra.mxu0 %v1158
        %v1285 = vpop.f32.mrf.mxu0
        %v1286 = vadd.f32 0.0, %v1285
        %1287 = vmatmul.f32.gmra.mxu0 %v1161
        %v1288 = vpop.f32.mrf.mxu0
        %v1289 = vadd.f32 0.0, %v1288
        %1290 = vmatmul.f32.gmra.mxu0 %v1164
        %v1291 = vpop.f32.mrf.mxu0
        %v1292 = vadd.f32 0.0, %v1291
        %1293 = vmatmul.f32.gmra.mxu0 %v1167
        %v1294 = vpop.f32.mrf.mxu0
        %v1295 = vadd.f32 0.0, %v1294
        %1296 = vmatmul.f32.gmra.mxu0 %v1170
        %v1297 = vpop.f32.mrf.mxu0
        %v1298 = vadd.f32 0.0, %v1297
        %1299 = vmatmul.f32.gmra.mxu0 %v1173
        %v1300 = vpop.f32.mrf.mxu0
        %v1301 = vadd.f32 0.0, %v1300
        %1302 = vmatmul.f32.gmra.mxu0 %v1176
        %v1303 = vpop.f32.mrf.mxu0
        %v1304 = vadd.f32 0.0, %v1303
        %1305 = vmatmul.f32.gmra.mxu0 %v1179
        %v1306 = vpop.f32.mrf.mxu0
        %v1307 = vadd.f32 0.0, %v1306
        %1308 = vmatmul.f32.gmra.mxu0 %v1182
        %v1309 = vpop.f32.mrf.mxu0
        %v1310 = vadd.f32 0.0, %v1309
        %1311 = vmatmul.f32.gmra.mxu0 %v1185
        %v1312 = vpop.f32.mrf.mxu0
        %v1313 = vadd.f32 0.0, %v1312
        %1314 = vmatmul.f32.gmra.mxu0 %v1188
        %v1315 = vpop.f32.mrf.mxu0
        %v1316 = vadd.f32 0.0, %v1315
        %1317 = vmatmul.f32.gmra.mxu0 %v1191
        %v1318 = vpop.f32.mrf.mxu0
        %v1319 = vadd.f32 0.0, %v1318
        %1320 = vmatmul.f32.gmra.mxu0 %v1194
        %v1321 = vpop.f32.mrf.mxu0
        %v1322 = vadd.f32 0.0, %v1321
        %1323 = vmatmul.f32.gmra.mxu0 %v1197
        %v1324 = vpop.f32.mrf.mxu0
        %v1325 = vadd.f32 0.0, %v1324
        %1326 = vmatmul.f32.gmra.mxu0 %v1200
        %v1327 = vpop.f32.mrf.mxu0
        %v1328 = vadd.f32 0.0, %v1327
        %1329 = vmatmul.f32.gmra.mxu0 %v1203
        %v1330 = vpop.f32.mrf.mxu0
        %v1331 = vadd.f32 0.0, %v1330
        %1332 = vmatmul.f32.gmra.mxu0 %v1206
        %v1333 = vpop.f32.mrf.mxu0
        %v1334 = vadd.f32 0.0, %v1333
        %1335 = vmatmul.f32.gmra.mxu0 %v1209
        %v1336 = vpop.f32.mrf.mxu0
        %v1337 = vadd.f32 0.0, %v1336
        %1338 = vmatmul.f32.gmra.mxu0 %v1212
        %v1339 = vpop.f32.mrf.mxu0
        %v1340 = vadd.f32 0.0, %v1339
        %1341 = vmatmul.f32.gmra.mxu0 %v1215
        %v1342 = vpop.f32.mrf.mxu0
        %v1343 = vadd.f32 0.0, %v1342
        %1344 = vmatmul.f32.gmra.mxu0 %v1218
        %v1345 = vpop.f32.mrf.mxu0
        %v1346 = vadd.f32 0.0, %v1345
        %1347 = vmatmul.f32.gmra.mxu0 %v1221
        %v1348 = vpop.f32.mrf.mxu0
        %v1349 = vadd.f32 0.0, %v1348
        %1350 = vmatmul.f32.gmra.mxu0 %v1224
        %v1351 = vpop.f32.mrf.mxu0
        %v1352 = vadd.f32 0.0, %v1351
        %1353 = vmatmul.f32.gmra.mxu0 %v1227
        %v1354 = vpop.f32.mrf.mxu0
        %v1355 = vadd.f32 0.0, %v1354
        %1356 = vmatmul.f32.gmra.mxu0 %v1230
        %v1357 = vpop.f32.mrf.mxu0
        %v1358 = vadd.f32 0.0, %v1357
        %1359 = vmatmul.f32.gmra.mxu0 %v1233
        %v1360 = vpop.f32.mrf.mxu0
        %v1361 = vadd.f32 0.0, %v1360
        %1362 = vmatmul.f32.gmra.mxu0 %v1236
        %v1363 = vpop.f32.mrf.mxu0
        %v1364 = vadd.f32 0.0, %v1363
        %1365 = vmatmul.f32.gmra.mxu0 %v1239
        %v1366 = vpop.f32.mrf.mxu0
        %v1367 = vadd.f32 0.0, %v1366
        %1368 = vmatmul.f32.gmra.mxu0 %v1242
        %v1369 = vpop.f32.mrf.mxu0
        %v1370 = vadd.f32 0.0, %v1369
        %1371 = vmatmul.f32.gmra.mxu0 %v1245
        %v1372 = vpop.f32.mrf.mxu0
        %v1373 = vadd.f32 0.0, %v1372
        %1374 = vmatmul.f32.gmra.mxu0 %v1248
        %v1375 = vpop.f32.mrf.mxu0
        %v1376 = vadd.f32 0.0, %v1375
        %1377 = vdwg.mxu0
        %v1378 = vadd.f32 %v997, %v1271
        %v1379 = vadd.f32 %v1000, %v1274
        %v1380 = vadd.f32 %v1003, %v1277
        %v1381 = vadd.f32 %v1006, %v1280
        %v1382 = vadd.f32 %v1009, %v1283
        %v1383 = vadd.f32 %v1012, %v1286
        %v1384 = vadd.f32 %v1015, %v1289
        %v1385 = vadd.f32 %v1018, %v1292
        %v1386 = vadd.f32 %v1021, %v1295
        %v1387 = vadd.f32 %v1024, %v1298
        %v1388 = vadd.f32 %v1027, %v1301
        %v1389 = vadd.f32 %v1030, %v1304
        %v1390 = vadd.f32 %v1033, %v1307
        %v1391 = vadd.f32 %v1036, %v1310
        %v1392 = vadd.f32 %v1039, %v1313
        %v1393 = vadd.f32 %v1042, %v1316
        %v1394 = vadd.f32 %v1045, %v1319
        %v1395 = vadd.f32 %v1048, %v1322
        %v1396 = vadd.f32 %v1051, %v1325
        %v1397 = vadd.f32 %v1054, %v1328
        %v1398 = vadd.f32 %v1057, %v1331
        %v1399 = vadd.f32 %v1060, %v1334
        %v1400 = vadd.f32 %v1063, %v1337
        %v1401 = vadd.f32 %v1066, %v1340
        %v1402 = vadd.f32 %v1069, %v1343
        %v1403 = vadd.f32 %v1072, %v1346
        %v1404 = vadd.f32 %v1075, %v1349
        %v1405 = vadd.f32 %v1078, %v1352
        %v1406 = vadd.f32 %v1081, %v1355
        %v1407 = vadd.f32 %v1084, %v1358
        %v1408 = vadd.f32 %v1087, %v1361
        %v1409 = vadd.f32 %v1090, %v1364
        %v1410 = vadd.f32 %v1093, %v1367
        %v1411 = vadd.f32 %v1096, %v1370
        %v1412 = vadd.f32 %v1099, %v1373
        %v1413 = vadd.f32 %v1102, %v1376
        %v1414 = vld [vmem:[%s437 + $0x12] sm:$0xff]
        %v1415 = vld [vmem:[%s437 + $0x1a] sm:$0xff]
        %v1416 = vld [vmem:[%s437 + $0x22] sm:$0xff]
        %v1417 = vld [vmem:[%s437 + $0x2a] sm:$0xff]
        %v1418 = vld [vmem:[%s437 + $0x32] sm:$0xff]
        %v1419 = vld [vmem:[%s437 + $0x3a] sm:$0xff]
        %v1420 = vld [vmem:[%s437 + $0x42] sm:$0xff]
        %v1421 = vld [vmem:[%s437 + $0x4a] sm:$0xff]
        %v1422 = vld [vmem:[%s437 + $0x52] sm:$0xff]
        %v1423 = vld [vmem:[%s437 + $0x5a] sm:$0xff]
        %v1424 = vld [vmem:[%s437 + $0x62] sm:$0xff]
        %v1425 = vld [vmem:[%s437 + $0x6a] sm:$0xff]
        %v1426 = vld [vmem:[%s437 + $0x72] sm:$0xff]
        %v1427 = vld [vmem:[%s437 + $0x7a] sm:$0xff]
        %v1428 = vld [vmem:[%s437 + $0x82] sm:$0xff]
        %v1429 = vld [vmem:[%s437 + $0x8a] sm:$0xff]
        %v1430 = vld [vmem:[%s437 + $0x92] sm:$0xff]
        %v1431 = vld [vmem:[%s437 + $0x9a] sm:$0xff]
        %v1432 = vld [vmem:[%s437 + $0xa2] sm:$0xff]
        %v1433 = vld [vmem:[%s437 + $0xaa] sm:$0xff]
        %v1434 = vld [vmem:[%s437 + $0xb2] sm:$0xff]
        %v1435 = vld [vmem:[%s437 + $0xba] sm:$0xff]
        %v1436 = vld [vmem:[%s437 + $0xc2] sm:$0xff]
        %v1437 = vld [vmem:[%s437 + $0xca] sm:$0xff]
        %v1438 = vld [vmem:[%s437 + $0xd2] sm:$0xff]
        %v1439 = vld [vmem:[%s437 + $0xda] sm:$0xff]
        %v1440 = vld [vmem:[%s437 + $0xe2] sm:$0xff]
        %v1441 = vld [vmem:[%s437 + $0xea] sm:$0xff]
        %v1442 = vld [vmem:[%s437 + $0xf2] sm:$0xff]
        %v1443 = vld [vmem:[%s437 + $0xfa] sm:$0xff]
        %v1444 = vld [vmem:[%s437 + $0x102] sm:$0xff]
        %v1445 = vld [vmem:[%s437 + $0x10a] sm:$0xff]
        %v1446 = vld [vmem:[%s437 + $0x112] sm:$0xff]
        %v1447 = vld [vmem:[%s437 + $0x11a] sm:$0xff]
        %v1448 = vld [vmem:[%s437 + $0x122] sm:$0xff]
        %v1449 = vld [vmem:[%s437 + $0x12a] sm:$0x3f]
        %s1450 = scalar_lea.vmem %s1, 12
        %v1451 = vld [vmem:[%s1450] sm:$0x7]
        %v1453 = vsel %vm630, %v1414, 0
        %v1456 = vsel %vm630, %v1415, 0
        %v1459 = vsel %vm630, %v1416, 0
        %v1462 = vsel %vm630, %v1417, 0
        %v1465 = vsel %vm630, %v1418, 0
        %v1468 = vsel %vm630, %v1419, 0
        %v1471 = vsel %vm630, %v1420, 0
        %v1474 = vsel %vm630, %v1421, 0
        %v1477 = vsel %vm630, %v1422, 0
        %v1480 = vsel %vm630, %v1423, 0
        %v1483 = vsel %vm630, %v1424, 0
        %v1486 = vsel %vm630, %v1425, 0
        %v1489 = vsel %vm630, %v1426, 0
        %v1492 = vsel %vm630, %v1427, 0
        %v1495 = vsel %vm630, %v1428, 0
        %v1498 = vsel %vm630, %v1429, 0
        %v1501 = vsel %vm630, %v1430, 0
        %v1504 = vsel %vm630, %v1431, 0
        %v1507 = vsel %vm630, %v1432, 0
        %v1510 = vsel %vm630, %v1433, 0
        %v1513 = vsel %vm630, %v1434, 0
        %v1516 = vsel %vm630, %v1435, 0
        %v1519 = vsel %vm630, %v1436, 0
        %v1522 = vsel %vm630, %v1437, 0
        %v1525 = vsel %vm630, %v1438, 0
        %v1528 = vsel %vm630, %v1439, 0
        %v1531 = vsel %vm630, %v1440, 0
        %v1534 = vsel %vm630, %v1441, 0
        %v1537 = vsel %vm630, %v1442, 0
        %v1540 = vsel %vm630, %v1443, 0
        %v1543 = vsel %vm630, %v1444, 0
        %v1546 = vsel %vm630, %v1445, 0
        %v1549 = vsel %vm630, %v1446, 0
        %v1552 = vsel %vm630, %v1447, 0
        %v1555 = vsel %vm630, %v1448, 0
        %v1558 = vsel %vm630, %v1449, 0
        %v1561 = vsel %vm739, %v1451, 0
        %1563 = vmatpush.msra.mxu0 0.0
        %1564 = vmatpush.msra.mxu0 0.0
        %1565 = vmatpush.msra.mxu0 0.0
        %1566 = vmatpush.msra.mxu0 0.0
        %1567 = vmatpush.msra.mxu0 0.0
        %1568 = vmatpush.msra.mxu0 0.0
        %1569 = vmatpush.msra.mxu0 0.0
        %1570 = vmatpush.msra.mxu0 0.0
        %1571 = vmatpush.msra.mxu0 0.0
        %1572 = vmatpush.msra.mxu0 0.0
        %1573 = vmatpush.msra.mxu0 0.0
        %1574 = vmatpush.msra.mxu0 0.0
        %1575 = vmatpush.msra.mxu0 0.0
        %1576 = vmatpush.msra.mxu0 0.0
        %1577 = vmatpush.msra.mxu0 0.0
        %1578 = vmatpush.msra.mxu0 %v1561
        %1579 = vmatmul.f32.gmra.mxu0 %v1453
        %v1580 = vpop.f32.mrf.mxu0
        %v1581 = vadd.f32 0.0, %v1580
        %1582 = vmatmul.f32.gmra.mxu0 %v1456
        %v1583 = vpop.f32.mrf.mxu0
        %v1584 = vadd.f32 0.0, %v1583
        %1585 = vmatmul.f32.gmra.mxu0 %v1459
        %v1586 = vpop.f32.mrf.mxu0
        %v1587 = vadd.f32 0.0, %v1586
        %1588 = vmatmul.f32.gmra.mxu0 %v1462
        %v1589 = vpop.f32.mrf.mxu0
        %v1590 = vadd.f32 0.0, %v1589
        %1591 = vmatmul.f32.gmra.mxu0 %v1465
        %v1592 = vpop.f32.mrf.mxu0
        %v1593 = vadd.f32 0.0, %v1592
        %1594 = vmatmul.f32.gmra.mxu0 %v1468
        %v1595 = vpop.f32.mrf.mxu0
        %v1596 = vadd.f32 0.0, %v1595
        %1597 = vmatmul.f32.gmra.mxu0 %v1471
        %v1598 = vpop.f32.mrf.mxu0
        %v1599 = vadd.f32 0.0, %v1598
        %1600 = vmatmul.f32.gmra.mxu0 %v1474
        %v1601 = vpop.f32.mrf.mxu0
        %v1602 = vadd.f32 0.0, %v1601
        %1603 = vmatmul.f32.gmra.mxu0 %v1477
        %v1604 = vpop.f32.mrf.mxu0
        %v1605 = vadd.f32 0.0, %v1604
        %1606 = vmatmul.f32.gmra.mxu0 %v1480
        %v1607 = vpop.f32.mrf.mxu0
        %v1608 = vadd.f32 0.0, %v1607
        %1609 = vmatmul.f32.gmra.mxu0 %v1483
        %v1610 = vpop.f32.mrf.mxu0
        %v1611 = vadd.f32 0.0, %v1610
        %1612 = vmatmul.f32.gmra.mxu0 %v1486
        %v1613 = vpop.f32.mrf.mxu0
        %v1614 = vadd.f32 0.0, %v1613
        %1615 = vmatmul.f32.gmra.mxu0 %v1489
        %v1616 = vpop.f32.mrf.mxu0
        %v1617 = vadd.f32 0.0, %v1616
        %1618 = vmatmul.f32.gmra.mxu0 %v1492
        %v1619 = vpop.f32.mrf.mxu0
        %v1620 = vadd.f32 0.0, %v1619
        %1621 = vmatmul.f32.gmra.mxu0 %v1495
        %v1622 = vpop.f32.mrf.mxu0
        %v1623 = vadd.f32 0.0, %v1622
        %1624 = vmatmul.f32.gmra.mxu0 %v1498
        %v1625 = vpop.f32.mrf.mxu0
        %v1626 = vadd.f32 0.0, %v1625
        %1627 = vmatmul.f32.gmra.mxu0 %v1501
        %v1628 = vpop.f32.mrf.mxu0
        %v1629 = vadd.f32 0.0, %v1628
        %1630 = vmatmul.f32.gmra.mxu0 %v1504
        %v1631 = vpop.f32.mrf.mxu0
        %v1632 = vadd.f32 0.0, %v1631
        %1633 = vmatmul.f32.gmra.mxu0 %v1507
        %v1634 = vpop.f32.mrf.mxu0
        %v1635 = vadd.f32 0.0, %v1634
        %1636 = vmatmul.f32.gmra.mxu0 %v1510
        %v1637 = vpop.f32.mrf.mxu0
        %v1638 = vadd.f32 0.0, %v1637
        %1639 = vmatmul.f32.gmra.mxu0 %v1513
        %v1640 = vpop.f32.mrf.mxu0
        %v1641 = vadd.f32 0.0, %v1640
        %1642 = vmatmul.f32.gmra.mxu0 %v1516
        %v1643 = vpop.f32.mrf.mxu0
        %v1644 = vadd.f32 0.0, %v1643
        %1645 = vmatmul.f32.gmra.mxu0 %v1519
        %v1646 = vpop.f32.mrf.mxu0
        %v1647 = vadd.f32 0.0, %v1646
        %1648 = vmatmul.f32.gmra.mxu0 %v1522
        %v1649 = vpop.f32.mrf.mxu0
        %v1650 = vadd.f32 0.0, %v1649
        %1651 = vmatmul.f32.gmra.mxu0 %v1525
        %v1652 = vpop.f32.mrf.mxu0
        %v1653 = vadd.f32 0.0, %v1652
        %1654 = vmatmul.f32.gmra.mxu0 %v1528
        %v1655 = vpop.f32.mrf.mxu0
        %v1656 = vadd.f32 0.0, %v1655
        %1657 = vmatmul.f32.gmra.mxu0 %v1531
        %v1658 = vpop.f32.mrf.mxu0
        %v1659 = vadd.f32 0.0, %v1658
        %1660 = vmatmul.f32.gmra.mxu0 %v1534
        %v1661 = vpop.f32.mrf.mxu0
        %v1662 = vadd.f32 0.0, %v1661
        %1663 = vmatmul.f32.gmra.mxu0 %v1537
        %v1664 = vpop.f32.mrf.mxu0
        %v1665 = vadd.f32 0.0, %v1664
        %1666 = vmatmul.f32.gmra.mxu0 %v1540
        %v1667 = vpop.f32.mrf.mxu0
        %v1668 = vadd.f32 0.0, %v1667
        %1669 = vmatmul.f32.gmra.mxu0 %v1543
        %v1670 = vpop.f32.mrf.mxu0
        %v1671 = vadd.f32 0.0, %v1670
        %1672 = vmatmul.f32.gmra.mxu0 %v1546
        %v1673 = vpop.f32.mrf.mxu0
        %v1674 = vadd.f32 0.0, %v1673
        %1675 = vmatmul.f32.gmra.mxu0 %v1549
        %v1676 = vpop.f32.mrf.mxu0
        %v1677 = vadd.f32 0.0, %v1676
        %1678 = vmatmul.f32.gmra.mxu0 %v1552
        %v1679 = vpop.f32.mrf.mxu0
        %v1680 = vadd.f32 0.0, %v1679
        %1681 = vmatmul.f32.gmra.mxu0 %v1555
        %v1682 = vpop.f32.mrf.mxu0
        %v1683 = vadd.f32 0.0, %v1682
        %1684 = vmatmul.f32.gmra.mxu0 %v1558
        %v1685 = vpop.f32.mrf.mxu0
        %v1686 = vadd.f32 0.0, %v1685
        %1687 = vdwg.mxu0
        %v1688 = vadd.f32 %v1378, %v1581
        %v1689 = vadd.f32 %v1379, %v1584
        %v1690 = vadd.f32 %v1380, %v1587
        %v1691 = vadd.f32 %v1381, %v1590
        %v1692 = vadd.f32 %v1382, %v1593
        %v1693 = vadd.f32 %v1383, %v1596
        %v1694 = vadd.f32 %v1384, %v1599
        %v1695 = vadd.f32 %v1385, %v1602
        %v1696 = vadd.f32 %v1386, %v1605
        %v1697 = vadd.f32 %v1387, %v1608
        %v1698 = vadd.f32 %v1388, %v1611
        %v1699 = vadd.f32 %v1389, %v1614
        %v1700 = vadd.f32 %v1390, %v1617
        %v1701 = vadd.f32 %v1391, %v1620
        %v1702 = vadd.f32 %v1392, %v1623
        %v1703 = vadd.f32 %v1393, %v1626
        %v1704 = vadd.f32 %v1394, %v1629
        %v1705 = vadd.f32 %v1395, %v1632
        %v1706 = vadd.f32 %v1396, %v1635
        %v1707 = vadd.f32 %v1397, %v1638
        %v1708 = vadd.f32 %v1398, %v1641
        %v1709 = vadd.f32 %v1399, %v1644
        %v1710 = vadd.f32 %v1400, %v1647
        %v1711 = vadd.f32 %v1401, %v1650
        %v1712 = vadd.f32 %v1402, %v1653
        %v1713 = vadd.f32 %v1403, %v1656
        %v1714 = vadd.f32 %v1404, %v1659
        %v1715 = vadd.f32 %v1405, %v1662
        %v1716 = vadd.f32 %v1406, %v1665
        %v1717 = vadd.f32 %v1407, %v1668
        %v1718 = vadd.f32 %v1408, %v1671
        %v1719 = vadd.f32 %v1409, %v1674
        %v1720 = vadd.f32 %v1410, %v1677
        %v1721 = vadd.f32 %v1411, %v1680
        %v1722 = vadd.f32 %v1412, %v1683
        %v1723 = vadd.f32 %v1413, %v1686
        %v1724 = vld [vmem:[%s437 + $0x13] sm:$0xff]
        %v1725 = vld [vmem:[%s437 + $0x1b] sm:$0xff]
        %v1726 = vld [vmem:[%s437 + $0x23] sm:$0xff]
        %v1727 = vld [vmem:[%s437 + $0x2b] sm:$0xff]
        %v1728 = vld [vmem:[%s437 + $0x33] sm:$0xff]
        %v1729 = vld [vmem:[%s437 + $0x3b] sm:$0xff]
        %v1730 = vld [vmem:[%s437 + $0x43] sm:$0xff]
        %v1731 = vld [vmem:[%s437 + $0x4b] sm:$0xff]
        %v1732 = vld [vmem:[%s437 + $0x53] sm:$0xff]
        %v1733 = vld [vmem:[%s437 + $0x5b] sm:$0xff]
        %v1734 = vld [vmem:[%s437 + $0x63] sm:$0xff]
        %v1735 = vld [vmem:[%s437 + $0x6b] sm:$0xff]
        %v1736 = vld [vmem:[%s437 + $0x73] sm:$0xff]
        %v1737 = vld [vmem:[%s437 + $0x7b] sm:$0xff]
        %v1738 = vld [vmem:[%s437 + $0x83] sm:$0xff]
        %v1739 = vld [vmem:[%s437 + $0x8b] sm:$0xff]
        %v1740 = vld [vmem:[%s437 + $0x93] sm:$0xff]
        %v1741 = vld [vmem:[%s437 + $0x9b] sm:$0xff]
        %v1742 = vld [vmem:[%s437 + $0xa3] sm:$0xff]
        %v1743 = vld [vmem:[%s437 + $0xab] sm:$0xff]
        %v1744 = vld [vmem:[%s437 + $0xb3] sm:$0xff]
        %v1745 = vld [vmem:[%s437 + $0xbb] sm:$0xff]
        %v1746 = vld [vmem:[%s437 + $0xc3] sm:$0xff]
        %v1747 = vld [vmem:[%s437 + $0xcb] sm:$0xff]
        %v1748 = vld [vmem:[%s437 + $0xd3] sm:$0xff]
        %v1749 = vld [vmem:[%s437 + $0xdb] sm:$0xff]
        %v1750 = vld [vmem:[%s437 + $0xe3] sm:$0xff]
        %v1751 = vld [vmem:[%s437 + $0xeb] sm:$0xff]
        %v1752 = vld [vmem:[%s437 + $0xf3] sm:$0xff]
        %v1753 = vld [vmem:[%s437 + $0xfb] sm:$0xff]
        %v1754 = vld [vmem:[%s437 + $0x103] sm:$0xff]
        %v1755 = vld [vmem:[%s437 + $0x10b] sm:$0xff]
        %v1756 = vld [vmem:[%s437 + $0x113] sm:$0xff]
        %v1757 = vld [vmem:[%s437 + $0x11b] sm:$0xff]
        %v1758 = vld [vmem:[%s437 + $0x123] sm:$0xff]
        %v1759 = vld [vmem:[%s437 + $0x12b] sm:$0x3f]
        %s1760 = scalar_lea.vmem %s1, 16
        %v1761 = vld [vmem:[%s1760] sm:$0x7]
        %v1763 = vsel %vm630, %v1724, 0
        %v1766 = vsel %vm630, %v1725, 0
        %v1769 = vsel %vm630, %v1726, 0
        %v1772 = vsel %vm630, %v1727, 0
        %v1775 = vsel %vm630, %v1728, 0
        %v1778 = vsel %vm630, %v1729, 0
        %v1781 = vsel %vm630, %v1730, 0
        %v1784 = vsel %vm630, %v1731, 0
        %v1787 = vsel %vm630, %v1732, 0
        %v1790 = vsel %vm630, %v1733, 0
        %v1793 = vsel %vm630, %v1734, 0
        %v1796 = vsel %vm630, %v1735, 0
        %v1799 = vsel %vm630, %v1736, 0
        %v1802 = vsel %vm630, %v1737, 0
        %v1805 = vsel %vm630, %v1738, 0
        %v1808 = vsel %vm630, %v1739, 0
        %v1811 = vsel %vm630, %v1740, 0
        %v1814 = vsel %vm630, %v1741, 0
        %v1817 = vsel %vm630, %v1742, 0
        %v1820 = vsel %vm630, %v1743, 0
        %v1823 = vsel %vm630, %v1744, 0
        %v1826 = vsel %vm630, %v1745, 0
        %v1829 = vsel %vm630, %v1746, 0
        %v1832 = vsel %vm630, %v1747, 0
        %v1835 = vsel %vm630, %v1748, 0
        %v1838 = vsel %vm630, %v1749, 0
        %v1841 = vsel %vm630, %v1750, 0
        %v1844 = vsel %vm630, %v1751, 0
        %v1847 = vsel %vm630, %v1752, 0
        %v1850 = vsel %vm630, %v1753, 0
        %v1853 = vsel %vm630, %v1754, 0
        %v1856 = vsel %vm630, %v1755, 0
        %v1859 = vsel %vm630, %v1756, 0
        %v1862 = vsel %vm630, %v1757, 0
        %v1865 = vsel %vm630, %v1758, 0
        %v1868 = vsel %vm630, %v1759, 0
        %v1871 = vsel %vm739, %v1761, 0
        %1873 = vmatpush.msra.mxu0 0.0
        %1874 = vmatpush.msra.mxu0 0.0
        %1875 = vmatpush.msra.mxu0 0.0
        %1876 = vmatpush.msra.mxu0 0.0
        %1877 = vmatpush.msra.mxu0 0.0
        %1878 = vmatpush.msra.mxu0 0.0
        %1879 = vmatpush.msra.mxu0 0.0
        %1880 = vmatpush.msra.mxu0 0.0
        %1881 = vmatpush.msra.mxu0 0.0
        %1882 = vmatpush.msra.mxu0 0.0
        %1883 = vmatpush.msra.mxu0 0.0
        %1884 = vmatpush.msra.mxu0 0.0
        %1885 = vmatpush.msra.mxu0 0.0
        %1886 = vmatpush.msra.mxu0 0.0
        %1887 = vmatpush.msra.mxu0 0.0
        %1888 = vmatpush.msra.mxu0 %v1871
        %1889 = vmatmul.f32.gmra.mxu0 %v1763
        %v1890 = vpop.f32.mrf.mxu0
        %v1891 = vadd.f32 0.0, %v1890
        %1892 = vmatmul.f32.gmra.mxu0 %v1766
        %v1893 = vpop.f32.mrf.mxu0
        %v1894 = vadd.f32 0.0, %v1893
        %1895 = vmatmul.f32.gmra.mxu0 %v1769
        %v1896 = vpop.f32.mrf.mxu0
        %v1897 = vadd.f32 0.0, %v1896
        %1898 = vmatmul.f32.gmra.mxu0 %v1772
        %v1899 = vpop.f32.mrf.mxu0
        %v1900 = vadd.f32 0.0, %v1899
        %1901 = vmatmul.f32.gmra.mxu0 %v1775
        %v1902 = vpop.f32.mrf.mxu0
        %v1903 = vadd.f32 0.0, %v1902
        %1904 = vmatmul.f32.gmra.mxu0 %v1778
        %v1905 = vpop.f32.mrf.mxu0
        %v1906 = vadd.f32 0.0, %v1905
        %1907 = vmatmul.f32.gmra.mxu0 %v1781
        %v1908 = vpop.f32.mrf.mxu0
        %v1909 = vadd.f32 0.0, %v1908
        %1910 = vmatmul.f32.gmra.mxu0 %v1784
        %v1911 = vpop.f32.mrf.mxu0
        %v1912 = vadd.f32 0.0, %v1911
        %1913 = vmatmul.f32.gmra.mxu0 %v1787
        %v1914 = vpop.f32.mrf.mxu0
        %v1915 = vadd.f32 0.0, %v1914
        %1916 = vmatmul.f32.gmra.mxu0 %v1790
        %v1917 = vpop.f32.mrf.mxu0
        %v1918 = vadd.f32 0.0, %v1917
        %1919 = vmatmul.f32.gmra.mxu0 %v1793
        %v1920 = vpop.f32.mrf.mxu0
        %v1921 = vadd.f32 0.0, %v1920
        %1922 = vmatmul.f32.gmra.mxu0 %v1796
        %v1923 = vpop.f32.mrf.mxu0
        %v1924 = vadd.f32 0.0, %v1923
        %1925 = vmatmul.f32.gmra.mxu0 %v1799
        %v1926 = vpop.f32.mrf.mxu0
        %v1927 = vadd.f32 0.0, %v1926
        %1928 = vmatmul.f32.gmra.mxu0 %v1802
        %v1929 = vpop.f32.mrf.mxu0
        %v1930 = vadd.f32 0.0, %v1929
        %1931 = vmatmul.f32.gmra.mxu0 %v1805
        %v1932 = vpop.f32.mrf.mxu0
        %v1933 = vadd.f32 0.0, %v1932
        %1934 = vmatmul.f32.gmra.mxu0 %v1808
        %v1935 = vpop.f32.mrf.mxu0
        %v1936 = vadd.f32 0.0, %v1935
        %1937 = vmatmul.f32.gmra.mxu0 %v1811
        %v1938 = vpop.f32.mrf.mxu0
        %v1939 = vadd.f32 0.0, %v1938
        %1940 = vmatmul.f32.gmra.mxu0 %v1814
        %v1941 = vpop.f32.mrf.mxu0
        %v1942 = vadd.f32 0.0, %v1941
        %1943 = vmatmul.f32.gmra.mxu0 %v1817
        %v1944 = vpop.f32.mrf.mxu0
        %v1945 = vadd.f32 0.0, %v1944
        %1946 = vmatmul.f32.gmra.mxu0 %v1820
        %v1947 = vpop.f32.mrf.mxu0
        %v1948 = vadd.f32 0.0, %v1947
        %1949 = vmatmul.f32.gmra.mxu0 %v1823
        %v1950 = vpop.f32.mrf.mxu0
        %v1951 = vadd.f32 0.0, %v1950
        %1952 = vmatmul.f32.gmra.mxu0 %v1826
        %v1953 = vpop.f32.mrf.mxu0
        %v1954 = vadd.f32 0.0, %v1953
        %1955 = vmatmul.f32.gmra.mxu0 %v1829
        %v1956 = vpop.f32.mrf.mxu0
        %v1957 = vadd.f32 0.0, %v1956
        %1958 = vmatmul.f32.gmra.mxu0 %v1832
        %v1959 = vpop.f32.mrf.mxu0
        %v1960 = vadd.f32 0.0, %v1959
        %1961 = vmatmul.f32.gmra.mxu0 %v1835
        %v1962 = vpop.f32.mrf.mxu0
        %v1963 = vadd.f32 0.0, %v1962
        %1964 = vmatmul.f32.gmra.mxu0 %v1838
        %v1965 = vpop.f32.mrf.mxu0
        %v1966 = vadd.f32 0.0, %v1965
        %1967 = vmatmul.f32.gmra.mxu0 %v1841
        %v1968 = vpop.f32.mrf.mxu0
        %v1969 = vadd.f32 0.0, %v1968
        %1970 = vmatmul.f32.gmra.mxu0 %v1844
        %v1971 = vpop.f32.mrf.mxu0
        %v1972 = vadd.f32 0.0, %v1971
        %1973 = vmatmul.f32.gmra.mxu0 %v1847
        %v1974 = vpop.f32.mrf.mxu0
        %v1975 = vadd.f32 0.0, %v1974
        %1976 = vmatmul.f32.gmra.mxu0 %v1850
        %v1977 = vpop.f32.mrf.mxu0
        %v1978 = vadd.f32 0.0, %v1977
        %1979 = vmatmul.f32.gmra.mxu0 %v1853
        %v1980 = vpop.f32.mrf.mxu0
        %v1981 = vadd.f32 0.0, %v1980
        %1982 = vmatmul.f32.gmra.mxu0 %v1856
        %v1983 = vpop.f32.mrf.mxu0
        %v1984 = vadd.f32 0.0, %v1983
        %1985 = vmatmul.f32.gmra.mxu0 %v1859
        %v1986 = vpop.f32.mrf.mxu0
        %v1987 = vadd.f32 0.0, %v1986
        %1988 = vmatmul.f32.gmra.mxu0 %v1862
        %v1989 = vpop.f32.mrf.mxu0
        %v1990 = vadd.f32 0.0, %v1989
        %1991 = vmatmul.f32.gmra.mxu0 %v1865
        %v1992 = vpop.f32.mrf.mxu0
        %v1993 = vadd.f32 0.0, %v1992
        %1994 = vmatmul.f32.gmra.mxu0 %v1868
        %v1995 = vpop.f32.mrf.mxu0
        %v1996 = vadd.f32 0.0, %v1995
        %1997 = vdwg.mxu0
        %v1998 = vadd.f32 %v1688, %v1891
        %v1999 = vadd.f32 %v1689, %v1894
        %v2000 = vadd.f32 %v1690, %v1897
        %v2001 = vadd.f32 %v1691, %v1900
        %v2002 = vadd.f32 %v1692, %v1903
        %v2003 = vadd.f32 %v1693, %v1906
        %v2004 = vadd.f32 %v1694, %v1909
        %v2005 = vadd.f32 %v1695, %v1912
        %v2006 = vadd.f32 %v1696, %v1915
        %v2007 = vadd.f32 %v1697, %v1918
        %v2008 = vadd.f32 %v1698, %v1921
        %v2009 = vadd.f32 %v1699, %v1924
        %v2010 = vadd.f32 %v1700, %v1927
        %v2011 = vadd.f32 %v1701, %v1930
        %v2012 = vadd.f32 %v1702, %v1933
        %v2013 = vadd.f32 %v1703, %v1936
        %v2014 = vadd.f32 %v1704, %v1939
        %v2015 = vadd.f32 %v1705, %v1942
        %v2016 = vadd.f32 %v1706, %v1945
        %v2017 = vadd.f32 %v1707, %v1948
        %v2018 = vadd.f32 %v1708, %v1951
        %v2019 = vadd.f32 %v1709, %v1954
        %v2020 = vadd.f32 %v1710, %v1957
        %v2021 = vadd.f32 %v1711, %v1960
        %v2022 = vadd.f32 %v1712, %v1963
        %v2023 = vadd.f32 %v1713, %v1966
        %v2024 = vadd.f32 %v1714, %v1969
        %v2025 = vadd.f32 %v1715, %v1972
        %v2026 = vadd.f32 %v1716, %v1975
        %v2027 = vadd.f32 %v1717, %v1978
        %v2028 = vadd.f32 %v1718, %v1981
        %v2029 = vadd.f32 %v1719, %v1984
        %v2030 = vadd.f32 %v1720, %v1987
        %v2031 = vadd.f32 %v1721, %v1990
        %v2032 = vadd.f32 %v1722, %v1993
        %v2033 = vadd.f32 %v1723, %v1996
        %v2034 = vld [vmem:[%s437 + $0x14] sm:$0xff]
        %v2035 = vld [vmem:[%s437 + $0x1c] sm:$0xff]
        %v2036 = vld [vmem:[%s437 + $0x24] sm:$0xff]
        %v2037 = vld [vmem:[%s437 + $0x2c] sm:$0xff]
        %v2038 = vld [vmem:[%s437 + $0x34] sm:$0xff]
        %v2039 = vld [vmem:[%s437 + $0x3c] sm:$0xff]
        %v2040 = vld [vmem:[%s437 + $0x44] sm:$0xff]
        %v2041 = vld [vmem:[%s437 + $0x4c] sm:$0xff]
        %v2042 = vld [vmem:[%s437 + $0x54] sm:$0xff]
        %v2043 = vld [vmem:[%s437 + $0x5c] sm:$0xff]
        %v2044 = vld [vmem:[%s437 + $0x64] sm:$0xff]
        %v2045 = vld [vmem:[%s437 + $0x6c] sm:$0xff]
        %v2046 = vld [vmem:[%s437 + $0x74] sm:$0xff]
        %v2047 = vld [vmem:[%s437 + $0x7c] sm:$0xff]
        %v2048 = vld [vmem:[%s437 + $0x84] sm:$0xff]
        %v2049 = vld [vmem:[%s437 + $0x8c] sm:$0xff]
        %v2050 = vld [vmem:[%s437 + $0x94] sm:$0xff]
        %v2051 = vld [vmem:[%s437 + $0x9c] sm:$0xff]
        %v2052 = vld [vmem:[%s437 + $0xa4] sm:$0xff]
        %v2053 = vld [vmem:[%s437 + $0xac] sm:$0xff]
        %v2054 = vld [vmem:[%s437 + $0xb4] sm:$0xff]
        %v2055 = vld [vmem:[%s437 + $0xbc] sm:$0xff]
        %v2056 = vld [vmem:[%s437 + $0xc4] sm:$0xff]
        %v2057 = vld [vmem:[%s437 + $0xcc] sm:$0xff]
        %v2058 = vld [vmem:[%s437 + $0xd4] sm:$0xff]
        %v2059 = vld [vmem:[%s437 + $0xdc] sm:$0xff]
        %v2060 = vld [vmem:[%s437 + $0xe4] sm:$0xff]
        %v2061 = vld [vmem:[%s437 + $0xec] sm:$0xff]
        %v2062 = vld [vmem:[%s437 + $0xf4] sm:$0xff]
        %v2063 = vld [vmem:[%s437 + $0xfc] sm:$0xff]
        %v2064 = vld [vmem:[%s437 + $0x104] sm:$0xff]
        %v2065 = vld [vmem:[%s437 + $0x10c] sm:$0xff]
        %v2066 = vld [vmem:[%s437 + $0x114] sm:$0xff]
        %v2067 = vld [vmem:[%s437 + $0x11c] sm:$0xff]
        %v2068 = vld [vmem:[%s437 + $0x124] sm:$0xff]
        %v2069 = vld [vmem:[%s437 + $0x12c] sm:$0x3f]
        %s2070 = scalar_lea.vmem %s1, 20
        %v2071 = vld [vmem:[%s2070] sm:$0x7]
        %v2073 = vsel %vm630, %v2034, 0
        %v2076 = vsel %vm630, %v2035, 0
        %v2079 = vsel %vm630, %v2036, 0
        %v2082 = vsel %vm630, %v2037, 0
        %v2085 = vsel %vm630, %v2038, 0
        %v2088 = vsel %vm630, %v2039, 0
        %v2091 = vsel %vm630, %v2040, 0
        %v2094 = vsel %vm630, %v2041, 0
        %v2097 = vsel %vm630, %v2042, 0
        %v2100 = vsel %vm630, %v2043, 0
        %v2103 = vsel %vm630, %v2044, 0
        %v2106 = vsel %vm630, %v2045, 0
        %v2109 = vsel %vm630, %v2046, 0
        %v2112 = vsel %vm630, %v2047, 0
        %v2115 = vsel %vm630, %v2048, 0
        %v2118 = vsel %vm630, %v2049, 0
        %v2121 = vsel %vm630, %v2050, 0
        %v2124 = vsel %vm630, %v2051, 0
        %v2127 = vsel %vm630, %v2052, 0
        %v2130 = vsel %vm630, %v2053, 0
        %v2133 = vsel %vm630, %v2054, 0
        %v2136 = vsel %vm630, %v2055, 0
        %v2139 = vsel %vm630, %v2056, 0
        %v2142 = vsel %vm630, %v2057, 0
        %v2145 = vsel %vm630, %v2058, 0
        %v2148 = vsel %vm630, %v2059, 0
        %v2151 = vsel %vm630, %v2060, 0
        %v2154 = vsel %vm630, %v2061, 0
        %v2157 = vsel %vm630, %v2062, 0
        %v2160 = vsel %vm630, %v2063, 0
        %v2163 = vsel %vm630, %v2064, 0
        %v2166 = vsel %vm630, %v2065, 0
        %v2169 = vsel %vm630, %v2066, 0
        %v2172 = vsel %vm630, %v2067, 0
        %v2175 = vsel %vm630, %v2068, 0
        %v2178 = vsel %vm630, %v2069, 0
        %v2181 = vsel %vm739, %v2071, 0
        %2183 = vmatpush.msra.mxu0 0.0
        %2184 = vmatpush.msra.mxu0 0.0
        %2185 = vmatpush.msra.mxu0 0.0
        %2186 = vmatpush.msra.mxu0 0.0
        %2187 = vmatpush.msra.mxu0 0.0
        %2188 = vmatpush.msra.mxu0 0.0
        %2189 = vmatpush.msra.mxu0 0.0
        %2190 = vmatpush.msra.mxu0 0.0
        %2191 = vmatpush.msra.mxu0 0.0
        %2192 = vmatpush.msra.mxu0 0.0
        %2193 = vmatpush.msra.mxu0 0.0
        %2194 = vmatpush.msra.mxu0 0.0
        %2195 = vmatpush.msra.mxu0 0.0
        %2196 = vmatpush.msra.mxu0 0.0
        %2197 = vmatpush.msra.mxu0 0.0
        %2198 = vmatpush.msra.mxu0 %v2181
        %2199 = vmatmul.f32.gmra.mxu0 %v2073
        %v2200 = vpop.f32.mrf.mxu0
        %v2201 = vadd.f32 0.0, %v2200
        %2202 = vmatmul.f32.gmra.mxu0 %v2076
        %v2203 = vpop.f32.mrf.mxu0
        %v2204 = vadd.f32 0.0, %v2203
        %2205 = vmatmul.f32.gmra.mxu0 %v2079
        %v2206 = vpop.f32.mrf.mxu0
        %v2207 = vadd.f32 0.0, %v2206
        %2208 = vmatmul.f32.gmra.mxu0 %v2082
        %v2209 = vpop.f32.mrf.mxu0
        %v2210 = vadd.f32 0.0, %v2209
        %2211 = vmatmul.f32.gmra.mxu0 %v2085
        %v2212 = vpop.f32.mrf.mxu0
        %v2213 = vadd.f32 0.0, %v2212
        %2214 = vmatmul.f32.gmra.mxu0 %v2088
        %v2215 = vpop.f32.mrf.mxu0
        %v2216 = vadd.f32 0.0, %v2215
        %2217 = vmatmul.f32.gmra.mxu0 %v2091
        %v2218 = vpop.f32.mrf.mxu0
        %v2219 = vadd.f32 0.0, %v2218
        %2220 = vmatmul.f32.gmra.mxu0 %v2094
        %v2221 = vpop.f32.mrf.mxu0
        %v2222 = vadd.f32 0.0, %v2221
        %2223 = vmatmul.f32.gmra.mxu0 %v2097
        %v2224 = vpop.f32.mrf.mxu0
        %v2225 = vadd.f32 0.0, %v2224
        %2226 = vmatmul.f32.gmra.mxu0 %v2100
        %v2227 = vpop.f32.mrf.mxu0
        %v2228 = vadd.f32 0.0, %v2227
        %2229 = vmatmul.f32.gmra.mxu0 %v2103
        %v2230 = vpop.f32.mrf.mxu0
        %v2231 = vadd.f32 0.0, %v2230
        %2232 = vmatmul.f32.gmra.mxu0 %v2106
        %v2233 = vpop.f32.mrf.mxu0
        %v2234 = vadd.f32 0.0, %v2233
        %2235 = vmatmul.f32.gmra.mxu0 %v2109
        %v2236 = vpop.f32.mrf.mxu0
        %v2237 = vadd.f32 0.0, %v2236
        %2238 = vmatmul.f32.gmra.mxu0 %v2112
        %v2239 = vpop.f32.mrf.mxu0
        %v2240 = vadd.f32 0.0, %v2239
        %2241 = vmatmul.f32.gmra.mxu0 %v2115
        %v2242 = vpop.f32.mrf.mxu0
        %v2243 = vadd.f32 0.0, %v2242
        %2244 = vmatmul.f32.gmra.mxu0 %v2118
        %v2245 = vpop.f32.mrf.mxu0
        %v2246 = vadd.f32 0.0, %v2245
        %2247 = vmatmul.f32.gmra.mxu0 %v2121
        %v2248 = vpop.f32.mrf.mxu0
        %v2249 = vadd.f32 0.0, %v2248
        %2250 = vmatmul.f32.gmra.mxu0 %v2124
        %v2251 = vpop.f32.mrf.mxu0
        %v2252 = vadd.f32 0.0, %v2251
        %2253 = vmatmul.f32.gmra.mxu0 %v2127
        %v2254 = vpop.f32.mrf.mxu0
        %v2255 = vadd.f32 0.0, %v2254
        %2256 = vmatmul.f32.gmra.mxu0 %v2130
        %v2257 = vpop.f32.mrf.mxu0
        %v2258 = vadd.f32 0.0, %v2257
        %2259 = vmatmul.f32.gmra.mxu0 %v2133
        %v2260 = vpop.f32.mrf.mxu0
        %v2261 = vadd.f32 0.0, %v2260
        %2262 = vmatmul.f32.gmra.mxu0 %v2136
        %v2263 = vpop.f32.mrf.mxu0
        %v2264 = vadd.f32 0.0, %v2263
        %2265 = vmatmul.f32.gmra.mxu0 %v2139
        %v2266 = vpop.f32.mrf.mxu0
        %v2267 = vadd.f32 0.0, %v2266
        %2268 = vmatmul.f32.gmra.mxu0 %v2142
        %v2269 = vpop.f32.mrf.mxu0
        %v2270 = vadd.f32 0.0, %v2269
        %2271 = vmatmul.f32.gmra.mxu0 %v2145
        %v2272 = vpop.f32.mrf.mxu0
        %v2273 = vadd.f32 0.0, %v2272
        %2274 = vmatmul.f32.gmra.mxu0 %v2148
        %v2275 = vpop.f32.mrf.mxu0
        %v2276 = vadd.f32 0.0, %v2275
        %2277 = vmatmul.f32.gmra.mxu0 %v2151
        %v2278 = vpop.f32.mrf.mxu0
        %v2279 = vadd.f32 0.0, %v2278
        %2280 = vmatmul.f32.gmra.mxu0 %v2154
        %v2281 = vpop.f32.mrf.mxu0
        %v2282 = vadd.f32 0.0, %v2281
        %2283 = vmatmul.f32.gmra.mxu0 %v2157
        %v2284 = vpop.f32.mrf.mxu0
        %v2285 = vadd.f32 0.0, %v2284
        %2286 = vmatmul.f32.gmra.mxu0 %v2160
        %v2287 = vpop.f32.mrf.mxu0
        %v2288 = vadd.f32 0.0, %v2287
        %2289 = vmatmul.f32.gmra.mxu0 %v2163
        %v2290 = vpop.f32.mrf.mxu0
        %v2291 = vadd.f32 0.0, %v2290
        %2292 = vmatmul.f32.gmra.mxu0 %v2166
        %v2293 = vpop.f32.mrf.mxu0
        %v2294 = vadd.f32 0.0, %v2293
        %2295 = vmatmul.f32.gmra.mxu0 %v2169
        %v2296 = vpop.f32.mrf.mxu0
        %v2297 = vadd.f32 0.0, %v2296
        %2298 = vmatmul.f32.gmra.mxu0 %v2172
        %v2299 = vpop.f32.mrf.mxu0
        %v2300 = vadd.f32 0.0, %v2299
        %2301 = vmatmul.f32.gmra.mxu0 %v2175
        %v2302 = vpop.f32.mrf.mxu0
        %v2303 = vadd.f32 0.0, %v2302
        %2304 = vmatmul.f32.gmra.mxu0 %v2178
        %v2305 = vpop.f32.mrf.mxu0
        %v2306 = vadd.f32 0.0, %v2305
        %2307 = vdwg.mxu0
        %v2308 = vadd.f32 %v1998, %v2201
        %v2309 = vadd.f32 %v1999, %v2204
        %v2310 = vadd.f32 %v2000, %v2207
        %v2311 = vadd.f32 %v2001, %v2210
        %v2312 = vadd.f32 %v2002, %v2213
        %v2313 = vadd.f32 %v2003, %v2216
        %v2314 = vadd.f32 %v2004, %v2219
        %v2315 = vadd.f32 %v2005, %v2222
        %v2316 = vadd.f32 %v2006, %v2225
        %v2317 = vadd.f32 %v2007, %v2228
        %v2318 = vadd.f32 %v2008, %v2231
        %v2319 = vadd.f32 %v2009, %v2234
        %v2320 = vadd.f32 %v2010, %v2237
        %v2321 = vadd.f32 %v2011, %v2240
        %v2322 = vadd.f32 %v2012, %v2243
        %v2323 = vadd.f32 %v2013, %v2246
        %v2324 = vadd.f32 %v2014, %v2249
        %v2325 = vadd.f32 %v2015, %v2252
        %v2326 = vadd.f32 %v2016, %v2255
        %v2327 = vadd.f32 %v2017, %v2258
        %v2328 = vadd.f32 %v2018, %v2261
        %v2329 = vadd.f32 %v2019, %v2264
        %v2330 = vadd.f32 %v2020, %v2267
        %v2331 = vadd.f32 %v2021, %v2270
        %v2332 = vadd.f32 %v2022, %v2273
        %v2333 = vadd.f32 %v2023, %v2276
        %v2334 = vadd.f32 %v2024, %v2279
        %v2335 = vadd.f32 %v2025, %v2282
        %v2336 = vadd.f32 %v2026, %v2285
        %v2337 = vadd.f32 %v2027, %v2288
        %v2338 = vadd.f32 %v2028, %v2291
        %v2339 = vadd.f32 %v2029, %v2294
        %v2340 = vadd.f32 %v2030, %v2297
        %v2341 = vadd.f32 %v2031, %v2300
        %v2342 = vadd.f32 %v2032, %v2303
        %v2343 = vadd.f32 %v2033, %v2306
        %v2344 = vld [vmem:[%s437 + $0x24] sm:$0xff]
        %v2345 = vld [vmem:[%s437 + $0x2c] sm:$0xff]
        %v2346 = vld [vmem:[%s437 + $0x34] sm:$0xff]
        %v2347 = vld [vmem:[%s437 + $0x3c] sm:$0xff]
        %v2348 = vld [vmem:[%s437 + $0x44] sm:$0xff]
        %v2349 = vld [vmem:[%s437 + $0x4c] sm:$0xff]
        %v2350 = vld [vmem:[%s437 + $0x54] sm:$0xff]
        %v2351 = vld [vmem:[%s437 + $0x5c] sm:$0xff]
        %v2352 = vld [vmem:[%s437 + $0x64] sm:$0xff]
        %v2353 = vld [vmem:[%s437 + $0x6c] sm:$0xff]
        %v2354 = vld [vmem:[%s437 + $0x74] sm:$0xff]
        %v2355 = vld [vmem:[%s437 + $0x7c] sm:$0xff]
        %v2356 = vld [vmem:[%s437 + $0x84] sm:$0xff]
        %v2357 = vld [vmem:[%s437 + $0x8c] sm:$0xff]
        %v2358 = vld [vmem:[%s437 + $0x94] sm:$0xff]
        %v2359 = vld [vmem:[%s437 + $0x9c] sm:$0xff]
        %v2360 = vld [vmem:[%s437 + $0xa4] sm:$0xff]
        %v2361 = vld [vmem:[%s437 + $0xac] sm:$0xff]
        %v2362 = vld [vmem:[%s437 + $0xb4] sm:$0xff]
        %v2363 = vld [vmem:[%s437 + $0xbc] sm:$0xff]
        %v2364 = vld [vmem:[%s437 + $0xc4] sm:$0xff]
        %v2365 = vld [vmem:[%s437 + $0xcc] sm:$0xff]
        %v2366 = vld [vmem:[%s437 + $0xd4] sm:$0xff]
        %v2367 = vld [vmem:[%s437 + $0xdc] sm:$0xff]
        %v2368 = vld [vmem:[%s437 + $0xe4] sm:$0xff]
        %v2369 = vld [vmem:[%s437 + $0xec] sm:$0xff]
        %v2370 = vld [vmem:[%s437 + $0xf4] sm:$0xff]
        %v2371 = vld [vmem:[%s437 + $0xfc] sm:$0xff]
        %v2372 = vld [vmem:[%s437 + $0x104] sm:$0xff]
        %v2373 = vld [vmem:[%s437 + $0x10c] sm:$0xff]
        %v2374 = vld [vmem:[%s437 + $0x114] sm:$0xff]
        %v2375 = vld [vmem:[%s437 + $0x11c] sm:$0xff]
        %v2376 = vld [vmem:[%s437 + $0x124] sm:$0xff]
        %v2377 = vld [vmem:[%s437 + $0x12c] sm:$0xff]
        %v2378 = vld [vmem:[%s437 + $0x134] sm:$0xff]
        %v2379 = vld [vmem:[%s437 + $0x13c] sm:$0x3f]
        %s2380 = scalar_lea.vmem %s1, 24
        %v2381 = vld [vmem:[%s2380] sm:$0x7]
        %v2383 = vsel %vm630, %v2344, 0
        %v2386 = vsel %vm630, %v2345, 0
        %v2389 = vsel %vm630, %v2346, 0
        %v2392 = vsel %vm630, %v2347, 0
        %v2395 = vsel %vm630, %v2348, 0
        %v2398 = vsel %vm630, %v2349, 0
        %v2401 = vsel %vm630, %v2350, 0
        %v2404 = vsel %vm630, %v2351, 0
        %v2407 = vsel %vm630, %v2352, 0
        %v2410 = vsel %vm630, %v2353, 0
        %v2413 = vsel %vm630, %v2354, 0
        %v2416 = vsel %vm630, %v2355, 0
        %v2419 = vsel %vm630, %v2356, 0
        %v2422 = vsel %vm630, %v2357, 0
        %v2425 = vsel %vm630, %v2358, 0
        %v2428 = vsel %vm630, %v2359, 0
        %v2431 = vsel %vm630, %v2360, 0
        %v2434 = vsel %vm630, %v2361, 0
        %v2437 = vsel %vm630, %v2362, 0
        %v2440 = vsel %vm630, %v2363, 0
        %v2443 = vsel %vm630, %v2364, 0
        %v2446 = vsel %vm630, %v2365, 0
        %v2449 = vsel %vm630, %v2366, 0
        %v2452 = vsel %vm630, %v2367, 0
        %v2455 = vsel %vm630, %v2368, 0
        %v2458 = vsel %vm630, %v2369, 0
        %v2461 = vsel %vm630, %v2370, 0
        %v2464 = vsel %vm630, %v2371, 0
        %v2467 = vsel %vm630, %v2372, 0
        %v2470 = vsel %vm630, %v2373, 0
        %v2473 = vsel %vm630, %v2374, 0
        %v2476 = vsel %vm630, %v2375, 0
        %v2479 = vsel %vm630, %v2376, 0
        %v2482 = vsel %vm630, %v2377, 0
        %v2485 = vsel %vm630, %v2378, 0
        %v2488 = vsel %vm630, %v2379, 0
        %v2491 = vsel %vm739, %v2381, 0
        %2493 = vmatpush.msra.mxu0 0.0
        %2494 = vmatpush.msra.mxu0 0.0
        %2495 = vmatpush.msra.mxu0 0.0
        %2496 = vmatpush.msra.mxu0 0.0
        %2497 = vmatpush.msra.mxu0 0.0
        %2498 = vmatpush.msra.mxu0 0.0
        %2499 = vmatpush.msra.mxu0 0.0
        %2500 = vmatpush.msra.mxu0 0.0
        %2501 = vmatpush.msra.mxu0 0.0
        %2502 = vmatpush.msra.mxu0 0.0
        %2503 = vmatpush.msra.mxu0 0.0
        %2504 = vmatpush.msra.mxu0 0.0
        %2505 = vmatpush.msra.mxu0 0.0
        %2506 = vmatpush.msra.mxu0 0.0
        %2507 = vmatpush.msra.mxu0 0.0
        %2508 = vmatpush.msra.mxu0 %v2491
        %2509 = vmatmul.f32.gmra.mxu0 %v2383
        %v2510 = vpop.f32.mrf.mxu0
        %v2511 = vadd.f32 0.0, %v2510
        %2512 = vmatmul.f32.gmra.mxu0 %v2386
        %v2513 = vpop.f32.mrf.mxu0
        %v2514 = vadd.f32 0.0, %v2513
        %2515 = vmatmul.f32.gmra.mxu0 %v2389
        %v2516 = vpop.f32.mrf.mxu0
        %v2517 = vadd.f32 0.0, %v2516
        %2518 = vmatmul.f32.gmra.mxu0 %v2392
        %v2519 = vpop.f32.mrf.mxu0
        %v2520 = vadd.f32 0.0, %v2519
        %2521 = vmatmul.f32.gmra.mxu0 %v2395
        %v2522 = vpop.f32.mrf.mxu0
        %v2523 = vadd.f32 0.0, %v2522
        %2524 = vmatmul.f32.gmra.mxu0 %v2398
        %v2525 = vpop.f32.mrf.mxu0
        %v2526 = vadd.f32 0.0, %v2525
        %2527 = vmatmul.f32.gmra.mxu0 %v2401
        %v2528 = vpop.f32.mrf.mxu0
        %v2529 = vadd.f32 0.0, %v2528
        %2530 = vmatmul.f32.gmra.mxu0 %v2404
        %v2531 = vpop.f32.mrf.mxu0
        %v2532 = vadd.f32 0.0, %v2531
        %2533 = vmatmul.f32.gmra.mxu0 %v2407
        %v2534 = vpop.f32.mrf.mxu0
        %v2535 = vadd.f32 0.0, %v2534
        %2536 = vmatmul.f32.gmra.mxu0 %v2410
        %v2537 = vpop.f32.mrf.mxu0
        %v2538 = vadd.f32 0.0, %v2537
        %2539 = vmatmul.f32.gmra.mxu0 %v2413
        %v2540 = vpop.f32.mrf.mxu0
        %v2541 = vadd.f32 0.0, %v2540
        %2542 = vmatmul.f32.gmra.mxu0 %v2416
        %v2543 = vpop.f32.mrf.mxu0
        %v2544 = vadd.f32 0.0, %v2543
        %2545 = vmatmul.f32.gmra.mxu0 %v2419
        %v2546 = vpop.f32.mrf.mxu0
        %v2547 = vadd.f32 0.0, %v2546
        %2548 = vmatmul.f32.gmra.mxu0 %v2422
        %v2549 = vpop.f32.mrf.mxu0
        %v2550 = vadd.f32 0.0, %v2549
        %2551 = vmatmul.f32.gmra.mxu0 %v2425
        %v2552 = vpop.f32.mrf.mxu0
        %v2553 = vadd.f32 0.0, %v2552
        %2554 = vmatmul.f32.gmra.mxu0 %v2428
        %v2555 = vpop.f32.mrf.mxu0
        %v2556 = vadd.f32 0.0, %v2555
        %2557 = vmatmul.f32.gmra.mxu0 %v2431
        %v2558 = vpop.f32.mrf.mxu0
        %v2559 = vadd.f32 0.0, %v2558
        %2560 = vmatmul.f32.gmra.mxu0 %v2434
        %v2561 = vpop.f32.mrf.mxu0
        %v2562 = vadd.f32 0.0, %v2561
        %2563 = vmatmul.f32.gmra.mxu0 %v2437
        %v2564 = vpop.f32.mrf.mxu0
        %v2565 = vadd.f32 0.0, %v2564
        %2566 = vmatmul.f32.gmra.mxu0 %v2440
        %v2567 = vpop.f32.mrf.mxu0
        %v2568 = vadd.f32 0.0, %v2567
        %2569 = vmatmul.f32.gmra.mxu0 %v2443
        %v2570 = vpop.f32.mrf.mxu0
        %v2571 = vadd.f32 0.0, %v2570
        %2572 = vmatmul.f32.gmra.mxu0 %v2446
        %v2573 = vpop.f32.mrf.mxu0
        %v2574 = vadd.f32 0.0, %v2573
        %2575 = vmatmul.f32.gmra.mxu0 %v2449
        %v2576 = vpop.f32.mrf.mxu0
        %v2577 = vadd.f32 0.0, %v2576
        %2578 = vmatmul.f32.gmra.mxu0 %v2452
        %v2579 = vpop.f32.mrf.mxu0
        %v2580 = vadd.f32 0.0, %v2579
        %2581 = vmatmul.f32.gmra.mxu0 %v2455
        %v2582 = vpop.f32.mrf.mxu0
        %v2583 = vadd.f32 0.0, %v2582
        %2584 = vmatmul.f32.gmra.mxu0 %v2458
        %v2585 = vpop.f32.mrf.mxu0
        %v2586 = vadd.f32 0.0, %v2585
        %2587 = vmatmul.f32.gmra.mxu0 %v2461
        %v2588 = vpop.f32.mrf.mxu0
        %v2589 = vadd.f32 0.0, %v2588
        %2590 = vmatmul.f32.gmra.mxu0 %v2464
        %v2591 = vpop.f32.mrf.mxu0
        %v2592 = vadd.f32 0.0, %v2591
        %2593 = vmatmul.f32.gmra.mxu0 %v2467
        %v2594 = vpop.f32.mrf.mxu0
        %v2595 = vadd.f32 0.0, %v2594
        %2596 = vmatmul.f32.gmra.mxu0 %v2470
        %v2597 = vpop.f32.mrf.mxu0
        %v2598 = vadd.f32 0.0, %v2597
        %2599 = vmatmul.f32.gmra.mxu0 %v2473
        %v2600 = vpop.f32.mrf.mxu0
        %v2601 = vadd.f32 0.0, %v2600
        %2602 = vmatmul.f32.gmra.mxu0 %v2476
        %v2603 = vpop.f32.mrf.mxu0
        %v2604 = vadd.f32 0.0, %v2603
        %2605 = vmatmul.f32.gmra.mxu0 %v2479
        %v2606 = vpop.f32.mrf.mxu0
        %v2607 = vadd.f32 0.0, %v2606
        %2608 = vmatmul.f32.gmra.mxu0 %v2482
        %v2609 = vpop.f32.mrf.mxu0
        %v2610 = vadd.f32 0.0, %v2609
        %2611 = vmatmul.f32.gmra.mxu0 %v2485
        %v2612 = vpop.f32.mrf.mxu0
        %v2613 = vadd.f32 0.0, %v2612
        %2614 = vmatmul.f32.gmra.mxu0 %v2488
        %v2615 = vpop.f32.mrf.mxu0
        %v2616 = vadd.f32 0.0, %v2615
        %2617 = vdwg.mxu0
        %v2618 = vadd.f32 %v2308, %v2511
        %v2619 = vadd.f32 %v2309, %v2514
        %v2620 = vadd.f32 %v2310, %v2517
        %v2621 = vadd.f32 %v2311, %v2520
        %v2622 = vadd.f32 %v2312, %v2523
        %v2623 = vadd.f32 %v2313, %v2526
        %v2624 = vadd.f32 %v2314, %v2529
        %v2625 = vadd.f32 %v2315, %v2532
        %v2626 = vadd.f32 %v2316, %v2535
        %v2627 = vadd.f32 %v2317, %v2538
        %v2628 = vadd.f32 %v2318, %v2541
        %v2629 = vadd.f32 %v2319, %v2544
        %v2630 = vadd.f32 %v2320, %v2547
        %v2631 = vadd.f32 %v2321, %v2550
        %v2632 = vadd.f32 %v2322, %v2553
        %v2633 = vadd.f32 %v2323, %v2556
        %v2634 = vadd.f32 %v2324, %v2559
        %v2635 = vadd.f32 %v2325, %v2562
        %v2636 = vadd.f32 %v2326, %v2565
        %v2637 = vadd.f32 %v2327, %v2568
        %v2638 = vadd.f32 %v2328, %v2571
        %v2639 = vadd.f32 %v2329, %v2574
        %v2640 = vadd.f32 %v2330, %v2577
        %v2641 = vadd.f32 %v2331, %v2580
        %v2642 = vadd.f32 %v2332, %v2583
        %v2643 = vadd.f32 %v2333, %v2586
        %v2644 = vadd.f32 %v2334, %v2589
        %v2645 = vadd.f32 %v2335, %v2592
        %v2646 = vadd.f32 %v2336, %v2595
        %v2647 = vadd.f32 %v2337, %v2598
        %v2648 = vadd.f32 %v2338, %v2601
        %v2649 = vadd.f32 %v2339, %v2604
        %v2650 = vadd.f32 %v2340, %v2607
        %v2651 = vadd.f32 %v2341, %v2610
        %v2652 = vadd.f32 %v2342, %v2613
        %v2653 = vadd.f32 %v2343, %v2616
        %v2654 = vld [vmem:[%s437 + $0x25] sm:$0xff]
        %v2655 = vld [vmem:[%s437 + $0x2d] sm:$0xff]
        %v2656 = vld [vmem:[%s437 + $0x35] sm:$0xff]
        %v2657 = vld [vmem:[%s437 + $0x3d] sm:$0xff]
        %v2658 = vld [vmem:[%s437 + $0x45] sm:$0xff]
        %v2659 = vld [vmem:[%s437 + $0x4d] sm:$0xff]
        %v2660 = vld [vmem:[%s437 + $0x55] sm:$0xff]
        %v2661 = vld [vmem:[%s437 + $0x5d] sm:$0xff]
        %v2662 = vld [vmem:[%s437 + $0x65] sm:$0xff]
        %v2663 = vld [vmem:[%s437 + $0x6d] sm:$0xff]
        %v2664 = vld [vmem:[%s437 + $0x75] sm:$0xff]
        %v2665 = vld [vmem:[%s437 + $0x7d] sm:$0xff]
        %v2666 = vld [vmem:[%s437 + $0x85] sm:$0xff]
        %v2667 = vld [vmem:[%s437 + $0x8d] sm:$0xff]
        %v2668 = vld [vmem:[%s437 + $0x95] sm:$0xff]
        %v2669 = vld [vmem:[%s437 + $0x9d] sm:$0xff]
        %v2670 = vld [vmem:[%s437 + $0xa5] sm:$0xff]
        %v2671 = vld [vmem:[%s437 + $0xad] sm:$0xff]
        %v2672 = vld [vmem:[%s437 + $0xb5] sm:$0xff]
        %v2673 = vld [vmem:[%s437 + $0xbd] sm:$0xff]
        %v2674 = vld [vmem:[%s437 + $0xc5] sm:$0xff]
        %v2675 = vld [vmem:[%s437 + $0xcd] sm:$0xff]
        %v2676 = vld [vmem:[%s437 + $0xd5] sm:$0xff]
        %v2677 = vld [vmem:[%s437 + $0xdd] sm:$0xff]
        %v2678 = vld [vmem:[%s437 + $0xe5] sm:$0xff]
        %v2679 = vld [vmem:[%s437 + $0xed] sm:$0xff]
        %v2680 = vld [vmem:[%s437 + $0xf5] sm:$0xff]
        %v2681 = vld [vmem:[%s437 + $0xfd] sm:$0xff]
        %v2682 = vld [vmem:[%s437 + $0x105] sm:$0xff]
        %v2683 = vld [vmem:[%s437 + $0x10d] sm:$0xff]
        %v2684 = vld [vmem:[%s437 + $0x115] sm:$0xff]
        %v2685 = vld [vmem:[%s437 + $0x11d] sm:$0xff]
        %v2686 = vld [vmem:[%s437 + $0x125] sm:$0xff]
        %v2687 = vld [vmem:[%s437 + $0x12d] sm:$0xff]
        %v2688 = vld [vmem:[%s437 + $0x135] sm:$0xff]
        %v2689 = vld [vmem:[%s437 + $0x13d] sm:$0x3f]
        %s2690 = scalar_lea.vmem %s1, 28
        %v2691 = vld [vmem:[%s2690] sm:$0x7]
        %v2693 = vsel %vm630, %v2654, 0
        %v2696 = vsel %vm630, %v2655, 0
        %v2699 = vsel %vm630, %v2656, 0
        %v2702 = vsel %vm630, %v2657, 0
        %v2705 = vsel %vm630, %v2658, 0
        %v2708 = vsel %vm630, %v2659, 0
        %v2711 = vsel %vm630, %v2660, 0
        %v2714 = vsel %vm630, %v2661, 0
        %v2717 = vsel %vm630, %v2662, 0
        %v2720 = vsel %vm630, %v2663, 0
        %v2723 = vsel %vm630, %v2664, 0
        %v2726 = vsel %vm630, %v2665, 0
        %v2729 = vsel %vm630, %v2666, 0
        %v2732 = vsel %vm630, %v2667, 0
        %v2735 = vsel %vm630, %v2668, 0
        %v2738 = vsel %vm630, %v2669, 0
        %v2741 = vsel %vm630, %v2670, 0
        %v2744 = vsel %vm630, %v2671, 0
        %v2747 = vsel %vm630, %v2672, 0
        %v2750 = vsel %vm630, %v2673, 0
        %v2753 = vsel %vm630, %v2674, 0
        %v2756 = vsel %vm630, %v2675, 0
        %v2759 = vsel %vm630, %v2676, 0
        %v2762 = vsel %vm630, %v2677, 0
        %v2765 = vsel %vm630, %v2678, 0
        %v2768 = vsel %vm630, %v2679, 0
        %v2771 = vsel %vm630, %v2680, 0
        %v2774 = vsel %vm630, %v2681, 0
        %v2777 = vsel %vm630, %v2682, 0
        %v2780 = vsel %vm630, %v2683, 0
        %v2783 = vsel %vm630, %v2684, 0
        %v2786 = vsel %vm630, %v2685, 0
        %v2789 = vsel %vm630, %v2686, 0
        %v2792 = vsel %vm630, %v2687, 0
        %v2795 = vsel %vm630, %v2688, 0
        %v2798 = vsel %vm630, %v2689, 0
        %v2801 = vsel %vm739, %v2691, 0
        %2803 = vmatpush.msra.mxu0 0.0
        %2804 = vmatpush.msra.mxu0 0.0
        %2805 = vmatpush.msra.mxu0 0.0
        %2806 = vmatpush.msra.mxu0 0.0
        %2807 = vmatpush.msra.mxu0 0.0
        %2808 = vmatpush.msra.mxu0 0.0
        %2809 = vmatpush.msra.mxu0 0.0
        %2810 = vmatpush.msra.mxu0 0.0
        %2811 = vmatpush.msra.mxu0 0.0
        %2812 = vmatpush.msra.mxu0 0.0
        %2813 = vmatpush.msra.mxu0 0.0
        %2814 = vmatpush.msra.mxu0 0.0
        %2815 = vmatpush.msra.mxu0 0.0
        %2816 = vmatpush.msra.mxu0 0.0
        %2817 = vmatpush.msra.mxu0 0.0
        %2818 = vmatpush.msra.mxu0 %v2801
        %2819 = vmatmul.f32.gmra.mxu0 %v2693
        %v2820 = vpop.f32.mrf.mxu0
        %v2821 = vadd.f32 0.0, %v2820
        %2822 = vmatmul.f32.gmra.mxu0 %v2696
        %v2823 = vpop.f32.mrf.mxu0
        %v2824 = vadd.f32 0.0, %v2823
        %2825 = vmatmul.f32.gmra.mxu0 %v2699
        %v2826 = vpop.f32.mrf.mxu0
        %v2827 = vadd.f32 0.0, %v2826
        %2828 = vmatmul.f32.gmra.mxu0 %v2702
        %v2829 = vpop.f32.mrf.mxu0
        %v2830 = vadd.f32 0.0, %v2829
        %2831 = vmatmul.f32.gmra.mxu0 %v2705
        %v2832 = vpop.f32.mrf.mxu0
        %v2833 = vadd.f32 0.0, %v2832
        %2834 = vmatmul.f32.gmra.mxu0 %v2708
        %v2835 = vpop.f32.mrf.mxu0
        %v2836 = vadd.f32 0.0, %v2835
        %2837 = vmatmul.f32.gmra.mxu0 %v2711
        %v2838 = vpop.f32.mrf.mxu0
        %v2839 = vadd.f32 0.0, %v2838
        %2840 = vmatmul.f32.gmra.mxu0 %v2714
        %v2841 = vpop.f32.mrf.mxu0
        %v2842 = vadd.f32 0.0, %v2841
        %2843 = vmatmul.f32.gmra.mxu0 %v2717
        %v2844 = vpop.f32.mrf.mxu0
        %v2845 = vadd.f32 0.0, %v2844
        %2846 = vmatmul.f32.gmra.mxu0 %v2720
        %v2847 = vpop.f32.mrf.mxu0
        %v2848 = vadd.f32 0.0, %v2847
        %2849 = vmatmul.f32.gmra.mxu0 %v2723
        %v2850 = vpop.f32.mrf.mxu0
        %v2851 = vadd.f32 0.0, %v2850
        %2852 = vmatmul.f32.gmra.mxu0 %v2726
        %v2853 = vpop.f32.mrf.mxu0
        %v2854 = vadd.f32 0.0, %v2853
        %2855 = vmatmul.f32.gmra.mxu0 %v2729
        %v2856 = vpop.f32.mrf.mxu0
        %v2857 = vadd.f32 0.0, %v2856
        %2858 = vmatmul.f32.gmra.mxu0 %v2732
        %v2859 = vpop.f32.mrf.mxu0
        %v2860 = vadd.f32 0.0, %v2859
        %2861 = vmatmul.f32.gmra.mxu0 %v2735
        %v2862 = vpop.f32.mrf.mxu0
        %v2863 = vadd.f32 0.0, %v2862
        %2864 = vmatmul.f32.gmra.mxu0 %v2738
        %v2865 = vpop.f32.mrf.mxu0
        %v2866 = vadd.f32 0.0, %v2865
        %2867 = vmatmul.f32.gmra.mxu0 %v2741
        %v2868 = vpop.f32.mrf.mxu0
        %v2869 = vadd.f32 0.0, %v2868
        %2870 = vmatmul.f32.gmra.mxu0 %v2744
        %v2871 = vpop.f32.mrf.mxu0
        %v2872 = vadd.f32 0.0, %v2871
        %2873 = vmatmul.f32.gmra.mxu0 %v2747
        %v2874 = vpop.f32.mrf.mxu0
        %v2875 = vadd.f32 0.0, %v2874
        %2876 = vmatmul.f32.gmra.mxu0 %v2750
        %v2877 = vpop.f32.mrf.mxu0
        %v2878 = vadd.f32 0.0, %v2877
        %2879 = vmatmul.f32.gmra.mxu0 %v2753
        %v2880 = vpop.f32.mrf.mxu0
        %v2881 = vadd.f32 0.0, %v2880
        %2882 = vmatmul.f32.gmra.mxu0 %v2756
        %v2883 = vpop.f32.mrf.mxu0
        %v2884 = vadd.f32 0.0, %v2883
        %2885 = vmatmul.f32.gmra.mxu0 %v2759
        %v2886 = vpop.f32.mrf.mxu0
        %v2887 = vadd.f32 0.0, %v2886
        %2888 = vmatmul.f32.gmra.mxu0 %v2762
        %v2889 = vpop.f32.mrf.mxu0
        %v2890 = vadd.f32 0.0, %v2889
        %2891 = vmatmul.f32.gmra.mxu0 %v2765
        %v2892 = vpop.f32.mrf.mxu0
        %v2893 = vadd.f32 0.0, %v2892
        %2894 = vmatmul.f32.gmra.mxu0 %v2768
        %v2895 = vpop.f32.mrf.mxu0
        %v2896 = vadd.f32 0.0, %v2895
        %2897 = vmatmul.f32.gmra.mxu0 %v2771
        %v2898 = vpop.f32.mrf.mxu0
        %v2899 = vadd.f32 0.0, %v2898
        %2900 = vmatmul.f32.gmra.mxu0 %v2774
        %v2901 = vpop.f32.mrf.mxu0
        %v2902 = vadd.f32 0.0, %v2901
        %2903 = vmatmul.f32.gmra.mxu0 %v2777
        %v2904 = vpop.f32.mrf.mxu0
        %v2905 = vadd.f32 0.0, %v2904
        %2906 = vmatmul.f32.gmra.mxu0 %v2780
        %v2907 = vpop.f32.mrf.mxu0
        %v2908 = vadd.f32 0.0, %v2907
        %2909 = vmatmul.f32.gmra.mxu0 %v2783
        %v2910 = vpop.f32.mrf.mxu0
        %v2911 = vadd.f32 0.0, %v2910
        %2912 = vmatmul.f32.gmra.mxu0 %v2786
        %v2913 = vpop.f32.mrf.mxu0
        %v2914 = vadd.f32 0.0, %v2913
        %2915 = vmatmul.f32.gmra.mxu0 %v2789
        %v2916 = vpop.f32.mrf.mxu0
        %v2917 = vadd.f32 0.0, %v2916
        %2918 = vmatmul.f32.gmra.mxu0 %v2792
        %v2919 = vpop.f32.mrf.mxu0
        %v2920 = vadd.f32 0.0, %v2919
        %2921 = vmatmul.f32.gmra.mxu0 %v2795
        %v2922 = vpop.f32.mrf.mxu0
        %v2923 = vadd.f32 0.0, %v2922
        %2924 = vmatmul.f32.gmra.mxu0 %v2798
        %v2925 = vpop.f32.mrf.mxu0
        %v2926 = vadd.f32 0.0, %v2925
        %2927 = vdwg.mxu0
        %v2928 = vadd.f32 %v2618, %v2821
        %v2929 = vadd.f32 %v2619, %v2824
        %v2930 = vadd.f32 %v2620, %v2827
        %v2931 = vadd.f32 %v2621, %v2830
        %v2932 = vadd.f32 %v2622, %v2833
        %v2933 = vadd.f32 %v2623, %v2836
        %v2934 = vadd.f32 %v2624, %v2839
        %v2935 = vadd.f32 %v2625, %v2842
        %v2936 = vadd.f32 %v2626, %v2845
        %v2937 = vadd.f32 %v2627, %v2848
        %v2938 = vadd.f32 %v2628, %v2851
        %v2939 = vadd.f32 %v2629, %v2854
        %v2940 = vadd.f32 %v2630, %v2857
        %v2941 = vadd.f32 %v2631, %v2860
        %v2942 = vadd.f32 %v2632, %v2863
        %v2943 = vadd.f32 %v2633, %v2866
        %v2944 = vadd.f32 %v2634, %v2869
        %v2945 = vadd.f32 %v2635, %v2872
        %v2946 = vadd.f32 %v2636, %v2875
        %v2947 = vadd.f32 %v2637, %v2878
        %v2948 = vadd.f32 %v2638, %v2881
        %v2949 = vadd.f32 %v2639, %v2884
        %v2950 = vadd.f32 %v2640, %v2887
        %v2951 = vadd.f32 %v2641, %v2890
        %v2952 = vadd.f32 %v2642, %v2893
        %v2953 = vadd.f32 %v2643, %v2896
        %v2954 = vadd.f32 %v2644, %v2899
        %v2955 = vadd.f32 %v2645, %v2902
        %v2956 = vadd.f32 %v2646, %v2905
        %v2957 = vadd.f32 %v2647, %v2908
        %v2958 = vadd.f32 %v2648, %v2911
        %v2959 = vadd.f32 %v2649, %v2914
        %v2960 = vadd.f32 %v2650, %v2917
        %v2961 = vadd.f32 %v2651, %v2920
        %v2962 = vadd.f32 %v2652, %v2923
        %v2963 = vadd.f32 %v2653, %v2926
        %v2964 = vld [vmem:[%s437 + $0x26] sm:$0xff]
        %v2965 = vld [vmem:[%s437 + $0x2e] sm:$0xff]
        %v2966 = vld [vmem:[%s437 + $0x36] sm:$0xff]
        %v2967 = vld [vmem:[%s437 + $0x3e] sm:$0xff]
        %v2968 = vld [vmem:[%s437 + $0x46] sm:$0xff]
        %v2969 = vld [vmem:[%s437 + $0x4e] sm:$0xff]
        %v2970 = vld [vmem:[%s437 + $0x56] sm:$0xff]
        %v2971 = vld [vmem:[%s437 + $0x5e] sm:$0xff]
        %v2972 = vld [vmem:[%s437 + $0x66] sm:$0xff]
        %v2973 = vld [vmem:[%s437 + $0x6e] sm:$0xff]
        %v2974 = vld [vmem:[%s437 + $0x76] sm:$0xff]
        %v2975 = vld [vmem:[%s437 + $0x7e] sm:$0xff]
        %v2976 = vld [vmem:[%s437 + $0x86] sm:$0xff]
        %v2977 = vld [vmem:[%s437 + $0x8e] sm:$0xff]
        %v2978 = vld [vmem:[%s437 + $0x96] sm:$0xff]
        %v2979 = vld [vmem:[%s437 + $0x9e] sm:$0xff]
        %v2980 = vld [vmem:[%s437 + $0xa6] sm:$0xff]
        %v2981 = vld [vmem:[%s437 + $0xae] sm:$0xff]
        %v2982 = vld [vmem:[%s437 + $0xb6] sm:$0xff]
        %v2983 = vld [vmem:[%s437 + $0xbe] sm:$0xff]
        %v2984 = vld [vmem:[%s437 + $0xc6] sm:$0xff]
        %v2985 = vld [vmem:[%s437 + $0xce] sm:$0xff]
        %v2986 = vld [vmem:[%s437 + $0xd6] sm:$0xff]
        %v2987 = vld [vmem:[%s437 + $0xde] sm:$0xff]
        %v2988 = vld [vmem:[%s437 + $0xe6] sm:$0xff]
        %v2989 = vld [vmem:[%s437 + $0xee] sm:$0xff]
        %v2990 = vld [vmem:[%s437 + $0xf6] sm:$0xff]
        %v2991 = vld [vmem:[%s437 + $0xfe] sm:$0xff]
        %v2992 = vld [vmem:[%s437 + $0x106] sm:$0xff]
        %v2993 = vld [vmem:[%s437 + $0x10e] sm:$0xff]
        %v2994 = vld [vmem:[%s437 + $0x116] sm:$0xff]
        %v2995 = vld [vmem:[%s437 + $0x11e] sm:$0xff]
        %v2996 = vld [vmem:[%s437 + $0x126] sm:$0xff]
        %v2997 = vld [vmem:[%s437 + $0x12e] sm:$0xff]
        %v2998 = vld [vmem:[%s437 + $0x136] sm:$0xff]
        %v2999 = vld [vmem:[%s437 + $0x13e] sm:$0x3f]
        %s3000 = scalar_lea.vmem %s1, 32
        %v3001 = vld [vmem:[%s3000] sm:$0x7]
        %v3003 = vsel %vm630, %v2964, 0
        %v3006 = vsel %vm630, %v2965, 0
        %v3009 = vsel %vm630, %v2966, 0
        %v3012 = vsel %vm630, %v2967, 0
        %v3015 = vsel %vm630, %v2968, 0
        %v3018 = vsel %vm630, %v2969, 0
        %v3021 = vsel %vm630, %v2970, 0
        %v3024 = vsel %vm630, %v2971, 0
        %v3027 = vsel %vm630, %v2972, 0
        %v3030 = vsel %vm630, %v2973, 0
        %v3033 = vsel %vm630, %v2974, 0
        %v3036 = vsel %vm630, %v2975, 0
        %v3039 = vsel %vm630, %v2976, 0
        %v3042 = vsel %vm630, %v2977, 0
        %v3045 = vsel %vm630, %v2978, 0
        %v3048 = vsel %vm630, %v2979, 0
        %v3051 = vsel %vm630, %v2980, 0
        %v3054 = vsel %vm630, %v2981, 0
        %v3057 = vsel %vm630, %v2982, 0
        %v3060 = vsel %vm630, %v2983, 0
        %v3063 = vsel %vm630, %v2984, 0
        %v3066 = vsel %vm630, %v2985, 0
        %v3069 = vsel %vm630, %v2986, 0
        %v3072 = vsel %vm630, %v2987, 0
        %v3075 = vsel %vm630, %v2988, 0
        %v3078 = vsel %vm630, %v2989, 0
        %v3081 = vsel %vm630, %v2990, 0
        %v3084 = vsel %vm630, %v2991, 0
        %v3087 = vsel %vm630, %v2992, 0
        %v3090 = vsel %vm630, %v2993, 0
        %v3093 = vsel %vm630, %v2994, 0
        %v3096 = vsel %vm630, %v2995, 0
        %v3099 = vsel %vm630, %v2996, 0
        %v3102 = vsel %vm630, %v2997, 0
        %v3105 = vsel %vm630, %v2998, 0
        %v3108 = vsel %vm630, %v2999, 0
        %v3111 = vsel %vm739, %v3001, 0
        %3113 = vmatpush.msra.mxu0 0.0
        %3114 = vmatpush.msra.mxu0 0.0
        %3115 = vmatpush.msra.mxu0 0.0
        %3116 = vmatpush.msra.mxu0 0.0
        %3117 = vmatpush.msra.mxu0 0.0
        %3118 = vmatpush.msra.mxu0 0.0
        %3119 = vmatpush.msra.mxu0 0.0
        %3120 = vmatpush.msra.mxu0 0.0
        %3121 = vmatpush.msra.mxu0 0.0
        %3122 = vmatpush.msra.mxu0 0.0
        %3123 = vmatpush.msra.mxu0 0.0
        %3124 = vmatpush.msra.mxu0 0.0
        %3125 = vmatpush.msra.mxu0 0.0
        %3126 = vmatpush.msra.mxu0 0.0
        %3127 = vmatpush.msra.mxu0 0.0
        %3128 = vmatpush.msra.mxu0 %v3111
        %3129 = vmatmul.f32.gmra.mxu0 %v3003
        %v3130 = vpop.f32.mrf.mxu0
        %v3131 = vadd.f32 0.0, %v3130
        %3132 = vmatmul.f32.gmra.mxu0 %v3006
        %v3133 = vpop.f32.mrf.mxu0
        %v3134 = vadd.f32 0.0, %v3133
        %3135 = vmatmul.f32.gmra.mxu0 %v3009
        %v3136 = vpop.f32.mrf.mxu0
        %v3137 = vadd.f32 0.0, %v3136
        %3138 = vmatmul.f32.gmra.mxu0 %v3012
        %v3139 = vpop.f32.mrf.mxu0
        %v3140 = vadd.f32 0.0, %v3139
        %3141 = vmatmul.f32.gmra.mxu0 %v3015
        %v3142 = vpop.f32.mrf.mxu0
        %v3143 = vadd.f32 0.0, %v3142
        %3144 = vmatmul.f32.gmra.mxu0 %v3018
        %v3145 = vpop.f32.mrf.mxu0
        %v3146 = vadd.f32 0.0, %v3145
        %3147 = vmatmul.f32.gmra.mxu0 %v3021
        %v3148 = vpop.f32.mrf.mxu0
        %v3149 = vadd.f32 0.0, %v3148
        %3150 = vmatmul.f32.gmra.mxu0 %v3024
        %v3151 = vpop.f32.mrf.mxu0
        %v3152 = vadd.f32 0.0, %v3151
        %3153 = vmatmul.f32.gmra.mxu0 %v3027
        %v3154 = vpop.f32.mrf.mxu0
        %v3155 = vadd.f32 0.0, %v3154
        %3156 = vmatmul.f32.gmra.mxu0 %v3030
        %v3157 = vpop.f32.mrf.mxu0
        %v3158 = vadd.f32 0.0, %v3157
        %3159 = vmatmul.f32.gmra.mxu0 %v3033
        %v3160 = vpop.f32.mrf.mxu0
        %v3161 = vadd.f32 0.0, %v3160
        %3162 = vmatmul.f32.gmra.mxu0 %v3036
        %v3163 = vpop.f32.mrf.mxu0
        %v3164 = vadd.f32 0.0, %v3163
        %3165 = vmatmul.f32.gmra.mxu0 %v3039
        %v3166 = vpop.f32.mrf.mxu0
        %v3167 = vadd.f32 0.0, %v3166
        %3168 = vmatmul.f32.gmra.mxu0 %v3042
        %v3169 = vpop.f32.mrf.mxu0
        %v3170 = vadd.f32 0.0, %v3169
        %3171 = vmatmul.f32.gmra.mxu0 %v3045
        %v3172 = vpop.f32.mrf.mxu0
        %v3173 = vadd.f32 0.0, %v3172
        %3174 = vmatmul.f32.gmra.mxu0 %v3048
        %v3175 = vpop.f32.mrf.mxu0
        %v3176 = vadd.f32 0.0, %v3175
        %3177 = vmatmul.f32.gmra.mxu0 %v3051
        %v3178 = vpop.f32.mrf.mxu0
        %v3179 = vadd.f32 0.0, %v3178
        %3180 = vmatmul.f32.gmra.mxu0 %v3054
        %v3181 = vpop.f32.mrf.mxu0
        %v3182 = vadd.f32 0.0, %v3181
        %3183 = vmatmul.f32.gmra.mxu0 %v3057
        %v3184 = vpop.f32.mrf.mxu0
        %v3185 = vadd.f32 0.0, %v3184
        %3186 = vmatmul.f32.gmra.mxu0 %v3060
        %v3187 = vpop.f32.mrf.mxu0
        %v3188 = vadd.f32 0.0, %v3187
        %3189 = vmatmul.f32.gmra.mxu0 %v3063
        %v3190 = vpop.f32.mrf.mxu0
        %v3191 = vadd.f32 0.0, %v3190
        %3192 = vmatmul.f32.gmra.mxu0 %v3066
        %v3193 = vpop.f32.mrf.mxu0
        %v3194 = vadd.f32 0.0, %v3193
        %3195 = vmatmul.f32.gmra.mxu0 %v3069
        %v3196 = vpop.f32.mrf.mxu0
        %v3197 = vadd.f32 0.0, %v3196
        %3198 = vmatmul.f32.gmra.mxu0 %v3072
        %v3199 = vpop.f32.mrf.mxu0
        %v3200 = vadd.f32 0.0, %v3199
        %3201 = vmatmul.f32.gmra.mxu0 %v3075
        %v3202 = vpop.f32.mrf.mxu0
        %v3203 = vadd.f32 0.0, %v3202
        %3204 = vmatmul.f32.gmra.mxu0 %v3078
        %v3205 = vpop.f32.mrf.mxu0
        %v3206 = vadd.f32 0.0, %v3205
        %3207 = vmatmul.f32.gmra.mxu0 %v3081
        %v3208 = vpop.f32.mrf.mxu0
        %v3209 = vadd.f32 0.0, %v3208
        %3210 = vmatmul.f32.gmra.mxu0 %v3084
        %v3211 = vpop.f32.mrf.mxu0
        %v3212 = vadd.f32 0.0, %v3211
        %3213 = vmatmul.f32.gmra.mxu0 %v3087
        %v3214 = vpop.f32.mrf.mxu0
        %v3215 = vadd.f32 0.0, %v3214
        %3216 = vmatmul.f32.gmra.mxu0 %v3090
        %v3217 = vpop.f32.mrf.mxu0
        %v3218 = vadd.f32 0.0, %v3217
        %3219 = vmatmul.f32.gmra.mxu0 %v3093
        %v3220 = vpop.f32.mrf.mxu0
        %v3221 = vadd.f32 0.0, %v3220
        %3222 = vmatmul.f32.gmra.mxu0 %v3096
        %v3223 = vpop.f32.mrf.mxu0
        %v3224 = vadd.f32 0.0, %v3223
        %3225 = vmatmul.f32.gmra.mxu0 %v3099
        %v3226 = vpop.f32.mrf.mxu0
        %v3227 = vadd.f32 0.0, %v3226
        %3228 = vmatmul.f32.gmra.mxu0 %v3102
        %v3229 = vpop.f32.mrf.mxu0
        %v3230 = vadd.f32 0.0, %v3229
        %3231 = vmatmul.f32.gmra.mxu0 %v3105
        %v3232 = vpop.f32.mrf.mxu0
        %v3233 = vadd.f32 0.0, %v3232
        %3234 = vmatmul.f32.gmra.mxu0 %v3108
        %v3235 = vpop.f32.mrf.mxu0
        %v3236 = vadd.f32 0.0, %v3235
        %3237 = vdwg.mxu0
        %v3238 = vadd.f32 %v2928, %v3131
        %v3239 = vadd.f32 %v2929, %v3134
        %v3240 = vadd.f32 %v2930, %v3137
        %v3241 = vadd.f32 %v2931, %v3140
        %v3242 = vadd.f32 %v2932, %v3143
        %v3243 = vadd.f32 %v2933, %v3146
        %v3244 = vadd.f32 %v2934, %v3149
        %v3245 = vadd.f32 %v2935, %v3152
        %v3246 = vadd.f32 %v2936, %v3155
        %v3247 = vadd.f32 %v2937, %v3158
        %v3248 = vadd.f32 %v2938, %v3161
        %v3249 = vadd.f32 %v2939, %v3164
        %v3250 = vadd.f32 %v2940, %v3167
        %v3251 = vadd.f32 %v2941, %v3170
        %v3252 = vadd.f32 %v2942, %v3173
        %v3253 = vadd.f32 %v2943, %v3176
        %v3254 = vadd.f32 %v2944, %v3179
        %v3255 = vadd.f32 %v2945, %v3182
        %v3256 = vadd.f32 %v2946, %v3185
        %v3257 = vadd.f32 %v2947, %v3188
        %v3258 = vadd.f32 %v2948, %v3191
        %v3259 = vadd.f32 %v2949, %v3194
        %v3260 = vadd.f32 %v2950, %v3197
        %v3261 = vadd.f32 %v2951, %v3200
        %v3262 = vadd.f32 %v2952, %v3203
        %v3263 = vadd.f32 %v2953, %v3206
        %v3264 = vadd.f32 %v2954, %v3209
        %v3265 = vadd.f32 %v2955, %v3212
        %v3266 = vadd.f32 %v2956, %v3215
        %v3267 = vadd.f32 %v2957, %v3218
        %v3268 = vadd.f32 %v2958, %v3221
        %v3269 = vadd.f32 %v2959, %v3224
        %v3270 = vadd.f32 %v2960, %v3227
        %v3271 = vadd.f32 %v2961, %v3230
        %v3272 = vadd.f32 %v2962, %v3233
        %v3273 = vadd.f32 %v2963, %v3236
        %v3274 = vld [vmem:[%s2] sm:$0x1]
        %v3276 = vperm.slane %v3274, 0
        %v3278 = vadd.f32 %v3238, %v3276
        %v3279 = vadd.f32 %v3239, %v3276
        %v3280 = vadd.f32 %v3240, %v3276
        %v3281 = vadd.f32 %v3241, %v3276
        %v3282 = vadd.f32 %v3242, %v3276
        %v3283 = vadd.f32 %v3243, %v3276
        %v3284 = vadd.f32 %v3244, %v3276
        %v3285 = vadd.f32 %v3245, %v3276
        %v3286 = vadd.f32 %v3246, %v3276
        %v3287 = vadd.f32 %v3247, %v3276
        %v3288 = vadd.f32 %v3248, %v3276
        %v3289 = vadd.f32 %v3249, %v3276
        %v3290 = vadd.f32 %v3250, %v3276
        %v3291 = vadd.f32 %v3251, %v3276
        %v3292 = vadd.f32 %v3252, %v3276
        %v3293 = vadd.f32 %v3253, %v3276
        %v3294 = vadd.f32 %v3254, %v3276
        %v3295 = vadd.f32 %v3255, %v3276
        %v3296 = vadd.f32 %v3256, %v3276
        %v3297 = vadd.f32 %v3257, %v3276
        %v3298 = vadd.f32 %v3258, %v3276
        %v3299 = vadd.f32 %v3259, %v3276
        %v3300 = vadd.f32 %v3260, %v3276
        %v3301 = vadd.f32 %v3261, %v3276
        %v3302 = vadd.f32 %v3262, %v3276
        %v3303 = vadd.f32 %v3263, %v3276
        %v3304 = vadd.f32 %v3264, %v3276
        %v3305 = vadd.f32 %v3265, %v3276
        %v3306 = vadd.f32 %v3266, %v3276
        %v3307 = vadd.f32 %v3267, %v3276
        %v3308 = vadd.f32 %v3268, %v3276
        %v3309 = vadd.f32 %v3269, %v3276
        %v3310 = vadd.f32 %v3270, %v3276
        %v3311 = vadd.f32 %v3271, %v3276
        %v3312 = vadd.f32 %v3272, %v3276
        %v3313 = vadd.f32 %v3273, %v3276
        %v3314 = vmax.f32 %v3278, 0.0
        %v3315 = vmax.f32 %v3279, 0.0
        %s3316 = scalar_lea.vmem [#allocation6], 24
        %3317 = vst.msk [vmem:[%s3316 + $0x1] sm:$0xff] %vm438, %v3314
        %3318 = vst.msk [vmem:[%s3316 + $0x9] sm:$0xff] %vm438, %v3315
        %v3319 = vmax.f32 %v3280, 0.0
        %v3320 = vmax.f32 %v3281, 0.0
        %v3321 = vmax.f32 %v3282, 0.0
        %s3322 = scalar_lea.vmem [#allocation6], 48
        %vm3323 = vcmask 64514
        %3324 = vst.msk [vmem:[%s3322 - $0x1] sm:$0xfc] %vm3323, %v3319
        %3325 = vst.msk [vmem:[%s3322 + $0x7] sm:$0xff] %vm438, %v3320
        %3326 = vst.msk [vmem:[%s3322 + $0xf] sm:$0x3] %vm469, %v3321
        %v3327 = vmax.f32 %v3283, 0.0
        %v3328 = vmax.f32 %v3284, 0.0
        %s3329 = scalar_lea.vmem [#allocation6], 72
        %vm3330 = vcmask 64516
        %3331 = vst.msk [vmem:[%s3329 - $0x3] sm:$0xf0] %vm3330, %v3321
        %3332 = vst.msk [vmem:[%s3329 + $0x5] sm:$0xff] %vm438, %v3327
        %3333 = vst.msk [vmem:[%s3329 + $0xd] sm:$0xf] %vm451, %v3328
        %v3334 = vmax.f32 %v3285, 0.0
        %v3335 = vmax.f32 %v3286, 0.0
        %s3336 = scalar_lea.vmem [#allocation6], 96
        %vm3337 = vcmask 64518
        %3338 = vst.msk [vmem:[%s3336 - $0x5] sm:$0xc0] %vm3337, %v3328
        %3339 = vst.msk [vmem:[%s3336 + $0x3] sm:$0xff] %vm438, %v3334
        %vm3340 = vcmask 62464
        %3341 = vst.msk [vmem:[%s3336 + $0xb] sm:$0x3f] %vm3340, %v3335
        %v3342 = vmax.f32 %v3287, 0.0
        %v3343 = vmax.f32 %v3288, 0.0
        %s3344 = scalar_lea.vmem [#allocation6], 120
        %3345 = vst.msk [vmem:[%s3344 + $0x1] sm:$0xff] %vm438, %v3342
        %3346 = vst.msk [vmem:[%s3344 + $0x9] sm:$0xff] %vm438, %v3343
        %v3347 = vmax.f32 %v3289, 0.0
        %v3348 = vmax.f32 %v3290, 0.0
        %v3349 = vmax.f32 %v3291, 0.0
        %s3350 = scalar_lea.vmem [#allocation6], 144
        %3351 = vst.msk [vmem:[%s3350 - $0x1] sm:$0xfc] %vm3323, %v3347
        %3352 = vst.msk [vmem:[%s3350 + $0x7] sm:$0xff] %vm438, %v3348
        %3353 = vst.msk [vmem:[%s3350 + $0xf] sm:$0x3] %vm469, %v3349
        %v3354 = vmax.f32 %v3292, 0.0
        %v3355 = vmax.f32 %v3293, 0.0
        %s3356 = scalar_lea.vmem [#allocation6], 168
        %3357 = vst.msk [vmem:[%s3356 - $0x3] sm:$0xf0] %vm3330, %v3349
        %3358 = vst.msk [vmem:[%s3356 + $0x5] sm:$0xff] %vm438, %v3354
        %3359 = vst.msk [vmem:[%s3356 + $0xd] sm:$0xf] %vm451, %v3355
        %v3360 = vmax.f32 %v3294, 0.0
        %v3361 = vmax.f32 %v3295, 0.0
        %s3362 = scalar_lea.vmem [#allocation6], 192
        %3363 = vst.msk [vmem:[%s3362 - $0x5] sm:$0xc0] %vm3337, %v3355
        %3364 = vst.msk [vmem:[%s3362 + $0x3] sm:$0xff] %vm438, %v3360
        %3365 = vst.msk [vmem:[%s3362 + $0xb] sm:$0x3f] %vm3340, %v3361
        %v3366 = vmax.f32 %v3296, 0.0
        %v3367 = vmax.f32 %v3297, 0.0
        %s3368 = scalar_lea.vmem [#allocation6], 216
        %3369 = vst.msk [vmem:[%s3368 + $0x1] sm:$0xff] %vm438, %v3366
        %3370 = vst.msk [vmem:[%s3368 + $0x9] sm:$0xff] %vm438, %v3367
        %v3371 = vmax.f32 %v3298, 0.0
        %v3372 = vmax.f32 %v3299, 0.0
        %v3373 = vmax.f32 %v3300, 0.0
        %s3374 = scalar_lea.vmem [#allocation6], 240
        %3375 = vst.msk [vmem:[%s3374 - $0x1] sm:$0xfc] %vm3323, %v3371
        %3376 = vst.msk [vmem:[%s3374 + $0x7] sm:$0xff] %vm438, %v3372
        %3377 = vst.msk [vmem:[%s3374 + $0xf] sm:$0x3] %vm469, %v3373
        %v3378 = vmax.f32 %v3301, 0.0
        %v3379 = vmax.f32 %v3302, 0.0
        %s3380 = scalar_lea.vmem [#allocation6], 264
        %3381 = vst.msk [vmem:[%s3380 - $0x3] sm:$0xf0] %vm3330, %v3373
        %3382 = vst.msk [vmem:[%s3380 + $0x5] sm:$0xff] %vm438, %v3378
        %3383 = vst.msk [vmem:[%s3380 + $0xd] sm:$0xf] %vm451, %v3379
        %v3384 = vmax.f32 %v3303, 0.0
        %v3385 = vmax.f32 %v3304, 0.0
        %s3386 = scalar_lea.vmem [#allocation6], 288
        %3387 = vst.msk [vmem:[%s3386 - $0x5] sm:$0xc0] %vm3337, %v3379
        %3388 = vst.msk [vmem:[%s3386 + $0x3] sm:$0xff] %vm438, %v3384
        %3389 = vst.msk [vmem:[%s3386 + $0xb] sm:$0x3f] %vm3340, %v3385
        %v3390 = vmax.f32 %v3305, 0.0
        %v3391 = vmax.f32 %v3306, 0.0
        %s3392 = scalar_lea.vmem [#allocation6], 312
        %3393 = vst.msk [vmem:[%s3392 + $0x1] sm:$0xff] %vm438, %v3390
        %3394 = vst.msk [vmem:[%s3392 + $0x9] sm:$0xff] %vm438, %v3391
        %v3395 = vmax.f32 %v3307, 0.0
        %v3396 = vmax.f32 %v3308, 0.0
        %v3397 = vmax.f32 %v3309, 0.0
        %s3398 = scalar_lea.vmem [#allocation6], 336
        %3399 = vst.msk [vmem:[%s3398 - $0x1] sm:$0xfc] %vm3323, %v3395
        %3400 = vst.msk [vmem:[%s3398 + $0x7] sm:$0xff] %vm438, %v3396
        %3401 = vst.msk [vmem:[%s3398 + $0xf] sm:$0x3] %vm469, %v3397
        %v3402 = vmax.f32 %v3310, 0.0
        %v3403 = vmax.f32 %v3311, 0.0
        %s3404 = scalar_lea.vmem [#allocation6], 360
        %3405 = vst.msk [vmem:[%s3404 - $0x3] sm:$0xf0] %vm3330, %v3397
        %3406 = vst.msk [vmem:[%s3404 + $0x5] sm:$0xff] %vm438, %v3402
        %3407 = vst.msk [vmem:[%s3404 + $0xd] sm:$0xf] %vm451, %v3403
        %v3408 = vmax.f32 %v3312, 0.0
        %v3409 = vmax.f32 %v3313, 0.0
        %s3410 = scalar_lea.vmem [#allocation6], 384
        %3411 = vst.msk [vmem:[%s3410 - $0x5] sm:$0xc0] %vm3337, %v3403
        %3412 = vst.msk [vmem:[%s3410 + $0x3] sm:$0xff] %vm438, %v3408
        %3413 = vst.msk [vmem:[%s3410 + $0xb] sm:$0x3f] %vm3340, %v3409
        %v3414 = vld [vmem:[#allocation6] sm:$0x1]
        %v3415 = vld [vmem:[#allocation6 + $0x18] sm:$0x1]
        %v3416 = vld [vmem:[#allocation6 + $0x30] sm:$0x1]
        %v3417 = vld [vmem:[#allocation6 + $0x48] sm:$0x1]
        %v3418 = vld [vmem:[#allocation6 + $0x60] sm:$0x1]
        %v3419 = vld [vmem:[#allocation6 + $0x78] sm:$0x1]
        %v3420 = vld [vmem:[#allocation6 + $0x90] sm:$0x1]
        %v3421 = vld [vmem:[#allocation6 + $0xa8] sm:$0x1]
        %v3422 = vld [vmem:[#allocation6 + $0xc0] sm:$0x1]
        %v3423 = vld [vmem:[#allocation6 + $0xd8] sm:$0x1]
        %v3424 = vld [vmem:[#allocation6 + $0xf0] sm:$0x1]
        %v3425 = vld [vmem:[#allocation6 + $0x108] sm:$0x1]
        %v3426 = vld [vmem:[#allocation6 + $0x120] sm:$0x1]
        %v3427 = vld [vmem:[#allocation6 + $0x138] sm:$0x1]
        %v3428 = vld [vmem:[#allocation6 + $0x150] sm:$0x1]
        %v3429 = vld [vmem:[#allocation6 + $0x168] sm:$0x1]
        %v3430 = vld [vmem:[#allocation6 + $0x180] sm:$0x1]
        %v3431 = vld [vmem:[#allocation6 + $0x198] sm:$0x1]
        %v3432 = vld [vmem:[#allocation6 + $0x1] sm:$0x1]
        %v3433 = vld [vmem:[#allocation6 + $0x19] sm:$0x1]
        %v3434 = vld [vmem:[#allocation6 + $0x31] sm:$0x1]
        %v3435 = vld [vmem:[#allocation6 + $0x49] sm:$0x1]
        %v3436 = vld [vmem:[#allocation6 + $0x61] sm:$0x1]
        %v3437 = vld [vmem:[#allocation6 + $0x79] sm:$0x1]
        %v3438 = vld [vmem:[#allocation6 + $0x91] sm:$0x1]
        %v3439 = vld [vmem:[#allocation6 + $0xa9] sm:$0x1]
        %v3440 = vld [vmem:[#allocation6 + $0xc1] sm:$0x1]
        %v3441 = vld [vmem:[#allocation6 + $0xd9] sm:$0x1]
        %v3442 = vld [vmem:[#allocation6 + $0xf1] sm:$0x1]
        %v3443 = vld [vmem:[#allocation6 + $0x109] sm:$0x1]
        %v3444 = vld [vmem:[#allocation6 + $0x121] sm:$0x1]
        %v3445 = vld [vmem:[#allocation6 + $0x139] sm:$0x1]
        %v3446 = vld [vmem:[#allocation6 + $0x151] sm:$0x1]
        %v3447 = vld [vmem:[#allocation6 + $0x169] sm:$0x1]
        %v3448 = vld [vmem:[#allocation6 + $0x181] sm:$0x1]
        %v3449 = vld [vmem:[#allocation6 + $0x199] sm:$0x1]
        %v3450 = vld [vmem:[#allocation6 + $0x2] sm:$0x1]
        %v3451 = vld [vmem:[#allocation6 + $0x1a] sm:$0x1]
        %v3452 = vld [vmem:[#allocation6 + $0x32] sm:$0x1]
        %v3453 = vld [vmem:[#allocation6 + $0x4a] sm:$0x1]
        %v3454 = vld [vmem:[#allocation6 + $0x62] sm:$0x1]
        %v3455 = vld [vmem:[#allocation6 + $0x7a] sm:$0x1]
        %v3456 = vld [vmem:[#allocation6 + $0x92] sm:$0x1]
        %v3457 = vld [vmem:[#allocation6 + $0xaa] sm:$0x1]
        %v3458 = vld [vmem:[#allocation6 + $0xc2] sm:$0x1]
        %v3459 = vld [vmem:[#allocation6 + $0xda] sm:$0x1]
        %v3460 = vld [vmem:[#allocation6 + $0xf2] sm:$0x1]
        %v3461 = vld [vmem:[#allocation6 + $0x10a] sm:$0x1]
        %v3462 = vld [vmem:[#allocation6 + $0x122] sm:$0x1]
        %v3463 = vld [vmem:[#allocation6 + $0x13a] sm:$0x1]
        %v3464 = vld [vmem:[#allocation6 + $0x152] sm:$0x1]
        %v3465 = vld [vmem:[#allocation6 + $0x16a] sm:$0x1]
        %v3466 = vld [vmem:[#allocation6 + $0x182] sm:$0x1]
        %v3467 = vld [vmem:[#allocation6 + $0x19a] sm:$0x1]
        %v3468 = vmax.f32 %v3414, %v3432
        %v3469 = vmax.f32 %v3415, %v3433
        %v3470 = vmax.f32 %v3416, %v3434
        %v3471 = vmax.f32 %v3417, %v3435
        %v3472 = vmax.f32 %v3418, %v3436
        %v3473 = vmax.f32 %v3419, %v3437
        %v3474 = vmax.f32 %v3420, %v3438
        %v3475 = vmax.f32 %v3421, %v3439
        %v3476 = vmax.f32 %v3422, %v3440
        %v3477 = vmax.f32 %v3423, %v3441
        %v3478 = vmax.f32 %v3424, %v3442
        %v3479 = vmax.f32 %v3425, %v3443
        %v3480 = vmax.f32 %v3426, %v3444
        %v3481 = vmax.f32 %v3427, %v3445
        %v3482 = vmax.f32 %v3428, %v3446
        %v3483 = vmax.f32 %v3429, %v3447
        %v3484 = vmax.f32 %v3430, %v3448
        %v3485 = vmax.f32 %v3431, %v3449
        %v3486 = vmax.f32 %v3468, %v3450
        %v3487 = vmax.f32 %v3469, %v3451
        %v3488 = vmax.f32 %v3470, %v3452
        %v3489 = vmax.f32 %v3471, %v3453
        %v3490 = vmax.f32 %v3472, %v3454
        %v3491 = vmax.f32 %v3473, %v3455
        %v3492 = vmax.f32 %v3474, %v3456
        %v3493 = vmax.f32 %v3475, %v3457
        %v3494 = vmax.f32 %v3476, %v3458
        %v3495 = vmax.f32 %v3477, %v3459
        %v3496 = vmax.f32 %v3478, %v3460
        %v3497 = vmax.f32 %v3479, %v3461
        %v3498 = vmax.f32 %v3480, %v3462
        %v3499 = vmax.f32 %v3481, %v3463
        %v3500 = vmax.f32 %v3482, %v3464
        %v3501 = vmax.f32 %v3483, %v3465
        %v3502 = vmax.f32 %v3484, %v3466
        %v3503 = vmax.f32 %v3485, %v3467
        %vm3504 = vcmask 57344
        %3505 = vst.msk [vmem:[#allocation10] sm:$0x1] %vm3504, %v3486
        %3506 = vst.msk [vmem:[#allocation10 + $0x8] sm:$0x1] %vm3504, %v3487
        %3507 = vst.msk [vmem:[#allocation10 + $0x10] sm:$0x1] %vm3504, %v3488
        %3508 = vst.msk [vmem:[#allocation10 + $0x18] sm:$0x1] %vm3504, %v3489
        %3509 = vst.msk [vmem:[#allocation10 + $0x20] sm:$0x1] %vm3504, %v3490
        %3510 = vst.msk [vmem:[#allocation10 + $0x28] sm:$0x1] %vm3504, %v3491
        %3511 = vst.msk [vmem:[#allocation10 + $0x30] sm:$0x1] %vm3504, %v3492
        %3512 = vst.msk [vmem:[#allocation10 + $0x38] sm:$0x1] %vm3504, %v3493
        %3513 = vst.msk [vmem:[#allocation10 + $0x40] sm:$0x1] %vm3504, %v3494
        %3514 = vst.msk [vmem:[#allocation10 + $0x48] sm:$0x1] %vm3504, %v3495
        %3515 = vst.msk [vmem:[#allocation10 + $0x50] sm:$0x1] %vm3504, %v3496
        %3516 = vst.msk [vmem:[#allocation10 + $0x58] sm:$0x1] %vm3504, %v3497
        %3517 = vst.msk [vmem:[#allocation10 + $0x60] sm:$0x1] %vm3504, %v3498
        %3518 = vst.msk [vmem:[#allocation10 + $0x68] sm:$0x1] %vm3504, %v3499
        %3519 = vst.msk [vmem:[#allocation10 + $0x70] sm:$0x1] %vm3504, %v3500
        %3520 = vst.msk [vmem:[#allocation10 + $0x78] sm:$0x1] %vm3504, %v3501
        %3521 = vst.msk [vmem:[#allocation10 + $0x80] sm:$0x1] %vm3504, %v3502
        %3522 = vst.msk [vmem:[#allocation10 + $0x88] sm:$0x1] %vm3504, %v3503
        %v3523 = vld [vmem:[#allocation6 + $0x2] sm:$0x1]
        %v3524 = vld [vmem:[#allocation6 + $0x1a] sm:$0x1]
        %v3525 = vld [vmem:[#allocation6 + $0x32] sm:$0x1]
        %v3526 = vld [vmem:[#allocation6 + $0x4a] sm:$0x1]
        %v3527 = vld [vmem:[#allocation6 + $0x62] sm:$0x1]
        %v3528 = vld [vmem:[#allocation6 + $0x7a] sm:$0x1]
        %v3529 = vld [vmem:[#allocation6 + $0x92] sm:$0x1]
        %v3530 = vld [vmem:[#allocation6 + $0xaa] sm:$0x1]
        %v3531 = vld [vmem:[#allocation6 + $0xc2] sm:$0x1]
        %v3532 = vld [vmem:[#allocation6 + $0xda] sm:$0x1]
        %v3533 = vld [vmem:[#allocation6 + $0xf2] sm:$0x1]
        %v3534 = vld [vmem:[#allocation6 + $0x10a] sm:$0x1]
        %v3535 = vld [vmem:[#allocation6 + $0x122] sm:$0x1]
        %v3536 = vld [vmem:[#allocation6 + $0x13a] sm:$0x1]
        %v3537 = vld [vmem:[#allocation6 + $0x152] sm:$0x1]
        %v3538 = vld [vmem:[#allocation6 + $0x16a] sm:$0x1]
        %v3539 = vld [vmem:[#allocation6 + $0x182] sm:$0x1]
        %v3540 = vld [vmem:[#allocation6 + $0x19a] sm:$0x1]
        %v3541 = vld [vmem:[#allocation6 + $0x3] sm:$0x1]
        %v3542 = vld [vmem:[#allocation6 + $0x1b] sm:$0x1]
        %v3543 = vld [vmem:[#allocation6 + $0x33] sm:$0x1]
        %v3544 = vld [vmem:[#allocation6 + $0x4b] sm:$0x1]
        %v3545 = vld [vmem:[#allocation6 + $0x63] sm:$0x1]
        %v3546 = vld [vmem:[#allocation6 + $0x7b] sm:$0x1]
        %v3547 = vld [vmem:[#allocation6 + $0x93] sm:$0x1]
        %v3548 = vld [vmem:[#allocation6 + $0xab] sm:$0x1]
        %v3549 = vld [vmem:[#allocation6 + $0xc3] sm:$0x1]
        %v3550 = vld [vmem:[#allocation6 + $0xdb] sm:$0x1]
        %v3551 = vld [vmem:[#allocation6 + $0xf3] sm:$0x1]
        %v3552 = vld [vmem:[#allocation6 + $0x10b] sm:$0x1]
        %v3553 = vld [vmem:[#allocation6 + $0x123] sm:$0x1]
        %v3554 = vld [vmem:[#allocation6 + $0x13b] sm:$0x1]
        %v3555 = vld [vmem:[#allocation6 + $0x153] sm:$0x1]
        %v3556 = vld [vmem:[#allocation6 + $0x16b] sm:$0x1]
        %v3557 = vld [vmem:[#allocation6 + $0x183] sm:$0x1]
        %v3558 = vld [vmem:[#allocation6 + $0x19b] sm:$0x1]
        %v3559 = vld [vmem:[#allocation6 + $0x4] sm:$0x1]
        %v3560 = vld [vmem:[#allocation6 + $0x1c] sm:$0x1]
        %v3561 = vld [vmem:[#allocation6 + $0x34] sm:$0x1]
        %v3562 = vld [vmem:[#allocation6 + $0x4c] sm:$0x1]
        %v3563 = vld [vmem:[#allocation6 + $0x64] sm:$0x1]
        %v3564 = vld [vmem:[#allocation6 + $0x7c] sm:$0x1]
        %v3565 = vld [vmem:[#allocation6 + $0x94] sm:$0x1]
        %v3566 = vld [vmem:[#allocation6 + $0xac] sm:$0x1]
        %v3567 = vld [vmem:[#allocation6 + $0xc4] sm:$0x1]
        %v3568 = vld [vmem:[#allocation6 + $0xdc] sm:$0x1]
        %v3569 = vld [vmem:[#allocation6 + $0xf4] sm:$0x1]
        %v3570 = vld [vmem:[#allocation6 + $0x10c] sm:$0x1]
        %v3571 = vld [vmem:[#allocation6 + $0x124] sm:$0x1]
        %v3572 = vld [vmem:[#allocation6 + $0x13c] sm:$0x1]
        %v3573 = vld [vmem:[#allocation6 + $0x154] sm:$0x1]
        %v3574 = vld [vmem:[#allocation6 + $0x16c] sm:$0x1]
        %v3575 = vld [vmem:[#allocation6 + $0x184] sm:$0x1]
        %v3576 = vld [vmem:[#allocation6 + $0x19c] sm:$0x1]
        %v3577 = vmax.f32 %v3523, %v3541
        %v3578 = vmax.f32 %v3524, %v3542
        %v3579 = vmax.f32 %v3525, %v3543
        %v3580 = vmax.f32 %v3526, %v3544
        %v3581 = vmax.f32 %v3527, %v3545
        %v3582 = vmax.f32 %v3528, %v3546
        %v3583 = vmax.f32 %v3529, %v3547
        %v3584 = vmax.f32 %v3530, %v3548
        %v3585 = vmax.f32 %v3531, %v3549
        %v3586 = vmax.f32 %v3532, %v3550
        %v3587 = vmax.f32 %v3533, %v3551
        %v3588 = vmax.f32 %v3534, %v3552
        %v3589 = vmax.f32 %v3535, %v3553
        %v3590 = vmax.f32 %v3536, %v3554
        %v3591 = vmax.f32 %v3537, %v3555
        %v3592 = vmax.f32 %v3538, %v3556
        %v3593 = vmax.f32 %v3539, %v3557
        %v3594 = vmax.f32 %v3540, %v3558
        %v3595 = vmax.f32 %v3577, %v3559
        %v3596 = vmax.f32 %v3578, %v3560
        %v3597 = vmax.f32 %v3579, %v3561
        %v3598 = vmax.f32 %v3580, %v3562
        %v3599 = vmax.f32 %v3581, %v3563
        %v3600 = vmax.f32 %v3582, %v3564
        %v3601 = vmax.f32 %v3583, %v3565
        %v3602 = vmax.f32 %v3584, %v3566
        %v3603 = vmax.f32 %v3585, %v3567
        %v3604 = vmax.f32 %v3586, %v3568
        %v3605 = vmax.f32 %v3587, %v3569
        %v3606 = vmax.f32 %v3588, %v3570
        %v3607 = vmax.f32 %v3589, %v3571
        %v3608 = vmax.f32 %v3590, %v3572
        %v3609 = vmax.f32 %v3591, %v3573
        %v3610 = vmax.f32 %v3592, %v3574
        %v3611 = vmax.f32 %v3593, %v3575
        %v3612 = vmax.f32 %v3594, %v3576
        %3613 = vst.msk [vmem:[#allocation10 + $0x1] sm:$0x1] %vm3504, %v3595
        %3614 = vst.msk [vmem:[#allocation10 + $0x9] sm:$0x1] %vm3504, %v3596
        %3615 = vst.msk [vmem:[#allocation10 + $0x11] sm:$0x1] %vm3504, %v3597
        %3616 = vst.msk [vmem:[#allocation10 + $0x19] sm:$0x1] %vm3504, %v3598
        %3617 = vst.msk [vmem:[#allocation10 + $0x21] sm:$0x1] %vm3504, %v3599
        %3618 = vst.msk [vmem:[#allocation10 + $0x29] sm:$0x1] %vm3504, %v3600
        %3619 = vst.msk [vmem:[#allocation10 + $0x31] sm:$0x1] %vm3504, %v3601
        %3620 = vst.msk [vmem:[#allocation10 + $0x39] sm:$0x1] %vm3504, %v3602
        %3621 = vst.msk [vmem:[#allocation10 + $0x41] sm:$0x1] %vm3504, %v3603
        %3622 = vst.msk [vmem:[#allocation10 + $0x49] sm:$0x1] %vm3504, %v3604
        %3623 = vst.msk [vmem:[#allocation10 + $0x51] sm:$0x1] %vm3504, %v3605
        %3624 = vst.msk [vmem:[#allocation10 + $0x59] sm:$0x1] %vm3504, %v3606
        %3625 = vst.msk [vmem:[#allocation10 + $0x61] sm:$0x1] %vm3504, %v3607
        %3626 = vst.msk [vmem:[#allocation10 + $0x69] sm:$0x1] %vm3504, %v3608
        %3627 = vst.msk [vmem:[#allocation10 + $0x71] sm:$0x1] %vm3504, %v3609
        %3628 = vst.msk [vmem:[#allocation10 + $0x79] sm:$0x1] %vm3504, %v3610
        %3629 = vst.msk [vmem:[#allocation10 + $0x81] sm:$0x1] %vm3504, %v3611
        %3630 = vst.msk [vmem:[#allocation10 + $0x89] sm:$0x1] %vm3504, %v3612
        %v3631 = vld [vmem:[#allocation6 + $0x4] sm:$0x1]
        %v3632 = vld [vmem:[#allocation6 + $0x1c] sm:$0x1]
        %v3633 = vld [vmem:[#allocation6 + $0x34] sm:$0x1]
        %v3634 = vld [vmem:[#allocation6 + $0x4c] sm:$0x1]
        %v3635 = vld [vmem:[#allocation6 + $0x64] sm:$0x1]
        %v3636 = vld [vmem:[#allocation6 + $0x7c] sm:$0x1]
        %v3637 = vld [vmem:[#allocation6 + $0x94] sm:$0x1]
        %v3638 = vld [vmem:[#allocation6 + $0xac] sm:$0x1]
        %v3639 = vld [vmem:[#allocation6 + $0xc4] sm:$0x1]
        %v3640 = vld [vmem:[#allocation6 + $0xdc] sm:$0x1]
        %v3641 = vld [vmem:[#allocation6 + $0xf4] sm:$0x1]
        %v3642 = vld [vmem:[#allocation6 + $0x10c] sm:$0x1]
        %v3643 = vld [vmem:[#allocation6 + $0x124] sm:$0x1]
        %v3644 = vld [vmem:[#allocation6 + $0x13c] sm:$0x1]
        %v3645 = vld [vmem:[#allocation6 + $0x154] sm:$0x1]
        %v3646 = vld [vmem:[#allocation6 + $0x16c] sm:$0x1]
        %v3647 = vld [vmem:[#allocation6 + $0x184] sm:$0x1]
        %v3648 = vld [vmem:[#allocation6 + $0x19c] sm:$0x1]
        %v3649 = vld [vmem:[#allocation6 + $0x5] sm:$0x1]
        %v3650 = vld [vmem:[#allocation6 + $0x1d] sm:$0x1]
        %v3651 = vld [vmem:[#allocation6 + $0x35] sm:$0x1]
        %v3652 = vld [vmem:[#allocation6 + $0x4d] sm:$0x1]
        %v3653 = vld [vmem:[#allocation6 + $0x65] sm:$0x1]
        %v3654 = vld [vmem:[#allocation6 + $0x7d] sm:$0x1]
        %v3655 = vld [vmem:[#allocation6 + $0x95] sm:$0x1]
        %v3656 = vld [vmem:[#allocation6 + $0xad] sm:$0x1]
        %v3657 = vld [vmem:[#allocation6 + $0xc5] sm:$0x1]
        %v3658 = vld [vmem:[#allocation6 + $0xdd] sm:$0x1]
        %v3659 = vld [vmem:[#allocation6 + $0xf5] sm:$0x1]
        %v3660 = vld [vmem:[#allocation6 + $0x10d] sm:$0x1]
        %v3661 = vld [vmem:[#allocation6 + $0x125] sm:$0x1]
        %v3662 = vld [vmem:[#allocation6 + $0x13d] sm:$0x1]
        %v3663 = vld [vmem:[#allocation6 + $0x155] sm:$0x1]
        %v3664 = vld [vmem:[#allocation6 + $0x16d] sm:$0x1]
        %v3665 = vld [vmem:[#allocation6 + $0x185] sm:$0x1]
        %v3666 = vld [vmem:[#allocation6 + $0x19d] sm:$0x1]
        %v3667 = vld [vmem:[#allocation6 + $0x6] sm:$0x1]
        %v3668 = vld [vmem:[#allocation6 + $0x1e] sm:$0x1]
        %v3669 = vld [vmem:[#allocation6 + $0x36] sm:$0x1]
        %v3670 = vld [vmem:[#allocation6 + $0x4e] sm:$0x1]
        %v3671 = vld [vmem:[#allocation6 + $0x66] sm:$0x1]
        %v3672 = vld [vmem:[#allocation6 + $0x7e] sm:$0x1]
        %v3673 = vld [vmem:[#allocation6 + $0x96] sm:$0x1]
        %v3674 = vld [vmem:[#allocation6 + $0xae] sm:$0x1]
        %v3675 = vld [vmem:[#allocation6 + $0xc6] sm:$0x1]
        %v3676 = vld [vmem:[#allocation6 + $0xde] sm:$0x1]
        %v3677 = vld [vmem:[#allocation6 + $0xf6] sm:$0x1]
        %v3678 = vld [vmem:[#allocation6 + $0x10e] sm:$0x1]
        %v3679 = vld [vmem:[#allocation6 + $0x126] sm:$0x1]
        %v3680 = vld [vmem:[#allocation6 + $0x13e] sm:$0x1]
        %v3681 = vld [vmem:[#allocation6 + $0x156] sm:$0x1]
        %v3682 = vld [vmem:[#allocation6 + $0x16e] sm:$0x1]
        %v3683 = vld [vmem:[#allocation6 + $0x186] sm:$0x1]
        %v3684 = vld [vmem:[#allocation6 + $0x19e] sm:$0x1]
        %v3685 = vmax.f32 %v3631, %v3649
        %v3686 = vmax.f32 %v3632, %v3650
        %v3687 = vmax.f32 %v3633, %v3651
        %v3688 = vmax.f32 %v3634, %v3652
        %v3689 = vmax.f32 %v3635, %v3653
        %v3690 = vmax.f32 %v3636, %v3654
        %v3691 = vmax.f32 %v3637, %v3655
        %v3692 = vmax.f32 %v3638, %v3656
        %v3693 = vmax.f32 %v3639, %v3657
        %v3694 = vmax.f32 %v3640, %v3658
        %v3695 = vmax.f32 %v3641, %v3659
        %v3696 = vmax.f32 %v3642, %v3660
        %v3697 = vmax.f32 %v3643, %v3661
        %v3698 = vmax.f32 %v3644, %v3662
        %v3699 = vmax.f32 %v3645, %v3663
        %v3700 = vmax.f32 %v3646, %v3664
        %v3701 = vmax.f32 %v3647, %v3665
        %v3702 = vmax.f32 %v3648, %v3666
        %v3703 = vmax.f32 %v3685, %v3667
        %v3704 = vmax.f32 %v3686, %v3668
        %v3705 = vmax.f32 %v3687, %v3669
        %v3706 = vmax.f32 %v3688, %v3670
        %v3707 = vmax.f32 %v3689, %v3671
        %v3708 = vmax.f32 %v3690, %v3672
        %v3709 = vmax.f32 %v3691, %v3673
        %v3710 = vmax.f32 %v3692, %v3674
        %v3711 = vmax.f32 %v3693, %v3675
        %v3712 = vmax.f32 %v3694, %v3676
        %v3713 = vmax.f32 %v3695, %v3677
        %v3714 = vmax.f32 %v3696, %v3678
        %v3715 = vmax.f32 %v3697, %v3679
        %v3716 = vmax.f32 %v3698, %v3680
        %v3717 = vmax.f32 %v3699, %v3681
        %v3718 = vmax.f32 %v3700, %v3682
        %v3719 = vmax.f32 %v3701, %v3683
        %v3720 = vmax.f32 %v3702, %v3684
        %3721 = vst.msk [vmem:[#allocation10 + $0x2] sm:$0x1] %vm3504, %v3703
        %3722 = vst.msk [vmem:[#allocation10 + $0xa] sm:$0x1] %vm3504, %v3704
        %3723 = vst.msk [vmem:[#allocation10 + $0x12] sm:$0x1] %vm3504, %v3705
        %3724 = vst.msk [vmem:[#allocation10 + $0x1a] sm:$0x1] %vm3504, %v3706
        %3725 = vst.msk [vmem:[#allocation10 + $0x22] sm:$0x1] %vm3504, %v3707
        %3726 = vst.msk [vmem:[#allocation10 + $0x2a] sm:$0x1] %vm3504, %v3708
        %3727 = vst.msk [vmem:[#allocation10 + $0x32] sm:$0x1] %vm3504, %v3709
        %3728 = vst.msk [vmem:[#allocation10 + $0x3a] sm:$0x1] %vm3504, %v3710
        %3729 = vst.msk [vmem:[#allocation10 + $0x42] sm:$0x1] %vm3504, %v3711
        %3730 = vst.msk [vmem:[#allocation10 + $0x4a] sm:$0x1] %vm3504, %v3712
        %3731 = vst.msk [vmem:[#allocation10 + $0x52] sm:$0x1] %vm3504, %v3713
        %3732 = vst.msk [vmem:[#allocation10 + $0x5a] sm:$0x1] %vm3504, %v3714
        %3733 = vst.msk [vmem:[#allocation10 + $0x62] sm:$0x1] %vm3504, %v3715
        %3734 = vst.msk [vmem:[#allocation10 + $0x6a] sm:$0x1] %vm3504, %v3716
        %3735 = vst.msk [vmem:[#allocation10 + $0x72] sm:$0x1] %vm3504, %v3717
        %3736 = vst.msk [vmem:[#allocation10 + $0x7a] sm:$0x1] %vm3504, %v3718
        %3737 = vst.msk [vmem:[#allocation10 + $0x82] sm:$0x1] %vm3504, %v3719
        %3738 = vst.msk [vmem:[#allocation10 + $0x8a] sm:$0x1] %vm3504, %v3720
        %v3739 = vld [vmem:[#allocation6 + $0x6] sm:$0x1]
        %v3740 = vld [vmem:[#allocation6 + $0x1e] sm:$0x1]
        %v3741 = vld [vmem:[#allocation6 + $0x36] sm:$0x1]
        %v3742 = vld [vmem:[#allocation6 + $0x4e] sm:$0x1]
        %v3743 = vld [vmem:[#allocation6 + $0x66] sm:$0x1]
        %v3744 = vld [vmem:[#allocation6 + $0x7e] sm:$0x1]
        %v3745 = vld [vmem:[#allocation6 + $0x96] sm:$0x1]
        %v3746 = vld [vmem:[#allocation6 + $0xae] sm:$0x1]
        %v3747 = vld [vmem:[#allocation6 + $0xc6] sm:$0x1]
        %v3748 = vld [vmem:[#allocation6 + $0xde] sm:$0x1]
        %v3749 = vld [vmem:[#allocation6 + $0xf6] sm:$0x1]
        %v3750 = vld [vmem:[#allocation6 + $0x10e] sm:$0x1]
        %v3751 = vld [vmem:[#allocation6 + $0x126] sm:$0x1]
        %v3752 = vld [vmem:[#allocation6 + $0x13e] sm:$0x1]
        %v3753 = vld [vmem:[#allocation6 + $0x156] sm:$0x1]
        %v3754 = vld [vmem:[#allocation6 + $0x16e] sm:$0x1]
        %v3755 = vld [vmem:[#allocation6 + $0x186] sm:$0x1]
        %v3756 = vld [vmem:[#allocation6 + $0x19e] sm:$0x1]
        %v3757 = vld [vmem:[#allocation6 + $0x7] sm:$0x1]
        %v3758 = vld [vmem:[#allocation6 + $0x1f] sm:$0x1]
        %v3759 = vld [vmem:[#allocation6 + $0x37] sm:$0x1]
        %v3760 = vld [vmem:[#allocation6 + $0x4f] sm:$0x1]
        %v3761 = vld [vmem:[#allocation6 + $0x67] sm:$0x1]
        %v3762 = vld [vmem:[#allocation6 + $0x7f] sm:$0x1]
        %v3763 = vld [vmem:[#allocation6 + $0x97] sm:$0x1]
        %v3764 = vld [vmem:[#allocation6 + $0xaf] sm:$0x1]
        %v3765 = vld [vmem:[#allocation6 + $0xc7] sm:$0x1]
        %v3766 = vld [vmem:[#allocation6 + $0xdf] sm:$0x1]
        %v3767 = vld [vmem:[#allocation6 + $0xf7] sm:$0x1]
        %v3768 = vld [vmem:[#allocation6 + $0x10f] sm:$0x1]
        %v3769 = vld [vmem:[#allocation6 + $0x127] sm:$0x1]
        %v3770 = vld [vmem:[#allocation6 + $0x13f] sm:$0x1]
        %v3771 = vld [vmem:[#allocation6 + $0x157] sm:$0x1]
        %v3772 = vld [vmem:[#allocation6 + $0x16f] sm:$0x1]
        %v3773 = vld [vmem:[#allocation6 + $0x187] sm:$0x1]
        %v3774 = vld [vmem:[#allocation6 + $0x19f] sm:$0x1]
        %v3775 = vld [vmem:[#allocation6 + $0x8] sm:$0x1]
        %v3776 = vld [vmem:[#allocation6 + $0x20] sm:$0x1]
        %v3777 = vld [vmem:[#allocation6 + $0x38] sm:$0x1]
        %v3778 = vld [vmem:[#allocation6 + $0x50] sm:$0x1]
        %v3779 = vld [vmem:[#allocation6 + $0x68] sm:$0x1]
        %v3780 = vld [vmem:[#allocation6 + $0x80] sm:$0x1]
        %v3781 = vld [vmem:[#allocation6 + $0x98] sm:$0x1]
        %v3782 = vld [vmem:[#allocation6 + $0xb0] sm:$0x1]
        %v3783 = vld [vmem:[#allocation6 + $0xc8] sm:$0x1]
        %v3784 = vld [vmem:[#allocation6 + $0xe0] sm:$0x1]
        %v3785 = vld [vmem:[#allocation6 + $0xf8] sm:$0x1]
        %v3786 = vld [vmem:[#allocation6 + $0x110] sm:$0x1]
        %v3787 = vld [vmem:[#allocation6 + $0x128] sm:$0x1]
        %v3788 = vld [vmem:[#allocation6 + $0x140] sm:$0x1]
        %v3789 = vld [vmem:[#allocation6 + $0x158] sm:$0x1]
        %v3790 = vld [vmem:[#allocation6 + $0x170] sm:$0x1]
        %v3791 = vld [vmem:[#allocation6 + $0x188] sm:$0x1]
        %v3792 = vld [vmem:[#allocation6 + $0x1a0] sm:$0x1]
        %v3793 = vmax.f32 %v3739, %v3757
        %v3794 = vmax.f32 %v3740, %v3758
        %v3795 = vmax.f32 %v3741, %v3759
        %v3796 = vmax.f32 %v3742, %v3760
        %v3797 = vmax.f32 %v3743, %v3761
        %v3798 = vmax.f32 %v3744, %v3762
        %v3799 = vmax.f32 %v3745, %v3763
        %v3800 = vmax.f32 %v3746, %v3764
        %v3801 = vmax.f32 %v3747, %v3765
        %v3802 = vmax.f32 %v3748, %v3766
        %v3803 = vmax.f32 %v3749, %v3767
        %v3804 = vmax.f32 %v3750, %v3768
        %v3805 = vmax.f32 %v3751, %v3769
        %v3806 = vmax.f32 %v3752, %v3770
        %v3807 = vmax.f32 %v3753, %v3771
        %v3808 = vmax.f32 %v3754, %v3772
        %v3809 = vmax.f32 %v3755, %v3773
        %v3810 = vmax.f32 %v3756, %v3774
        %v3811 = vmax.f32 %v3793, %v3775
        %v3812 = vmax.f32 %v3794, %v3776
        %v3813 = vmax.f32 %v3795, %v3777
        %v3814 = vmax.f32 %v3796, %v3778
        %v3815 = vmax.f32 %v3797, %v3779
        %v3816 = vmax.f32 %v3798, %v3780
        %v3817 = vmax.f32 %v3799, %v3781
        %v3818 = vmax.f32 %v3800, %v3782
        %v3819 = vmax.f32 %v3801, %v3783
        %v3820 = vmax.f32 %v3802, %v3784
        %v3821 = vmax.f32 %v3803, %v3785
        %v3822 = vmax.f32 %v3804, %v3786
        %v3823 = vmax.f32 %v3805, %v3787
        %v3824 = vmax.f32 %v3806, %v3788
        %v3825 = vmax.f32 %v3807, %v3789
        %v3826 = vmax.f32 %v3808, %v3790
        %v3827 = vmax.f32 %v3809, %v3791
        %v3828 = vmax.f32 %v3810, %v3792
        %3829 = vst.msk [vmem:[#allocation10 + $0x3] sm:$0x1] %vm3504, %v3811
        %3830 = vst.msk [vmem:[#allocation10 + $0xb] sm:$0x1] %vm3504, %v3812
        %3831 = vst.msk [vmem:[#allocation10 + $0x13] sm:$0x1] %vm3504, %v3813
        %3832 = vst.msk [vmem:[#allocation10 + $0x1b] sm:$0x1] %vm3504, %v3814
        %3833 = vst.msk [vmem:[#allocation10 + $0x23] sm:$0x1] %vm3504, %v3815
        %3834 = vst.msk [vmem:[#allocation10 + $0x2b] sm:$0x1] %vm3504, %v3816
        %3835 = vst.msk [vmem:[#allocation10 + $0x33] sm:$0x1] %vm3504, %v3817
        %3836 = vst.msk [vmem:[#allocation10 + $0x3b] sm:$0x1] %vm3504, %v3818
        %3837 = vst.msk [vmem:[#allocation10 + $0x43] sm:$0x1] %vm3504, %v3819
        %3838 = vst.msk [vmem:[#allocation10 + $0x4b] sm:$0x1] %vm3504, %v3820
        %3839 = vst.msk [vmem:[#allocation10 + $0x53] sm:$0x1] %vm3504, %v3821
        %3840 = vst.msk [vmem:[#allocation10 + $0x5b] sm:$0x1] %vm3504, %v3822
        %3841 = vst.msk [vmem:[#allocation10 + $0x63] sm:$0x1] %vm3504, %v3823
        %3842 = vst.msk [vmem:[#allocation10 + $0x6b] sm:$0x1] %vm3504, %v3824
        %3843 = vst.msk [vmem:[#allocation10 + $0x73] sm:$0x1] %vm3504, %v3825
        %3844 = vst.msk [vmem:[#allocation10 + $0x7b] sm:$0x1] %vm3504, %v3826
        %3845 = vst.msk [vmem:[#allocation10 + $0x83] sm:$0x1] %vm3504, %v3827
        %3846 = vst.msk [vmem:[#allocation10 + $0x8b] sm:$0x1] %vm3504, %v3828
        %v3847 = vld [vmem:[#allocation6 + $0x8] sm:$0x1]
        %v3848 = vld [vmem:[#allocation6 + $0x20] sm:$0x1]
        %v3849 = vld [vmem:[#allocation6 + $0x38] sm:$0x1]
        %v3850 = vld [vmem:[#allocation6 + $0x50] sm:$0x1]
        %v3851 = vld [vmem:[#allocation6 + $0x68] sm:$0x1]
        %v3852 = vld [vmem:[#allocation6 + $0x80] sm:$0x1]
        %v3853 = vld [vmem:[#allocation6 + $0x98] sm:$0x1]
        %v3854 = vld [vmem:[#allocation6 + $0xb0] sm:$0x1]
        %v3855 = vld [vmem:[#allocation6 + $0xc8] sm:$0x1]
        %v3856 = vld [vmem:[#allocation6 + $0xe0] sm:$0x1]
        %v3857 = vld [vmem:[#allocation6 + $0xf8] sm:$0x1]
        %v3858 = vld [vmem:[#allocation6 + $0x110] sm:$0x1]
        %v3859 = vld [vmem:[#allocation6 + $0x128] sm:$0x1]
        %v3860 = vld [vmem:[#allocation6 + $0x140] sm:$0x1]
        %v3861 = vld [vmem:[#allocation6 + $0x158] sm:$0x1]
        %v3862 = vld [vmem:[#allocation6 + $0x170] sm:$0x1]
        %v3863 = vld [vmem:[#allocation6 + $0x188] sm:$0x1]
        %v3864 = vld [vmem:[#allocation6 + $0x1a0] sm:$0x1]
        %v3865 = vld [vmem:[#allocation6 + $0x9] sm:$0x1]
        %v3866 = vld [vmem:[#allocation6 + $0x21] sm:$0x1]
        %v3867 = vld [vmem:[#allocation6 + $0x39] sm:$0x1]
        %v3868 = vld [vmem:[#allocation6 + $0x51] sm:$0x1]
        %v3869 = vld [vmem:[#allocation6 + $0x69] sm:$0x1]
        %v3870 = vld [vmem:[#allocation6 + $0x81] sm:$0x1]
        %v3871 = vld [vmem:[#allocation6 + $0x99] sm:$0x1]
        %v3872 = vld [vmem:[#allocation6 + $0xb1] sm:$0x1]
        %v3873 = vld [vmem:[#allocation6 + $0xc9] sm:$0x1]
        %v3874 = vld [vmem:[#allocation6 + $0xe1] sm:$0x1]
        %v3875 = vld [vmem:[#allocation6 + $0xf9] sm:$0x1]
        %v3876 = vld [vmem:[#allocation6 + $0x111] sm:$0x1]
        %v3877 = vld [vmem:[#allocation6 + $0x129] sm:$0x1]
        %v3878 = vld [vmem:[#allocation6 + $0x141] sm:$0x1]
        %v3879 = vld [vmem:[#allocation6 + $0x159] sm:$0x1]
        %v3880 = vld [vmem:[#allocation6 + $0x171] sm:$0x1]
        %v3881 = vld [vmem:[#allocation6 + $0x189] sm:$0x1]
        %v3882 = vld [vmem:[#allocation6 + $0x1a1] sm:$0x1]
        %v3883 = vld [vmem:[#allocation6 + $0xa] sm:$0x1]
        %v3884 = vld [vmem:[#allocation6 + $0x22] sm:$0x1]
        %v3885 = vld [vmem:[#allocation6 + $0x3a] sm:$0x1]
        %v3886 = vld [vmem:[#allocation6 + $0x52] sm:$0x1]
        %v3887 = vld [vmem:[#allocation6 + $0x6a] sm:$0x1]
        %v3888 = vld [vmem:[#allocation6 + $0x82] sm:$0x1]
        %v3889 = vld [vmem:[#allocation6 + $0x9a] sm:$0x1]
        %v3890 = vld [vmem:[#allocation6 + $0xb2] sm:$0x1]
        %v3891 = vld [vmem:[#allocation6 + $0xca] sm:$0x1]
        %v3892 = vld [vmem:[#allocation6 + $0xe2] sm:$0x1]
        %v3893 = vld [vmem:[#allocation6 + $0xfa] sm:$0x1]
        %v3894 = vld [vmem:[#allocation6 + $0x112] sm:$0x1]
        %v3895 = vld [vmem:[#allocation6 + $0x12a] sm:$0x1]
        %v3896 = vld [vmem:[#allocation6 + $0x142] sm:$0x1]
        %v3897 = vld [vmem:[#allocation6 + $0x15a] sm:$0x1]
        %v3898 = vld [vmem:[#allocation6 + $0x172] sm:$0x1]
        %v3899 = vld [vmem:[#allocation6 + $0x18a] sm:$0x1]
        %v3900 = vld [vmem:[#allocation6 + $0x1a2] sm:$0x1]
        %v3901 = vmax.f32 %v3847, %v3865
        %v3902 = vmax.f32 %v3848, %v3866
        %v3903 = vmax.f32 %v3849, %v3867
        %v3904 = vmax.f32 %v3850, %v3868
        %v3905 = vmax.f32 %v3851, %v3869
        %v3906 = vmax.f32 %v3852, %v3870
        %v3907 = vmax.f32 %v3853, %v3871
        %v3908 = vmax.f32 %v3854, %v3872
        %v3909 = vmax.f32 %v3855, %v3873
        %v3910 = vmax.f32 %v3856, %v3874
        %v3911 = vmax.f32 %v3857, %v3875
        %v3912 = vmax.f32 %v3858, %v3876
        %v3913 = vmax.f32 %v3859, %v3877
        %v3914 = vmax.f32 %v3860, %v3878
        %v3915 = vmax.f32 %v3861, %v3879
        %v3916 = vmax.f32 %v3862, %v3880
        %v3917 = vmax.f32 %v3863, %v3881
        %v3918 = vmax.f32 %v3864, %v3882
        %v3919 = vmax.f32 %v3901, %v3883
        %v3920 = vmax.f32 %v3902, %v3884
        %v3921 = vmax.f32 %v3903, %v3885
        %v3922 = vmax.f32 %v3904, %v3886
        %v3923 = vmax.f32 %v3905, %v3887
        %v3924 = vmax.f32 %v3906, %v3888
        %v3925 = vmax.f32 %v3907, %v3889
        %v3926 = vmax.f32 %v3908, %v3890
        %v3927 = vmax.f32 %v3909, %v3891
        %v3928 = vmax.f32 %v3910, %v3892
        %v3929 = vmax.f32 %v3911, %v3893
        %v3930 = vmax.f32 %v3912, %v3894
        %v3931 = vmax.f32 %v3913, %v3895
        %v3932 = vmax.f32 %v3914, %v3896
        %v3933 = vmax.f32 %v3915, %v3897
        %v3934 = vmax.f32 %v3916, %v3898
        %v3935 = vmax.f32 %v3917, %v3899
        %v3936 = vmax.f32 %v3918, %v3900
        %3937 = vst.msk [vmem:[#allocation10 + $0x4] sm:$0x1] %vm3504, %v3919
        %3938 = vst.msk [vmem:[#allocation10 + $0xc] sm:$0x1] %vm3504, %v3920
        %3939 = vst.msk [vmem:[#allocation10 + $0x14] sm:$0x1] %vm3504, %v3921
        %3940 = vst.msk [vmem:[#allocation10 + $0x1c] sm:$0x1] %vm3504, %v3922
        %3941 = vst.msk [vmem:[#allocation10 + $0x24] sm:$0x1] %vm3504, %v3923
        %3942 = vst.msk [vmem:[#allocation10 + $0x2c] sm:$0x1] %vm3504, %v3924
        %3943 = vst.msk [vmem:[#allocation10 + $0x34] sm:$0x1] %vm3504, %v3925
        %3944 = vst.msk [vmem:[#allocation10 + $0x3c] sm:$0x1] %vm3504, %v3926
        %3945 = vst.msk [vmem:[#allocation10 + $0x44] sm:$0x1] %vm3504, %v3927
        %3946 = vst.msk [vmem:[#allocation10 + $0x4c] sm:$0x1] %vm3504, %v3928
        %3947 = vst.msk [vmem:[#allocation10 + $0x54] sm:$0x1] %vm3504, %v3929
        %3948 = vst.msk [vmem:[#allocation10 + $0x5c] sm:$0x1] %vm3504, %v3930
        %3949 = vst.msk [vmem:[#allocation10 + $0x64] sm:$0x1] %vm3504, %v3931
        %3950 = vst.msk [vmem:[#allocation10 + $0x6c] sm:$0x1] %vm3504, %v3932
        %3951 = vst.msk [vmem:[#allocation10 + $0x74] sm:$0x1] %vm3504, %v3933
        %3952 = vst.msk [vmem:[#allocation10 + $0x7c] sm:$0x1] %vm3504, %v3934
        %3953 = vst.msk [vmem:[#allocation10 + $0x84] sm:$0x1] %vm3504, %v3935
        %3954 = vst.msk [vmem:[#allocation10 + $0x8c] sm:$0x1] %vm3504, %v3936
        %v3955 = vld [vmem:[#allocation6 + $0xa] sm:$0x1]
        %v3956 = vld [vmem:[#allocation6 + $0x22] sm:$0x1]
        %v3957 = vld [vmem:[#allocation6 + $0x3a] sm:$0x1]
        %v3958 = vld [vmem:[#allocation6 + $0x52] sm:$0x1]
        %v3959 = vld [vmem:[#allocation6 + $0x6a] sm:$0x1]
        %v3960 = vld [vmem:[#allocation6 + $0x82] sm:$0x1]
        %v3961 = vld [vmem:[#allocation6 + $0x9a] sm:$0x1]
        %v3962 = vld [vmem:[#allocation6 + $0xb2] sm:$0x1]
        %v3963 = vld [vmem:[#allocation6 + $0xca] sm:$0x1]
        %v3964 = vld [vmem:[#allocation6 + $0xe2] sm:$0x1]
        %v3965 = vld [vmem:[#allocation6 + $0xfa] sm:$0x1]
        %v3966 = vld [vmem:[#allocation6 + $0x112] sm:$0x1]
        %v3967 = vld [vmem:[#allocation6 + $0x12a] sm:$0x1]
        %v3968 = vld [vmem:[#allocation6 + $0x142] sm:$0x1]
        %v3969 = vld [vmem:[#allocation6 + $0x15a] sm:$0x1]
        %v3970 = vld [vmem:[#allocation6 + $0x172] sm:$0x1]
        %v3971 = vld [vmem:[#allocation6 + $0x18a] sm:$0x1]
        %v3972 = vld [vmem:[#allocation6 + $0x1a2] sm:$0x1]
        %v3973 = vld [vmem:[#allocation6 + $0xb] sm:$0x1]
        %v3974 = vld [vmem:[#allocation6 + $0x23] sm:$0x1]
        %v3975 = vld [vmem:[#allocation6 + $0x3b] sm:$0x1]
        %v3976 = vld [vmem:[#allocation6 + $0x53] sm:$0x1]
        %v3977 = vld [vmem:[#allocation6 + $0x6b] sm:$0x1]
        %v3978 = vld [vmem:[#allocation6 + $0x83] sm:$0x1]
        %v3979 = vld [vmem:[#allocation6 + $0x9b] sm:$0x1]
        %v3980 = vld [vmem:[#allocation6 + $0xb3] sm:$0x1]
        %v3981 = vld [vmem:[#allocation6 + $0xcb] sm:$0x1]
        %v3982 = vld [vmem:[#allocation6 + $0xe3] sm:$0x1]
        %v3983 = vld [vmem:[#allocation6 + $0xfb] sm:$0x1]
        %v3984 = vld [vmem:[#allocation6 + $0x113] sm:$0x1]
        %v3985 = vld [vmem:[#allocation6 + $0x12b] sm:$0x1]
        %v3986 = vld [vmem:[#allocation6 + $0x143] sm:$0x1]
        %v3987 = vld [vmem:[#allocation6 + $0x15b] sm:$0x1]
        %v3988 = vld [vmem:[#allocation6 + $0x173] sm:$0x1]
        %v3989 = vld [vmem:[#allocation6 + $0x18b] sm:$0x1]
        %v3990 = vld [vmem:[#allocation6 + $0x1a3] sm:$0x1]
        %v3991 = vld [vmem:[#allocation6 + $0xc] sm:$0x1]
        %v3992 = vld [vmem:[#allocation6 + $0x24] sm:$0x1]
        %v3993 = vld [vmem:[#allocation6 + $0x3c] sm:$0x1]
        %v3994 = vld [vmem:[#allocation6 + $0x54] sm:$0x1]
        %v3995 = vld [vmem:[#allocation6 + $0x6c] sm:$0x1]
        %v3996 = vld [vmem:[#allocation6 + $0x84] sm:$0x1]
        %v3997 = vld [vmem:[#allocation6 + $0x9c] sm:$0x1]
        %v3998 = vld [vmem:[#allocation6 + $0xb4] sm:$0x1]
        %v3999 = vld [vmem:[#allocation6 + $0xcc] sm:$0x1]
        %v4000 = vld [vmem:[#allocation6 + $0xe4] sm:$0x1]
        %v4001 = vld [vmem:[#allocation6 + $0xfc] sm:$0x1]
        %v4002 = vld [vmem:[#allocation6 + $0x114] sm:$0x1]
        %v4003 = vld [vmem:[#allocation6 + $0x12c] sm:$0x1]
        %v4004 = vld [vmem:[#allocation6 + $0x144] sm:$0x1]
        %v4005 = vld [vmem:[#allocation6 + $0x15c] sm:$0x1]
        %v4006 = vld [vmem:[#allocation6 + $0x174] sm:$0x1]
        %v4007 = vld [vmem:[#allocation6 + $0x18c] sm:$0x1]
        %v4008 = vld [vmem:[#allocation6 + $0x1a4] sm:$0x1]
        %v4009 = vmax.f32 %v3955, %v3973
        %v4010 = vmax.f32 %v3956, %v3974
        %v4011 = vmax.f32 %v3957, %v3975
        %v4012 = vmax.f32 %v3958, %v3976
        %v4013 = vmax.f32 %v3959, %v3977
        %v4014 = vmax.f32 %v3960, %v3978
        %v4015 = vmax.f32 %v3961, %v3979
        %v4016 = vmax.f32 %v3962, %v3980
        %v4017 = vmax.f32 %v3963, %v3981
        %v4018 = vmax.f32 %v3964, %v3982
        %v4019 = vmax.f32 %v3965, %v3983
        %v4020 = vmax.f32 %v3966, %v3984
        %v4021 = vmax.f32 %v3967, %v3985
        %v4022 = vmax.f32 %v3968, %v3986
        %v4023 = vmax.f32 %v3969, %v3987
        %v4024 = vmax.f32 %v3970, %v3988
        %v4025 = vmax.f32 %v3971, %v3989
        %v4026 = vmax.f32 %v3972, %v3990
        %v4027 = vmax.f32 %v4009, %v3991
        %v4028 = vmax.f32 %v4010, %v3992
        %v4029 = vmax.f32 %v4011, %v3993
        %v4030 = vmax.f32 %v4012, %v3994
        %v4031 = vmax.f32 %v4013, %v3995
        %v4032 = vmax.f32 %v4014, %v3996
        %v4033 = vmax.f32 %v4015, %v3997
        %v4034 = vmax.f32 %v4016, %v3998
        %v4035 = vmax.f32 %v4017, %v3999
        %v4036 = vmax.f32 %v4018, %v4000
        %v4037 = vmax.f32 %v4019, %v4001
        %v4038 = vmax.f32 %v4020, %v4002
        %v4039 = vmax.f32 %v4021, %v4003
        %v4040 = vmax.f32 %v4022, %v4004
        %v4041 = vmax.f32 %v4023, %v4005
        %v4042 = vmax.f32 %v4024, %v4006
        %v4043 = vmax.f32 %v4025, %v4007
        %v4044 = vmax.f32 %v4026, %v4008
        %4045 = vst.msk [vmem:[#allocation10 + $0x5] sm:$0x1] %vm3504, %v4027
        %4046 = vst.msk [vmem:[#allocation10 + $0xd] sm:$0x1] %vm3504, %v4028
        %4047 = vst.msk [vmem:[#allocation10 + $0x15] sm:$0x1] %vm3504, %v4029
        %4048 = vst.msk [vmem:[#allocation10 + $0x1d] sm:$0x1] %vm3504, %v4030
        %4049 = vst.msk [vmem:[#allocation10 + $0x25] sm:$0x1] %vm3504, %v4031
        %4050 = vst.msk [vmem:[#allocation10 + $0x2d] sm:$0x1] %vm3504, %v4032
        %4051 = vst.msk [vmem:[#allocation10 + $0x35] sm:$0x1] %vm3504, %v4033
        %4052 = vst.msk [vmem:[#allocation10 + $0x3d] sm:$0x1] %vm3504, %v4034
        %4053 = vst.msk [vmem:[#allocation10 + $0x45] sm:$0x1] %vm3504, %v4035
        %4054 = vst.msk [vmem:[#allocation10 + $0x4d] sm:$0x1] %vm3504, %v4036
        %4055 = vst.msk [vmem:[#allocation10 + $0x55] sm:$0x1] %vm3504, %v4037
        %4056 = vst.msk [vmem:[#allocation10 + $0x5d] sm:$0x1] %vm3504, %v4038
        %4057 = vst.msk [vmem:[#allocation10 + $0x65] sm:$0x1] %vm3504, %v4039
        %4058 = vst.msk [vmem:[#allocation10 + $0x6d] sm:$0x1] %vm3504, %v4040
        %4059 = vst.msk [vmem:[#allocation10 + $0x75] sm:$0x1] %vm3504, %v4041
        %4060 = vst.msk [vmem:[#allocation10 + $0x7d] sm:$0x1] %vm3504, %v4042
        %4061 = vst.msk [vmem:[#allocation10 + $0x85] sm:$0x1] %vm3504, %v4043
        %4062 = vst.msk [vmem:[#allocation10 + $0x8d] sm:$0x1] %vm3504, %v4044
        %v4063 = vld [vmem:[#allocation6 + $0xc] sm:$0x1]
        %v4064 = vld [vmem:[#allocation6 + $0x24] sm:$0x1]
        %v4065 = vld [vmem:[#allocation6 + $0x3c] sm:$0x1]
        %v4066 = vld [vmem:[#allocation6 + $0x54] sm:$0x1]
        %v4067 = vld [vmem:[#allocation6 + $0x6c] sm:$0x1]
        %v4068 = vld [vmem:[#allocation6 + $0x84] sm:$0x1]
        %v4069 = vld [vmem:[#allocation6 + $0x9c] sm:$0x1]
        %v4070 = vld [vmem:[#allocation6 + $0xb4] sm:$0x1]
        %v4071 = vld [vmem:[#allocation6 + $0xcc] sm:$0x1]
        %v4072 = vld [vmem:[#allocation6 + $0xe4] sm:$0x1]
        %v4073 = vld [vmem:[#allocation6 + $0xfc] sm:$0x1]
        %v4074 = vld [vmem:[#allocation6 + $0x114] sm:$0x1]
        %v4075 = vld [vmem:[#allocation6 + $0x12c] sm:$0x1]
        %v4076 = vld [vmem:[#allocation6 + $0x144] sm:$0x1]
        %v4077 = vld [vmem:[#allocation6 + $0x15c] sm:$0x1]
        %v4078 = vld [vmem:[#allocation6 + $0x174] sm:$0x1]
        %v4079 = vld [vmem:[#allocation6 + $0x18c] sm:$0x1]
        %v4080 = vld [vmem:[#allocation6 + $0x1a4] sm:$0x1]
        %v4081 = vld [vmem:[#allocation6 + $0xd] sm:$0x1]
        %v4082 = vld [vmem:[#allocation6 + $0x25] sm:$0x1]
        %v4083 = vld [vmem:[#allocation6 + $0x3d] sm:$0x1]
        %v4084 = vld [vmem:[#allocation6 + $0x55] sm:$0x1]
        %v4085 = vld [vmem:[#allocation6 + $0x6d] sm:$0x1]
        %v4086 = vld [vmem:[#allocation6 + $0x85] sm:$0x1]
        %v4087 = vld [vmem:[#allocation6 + $0x9d] sm:$0x1]
        %v4088 = vld [vmem:[#allocation6 + $0xb5] sm:$0x1]
        %v4089 = vld [vmem:[#allocation6 + $0xcd] sm:$0x1]
        %v4090 = vld [vmem:[#allocation6 + $0xe5] sm:$0x1]
        %v4091 = vld [vmem:[#allocation6 + $0xfd] sm:$0x1]
        %v4092 = vld [vmem:[#allocation6 + $0x115] sm:$0x1]
        %v4093 = vld [vmem:[#allocation6 + $0x12d] sm:$0x1]
        %v4094 = vld [vmem:[#allocation6 + $0x145] sm:$0x1]
        %v4095 = vld [vmem:[#allocation6 + $0x15d] sm:$0x1]
        %v4096 = vld [vmem:[#allocation6 + $0x175] sm:$0x1]
        %v4097 = vld [vmem:[#allocation6 + $0x18d] sm:$0x1]
        %v4098 = vld [vmem:[#allocation6 + $0x1a5] sm:$0x1]
        %v4099 = vld [vmem:[#allocation6 + $0xe] sm:$0x1]
        %v4100 = vld [vmem:[#allocation6 + $0x26] sm:$0x1]
        %v4101 = vld [vmem:[#allocation6 + $0x3e] sm:$0x1]
        %v4102 = vld [vmem:[#allocation6 + $0x56] sm:$0x1]
        %v4103 = vld [vmem:[#allocation6 + $0x6e] sm:$0x1]
        %v4104 = vld [vmem:[#allocation6 + $0x86] sm:$0x1]
        %v4105 = vld [vmem:[#allocation6 + $0x9e] sm:$0x1]
        %v4106 = vld [vmem:[#allocation6 + $0xb6] sm:$0x1]
        %v4107 = vld [vmem:[#allocation6 + $0xce] sm:$0x1]
        %v4108 = vld [vmem:[#allocation6 + $0xe6] sm:$0x1]
        %v4109 = vld [vmem:[#allocation6 + $0xfe] sm:$0x1]
        %v4110 = vld [vmem:[#allocation6 + $0x116] sm:$0x1]
        %v4111 = vld [vmem:[#allocation6 + $0x12e] sm:$0x1]
        %v4112 = vld [vmem:[#allocation6 + $0x146] sm:$0x1]
        %v4113 = vld [vmem:[#allocation6 + $0x15e] sm:$0x1]
        %v4114 = vld [vmem:[#allocation6 + $0x176] sm:$0x1]
        %v4115 = vld [vmem:[#allocation6 + $0x18e] sm:$0x1]
        %v4116 = vld [vmem:[#allocation6 + $0x1a6] sm:$0x1]
        %v4117 = vmax.f32 %v4063, %v4081
        %v4118 = vmax.f32 %v4064, %v4082
        %v4119 = vmax.f32 %v4065, %v4083
        %v4120 = vmax.f32 %v4066, %v4084
        %v4121 = vmax.f32 %v4067, %v4085
        %v4122 = vmax.f32 %v4068, %v4086
        %v4123 = vmax.f32 %v4069, %v4087
        %v4124 = vmax.f32 %v4070, %v4088
        %v4125 = vmax.f32 %v4071, %v4089
        %v4126 = vmax.f32 %v4072, %v4090
        %v4127 = vmax.f32 %v4073, %v4091
        %v4128 = vmax.f32 %v4074, %v4092
        %v4129 = vmax.f32 %v4075, %v4093
        %v4130 = vmax.f32 %v4076, %v4094
        %v4131 = vmax.f32 %v4077, %v4095
        %v4132 = vmax.f32 %v4078, %v4096
        %v4133 = vmax.f32 %v4079, %v4097
        %v4134 = vmax.f32 %v4080, %v4098
        %v4135 = vmax.f32 %v4117, %v4099
        %v4136 = vmax.f32 %v4118, %v4100
        %v4137 = vmax.f32 %v4119, %v4101
        %v4138 = vmax.f32 %v4120, %v4102
        %v4139 = vmax.f32 %v4121, %v4103
        %v4140 = vmax.f32 %v4122, %v4104
        %v4141 = vmax.f32 %v4123, %v4105
        %v4142 = vmax.f32 %v4124, %v4106
        %v4143 = vmax.f32 %v4125, %v4107
        %v4144 = vmax.f32 %v4126, %v4108
        %v4145 = vmax.f32 %v4127, %v4109
        %v4146 = vmax.f32 %v4128, %v4110
        %v4147 = vmax.f32 %v4129, %v4111
        %v4148 = vmax.f32 %v4130, %v4112
        %v4149 = vmax.f32 %v4131, %v4113
        %v4150 = vmax.f32 %v4132, %v4114
        %v4151 = vmax.f32 %v4133, %v4115
        %v4152 = vmax.f32 %v4134, %v4116
        %4153 = vst.msk [vmem:[#allocation10 + $0x6] sm:$0x1] %vm3504, %v4135
        %4154 = vst.msk [vmem:[#allocation10 + $0xe] sm:$0x1] %vm3504, %v4136
        %4155 = vst.msk [vmem:[#allocation10 + $0x16] sm:$0x1] %vm3504, %v4137
        %4156 = vst.msk [vmem:[#allocation10 + $0x1e] sm:$0x1] %vm3504, %v4138
        %4157 = vst.msk [vmem:[#allocation10 + $0x26] sm:$0x1] %vm3504, %v4139
        %4158 = vst.msk [vmem:[#allocation10 + $0x2e] sm:$0x1] %vm3504, %v4140
        %4159 = vst.msk [vmem:[#allocation10 + $0x36] sm:$0x1] %vm3504, %v4141
        %4160 = vst.msk [vmem:[#allocation10 + $0x3e] sm:$0x1] %vm3504, %v4142
        %4161 = vst.msk [vmem:[#allocation10 + $0x46] sm:$0x1] %vm3504, %v4143
        %4162 = vst.msk [vmem:[#allocation10 + $0x4e] sm:$0x1] %vm3504, %v4144
        %4163 = vst.msk [vmem:[#allocation10 + $0x56] sm:$0x1] %vm3504, %v4145
        %4164 = vst.msk [vmem:[#allocation10 + $0x5e] sm:$0x1] %vm3504, %v4146
        %4165 = vst.msk [vmem:[#allocation10 + $0x66] sm:$0x1] %vm3504, %v4147
        %4166 = vst.msk [vmem:[#allocation10 + $0x6e] sm:$0x1] %vm3504, %v4148
        %4167 = vst.msk [vmem:[#allocation10 + $0x76] sm:$0x1] %vm3504, %v4149
        %4168 = vst.msk [vmem:[#allocation10 + $0x7e] sm:$0x1] %vm3504, %v4150
        %4169 = vst.msk [vmem:[#allocation10 + $0x86] sm:$0x1] %vm3504, %v4151
        %4170 = vst.msk [vmem:[#allocation10 + $0x8e] sm:$0x1] %vm3504, %v4152
        %v4171 = vld [vmem:[#allocation6 + $0xe] sm:$0x1]
        %v4172 = vld [vmem:[#allocation6 + $0x26] sm:$0x1]
        %v4173 = vld [vmem:[#allocation6 + $0x3e] sm:$0x1]
        %v4174 = vld [vmem:[#allocation6 + $0x56] sm:$0x1]
        %v4175 = vld [vmem:[#allocation6 + $0x6e] sm:$0x1]
        %v4176 = vld [vmem:[#allocation6 + $0x86] sm:$0x1]
        %v4177 = vld [vmem:[#allocation6 + $0x9e] sm:$0x1]
        %v4178 = vld [vmem:[#allocation6 + $0xb6] sm:$0x1]
        %v4179 = vld [vmem:[#allocation6 + $0xce] sm:$0x1]
        %v4180 = vld [vmem:[#allocation6 + $0xe6] sm:$0x1]
        %v4181 = vld [vmem:[#allocation6 + $0xfe] sm:$0x1]
        %v4182 = vld [vmem:[#allocation6 + $0x116] sm:$0x1]
        %v4183 = vld [vmem:[#allocation6 + $0x12e] sm:$0x1]
        %v4184 = vld [vmem:[#allocation6 + $0x146] sm:$0x1]
        %v4185 = vld [vmem:[#allocation6 + $0x15e] sm:$0x1]
        %v4186 = vld [vmem:[#allocation6 + $0x176] sm:$0x1]
        %v4187 = vld [vmem:[#allocation6 + $0x18e] sm:$0x1]
        %v4188 = vld [vmem:[#allocation6 + $0x1a6] sm:$0x1]
        %v4189 = vld [vmem:[#allocation6 + $0xf] sm:$0x1]
        %v4190 = vld [vmem:[#allocation6 + $0x27] sm:$0x1]
        %v4191 = vld [vmem:[#allocation6 + $0x3f] sm:$0x1]
        %v4192 = vld [vmem:[#allocation6 + $0x57] sm:$0x1]
        %v4193 = vld [vmem:[#allocation6 + $0x6f] sm:$0x1]
        %v4194 = vld [vmem:[#allocation6 + $0x87] sm:$0x1]
        %v4195 = vld [vmem:[#allocation6 + $0x9f] sm:$0x1]
        %v4196 = vld [vmem:[#allocation6 + $0xb7] sm:$0x1]
        %v4197 = vld [vmem:[#allocation6 + $0xcf] sm:$0x1]
        %v4198 = vld [vmem:[#allocation6 + $0xe7] sm:$0x1]
        %v4199 = vld [vmem:[#allocation6 + $0xff] sm:$0x1]
        %v4200 = vld [vmem:[#allocation6 + $0x117] sm:$0x1]
        %v4201 = vld [vmem:[#allocation6 + $0x12f] sm:$0x1]
        %v4202 = vld [vmem:[#allocation6 + $0x147] sm:$0x1]
        %v4203 = vld [vmem:[#allocation6 + $0x15f] sm:$0x1]
        %v4204 = vld [vmem:[#allocation6 + $0x177] sm:$0x1]
        %v4205 = vld [vmem:[#allocation6 + $0x18f] sm:$0x1]
        %v4206 = vld [vmem:[#allocation6 + $0x1a7] sm:$0x1]
        %v4207 = vld [vmem:[#allocation6 + $0x10] sm:$0x1]
        %v4208 = vld [vmem:[#allocation6 + $0x28] sm:$0x1]
        %v4209 = vld [vmem:[#allocation6 + $0x40] sm:$0x1]
        %v4210 = vld [vmem:[#allocation6 + $0x58] sm:$0x1]
        %v4211 = vld [vmem:[#allocation6 + $0x70] sm:$0x1]
        %v4212 = vld [vmem:[#allocation6 + $0x88] sm:$0x1]
        %v4213 = vld [vmem:[#allocation6 + $0xa0] sm:$0x1]
        %v4214 = vld [vmem:[#allocation6 + $0xb8] sm:$0x1]
        %v4215 = vld [vmem:[#allocation6 + $0xd0] sm:$0x1]
        %v4216 = vld [vmem:[#allocation6 + $0xe8] sm:$0x1]
        %v4217 = vld [vmem:[#allocation6 + $0x100] sm:$0x1]
        %v4218 = vld [vmem:[#allocation6 + $0x118] sm:$0x1]
        %v4219 = vld [vmem:[#allocation6 + $0x130] sm:$0x1]
        %v4220 = vld [vmem:[#allocation6 + $0x148] sm:$0x1]
        %v4221 = vld [vmem:[#allocation6 + $0x160] sm:$0x1]
        %v4222 = vld [vmem:[#allocation6 + $0x178] sm:$0x1]
        %v4223 = vld [vmem:[#allocation6 + $0x190] sm:$0x1]
        %v4224 = vld [vmem:[#allocation6 + $0x1a8] sm:$0x1]
        %v4225 = vmax.f32 %v4171, %v4189
        %v4226 = vmax.f32 %v4172, %v4190
        %v4227 = vmax.f32 %v4173, %v4191
        %v4228 = vmax.f32 %v4174, %v4192
        %v4229 = vmax.f32 %v4175, %v4193
        %v4230 = vmax.f32 %v4176, %v4194
        %v4231 = vmax.f32 %v4177, %v4195
        %v4232 = vmax.f32 %v4178, %v4196
        %v4233 = vmax.f32 %v4179, %v4197
        %v4234 = vmax.f32 %v4180, %v4198
        %v4235 = vmax.f32 %v4181, %v4199
        %v4236 = vmax.f32 %v4182, %v4200
        %v4237 = vmax.f32 %v4183, %v4201
        %v4238 = vmax.f32 %v4184, %v4202
        %v4239 = vmax.f32 %v4185, %v4203
        %v4240 = vmax.f32 %v4186, %v4204
        %v4241 = vmax.f32 %v4187, %v4205
        %v4242 = vmax.f32 %v4188, %v4206
        %v4243 = vmax.f32 %v4225, %v4207
        %v4244 = vmax.f32 %v4226, %v4208
        %v4245 = vmax.f32 %v4227, %v4209
        %v4246 = vmax.f32 %v4228, %v4210
        %v4247 = vmax.f32 %v4229, %v4211
        %v4248 = vmax.f32 %v4230, %v4212
        %v4249 = vmax.f32 %v4231, %v4213
        %v4250 = vmax.f32 %v4232, %v4214
        %v4251 = vmax.f32 %v4233, %v4215
        %v4252 = vmax.f32 %v4234, %v4216
        %v4253 = vmax.f32 %v4235, %v4217
        %v4254 = vmax.f32 %v4236, %v4218
        %v4255 = vmax.f32 %v4237, %v4219
        %v4256 = vmax.f32 %v4238, %v4220
        %v4257 = vmax.f32 %v4239, %v4221
        %v4258 = vmax.f32 %v4240, %v4222
        %v4259 = vmax.f32 %v4241, %v4223
        %v4260 = vmax.f32 %v4242, %v4224
        %4261 = vst.msk [vmem:[#allocation10 + $0x7] sm:$0x1] %vm3504, %v4243
        %4262 = vst.msk [vmem:[#allocation10 + $0xf] sm:$0x1] %vm3504, %v4244
        %4263 = vst.msk [vmem:[#allocation10 + $0x17] sm:$0x1] %vm3504, %v4245
        %4264 = vst.msk [vmem:[#allocation10 + $0x1f] sm:$0x1] %vm3504, %v4246
        %4265 = vst.msk [vmem:[#allocation10 + $0x27] sm:$0x1] %vm3504, %v4247
        %4266 = vst.msk [vmem:[#allocation10 + $0x2f] sm:$0x1] %vm3504, %v4248
        %4267 = vst.msk [vmem:[#allocation10 + $0x37] sm:$0x1] %vm3504, %v4249
        %4268 = vst.msk [vmem:[#allocation10 + $0x3f] sm:$0x1] %vm3504, %v4250
        %4269 = vst.msk [vmem:[#allocation10 + $0x47] sm:$0x1] %vm3504, %v4251
        %4270 = vst.msk [vmem:[#allocation10 + $0x4f] sm:$0x1] %vm3504, %v4252
        %4271 = vst.msk [vmem:[#allocation10 + $0x57] sm:$0x1] %vm3504, %v4253
        %4272 = vst.msk [vmem:[#allocation10 + $0x5f] sm:$0x1] %vm3504, %v4254
        %4273 = vst.msk [vmem:[#allocation10 + $0x67] sm:$0x1] %vm3504, %v4255
        %4274 = vst.msk [vmem:[#allocation10 + $0x6f] sm:$0x1] %vm3504, %v4256
        %4275 = vst.msk [vmem:[#allocation10 + $0x77] sm:$0x1] %vm3504, %v4257
        %4276 = vst.msk [vmem:[#allocation10 + $0x7f] sm:$0x1] %vm3504, %v4258
        %4277 = vst.msk [vmem:[#allocation10 + $0x87] sm:$0x1] %vm3504, %v4259
        %4278 = vst.msk [vmem:[#allocation10 + $0x8f] sm:$0x1] %vm3504, %v4260
        %v4279 = vld [vmem:[#allocation10] sm:$0xff]
        %s4280 = scalar_lea.vmem [#allocation10], 8
        %v4281 = vld [vmem:[%s4280] sm:$0xff]
        %s4282 = scalar_lea.vmem [#allocation10], 16
        %v4283 = vld [vmem:[%s4282] sm:$0xff]
        %v4284 = vmax.f32 %v4279, %v4281
        %v4285 = vmax.f32 %v4284, %v4283
        %4286 = vst.msk [vmem:[#allocation2 + $0xb] sm:$0xff] %vm438, %v4285
        %v4287 = vld [vmem:[%s4282] sm:$0xff]
        %s4288 = scalar_lea.vmem [#allocation10], 24
        %v4289 = vld [vmem:[%s4288] sm:$0xff]
        %s4290 = scalar_lea.vmem [#allocation10], 32
        %v4291 = vld [vmem:[%s4290] sm:$0xff]
        %v4292 = vmax.f32 %v4287, %v4289
        %v4293 = vmax.f32 %v4292, %v4291
        %4294 = vst.msk [vmem:[#allocation2 + $0x15] sm:$0xff] %vm438, %v4293
        %v4295 = vld [vmem:[%s4290] sm:$0xff]
        %s4296 = scalar_lea.vmem [#allocation10], 40
        %v4297 = vld [vmem:[%s4296] sm:$0xff]
        %s4298 = scalar_lea.vmem [#allocation10], 48
        %v4299 = vld [vmem:[%s4298] sm:$0xff]
        %v4300 = vmax.f32 %v4295, %v4297
        %v4301 = vmax.f32 %v4300, %v4299
        %4302 = vst.msk [vmem:[#allocation2 + $0x1f] sm:$0xff] %vm438, %v4301
        %v4303 = vld [vmem:[%s4298] sm:$0xff]
        %s4304 = scalar_lea.vmem [#allocation10], 56
        %v4305 = vld [vmem:[%s4304] sm:$0xff]
        %s4306 = scalar_lea.vmem [#allocation10], 64
        %v4307 = vld [vmem:[%s4306] sm:$0xff]
        %v4308 = vmax.f32 %v4303, %v4305
        %v4309 = vmax.f32 %v4308, %v4307
        %4310 = vst.msk [vmem:[#allocation2 + $0x29] sm:$0xff] %vm438, %v4309
        %v4311 = vld [vmem:[%s4306] sm:$0xff]
        %s4312 = scalar_lea.vmem [#allocation10], 72
        %v4313 = vld [vmem:[%s4312] sm:$0xff]
        %s4314 = scalar_lea.vmem [#allocation10], 80
        %v4315 = vld [vmem:[%s4314] sm:$0xff]
        %v4316 = vmax.f32 %v4311, %v4313
        %v4317 = vmax.f32 %v4316, %v4315
        %4318 = vst.msk [vmem:[#allocation2 + $0x33] sm:$0xff] %vm438, %v4317
        %v4319 = vld [vmem:[%s4314] sm:$0xff]
        %s4320 = scalar_lea.vmem [#allocation10], 88
        %v4321 = vld [vmem:[%s4320] sm:$0xff]
        %s4322 = scalar_lea.vmem [#allocation10], 96
        %v4323 = vld [vmem:[%s4322] sm:$0xff]
        %v4324 = vmax.f32 %v4319, %v4321
        %v4325 = vmax.f32 %v4324, %v4323
        %4326 = vst.msk [vmem:[#allocation2 + $0x3d] sm:$0xff] %vm438, %v4325
        %v4327 = vld [vmem:[%s4322] sm:$0xff]
        %s4328 = scalar_lea.vmem [#allocation10], 104
        %v4329 = vld [vmem:[%s4328] sm:$0xff]
        %s4330 = scalar_lea.vmem [#allocation10], 112
        %v4331 = vld [vmem:[%s4330] sm:$0xff]
        %v4332 = vmax.f32 %v4327, %v4329
        %v4333 = vmax.f32 %v4332, %v4331
        %4334 = vst.msk [vmem:[#allocation2 + $0x47] sm:$0xff] %vm438, %v4333
        %v4335 = vld [vmem:[%s4330] sm:$0xff]
        %s4336 = scalar_lea.vmem [#allocation10], 120
        %v4337 = vld [vmem:[%s4336] sm:$0xff]
        %s4338 = scalar_lea.vmem [#allocation10], 128
        %v4339 = vld [vmem:[%s4338] sm:$0xff]
        %v4340 = vmax.f32 %v4335, %v4337
        %v4341 = vmax.f32 %v4340, %v4339
        %4342 = vst.msk [vmem:[#allocation2 + $0x51] sm:$0xff] %vm438, %v4341
        %v4343 = vld [vmem:[#allocation2] sm:$0xff]
        %v4344 = vld [vmem:[#allocation2 + $0x8] sm:$0xff]
        %v4345 = vld [vmem:[#allocation2 + $0x10] sm:$0xff]
        %v4346 = vld [vmem:[#allocation2 + $0x18] sm:$0xff]
        %v4347 = vld [vmem:[#allocation2 + $0x20] sm:$0xff]
        %v4348 = vld [vmem:[#allocation2 + $0x28] sm:$0xff]
        %v4349 = vld [vmem:[#allocation2 + $0x30] sm:$0xff]
        %v4350 = vld [vmem:[#allocation2 + $0x38] sm:$0xff]
        %v4351 = vld [vmem:[#allocation2 + $0x40] sm:$0xff]
        %v4352 = vld [vmem:[#allocation2 + $0x48] sm:$0x3f]
        %v4353 = vld [vmem:[%s3] sm:$0xff]
        %v4354 = vld [vmem:[#allocation2 + $0x1] sm:$0xff]
        %v4355 = vld [vmem:[#allocation2 + $0x9] sm:$0xff]
        %v4356 = vld [vmem:[#allocation2 + $0x11] sm:$0xff]
        %v4357 = vld [vmem:[#allocation2 + $0x19] sm:$0xff]
        %v4358 = vld [vmem:[#allocation2 + $0x21] sm:$0xff]
        %v4359 = vld [vmem:[#allocation2 + $0x29] sm:$0xff]
        %v4360 = vld [vmem:[#allocation2 + $0x31] sm:$0xff]
        %v4361 = vld [vmem:[#allocation2 + $0x39] sm:$0xff]
        %v4362 = vld [vmem:[#allocation2 + $0x41] sm:$0xff]
        %v4363 = vld [vmem:[#allocation2 + $0x49] sm:$0x3f]
        %s4364 = scalar_lea.vmem %s3, 8
        %v4365 = vld [vmem:[%s4364] sm:$0xff]
        %v4367 = vsel %vm438, %v4354, 0
        %v4370 = vsel %vm438, %v4355, 0
        %v4373 = vsel %vm438, %v4356, 0
        %v4376 = vsel %vm438, %v4357, 0
        %v4379 = vsel %vm438, %v4358, 0
        %v4382 = vsel %vm438, %v4359, 0
        %v4385 = vsel %vm438, %v4360, 0
        %v4388 = vsel %vm438, %v4361, 0
        %v4391 = vsel %vm438, %v4362, 0
        %v4394 = vsel %vm438, %v4363, 0
        %4396 = vmatpush.msra.mxu0 0.0
        %4397 = vmatpush.msra.mxu0 0.0
        %4398 = vmatpush.msra.mxu0 0.0
        %4399 = vmatpush.msra.mxu0 0.0
        %4400 = vmatpush.msra.mxu0 0.0
        %4401 = vmatpush.msra.mxu0 0.0
        %4402 = vmatpush.msra.mxu0 0.0
        %4403 = vmatpush.msra.mxu0 0.0
        %4404 = vmatpush.msra.mxu0 0.0
        %4405 = vmatpush.msra.mxu0 0.0
        %4406 = vmatpush.msra.mxu0 0.0
        %4407 = vmatpush.msra.mxu0 0.0
        %4408 = vmatpush.msra.mxu0 0.0
        %4409 = vmatpush.msra.mxu0 0.0
        %4410 = vmatpush.msra.mxu0 0.0
        %4411 = vmatpush.msra.mxu0 %v4365
        %4412 = vmatmul.f32.gmra.mxu0 %v4367
        %v4413 = vpop.f32.mrf.mxu0
        %v4414 = vadd.f32 0.0, %v4413
        %4415 = vmatmul.f32.gmra.mxu0 %v4370
        %v4416 = vpop.f32.mrf.mxu0
        %v4417 = vadd.f32 0.0, %v4416
        %4418 = vmatmul.f32.gmra.mxu0 %v4373
        %v4419 = vpop.f32.mrf.mxu0
        %v4420 = vadd.f32 0.0, %v4419
        %4421 = vmatmul.f32.gmra.mxu0 %v4376
        %v4422 = vpop.f32.mrf.mxu0
        %v4423 = vadd.f32 0.0, %v4422
        %4424 = vmatmul.f32.gmra.mxu0 %v4379
        %v4425 = vpop.f32.mrf.mxu0
        %v4426 = vadd.f32 0.0, %v4425
        %4427 = vmatmul.f32.gmra.mxu0 %v4382
        %v4428 = vpop.f32.mrf.mxu0
        %v4429 = vadd.f32 0.0, %v4428
        %4430 = vmatmul.f32.gmra.mxu0 %v4385
        %v4431 = vpop.f32.mrf.mxu0
        %v4432 = vadd.f32 0.0, %v4431
        %4433 = vmatmul.f32.gmra.mxu0 %v4388
        %v4434 = vpop.f32.mrf.mxu0
        %v4435 = vadd.f32 0.0, %v4434
        %4436 = vmatmul.f32.gmra.mxu0 %v4391
        %v4437 = vpop.f32.mrf.mxu0
        %v4438 = vadd.f32 0.0, %v4437
        %4439 = vmatmul.f32.gmra.mxu0 %v4394
        %v4440 = vpop.f32.mrf.mxu0
        %v4441 = vadd.f32 0.0, %v4440
        %4442 = vdwg.mxu0
        %v4444 = vsel %vm438, %v4343, 0
        %v4447 = vsel %vm438, %v4344, 0
        %v4450 = vsel %vm438, %v4345, 0
        %v4453 = vsel %vm438, %v4346, 0
        %v4456 = vsel %vm438, %v4347, 0
        %v4459 = vsel %vm438, %v4348, 0
        %v4462 = vsel %vm438, %v4349, 0
        %v4465 = vsel %vm438, %v4350, 0
        %v4468 = vsel %vm438, %v4351, 0
        %v4471 = vsel %vm438, %v4352, 0
        %4473 = vmatpush.msra.mxu0 0.0
        %4474 = vmatpush.msra.mxu0 0.0
        %4475 = vmatpush.msra.mxu0 0.0
        %4476 = vmatpush.msra.mxu0 0.0
        %4477 = vmatpush.msra.mxu0 0.0
        %4478 = vmatpush.msra.mxu0 0.0
        %4479 = vmatpush.msra.mxu0 0.0
        %4480 = vmatpush.msra.mxu0 0.0
        %4481 = vmatpush.msra.mxu0 0.0
        %4482 = vmatpush.msra.mxu0 0.0
        %4483 = vmatpush.msra.mxu0 0.0
        %4484 = vmatpush.msra.mxu0 0.0
        %4485 = vmatpush.msra.mxu0 0.0
        %4486 = vmatpush.msra.mxu0 0.0
        %4487 = vmatpush.msra.mxu0 0.0
        %4488 = vmatpush.msra.mxu0 %v4353
        %4489 = vmatmul.f32.gmra.mxu0 %v4444
        %v4490 = vpop.f32.mrf.mxu0
        %v4491 = vadd.f32 %v4414, %v4490
        %4492 = vmatmul.f32.gmra.mxu0 %v4447
        %v4493 = vpop.f32.mrf.mxu0
        %v4494 = vadd.f32 %v4417, %v4493
        %4495 = vmatmul.f32.gmra.mxu0 %v4450
        %v4496 = vpop.f32.mrf.mxu0
        %v4497 = vadd.f32 %v4420, %v4496
        %4498 = vmatmul.f32.gmra.mxu0 %v4453
        %v4499 = vpop.f32.mrf.mxu0
        %v4500 = vadd.f32 %v4423, %v4499
        %4501 = vmatmul.f32.gmra.mxu0 %v4456
        %v4502 = vpop.f32.mrf.mxu0
        %v4503 = vadd.f32 %v4426, %v4502
        %4504 = vmatmul.f32.gmra.mxu0 %v4459
        %v4505 = vpop.f32.mrf.mxu0
        %v4506 = vadd.f32 %v4429, %v4505
        %4507 = vmatmul.f32.gmra.mxu0 %v4462
        %v4508 = vpop.f32.mrf.mxu0
        %v4509 = vadd.f32 %v4432, %v4508
        %4510 = vmatmul.f32.gmra.mxu0 %v4465
        %v4511 = vpop.f32.mrf.mxu0
        %v4512 = vadd.f32 %v4435, %v4511
        %4513 = vmatmul.f32.gmra.mxu0 %v4468
        %v4514 = vpop.f32.mrf.mxu0
        %v4515 = vadd.f32 %v4438, %v4514
        %4516 = vmatmul.f32.gmra.mxu0 %v4471
        %v4517 = vpop.f32.mrf.mxu0
        %v4518 = vadd.f32 %v4441, %v4517
        %4519 = vdwg.mxu0
        %v4520 = vld [vmem:[#allocation2 + $0x2] sm:$0xff]
        %v4521 = vld [vmem:[#allocation2 + $0xa] sm:$0xff]
        %v4522 = vld [vmem:[#allocation2 + $0x12] sm:$0xff]
        %v4523 = vld [vmem:[#allocation2 + $0x1a] sm:$0xff]
        %v4524 = vld [vmem:[#allocation2 + $0x22] sm:$0xff]
        %v4525 = vld [vmem:[#allocation2 + $0x2a] sm:$0xff]
        %v4526 = vld [vmem:[#allocation2 + $0x32] sm:$0xff]
        %v4527 = vld [vmem:[#allocation2 + $0x3a] sm:$0xff]
        %v4528 = vld [vmem:[#allocation2 + $0x42] sm:$0xff]
        %v4529 = vld [vmem:[#allocation2 + $0x4a] sm:$0x3f]
        %s4530 = scalar_lea.vmem %s3, 16
        %v4531 = vld [vmem:[%s4530] sm:$0xff]
        %v4533 = vsel %vm438, %v4520, 0
        %v4536 = vsel %vm438, %v4521, 0
        %v4539 = vsel %vm438, %v4522, 0
        %v4542 = vsel %vm438, %v4523, 0
        %v4545 = vsel %vm438, %v4524, 0
        %v4548 = vsel %vm438, %v4525, 0
        %v4551 = vsel %vm438, %v4526, 0
        %v4554 = vsel %vm438, %v4527, 0
        %v4557 = vsel %vm438, %v4528, 0
        %v4560 = vsel %vm438, %v4529, 0
        %4562 = vmatpush.msra.mxu0 0.0
        %4563 = vmatpush.msra.mxu0 0.0
        %4564 = vmatpush.msra.mxu0 0.0
        %4565 = vmatpush.msra.mxu0 0.0
        %4566 = vmatpush.msra.mxu0 0.0
        %4567 = vmatpush.msra.mxu0 0.0
        %4568 = vmatpush.msra.mxu0 0.0
        %4569 = vmatpush.msra.mxu0 0.0
        %4570 = vmatpush.msra.mxu0 0.0
        %4571 = vmatpush.msra.mxu0 0.0
        %4572 = vmatpush.msra.mxu0 0.0
        %4573 = vmatpush.msra.mxu0 0.0
        %4574 = vmatpush.msra.mxu0 0.0
        %4575 = vmatpush.msra.mxu0 0.0
        %4576 = vmatpush.msra.mxu0 0.0
        %4577 = vmatpush.msra.mxu0 %v4531
        %4578 = vmatmul.f32.gmra.mxu0 %v4533
        %v4579 = vpop.f32.mrf.mxu0
        %v4580 = vadd.f32 0.0, %v4579
        %4581 = vmatmul.f32.gmra.mxu0 %v4536
        %v4582 = vpop.f32.mrf.mxu0
        %v4583 = vadd.f32 0.0, %v4582
        %4584 = vmatmul.f32.gmra.mxu0 %v4539
        %v4585 = vpop.f32.mrf.mxu0
        %v4586 = vadd.f32 0.0, %v4585
        %4587 = vmatmul.f32.gmra.mxu0 %v4542
        %v4588 = vpop.f32.mrf.mxu0
        %v4589 = vadd.f32 0.0, %v4588
        %4590 = vmatmul.f32.gmra.mxu0 %v4545
        %v4591 = vpop.f32.mrf.mxu0
        %v4592 = vadd.f32 0.0, %v4591
        %4593 = vmatmul.f32.gmra.mxu0 %v4548
        %v4594 = vpop.f32.mrf.mxu0
        %v4595 = vadd.f32 0.0, %v4594
        %4596 = vmatmul.f32.gmra.mxu0 %v4551
        %v4597 = vpop.f32.mrf.mxu0
        %v4598 = vadd.f32 0.0, %v4597
        %4599 = vmatmul.f32.gmra.mxu0 %v4554
        %v4600 = vpop.f32.mrf.mxu0
        %v4601 = vadd.f32 0.0, %v4600
        %4602 = vmatmul.f32.gmra.mxu0 %v4557
        %v4603 = vpop.f32.mrf.mxu0
        %v4604 = vadd.f32 0.0, %v4603
        %4605 = vmatmul.f32.gmra.mxu0 %v4560
        %v4606 = vpop.f32.mrf.mxu0
        %v4607 = vadd.f32 0.0, %v4606
        %4608 = vdwg.mxu0
        %v4609 = vadd.f32 %v4491, %v4580
        %v4610 = vadd.f32 %v4494, %v4583
        %v4611 = vadd.f32 %v4497, %v4586
        %v4612 = vadd.f32 %v4500, %v4589
        %v4613 = vadd.f32 %v4503, %v4592
        %v4614 = vadd.f32 %v4506, %v4595
        %v4615 = vadd.f32 %v4509, %v4598
        %v4616 = vadd.f32 %v4512, %v4601
        %v4617 = vadd.f32 %v4515, %v4604
        %v4618 = vadd.f32 %v4518, %v4607
        %v4619 = vld [vmem:[#allocation2 + $0xa] sm:$0xff]
        %v4620 = vld [vmem:[#allocation2 + $0x12] sm:$0xff]
        %v4621 = vld [vmem:[#allocation2 + $0x1a] sm:$0xff]
        %v4622 = vld [vmem:[#allocation2 + $0x22] sm:$0xff]
        %v4623 = vld [vmem:[#allocation2 + $0x2a] sm:$0xff]
        %v4624 = vld [vmem:[#allocation2 + $0x32] sm:$0xff]
        %v4625 = vld [vmem:[#allocation2 + $0x3a] sm:$0xff]
        %v4626 = vld [vmem:[#allocation2 + $0x42] sm:$0xff]
        %v4627 = vld [vmem:[#allocation2 + $0x4a] sm:$0xff]
        %v4628 = vld [vmem:[#allocation2 + $0x52] sm:$0x3f]
        %s4629 = scalar_lea.vmem %s3, 24
        %v4630 = vld [vmem:[%s4629] sm:$0xff]
        %v4632 = vsel %vm438, %v4619, 0
        %v4635 = vsel %vm438, %v4620, 0
        %v4638 = vsel %vm438, %v4621, 0
        %v4641 = vsel %vm438, %v4622, 0
        %v4644 = vsel %vm438, %v4623, 0
        %v4647 = vsel %vm438, %v4624, 0
        %v4650 = vsel %vm438, %v4625, 0
        %v4653 = vsel %vm438, %v4626, 0
        %v4656 = vsel %vm438, %v4627, 0
        %v4659 = vsel %vm438, %v4628, 0
        %4661 = vmatpush.msra.mxu0 0.0
        %4662 = vmatpush.msra.mxu0 0.0
        %4663 = vmatpush.msra.mxu0 0.0
        %4664 = vmatpush.msra.mxu0 0.0
        %4665 = vmatpush.msra.mxu0 0.0
        %4666 = vmatpush.msra.mxu0 0.0
        %4667 = vmatpush.msra.mxu0 0.0
        %4668 = vmatpush.msra.mxu0 0.0
        %4669 = vmatpush.msra.mxu0 0.0
        %4670 = vmatpush.msra.mxu0 0.0
        %4671 = vmatpush.msra.mxu0 0.0
        %4672 = vmatpush.msra.mxu0 0.0
        %4673 = vmatpush.msra.mxu0 0.0
        %4674 = vmatpush.msra.mxu0 0.0
        %4675 = vmatpush.msra.mxu0 0.0
        %4676 = vmatpush.msra.mxu0 %v4630
        %4677 = vmatmul.f32.gmra.mxu0 %v4632
        %v4678 = vpop.f32.mrf.mxu0
        %v4679 = vadd.f32 0.0, %v4678
        %4680 = vmatmul.f32.gmra.mxu0 %v4635
        %v4681 = vpop.f32.mrf.mxu0
        %v4682 = vadd.f32 0.0, %v4681
        %4683 = vmatmul.f32.gmra.mxu0 %v4638
        %v4684 = vpop.f32.mrf.mxu0
        %v4685 = vadd.f32 0.0, %v4684
        %4686 = vmatmul.f32.gmra.mxu0 %v4641
        %v4687 = vpop.f32.mrf.mxu0
        %v4688 = vadd.f32 0.0, %v4687
        %4689 = vmatmul.f32.gmra.mxu0 %v4644
        %v4690 = vpop.f32.mrf.mxu0
        %v4691 = vadd.f32 0.0, %v4690
        %4692 = vmatmul.f32.gmra.mxu0 %v4647
        %v4693 = vpop.f32.mrf.mxu0
        %v4694 = vadd.f32 0.0, %v4693
        %4695 = vmatmul.f32.gmra.mxu0 %v4650
        %v4696 = vpop.f32.mrf.mxu0
        %v4697 = vadd.f32 0.0, %v4696
        %4698 = vmatmul.f32.gmra.mxu0 %v4653
        %v4699 = vpop.f32.mrf.mxu0
        %v4700 = vadd.f32 0.0, %v4699
        %4701 = vmatmul.f32.gmra.mxu0 %v4656
        %v4702 = vpop.f32.mrf.mxu0
        %v4703 = vadd.f32 0.0, %v4702
        %4704 = vmatmul.f32.gmra.mxu0 %v4659
        %v4705 = vpop.f32.mrf.mxu0
        %v4706 = vadd.f32 0.0, %v4705
        %4707 = vdwg.mxu0
        %v4708 = vadd.f32 %v4609, %v4679
        %v4709 = vadd.f32 %v4610, %v4682
        %v4710 = vadd.f32 %v4611, %v4685
        %v4711 = vadd.f32 %v4612, %v4688
        %v4712 = vadd.f32 %v4613, %v4691
        %v4713 = vadd.f32 %v4614, %v4694
        %v4714 = vadd.f32 %v4615, %v4697
        %v4715 = vadd.f32 %v4616, %v4700
        %v4716 = vadd.f32 %v4617, %v4703
        %v4717 = vadd.f32 %v4618, %v4706
        %v4718 = vld [vmem:[#allocation2 + $0xb] sm:$0xff]
        %v4719 = vld [vmem:[#allocation2 + $0x13] sm:$0xff]
        %v4720 = vld [vmem:[#allocation2 + $0x1b] sm:$0xff]
        %v4721 = vld [vmem:[#allocation2 + $0x23] sm:$0xff]
        %v4722 = vld [vmem:[#allocation2 + $0x2b] sm:$0xff]
        %v4723 = vld [vmem:[#allocation2 + $0x33] sm:$0xff]
        %v4724 = vld [vmem:[#allocation2 + $0x3b] sm:$0xff]
        %v4725 = vld [vmem:[#allocation2 + $0x43] sm:$0xff]
        %v4726 = vld [vmem:[#allocation2 + $0x4b] sm:$0xff]
        %v4727 = vld [vmem:[#allocation2 + $0x53] sm:$0x3f]
        %s4728 = scalar_lea.vmem %s3, 32
        %v4729 = vld [vmem:[%s4728] sm:$0xff]
        %v4731 = vsel %vm438, %v4718, 0
        %v4734 = vsel %vm438, %v4719, 0
        %v4737 = vsel %vm438, %v4720, 0
        %v4740 = vsel %vm438, %v4721, 0
        %v4743 = vsel %vm438, %v4722, 0
        %v4746 = vsel %vm438, %v4723, 0
        %v4749 = vsel %vm438, %v4724, 0
        %v4752 = vsel %vm438, %v4725, 0
        %v4755 = vsel %vm438, %v4726, 0
        %v4758 = vsel %vm438, %v4727, 0
        %4760 = vmatpush.msra.mxu0 0.0
        %4761 = vmatpush.msra.mxu0 0.0
        %4762 = vmatpush.msra.mxu0 0.0
        %4763 = vmatpush.msra.mxu0 0.0
        %4764 = vmatpush.msra.mxu0 0.0
        %4765 = vmatpush.msra.mxu0 0.0
        %4766 = vmatpush.msra.mxu0 0.0
        %4767 = vmatpush.msra.mxu0 0.0
        %4768 = vmatpush.msra.mxu0 0.0
        %4769 = vmatpush.msra.mxu0 0.0
        %4770 = vmatpush.msra.mxu0 0.0
        %4771 = vmatpush.msra.mxu0 0.0
        %4772 = vmatpush.msra.mxu0 0.0
        %4773 = vmatpush.msra.mxu0 0.0
        %4774 = vmatpush.msra.mxu0 0.0
        %4775 = vmatpush.msra.mxu0 %v4729
        %4776 = vmatmul.f32.gmra.mxu0 %v4731
        %v4777 = vpop.f32.mrf.mxu0
        %v4778 = vadd.f32 0.0, %v4777
        %4779 = vmatmul.f32.gmra.mxu0 %v4734
        %v4780 = vpop.f32.mrf.mxu0
        %v4781 = vadd.f32 0.0, %v4780
        %4782 = vmatmul.f32.gmra.mxu0 %v4737
        %v4783 = vpop.f32.mrf.mxu0
        %v4784 = vadd.f32 0.0, %v4783
        %4785 = vmatmul.f32.gmra.mxu0 %v4740
        %v4786 = vpop.f32.mrf.mxu0
        %v4787 = vadd.f32 0.0, %v4786
        %4788 = vmatmul.f32.gmra.mxu0 %v4743
        %v4789 = vpop.f32.mrf.mxu0
        %v4790 = vadd.f32 0.0, %v4789
        %4791 = vmatmul.f32.gmra.mxu0 %v4746
        %v4792 = vpop.f32.mrf.mxu0
        %v4793 = vadd.f32 0.0, %v4792
        %4794 = vmatmul.f32.gmra.mxu0 %v4749
        %v4795 = vpop.f32.mrf.mxu0
        %v4796 = vadd.f32 0.0, %v4795
        %4797 = vmatmul.f32.gmra.mxu0 %v4752
        %v4798 = vpop.f32.mrf.mxu0
        %v4799 = vadd.f32 0.0, %v4798
        %4800 = vmatmul.f32.gmra.mxu0 %v4755
        %v4801 = vpop.f32.mrf.mxu0
        %v4802 = vadd.f32 0.0, %v4801
        %4803 = vmatmul.f32.gmra.mxu0 %v4758
        %v4804 = vpop.f32.mrf.mxu0
        %v4805 = vadd.f32 0.0, %v4804
        %4806 = vdwg.mxu0
        %v4807 = vadd.f32 %v4708, %v4778
        %v4808 = vadd.f32 %v4709, %v4781
        %v4809 = vadd.f32 %v4710, %v4784
        %v4810 = vadd.f32 %v4711, %v4787
        %v4811 = vadd.f32 %v4712, %v4790
        %v4812 = vadd.f32 %v4713, %v4793
        %v4813 = vadd.f32 %v4714, %v4796
        %v4814 = vadd.f32 %v4715, %v4799
        %v4815 = vadd.f32 %v4716, %v4802
        %v4816 = vadd.f32 %v4717, %v4805
        %v4817 = vld [vmem:[#allocation2 + $0xc] sm:$0xff]
        %v4818 = vld [vmem:[#allocation2 + $0x14] sm:$0xff]
        %v4819 = vld [vmem:[#allocation2 + $0x1c] sm:$0xff]
        %v4820 = vld [vmem:[#allocation2 + $0x24] sm:$0xff]
        %v4821 = vld [vmem:[#allocation2 + $0x2c] sm:$0xff]
        %v4822 = vld [vmem:[#allocation2 + $0x34] sm:$0xff]
        %v4823 = vld [vmem:[#allocation2 + $0x3c] sm:$0xff]
        %v4824 = vld [vmem:[#allocation2 + $0x44] sm:$0xff]
        %v4825 = vld [vmem:[#allocation2 + $0x4c] sm:$0xff]
        %v4826 = vld [vmem:[#allocation2 + $0x54] sm:$0x3f]
        %s4827 = scalar_lea.vmem %s3, 40
        %v4828 = vld [vmem:[%s4827] sm:$0xff]
        %v4830 = vsel %vm438, %v4817, 0
        %v4833 = vsel %vm438, %v4818, 0
        %v4836 = vsel %vm438, %v4819, 0
        %v4839 = vsel %vm438, %v4820, 0
        %v4842 = vsel %vm438, %v4821, 0
        %v4845 = vsel %vm438, %v4822, 0
        %v4848 = vsel %vm438, %v4823, 0
        %v4851 = vsel %vm438, %v4824, 0
        %v4854 = vsel %vm438, %v4825, 0
        %v4857 = vsel %vm438, %v4826, 0
        %4859 = vmatpush.msra.mxu0 0.0
        %4860 = vmatpush.msra.mxu0 0.0
        %4861 = vmatpush.msra.mxu0 0.0
        %4862 = vmatpush.msra.mxu0 0.0
        %4863 = vmatpush.msra.mxu0 0.0
        %4864 = vmatpush.msra.mxu0 0.0
        %4865 = vmatpush.msra.mxu0 0.0
        %4866 = vmatpush.msra.mxu0 0.0
        %4867 = vmatpush.msra.mxu0 0.0
        %4868 = vmatpush.msra.mxu0 0.0
        %4869 = vmatpush.msra.mxu0 0.0
        %4870 = vmatpush.msra.mxu0 0.0
        %4871 = vmatpush.msra.mxu0 0.0
        %4872 = vmatpush.msra.mxu0 0.0
        %4873 = vmatpush.msra.mxu0 0.0
        %4874 = vmatpush.msra.mxu0 %v4828
        %4875 = vmatmul.f32.gmra.mxu0 %v4830
        %v4876 = vpop.f32.mrf.mxu0
        %v4877 = vadd.f32 0.0, %v4876
        %4878 = vmatmul.f32.gmra.mxu0 %v4833
        %v4879 = vpop.f32.mrf.mxu0
        %v4880 = vadd.f32 0.0, %v4879
        %4881 = vmatmul.f32.gmra.mxu0 %v4836
        %v4882 = vpop.f32.mrf.mxu0
        %v4883 = vadd.f32 0.0, %v4882
        %4884 = vmatmul.f32.gmra.mxu0 %v4839
        %v4885 = vpop.f32.mrf.mxu0
        %v4886 = vadd.f32 0.0, %v4885
        %4887 = vmatmul.f32.gmra.mxu0 %v4842
        %v4888 = vpop.f32.mrf.mxu0
        %v4889 = vadd.f32 0.0, %v4888
        %4890 = vmatmul.f32.gmra.mxu0 %v4845
        %v4891 = vpop.f32.mrf.mxu0
        %v4892 = vadd.f32 0.0, %v4891
        %4893 = vmatmul.f32.gmra.mxu0 %v4848
        %v4894 = vpop.f32.mrf.mxu0
        %v4895 = vadd.f32 0.0, %v4894
        %4896 = vmatmul.f32.gmra.mxu0 %v4851
        %v4897 = vpop.f32.mrf.mxu0
        %v4898 = vadd.f32 0.0, %v4897
        %4899 = vmatmul.f32.gmra.mxu0 %v4854
        %v4900 = vpop.f32.mrf.mxu0
        %v4901 = vadd.f32 0.0, %v4900
        %4902 = vmatmul.f32.gmra.mxu0 %v4857
        %v4903 = vpop.f32.mrf.mxu0
        %v4904 = vadd.f32 0.0, %v4903
        %4905 = vdwg.mxu0
        %v4906 = vadd.f32 %v4807, %v4877
        %v4907 = vadd.f32 %v4808, %v4880
        %v4908 = vadd.f32 %v4809, %v4883
        %v4909 = vadd.f32 %v4810, %v4886
        %v4910 = vadd.f32 %v4811, %v4889
        %v4911 = vadd.f32 %v4812, %v4892
        %v4912 = vadd.f32 %v4813, %v4895
        %v4913 = vadd.f32 %v4814, %v4898
        %v4914 = vadd.f32 %v4815, %v4901
        %v4915 = vadd.f32 %v4816, %v4904
        %v4916 = vld [vmem:[#allocation2 + $0x14] sm:$0xff]
        %v4917 = vld [vmem:[#allocation2 + $0x1c] sm:$0xff]
        %v4918 = vld [vmem:[#allocation2 + $0x24] sm:$0xff]
        %v4919 = vld [vmem:[#allocation2 + $0x2c] sm:$0xff]
        %v4920 = vld [vmem:[#allocation2 + $0x34] sm:$0xff]
        %v4921 = vld [vmem:[#allocation2 + $0x3c] sm:$0xff]
        %v4922 = vld [vmem:[#allocation2 + $0x44] sm:$0xff]
        %v4923 = vld [vmem:[#allocation2 + $0x4c] sm:$0xff]
        %v4924 = vld [vmem:[#allocation2 + $0x54] sm:$0xff]
        %v4925 = vld [vmem:[#allocation2 + $0x5c] sm:$0x3f]
        %s4926 = scalar_lea.vmem %s3, 48
        %v4927 = vld [vmem:[%s4926] sm:$0xff]
        %v4929 = vsel %vm438, %v4916, 0
        %v4932 = vsel %vm438, %v4917, 0
        %v4935 = vsel %vm438, %v4918, 0
        %v4938 = vsel %vm438, %v4919, 0
        %v4941 = vsel %vm438, %v4920, 0
        %v4944 = vsel %vm438, %v4921, 0
        %v4947 = vsel %vm438, %v4922, 0
        %v4950 = vsel %vm438, %v4923, 0
        %v4953 = vsel %vm438, %v4924, 0
        %v4956 = vsel %vm438, %v4925, 0
        %4958 = vmatpush.msra.mxu0 0.0
        %4959 = vmatpush.msra.mxu0 0.0
        %4960 = vmatpush.msra.mxu0 0.0
        %4961 = vmatpush.msra.mxu0 0.0
        %4962 = vmatpush.msra.mxu0 0.0
        %4963 = vmatpush.msra.mxu0 0.0
        %4964 = vmatpush.msra.mxu0 0.0
        %4965 = vmatpush.msra.mxu0 0.0
        %4966 = vmatpush.msra.mxu0 0.0
        %4967 = vmatpush.msra.mxu0 0.0
        %4968 = vmatpush.msra.mxu0 0.0
        %4969 = vmatpush.msra.mxu0 0.0
        %4970 = vmatpush.msra.mxu0 0.0
        %4971 = vmatpush.msra.mxu0 0.0
        %4972 = vmatpush.msra.mxu0 0.0
        %4973 = vmatpush.msra.mxu0 %v4927
        %4974 = vmatmul.f32.gmra.mxu0 %v4929
        %v4975 = vpop.f32.mrf.mxu0
        %v4976 = vadd.f32 0.0, %v4975
        %4977 = vmatmul.f32.gmra.mxu0 %v4932
        %v4978 = vpop.f32.mrf.mxu0
        %v4979 = vadd.f32 0.0, %v4978
        %4980 = vmatmul.f32.gmra.mxu0 %v4935
        %v4981 = vpop.f32.mrf.mxu0
        %v4982 = vadd.f32 0.0, %v4981
        %4983 = vmatmul.f32.gmra.mxu0 %v4938
        %v4984 = vpop.f32.mrf.mxu0
        %v4985 = vadd.f32 0.0, %v4984
        %4986 = vmatmul.f32.gmra.mxu0 %v4941
        %v4987 = vpop.f32.mrf.mxu0
        %v4988 = vadd.f32 0.0, %v4987
        %4989 = vmatmul.f32.gmra.mxu0 %v4944
        %v4990 = vpop.f32.mrf.mxu0
        %v4991 = vadd.f32 0.0, %v4990
        %4992 = vmatmul.f32.gmra.mxu0 %v4947
        %v4993 = vpop.f32.mrf.mxu0
        %v4994 = vadd.f32 0.0, %v4993
        %4995 = vmatmul.f32.gmra.mxu0 %v4950
        %v4996 = vpop.f32.mrf.mxu0
        %v4997 = vadd.f32 0.0, %v4996
        %4998 = vmatmul.f32.gmra.mxu0 %v4953
        %v4999 = vpop.f32.mrf.mxu0
        %v5000 = vadd.f32 0.0, %v4999
        %5001 = vmatmul.f32.gmra.mxu0 %v4956
        %v5002 = vpop.f32.mrf.mxu0
        %v5003 = vadd.f32 0.0, %v5002
        %5004 = vdwg.mxu0
        %v5005 = vadd.f32 %v4906, %v4976
        %v5006 = vadd.f32 %v4907, %v4979
        %v5007 = vadd.f32 %v4908, %v4982
        %v5008 = vadd.f32 %v4909, %v4985
        %v5009 = vadd.f32 %v4910, %v4988
        %v5010 = vadd.f32 %v4911, %v4991
        %v5011 = vadd.f32 %v4912, %v4994
        %v5012 = vadd.f32 %v4913, %v4997
        %v5013 = vadd.f32 %v4914, %v5000
        %v5014 = vadd.f32 %v4915, %v5003
        %v5015 = vld [vmem:[#allocation2 + $0x15] sm:$0xff]
        %v5016 = vld [vmem:[#allocation2 + $0x1d] sm:$0xff]
        %v5017 = vld [vmem:[#allocation2 + $0x25] sm:$0xff]
        %v5018 = vld [vmem:[#allocation2 + $0x2d] sm:$0xff]
        %v5019 = vld [vmem:[#allocation2 + $0x35] sm:$0xff]
        %v5020 = vld [vmem:[#allocation2 + $0x3d] sm:$0xff]
        %v5021 = vld [vmem:[#allocation2 + $0x45] sm:$0xff]
        %v5022 = vld [vmem:[#allocation2 + $0x4d] sm:$0xff]
        %v5023 = vld [vmem:[#allocation2 + $0x55] sm:$0xff]
        %v5024 = vld [vmem:[#allocation2 + $0x5d] sm:$0x3f]
        %s5025 = scalar_lea.vmem %s3, 56
        %v5026 = vld [vmem:[%s5025] sm:$0xff]
        %v5028 = vsel %vm438, %v5015, 0
        %v5031 = vsel %vm438, %v5016, 0
        %v5034 = vsel %vm438, %v5017, 0
        %v5037 = vsel %vm438, %v5018, 0
        %v5040 = vsel %vm438, %v5019, 0
        %v5043 = vsel %vm438, %v5020, 0
        %v5046 = vsel %vm438, %v5021, 0
        %v5049 = vsel %vm438, %v5022, 0
        %v5052 = vsel %vm438, %v5023, 0
        %v5055 = vsel %vm438, %v5024, 0
        %5057 = vmatpush.msra.mxu0 0.0
        %5058 = vmatpush.msra.mxu0 0.0
        %5059 = vmatpush.msra.mxu0 0.0
        %5060 = vmatpush.msra.mxu0 0.0
        %5061 = vmatpush.msra.mxu0 0.0
        %5062 = vmatpush.msra.mxu0 0.0
        %5063 = vmatpush.msra.mxu0 0.0
        %5064 = vmatpush.msra.mxu0 0.0
        %5065 = vmatpush.msra.mxu0 0.0
        %5066 = vmatpush.msra.mxu0 0.0
        %5067 = vmatpush.msra.mxu0 0.0
        %5068 = vmatpush.msra.mxu0 0.0
        %5069 = vmatpush.msra.mxu0 0.0
        %5070 = vmatpush.msra.mxu0 0.0
        %5071 = vmatpush.msra.mxu0 0.0
        %5072 = vmatpush.msra.mxu0 %v5026
        %5073 = vmatmul.f32.gmra.mxu0 %v5028
        %v5074 = vpop.f32.mrf.mxu0
        %v5075 = vadd.f32 0.0, %v5074
        %5076 = vmatmul.f32.gmra.mxu0 %v5031
        %v5077 = vpop.f32.mrf.mxu0
        %v5078 = vadd.f32 0.0, %v5077
        %5079 = vmatmul.f32.gmra.mxu0 %v5034
        %v5080 = vpop.f32.mrf.mxu0
        %v5081 = vadd.f32 0.0, %v5080
        %5082 = vmatmul.f32.gmra.mxu0 %v5037
        %v5083 = vpop.f32.mrf.mxu0
        %v5084 = vadd.f32 0.0, %v5083
        %5085 = vmatmul.f32.gmra.mxu0 %v5040
        %v5086 = vpop.f32.mrf.mxu0
        %v5087 = vadd.f32 0.0, %v5086
        %5088 = vmatmul.f32.gmra.mxu0 %v5043
        %v5089 = vpop.f32.mrf.mxu0
        %v5090 = vadd.f32 0.0, %v5089
        %5091 = vmatmul.f32.gmra.mxu0 %v5046
        %v5092 = vpop.f32.mrf.mxu0
        %v5093 = vadd.f32 0.0, %v5092
        %5094 = vmatmul.f32.gmra.mxu0 %v5049
        %v5095 = vpop.f32.mrf.mxu0
        %v5096 = vadd.f32 0.0, %v5095
        %5097 = vmatmul.f32.gmra.mxu0 %v5052
        %v5098 = vpop.f32.mrf.mxu0
        %v5099 = vadd.f32 0.0, %v5098
        %5100 = vmatmul.f32.gmra.mxu0 %v5055
        %v5101 = vpop.f32.mrf.mxu0
        %v5102 = vadd.f32 0.0, %v5101
        %5103 = vdwg.mxu0
        %v5104 = vadd.f32 %v5005, %v5075
        %v5105 = vadd.f32 %v5006, %v5078
        %v5106 = vadd.f32 %v5007, %v5081
        %v5107 = vadd.f32 %v5008, %v5084
        %v5108 = vadd.f32 %v5009, %v5087
        %v5109 = vadd.f32 %v5010, %v5090
        %v5110 = vadd.f32 %v5011, %v5093
        %v5111 = vadd.f32 %v5012, %v5096
        %v5112 = vadd.f32 %v5013, %v5099
        %v5113 = vadd.f32 %v5014, %v5102
        %v5114 = vld [vmem:[#allocation2 + $0x16] sm:$0xff]
        %v5115 = vld [vmem:[#allocation2 + $0x1e] sm:$0xff]
        %v5116 = vld [vmem:[#allocation2 + $0x26] sm:$0xff]
        %v5117 = vld [vmem:[#allocation2 + $0x2e] sm:$0xff]
        %v5118 = vld [vmem:[#allocation2 + $0x36] sm:$0xff]
        %v5119 = vld [vmem:[#allocation2 + $0x3e] sm:$0xff]
        %v5120 = vld [vmem:[#allocation2 + $0x46] sm:$0xff]
        %v5121 = vld [vmem:[#allocation2 + $0x4e] sm:$0xff]
        %v5122 = vld [vmem:[#allocation2 + $0x56] sm:$0xff]
        %v5123 = vld [vmem:[#allocation2 + $0x5e] sm:$0x3f]
        %s5124 = scalar_lea.vmem %s3, 64
        %v5125 = vld [vmem:[%s5124] sm:$0xff]
        %v5127 = vsel %vm438, %v5114, 0
        %v5130 = vsel %vm438, %v5115, 0
        %v5133 = vsel %vm438, %v5116, 0
        %v5136 = vsel %vm438, %v5117, 0
        %v5139 = vsel %vm438, %v5118, 0
        %v5142 = vsel %vm438, %v5119, 0
        %v5145 = vsel %vm438, %v5120, 0
        %v5148 = vsel %vm438, %v5121, 0
        %v5151 = vsel %vm438, %v5122, 0
        %v5154 = vsel %vm438, %v5123, 0
        %5156 = vmatpush.msra.mxu0 0.0
        %5157 = vmatpush.msra.mxu0 0.0
        %5158 = vmatpush.msra.mxu0 0.0
        %5159 = vmatpush.msra.mxu0 0.0
        %5160 = vmatpush.msra.mxu0 0.0
        %5161 = vmatpush.msra.mxu0 0.0
        %5162 = vmatpush.msra.mxu0 0.0
        %5163 = vmatpush.msra.mxu0 0.0
        %5164 = vmatpush.msra.mxu0 0.0
        %5165 = vmatpush.msra.mxu0 0.0
        %5166 = vmatpush.msra.mxu0 0.0
        %5167 = vmatpush.msra.mxu0 0.0
        %5168 = vmatpush.msra.mxu0 0.0
        %5169 = vmatpush.msra.mxu0 0.0
        %5170 = vmatpush.msra.mxu0 0.0
        %5171 = vmatpush.msra.mxu0 %v5125
        %5172 = vmatmul.f32.gmra.mxu0 %v5127
        %v5173 = vpop.f32.mrf.mxu0
        %v5174 = vadd.f32 0.0, %v5173
        %5175 = vmatmul.f32.gmra.mxu0 %v5130
        %v5176 = vpop.f32.mrf.mxu0
        %v5177 = vadd.f32 0.0, %v5176
        %5178 = vmatmul.f32.gmra.mxu0 %v5133
        %v5179 = vpop.f32.mrf.mxu0
        %v5180 = vadd.f32 0.0, %v5179
        %5181 = vmatmul.f32.gmra.mxu0 %v5136
        %v5182 = vpop.f32.mrf.mxu0
        %v5183 = vadd.f32 0.0, %v5182
        %5184 = vmatmul.f32.gmra.mxu0 %v5139
        %v5185 = vpop.f32.mrf.mxu0
        %v5186 = vadd.f32 0.0, %v5185
        %5187 = vmatmul.f32.gmra.mxu0 %v5142
        %v5188 = vpop.f32.mrf.mxu0
        %v5189 = vadd.f32 0.0, %v5188
        %5190 = vmatmul.f32.gmra.mxu0 %v5145
        %v5191 = vpop.f32.mrf.mxu0
        %v5192 = vadd.f32 0.0, %v5191
        %5193 = vmatmul.f32.gmra.mxu0 %v5148
        %v5194 = vpop.f32.mrf.mxu0
        %v5195 = vadd.f32 0.0, %v5194
        %5196 = vmatmul.f32.gmra.mxu0 %v5151
        %v5197 = vpop.f32.mrf.mxu0
        %v5198 = vadd.f32 0.0, %v5197
        %5199 = vmatmul.f32.gmra.mxu0 %v5154
        %v5200 = vpop.f32.mrf.mxu0
        %v5201 = vadd.f32 0.0, %v5200
        %5202 = vdwg.mxu0
        %v5203 = vadd.f32 %v5104, %v5174
        %v5204 = vadd.f32 %v5105, %v5177
        %v5205 = vadd.f32 %v5106, %v5180
        %v5206 = vadd.f32 %v5107, %v5183
        %v5207 = vadd.f32 %v5108, %v5186
        %v5208 = vadd.f32 %v5109, %v5189
        %v5209 = vadd.f32 %v5110, %v5192
        %v5210 = vadd.f32 %v5111, %v5195
        %v5211 = vadd.f32 %v5112, %v5198
        %v5212 = vadd.f32 %v5113, %v5201
        %v5213 = vld [vmem:[%s4] sm:$0x1]
        %v5215 = vperm.slane %v5213, 0
        %v5217 = vadd.f32 %v5203, %v5215
        %v5218 = vadd.f32 %v5204, %v5215
        %v5219 = vadd.f32 %v5205, %v5215
        %v5220 = vadd.f32 %v5206, %v5215
        %v5221 = vadd.f32 %v5207, %v5215
        %v5222 = vadd.f32 %v5208, %v5215
        %v5223 = vadd.f32 %v5209, %v5215
        %v5224 = vadd.f32 %v5210, %v5215
        %v5225 = vadd.f32 %v5211, %v5215
        %v5226 = vadd.f32 %v5212, %v5215
        %v5227 = vmax.f32 %v5217, 0.0
        %s5228 = scalar_lea.vmem [#allocation7], 16
        %5229 = vst.msk [vmem:[%s5228 + $0x1] sm:$0xff] %vm453, %v5227
        %v5230 = vmax.f32 %v5218, 0.0
        %v5231 = vmax.f32 %v5219, 0.0
        %s5232 = scalar_lea.vmem [#allocation7], 32
        %vm5233 = vcmask 130050
        %5234 = vst.msk [vmem:[%s5232 - $0x1] sm:$0xfc] %vm5233, %v5230
        %5235 = vst.msk [vmem:[%s5232 + $0x7] sm:$0x3] %vm523, %v5231
        %v5236 = vmax.f32 %v5220, 0.0
        %s5237 = scalar_lea.vmem [#allocation7], 48
        %vm5238 = vcmask 130052
        %5239 = vst.msk [vmem:[%s5237 - $0x3] sm:$0xf0] %vm5238, %v5231
        %5240 = vst.msk [vmem:[%s5237 + $0x5] sm:$0xf] %vm458, %v5236
        %v5241 = vmax.f32 %v5221, 0.0
        %s5242 = scalar_lea.vmem [#allocation7], 64
        %vm5243 = vcmask 130054
        %5244 = vst.msk [vmem:[%s5242 - $0x5] sm:$0xc0] %vm5243, %v5236
        %vm5245 = vcmask 128000
        %5246 = vst.msk [vmem:[%s5242 + $0x3] sm:$0x3f] %vm5245, %v5241
        %v5247 = vmax.f32 %v5222, 0.0
        %s5248 = scalar_lea.vmem [#allocation7], 80
        %5249 = vst.msk [vmem:[%s5248 + $0x1] sm:$0xff] %vm453, %v5247
        %v5250 = vmax.f32 %v5223, 0.0
        %v5251 = vmax.f32 %v5224, 0.0
        %s5252 = scalar_lea.vmem [#allocation7], 96
        %5253 = vst.msk [vmem:[%s5252 - $0x1] sm:$0xfc] %vm5233, %v5250
        %5254 = vst.msk [vmem:[%s5252 + $0x7] sm:$0x3] %vm523, %v5251
        %v5255 = vmax.f32 %v5225, 0.0
        %s5256 = scalar_lea.vmem [#allocation7], 112
        %5257 = vst.msk [vmem:[%s5256 - $0x3] sm:$0xf0] %vm5238, %v5251
        %5258 = vst.msk [vmem:[%s5256 + $0x5] sm:$0xf] %vm458, %v5255
        %v5259 = vmax.f32 %v5226, 0.0
        %s5260 = scalar_lea.vmem [#allocation7], 128
        %5261 = vst.msk [vmem:[%s5260 - $0x5] sm:$0xc0] %vm5243, %v5255
        %5262 = vst.msk [vmem:[%s5260 + $0x3] sm:$0x3f] %vm5245, %v5259
        %v5263 = vld [vmem:[#allocation7] sm:$0x1]
        %v5264 = vld [vmem:[#allocation7 + $0x10] sm:$0x1]
        %v5265 = vld [vmem:[#allocation7 + $0x20] sm:$0x1]
        %v5266 = vld [vmem:[#allocation7 + $0x30] sm:$0x1]
        %v5267 = vld [vmem:[#allocation7 + $0x40] sm:$0x1]
        %v5268 = vld [vmem:[#allocation7 + $0x50] sm:$0x1]
        %v5269 = vld [vmem:[#allocation7 + $0x60] sm:$0x1]
        %v5270 = vld [vmem:[#allocation7 + $0x70] sm:$0x1]
        %v5271 = vld [vmem:[#allocation7 + $0x80] sm:$0x1]
        %v5272 = vld [vmem:[#allocation7 + $0x90] sm:$0x1]
        %v5273 = vld [vmem:[#allocation7 + $0x1] sm:$0x1]
        %v5274 = vld [vmem:[#allocation7 + $0x11] sm:$0x1]
        %v5275 = vld [vmem:[#allocation7 + $0x21] sm:$0x1]
        %v5276 = vld [vmem:[#allocation7 + $0x31] sm:$0x1]
        %v5277 = vld [vmem:[#allocation7 + $0x41] sm:$0x1]
        %v5278 = vld [vmem:[#allocation7 + $0x51] sm:$0x1]
        %v5279 = vld [vmem:[#allocation7 + $0x61] sm:$0x1]
        %v5280 = vld [vmem:[#allocation7 + $0x71] sm:$0x1]
        %v5281 = vld [vmem:[#allocation7 + $0x81] sm:$0x1]
        %v5282 = vld [vmem:[#allocation7 + $0x91] sm:$0x1]
        %v5283 = vld [vmem:[#allocation7 + $0x2] sm:$0x1]
        %v5284 = vld [vmem:[#allocation7 + $0x12] sm:$0x1]
        %v5285 = vld [vmem:[#allocation7 + $0x22] sm:$0x1]
        %v5286 = vld [vmem:[#allocation7 + $0x32] sm:$0x1]
        %v5287 = vld [vmem:[#allocation7 + $0x42] sm:$0x1]
        %v5288 = vld [vmem:[#allocation7 + $0x52] sm:$0x1]
        %v5289 = vld [vmem:[#allocation7 + $0x62] sm:$0x1]
        %v5290 = vld [vmem:[#allocation7 + $0x72] sm:$0x1]
        %v5291 = vld [vmem:[#allocation7 + $0x82] sm:$0x1]
        %v5292 = vld [vmem:[#allocation7 + $0x92] sm:$0x1]
        %v5293 = vmax.f32 %v5263, %v5273
        %v5294 = vmax.f32 %v5264, %v5274
        %v5295 = vmax.f32 %v5265, %v5275
        %v5296 = vmax.f32 %v5266, %v5276
        %v5297 = vmax.f32 %v5267, %v5277
        %v5298 = vmax.f32 %v5268, %v5278
        %v5299 = vmax.f32 %v5269, %v5279
        %v5300 = vmax.f32 %v5270, %v5280
        %v5301 = vmax.f32 %v5271, %v5281
        %v5302 = vmax.f32 %v5272, %v5282
        %v5303 = vmax.f32 %v5293, %v5283
        %v5304 = vmax.f32 %v5294, %v5284
        %v5305 = vmax.f32 %v5295, %v5285
        %v5306 = vmax.f32 %v5296, %v5286
        %v5307 = vmax.f32 %v5297, %v5287
        %v5308 = vmax.f32 %v5298, %v5288
        %v5309 = vmax.f32 %v5299, %v5289
        %v5310 = vmax.f32 %v5300, %v5290
        %v5311 = vmax.f32 %v5301, %v5291
        %v5312 = vmax.f32 %v5302, %v5292
        %vm5313 = vcmask 122880
        %5314 = vst.msk [vmem:[#allocation11] sm:$0x1] %vm5313, %v5303
        %5315 = vst.msk [vmem:[#allocation11 + $0x4] sm:$0x1] %vm5313, %v5304
        %5316 = vst.msk [vmem:[#allocation11 + $0x8] sm:$0x1] %vm5313, %v5305
        %5317 = vst.msk [vmem:[#allocation11 + $0xc] sm:$0x1] %vm5313, %v5306
        %5318 = vst.msk [vmem:[#allocation11 + $0x10] sm:$0x1] %vm5313, %v5307
        %5319 = vst.msk [vmem:[#allocation11 + $0x14] sm:$0x1] %vm5313, %v5308
        %5320 = vst.msk [vmem:[#allocation11 + $0x18] sm:$0x1] %vm5313, %v5309
        %5321 = vst.msk [vmem:[#allocation11 + $0x1c] sm:$0x1] %vm5313, %v5310
        %5322 = vst.msk [vmem:[#allocation11 + $0x20] sm:$0x1] %vm5313, %v5311
        %5323 = vst.msk [vmem:[#allocation11 + $0x24] sm:$0x1] %vm5313, %v5312
        %v5324 = vld [vmem:[#allocation7 + $0x2] sm:$0x1]
        %v5325 = vld [vmem:[#allocation7 + $0x12] sm:$0x1]
        %v5326 = vld [vmem:[#allocation7 + $0x22] sm:$0x1]
        %v5327 = vld [vmem:[#allocation7 + $0x32] sm:$0x1]
        %v5328 = vld [vmem:[#allocation7 + $0x42] sm:$0x1]
        %v5329 = vld [vmem:[#allocation7 + $0x52] sm:$0x1]
        %v5330 = vld [vmem:[#allocation7 + $0x62] sm:$0x1]
        %v5331 = vld [vmem:[#allocation7 + $0x72] sm:$0x1]
        %v5332 = vld [vmem:[#allocation7 + $0x82] sm:$0x1]
        %v5333 = vld [vmem:[#allocation7 + $0x92] sm:$0x1]
        %v5334 = vld [vmem:[#allocation7 + $0x3] sm:$0x1]
        %v5335 = vld [vmem:[#allocation7 + $0x13] sm:$0x1]
        %v5336 = vld [vmem:[#allocation7 + $0x23] sm:$0x1]
        %v5337 = vld [vmem:[#allocation7 + $0x33] sm:$0x1]
        %v5338 = vld [vmem:[#allocation7 + $0x43] sm:$0x1]
        %v5339 = vld [vmem:[#allocation7 + $0x53] sm:$0x1]
        %v5340 = vld [vmem:[#allocation7 + $0x63] sm:$0x1]
        %v5341 = vld [vmem:[#allocation7 + $0x73] sm:$0x1]
        %v5342 = vld [vmem:[#allocation7 + $0x83] sm:$0x1]
        %v5343 = vld [vmem:[#allocation7 + $0x93] sm:$0x1]
        %v5344 = vld [vmem:[#allocation7 + $0x4] sm:$0x1]
        %v5345 = vld [vmem:[#allocation7 + $0x14] sm:$0x1]
        %v5346 = vld [vmem:[#allocation7 + $0x24] sm:$0x1]
        %v5347 = vld [vmem:[#allocation7 + $0x34] sm:$0x1]
        %v5348 = vld [vmem:[#allocation7 + $0x44] sm:$0x1]
        %v5349 = vld [vmem:[#allocation7 + $0x54] sm:$0x1]
        %v5350 = vld [vmem:[#allocation7 + $0x64] sm:$0x1]
        %v5351 = vld [vmem:[#allocation7 + $0x74] sm:$0x1]
        %v5352 = vld [vmem:[#allocation7 + $0x84] sm:$0x1]
        %v5353 = vld [vmem:[#allocation7 + $0x94] sm:$0x1]
        %v5354 = vmax.f32 %v5324, %v5334
        %v5355 = vmax.f32 %v5325, %v5335
        %v5356 = vmax.f32 %v5326, %v5336
        %v5357 = vmax.f32 %v5327, %v5337
        %v5358 = vmax.f32 %v5328, %v5338
        %v5359 = vmax.f32 %v5329, %v5339
        %v5360 = vmax.f32 %v5330, %v5340
        %v5361 = vmax.f32 %v5331, %v5341
        %v5362 = vmax.f32 %v5332, %v5342
        %v5363 = vmax.f32 %v5333, %v5343
        %v5364 = vmax.f32 %v5354, %v5344
        %v5365 = vmax.f32 %v5355, %v5345
        %v5366 = vmax.f32 %v5356, %v5346
        %v5367 = vmax.f32 %v5357, %v5347
        %v5368 = vmax.f32 %v5358, %v5348
        %v5369 = vmax.f32 %v5359, %v5349
        %v5370 = vmax.f32 %v5360, %v5350
        %v5371 = vmax.f32 %v5361, %v5351
        %v5372 = vmax.f32 %v5362, %v5352
        %v5373 = vmax.f32 %v5363, %v5353
        %5374 = vst.msk [vmem:[#allocation11 + $0x1] sm:$0x1] %vm5313, %v5364
        %5375 = vst.msk [vmem:[#allocation11 + $0x5] sm:$0x1] %vm5313, %v5365
        %5376 = vst.msk [vmem:[#allocation11 + $0x9] sm:$0x1] %vm5313, %v5366
        %5377 = vst.msk [vmem:[#allocation11 + $0xd] sm:$0x1] %vm5313, %v5367
        %5378 = vst.msk [vmem:[#allocation11 + $0x11] sm:$0x1] %vm5313, %v5368
        %5379 = vst.msk [vmem:[#allocation11 + $0x15] sm:$0x1] %vm5313, %v5369
        %5380 = vst.msk [vmem:[#allocation11 + $0x19] sm:$0x1] %vm5313, %v5370
        %5381 = vst.msk [vmem:[#allocation11 + $0x1d] sm:$0x1] %vm5313, %v5371
        %5382 = vst.msk [vmem:[#allocation11 + $0x21] sm:$0x1] %vm5313, %v5372
        %5383 = vst.msk [vmem:[#allocation11 + $0x25] sm:$0x1] %vm5313, %v5373
        %v5384 = vld [vmem:[#allocation7 + $0x4] sm:$0x1]
        %v5385 = vld [vmem:[#allocation7 + $0x14] sm:$0x1]
        %v5386 = vld [vmem:[#allocation7 + $0x24] sm:$0x1]
        %v5387 = vld [vmem:[#allocation7 + $0x34] sm:$0x1]
        %v5388 = vld [vmem:[#allocation7 + $0x44] sm:$0x1]
        %v5389 = vld [vmem:[#allocation7 + $0x54] sm:$0x1]
        %v5390 = vld [vmem:[#allocation7 + $0x64] sm:$0x1]
        %v5391 = vld [vmem:[#allocation7 + $0x74] sm:$0x1]
        %v5392 = vld [vmem:[#allocation7 + $0x84] sm:$0x1]
        %v5393 = vld [vmem:[#allocation7 + $0x94] sm:$0x1]
        %v5394 = vld [vmem:[#allocation7 + $0x5] sm:$0x1]
        %v5395 = vld [vmem:[#allocation7 + $0x15] sm:$0x1]
        %v5396 = vld [vmem:[#allocation7 + $0x25] sm:$0x1]
        %v5397 = vld [vmem:[#allocation7 + $0x35] sm:$0x1]
        %v5398 = vld [vmem:[#allocation7 + $0x45] sm:$0x1]
        %v5399 = vld [vmem:[#allocation7 + $0x55] sm:$0x1]
        %v5400 = vld [vmem:[#allocation7 + $0x65] sm:$0x1]
        %v5401 = vld [vmem:[#allocation7 + $0x75] sm:$0x1]
        %v5402 = vld [vmem:[#allocation7 + $0x85] sm:$0x1]
        %v5403 = vld [vmem:[#allocation7 + $0x95] sm:$0x1]
        %v5404 = vld [vmem:[#allocation7 + $0x6] sm:$0x1]
        %v5405 = vld [vmem:[#allocation7 + $0x16] sm:$0x1]
        %v5406 = vld [vmem:[#allocation7 + $0x26] sm:$0x1]
        %v5407 = vld [vmem:[#allocation7 + $0x36] sm:$0x1]
        %v5408 = vld [vmem:[#allocation7 + $0x46] sm:$0x1]
        %v5409 = vld [vmem:[#allocation7 + $0x56] sm:$0x1]
        %v5410 = vld [vmem:[#allocation7 + $0x66] sm:$0x1]
        %v5411 = vld [vmem:[#allocation7 + $0x76] sm:$0x1]
        %v5412 = vld [vmem:[#allocation7 + $0x86] sm:$0x1]
        %v5413 = vld [vmem:[#allocation7 + $0x96] sm:$0x1]
        %v5414 = vmax.f32 %v5384, %v5394
        %v5415 = vmax.f32 %v5385, %v5395
        %v5416 = vmax.f32 %v5386, %v5396
        %v5417 = vmax.f32 %v5387, %v5397
        %v5418 = vmax.f32 %v5388, %v5398
        %v5419 = vmax.f32 %v5389, %v5399
        %v5420 = vmax.f32 %v5390, %v5400
        %v5421 = vmax.f32 %v5391, %v5401
        %v5422 = vmax.f32 %v5392, %v5402
        %v5423 = vmax.f32 %v5393, %v5403
        %v5424 = vmax.f32 %v5414, %v5404
        %v5425 = vmax.f32 %v5415, %v5405
        %v5426 = vmax.f32 %v5416, %v5406
        %v5427 = vmax.f32 %v5417, %v5407
        %v5428 = vmax.f32 %v5418, %v5408
        %v5429 = vmax.f32 %v5419, %v5409
        %v5430 = vmax.f32 %v5420, %v5410
        %v5431 = vmax.f32 %v5421, %v5411
        %v5432 = vmax.f32 %v5422, %v5412
        %v5433 = vmax.f32 %v5423, %v5413
        %5434 = vst.msk [vmem:[#allocation11 + $0x2] sm:$0x1] %vm5313, %v5424
        %5435 = vst.msk [vmem:[#allocation11 + $0x6] sm:$0x1] %vm5313, %v5425
        %5436 = vst.msk [vmem:[#allocation11 + $0xa] sm:$0x1] %vm5313, %v5426
        %5437 = vst.msk [vmem:[#allocation11 + $0xe] sm:$0x1] %vm5313, %v5427
        %5438 = vst.msk [vmem:[#allocation11 + $0x12] sm:$0x1] %vm5313, %v5428
        %5439 = vst.msk [vmem:[#allocation11 + $0x16] sm:$0x1] %vm5313, %v5429
        %5440 = vst.msk [vmem:[#allocation11 + $0x1a] sm:$0x1] %vm5313, %v5430
        %5441 = vst.msk [vmem:[#allocation11 + $0x1e] sm:$0x1] %vm5313, %v5431
        %5442 = vst.msk [vmem:[#allocation11 + $0x22] sm:$0x1] %vm5313, %v5432
        %5443 = vst.msk [vmem:[#allocation11 + $0x26] sm:$0x1] %vm5313, %v5433
        %v5444 = vld [vmem:[#allocation7 + $0x6] sm:$0x1]
        %v5445 = vld [vmem:[#allocation7 + $0x16] sm:$0x1]
        %v5446 = vld [vmem:[#allocation7 + $0x26] sm:$0x1]
        %v5447 = vld [vmem:[#allocation7 + $0x36] sm:$0x1]
        %v5448 = vld [vmem:[#allocation7 + $0x46] sm:$0x1]
        %v5449 = vld [vmem:[#allocation7 + $0x56] sm:$0x1]
        %v5450 = vld [vmem:[#allocation7 + $0x66] sm:$0x1]
        %v5451 = vld [vmem:[#allocation7 + $0x76] sm:$0x1]
        %v5452 = vld [vmem:[#allocation7 + $0x86] sm:$0x1]
        %v5453 = vld [vmem:[#allocation7 + $0x96] sm:$0x1]
        %v5454 = vld [vmem:[#allocation7 + $0x7] sm:$0x1]
        %v5455 = vld [vmem:[#allocation7 + $0x17] sm:$0x1]
        %v5456 = vld [vmem:[#allocation7 + $0x27] sm:$0x1]
        %v5457 = vld [vmem:[#allocation7 + $0x37] sm:$0x1]
        %v5458 = vld [vmem:[#allocation7 + $0x47] sm:$0x1]
        %v5459 = vld [vmem:[#allocation7 + $0x57] sm:$0x1]
        %v5460 = vld [vmem:[#allocation7 + $0x67] sm:$0x1]
        %v5461 = vld [vmem:[#allocation7 + $0x77] sm:$0x1]
        %v5462 = vld [vmem:[#allocation7 + $0x87] sm:$0x1]
        %v5463 = vld [vmem:[#allocation7 + $0x97] sm:$0x1]
        %v5464 = vld [vmem:[#allocation7 + $0x8] sm:$0x1]
        %v5465 = vld [vmem:[#allocation7 + $0x18] sm:$0x1]
        %v5466 = vld [vmem:[#allocation7 + $0x28] sm:$0x1]
        %v5467 = vld [vmem:[#allocation7 + $0x38] sm:$0x1]
        %v5468 = vld [vmem:[#allocation7 + $0x48] sm:$0x1]
        %v5469 = vld [vmem:[#allocation7 + $0x58] sm:$0x1]
        %v5470 = vld [vmem:[#allocation7 + $0x68] sm:$0x1]
        %v5471 = vld [vmem:[#allocation7 + $0x78] sm:$0x1]
        %v5472 = vld [vmem:[#allocation7 + $0x88] sm:$0x1]
        %v5473 = vld [vmem:[#allocation7 + $0x98] sm:$0x1]
        %v5474 = vmax.f32 %v5444, %v5454
        %v5475 = vmax.f32 %v5445, %v5455
        %v5476 = vmax.f32 %v5446, %v5456
        %v5477 = vmax.f32 %v5447, %v5457
        %v5478 = vmax.f32 %v5448, %v5458
        %v5479 = vmax.f32 %v5449, %v5459
        %v5480 = vmax.f32 %v5450, %v5460
        %v5481 = vmax.f32 %v5451, %v5461
        %v5482 = vmax.f32 %v5452, %v5462
        %v5483 = vmax.f32 %v5453, %v5463
        %v5484 = vmax.f32 %v5474, %v5464
        %v5485 = vmax.f32 %v5475, %v5465
        %v5486 = vmax.f32 %v5476, %v5466
        %v5487 = vmax.f32 %v5477, %v5467
        %v5488 = vmax.f32 %v5478, %v5468
        %v5489 = vmax.f32 %v5479, %v5469
        %v5490 = vmax.f32 %v5480, %v5470
        %v5491 = vmax.f32 %v5481, %v5471
        %v5492 = vmax.f32 %v5482, %v5472
        %v5493 = vmax.f32 %v5483, %v5473
        %5494 = vst.msk [vmem:[#allocation11 + $0x3] sm:$0x1] %vm5313, %v5484
        %5495 = vst.msk [vmem:[#allocation11 + $0x7] sm:$0x1] %vm5313, %v5485
        %5496 = vst.msk [vmem:[#allocation11 + $0xb] sm:$0x1] %vm5313, %v5486
        %5497 = vst.msk [vmem:[#allocation11 + $0xf] sm:$0x1] %vm5313, %v5487
        %5498 = vst.msk [vmem:[#allocation11 + $0x13] sm:$0x1] %vm5313, %v5488
        %5499 = vst.msk [vmem:[#allocation11 + $0x17] sm:$0x1] %vm5313, %v5489
        %5500 = vst.msk [vmem:[#allocation11 + $0x1b] sm:$0x1] %vm5313, %v5490
        %5501 = vst.msk [vmem:[#allocation11 + $0x1f] sm:$0x1] %vm5313, %v5491
        %5502 = vst.msk [vmem:[#allocation11 + $0x23] sm:$0x1] %vm5313, %v5492
        %5503 = vst.msk [vmem:[#allocation11 + $0x27] sm:$0x1] %vm5313, %v5493
        %v5504 = vld [vmem:[#allocation11] sm:$0xf]
        %s5505 = scalar_lea.vmem [#allocation11], 4
        %v5506 = vld [vmem:[%s5505] sm:$0xf]
        %s5507 = scalar_lea.vmem [#allocation11], 8
        %v5508 = vld [vmem:[%s5507] sm:$0xf]
        %v5509 = vmax.f32 %v5504, %v5506
        %v5510 = vmax.f32 %v5509, %v5508
        %5511 = vst.msk [vmem:[#allocation3 + $0x7] sm:$0xf] %vm458, %v5510
        %v5512 = vld [vmem:[%s5507] sm:$0xf]
        %s5513 = scalar_lea.vmem [#allocation11], 12
        %v5514 = vld [vmem:[%s5513] sm:$0xf]
        %s5515 = scalar_lea.vmem [#allocation11], 16
        %v5516 = vld [vmem:[%s5515] sm:$0xf]
        %v5517 = vmax.f32 %v5512, %v5514
        %v5518 = vmax.f32 %v5517, %v5516
        %5519 = vst.msk [vmem:[#allocation3 + $0xd] sm:$0xf] %vm458, %v5518
        %v5520 = vld [vmem:[%s5515] sm:$0xf]
        %s5521 = scalar_lea.vmem [#allocation11], 20
        %v5522 = vld [vmem:[%s5521] sm:$0xf]
        %s5523 = scalar_lea.vmem [#allocation11], 24
        %v5524 = vld [vmem:[%s5523] sm:$0xf]
        %v5525 = vmax.f32 %v5520, %v5522
        %v5526 = vmax.f32 %v5525, %v5524
        %5527 = vst.msk [vmem:[#allocation3 + $0x13] sm:$0xf] %vm458, %v5526
        %v5528 = vld [vmem:[%s5523] sm:$0xf]
        %s5529 = scalar_lea.vmem [#allocation11], 28
        %v5530 = vld [vmem:[%s5529] sm:$0xf]
        %s5531 = scalar_lea.vmem [#allocation11], 32
        %v5532 = vld [vmem:[%s5531] sm:$0xf]
        %v5533 = vmax.f32 %v5528, %v5530
        %v5534 = vmax.f32 %v5533, %v5532
        %5535 = vst.msk [vmem:[#allocation3 + $0x19] sm:$0xf] %vm458, %v5534
        %v5536 = vld [vmem:[#allocation3] sm:$0xff]
        %v5537 = vld [vmem:[#allocation3 + $0x8] sm:$0xff]
        %v5538 = vld [vmem:[#allocation3 + $0x10] sm:$0x3f]
        %v5539 = vld [vmem:[%s5] sm:$0xff]
        %v5540 = vld [vmem:[%s5 + $0x8] sm:$0xff]
        %v5541 = vld [vmem:[#allocation3 + $0x1] sm:$0xff]
        %v5542 = vld [vmem:[#allocation3 + $0x9] sm:$0xff]
        %v5543 = vld [vmem:[#allocation3 + $0x11] sm:$0x3f]
        %s5544 = scalar_lea.vmem %s5, 16
        %v5545 = vld [vmem:[%s5544] sm:$0xff]
        %v5546 = vld [vmem:[%s5544 + $0x8] sm:$0xff]
        %v5548 = vsel %vm453, %v5541, 0
        %v5551 = vsel %vm453, %v5542, 0
        %v5554 = vsel %vm453, %v5543, 0
        %5556 = vmatpush.msra.mxu0 0.0
        %5557 = vmatpush.msra.mxu0 0.0
        %5558 = vmatpush.msra.mxu0 0.0
        %5559 = vmatpush.msra.mxu0 0.0
        %5560 = vmatpush.msra.mxu0 0.0
        %5561 = vmatpush.msra.mxu0 0.0
        %5562 = vmatpush.msra.mxu0 0.0
        %5563 = vmatpush.msra.mxu0 0.0
        %5564 = vmatpush.msra.mxu0 0.0
        %5565 = vmatpush.msra.mxu0 0.0
        %5566 = vmatpush.msra.mxu0 0.0
        %5567 = vmatpush.msra.mxu0 0.0
        %5568 = vmatpush.msra.mxu0 0.0
        %5569 = vmatpush.msra.mxu0 0.0
        %5570 = vmatpush.msra.mxu0 %v5546
        %5571 = vmatpush.msra.mxu0 %v5545
        %5572 = vmatmul.f32.gmra.mxu0 %v5548
        %v5573 = vpop.f32.mrf.mxu0
        %v5574 = vadd.f32 0.0, %v5573
        %5575 = vmatmul.f32.gmra.mxu0 %v5551
        %v5576 = vpop.f32.mrf.mxu0
        %v5577 = vadd.f32 0.0, %v5576
        %5578 = vmatmul.f32.gmra.mxu0 %v5554
        %v5579 = vpop.f32.mrf.mxu0
        %v5580 = vadd.f32 0.0, %v5579
        %5581 = vdwg.mxu0
        %v5583 = vsel %vm453, %v5536, 0
        %v5586 = vsel %vm453, %v5537, 0
        %v5589 = vsel %vm453, %v5538, 0
        %5591 = vmatpush.msra.mxu0 0.0
        %5592 = vmatpush.msra.mxu0 0.0
        %5593 = vmatpush.msra.mxu0 0.0
        %5594 = vmatpush.msra.mxu0 0.0
        %5595 = vmatpush.msra.mxu0 0.0
        %5596 = vmatpush.msra.mxu0 0.0
        %5597 = vmatpush.msra.mxu0 0.0
        %5598 = vmatpush.msra.mxu0 0.0
        %5599 = vmatpush.msra.mxu0 0.0
        %5600 = vmatpush.msra.mxu0 0.0
        %5601 = vmatpush.msra.mxu0 0.0
        %5602 = vmatpush.msra.mxu0 0.0
        %5603 = vmatpush.msra.mxu0 0.0
        %5604 = vmatpush.msra.mxu0 0.0
        %5605 = vmatpush.msra.mxu0 %v5540
        %5606 = vmatpush.msra.mxu0 %v5539
        %5607 = vmatmul.f32.gmra.mxu0 %v5583
        %v5608 = vpop.f32.mrf.mxu0
        %v5609 = vadd.f32 %v5574, %v5608
        %5610 = vmatmul.f32.gmra.mxu0 %v5586
        %v5611 = vpop.f32.mrf.mxu0
        %v5612 = vadd.f32 %v5577, %v5611
        %5613 = vmatmul.f32.gmra.mxu0 %v5589
        %v5614 = vpop.f32.mrf.mxu0
        %v5615 = vadd.f32 %v5580, %v5614
        %5616 = vdwg.mxu0
        %v5617 = vld [vmem:[#allocation3 + $0x2] sm:$0xff]
        %v5618 = vld [vmem:[#allocation3 + $0xa] sm:$0xff]
        %v5619 = vld [vmem:[#allocation3 + $0x12] sm:$0x3f]
        %s5620 = scalar_lea.vmem %s5, 32
        %v5621 = vld [vmem:[%s5620] sm:$0xff]
        %v5622 = vld [vmem:[%s5620 + $0x8] sm:$0xff]
        %v5624 = vsel %vm453, %v5617, 0
        %v5627 = vsel %vm453, %v5618, 0
        %v5630 = vsel %vm453, %v5619, 0
        %5632 = vmatpush.msra.mxu0 0.0
        %5633 = vmatpush.msra.mxu0 0.0
        %5634 = vmatpush.msra.mxu0 0.0
        %5635 = vmatpush.msra.mxu0 0.0
        %5636 = vmatpush.msra.mxu0 0.0
        %5637 = vmatpush.msra.mxu0 0.0
        %5638 = vmatpush.msra.mxu0 0.0
        %5639 = vmatpush.msra.mxu0 0.0
        %5640 = vmatpush.msra.mxu0 0.0
        %5641 = vmatpush.msra.mxu0 0.0
        %5642 = vmatpush.msra.mxu0 0.0
        %5643 = vmatpush.msra.mxu0 0.0
        %5644 = vmatpush.msra.mxu0 0.0
        %5645 = vmatpush.msra.mxu0 0.0
        %5646 = vmatpush.msra.mxu0 %v5622
        %5647 = vmatpush.msra.mxu0 %v5621
        %5648 = vmatmul.f32.gmra.mxu0 %v5624
        %v5649 = vpop.f32.mrf.mxu0
        %v5650 = vadd.f32 0.0, %v5649
        %5651 = vmatmul.f32.gmra.mxu0 %v5627
        %v5652 = vpop.f32.mrf.mxu0
        %v5653 = vadd.f32 0.0, %v5652
        %5654 = vmatmul.f32.gmra.mxu0 %v5630
        %v5655 = vpop.f32.mrf.mxu0
        %v5656 = vadd.f32 0.0, %v5655
        %5657 = vdwg.mxu0
        %v5658 = vadd.f32 %v5609, %v5650
        %v5659 = vadd.f32 %v5612, %v5653
        %v5660 = vadd.f32 %v5615, %v5656
        %v5661 = vld [vmem:[#allocation3 + $0x6] sm:$0xff]
        %v5662 = vld [vmem:[#allocation3 + $0xe] sm:$0xff]
        %v5663 = vld [vmem:[#allocation3 + $0x16] sm:$0x3f]
        %s5664 = scalar_lea.vmem %s5, 48
        %v5665 = vld [vmem:[%s5664] sm:$0xff]
        %v5666 = vld [vmem:[%s5664 + $0x8] sm:$0xff]
        %v5668 = vsel %vm453, %v5661, 0
        %v5671 = vsel %vm453, %v5662, 0
        %v5674 = vsel %vm453, %v5663, 0
        %5676 = vmatpush.msra.mxu0 0.0
        %5677 = vmatpush.msra.mxu0 0.0
        %5678 = vmatpush.msra.mxu0 0.0
        %5679 = vmatpush.msra.mxu0 0.0
        %5680 = vmatpush.msra.mxu0 0.0
        %5681 = vmatpush.msra.mxu0 0.0
        %5682 = vmatpush.msra.mxu0 0.0
        %5683 = vmatpush.msra.mxu0 0.0
        %5684 = vmatpush.msra.mxu0 0.0
        %5685 = vmatpush.msra.mxu0 0.0
        %5686 = vmatpush.msra.mxu0 0.0
        %5687 = vmatpush.msra.mxu0 0.0
        %5688 = vmatpush.msra.mxu0 0.0
        %5689 = vmatpush.msra.mxu0 0.0
        %5690 = vmatpush.msra.mxu0 %v5666
        %5691 = vmatpush.msra.mxu0 %v5665
        %5692 = vmatmul.f32.gmra.mxu0 %v5668
        %v5693 = vpop.f32.mrf.mxu0
        %v5694 = vadd.f32 0.0, %v5693
        %5695 = vmatmul.f32.gmra.mxu0 %v5671
        %v5696 = vpop.f32.mrf.mxu0
        %v5697 = vadd.f32 0.0, %v5696
        %5698 = vmatmul.f32.gmra.mxu0 %v5674
        %v5699 = vpop.f32.mrf.mxu0
        %v5700 = vadd.f32 0.0, %v5699
        %5701 = vdwg.mxu0
        %v5702 = vadd.f32 %v5658, %v5694
        %v5703 = vadd.f32 %v5659, %v5697
        %v5704 = vadd.f32 %v5660, %v5700
        %v5705 = vld [vmem:[#allocation3 + $0x7] sm:$0xff]
        %v5706 = vld [vmem:[#allocation3 + $0xf] sm:$0xff]
        %v5707 = vld [vmem:[#allocation3 + $0x17] sm:$0x3f]
        %s5708 = scalar_lea.vmem %s5, 64
        %v5709 = vld [vmem:[%s5708] sm:$0xff]
        %v5710 = vld [vmem:[%s5708 + $0x8] sm:$0xff]
        %v5712 = vsel %vm453, %v5705, 0
        %v5715 = vsel %vm453, %v5706, 0
        %v5718 = vsel %vm453, %v5707, 0
        %5720 = vmatpush.msra.mxu0 0.0
        %5721 = vmatpush.msra.mxu0 0.0
        %5722 = vmatpush.msra.mxu0 0.0
        %5723 = vmatpush.msra.mxu0 0.0
        %5724 = vmatpush.msra.mxu0 0.0
        %5725 = vmatpush.msra.mxu0 0.0
        %5726 = vmatpush.msra.mxu0 0.0
        %5727 = vmatpush.msra.mxu0 0.0
        %5728 = vmatpush.msra.mxu0 0.0
        %5729 = vmatpush.msra.mxu0 0.0
        %5730 = vmatpush.msra.mxu0 0.0
        %5731 = vmatpush.msra.mxu0 0.0
        %5732 = vmatpush.msra.mxu0 0.0
        %5733 = vmatpush.msra.mxu0 0.0
        %5734 = vmatpush.msra.mxu0 %v5710
        %5735 = vmatpush.msra.mxu0 %v5709
        %5736 = vmatmul.f32.gmra.mxu0 %v5712
        %v5737 = vpop.f32.mrf.mxu0
        %v5738 = vadd.f32 0.0, %v5737
        %5739 = vmatmul.f32.gmra.mxu0 %v5715
        %v5740 = vpop.f32.mrf.mxu0
        %v5741 = vadd.f32 0.0, %v5740
        %5742 = vmatmul.f32.gmra.mxu0 %v5718
        %v5743 = vpop.f32.mrf.mxu0
        %v5744 = vadd.f32 0.0, %v5743
        %5745 = vdwg.mxu0
        %v5746 = vadd.f32 %v5702, %v5738
        %v5747 = vadd.f32 %v5703, %v5741
        %v5748 = vadd.f32 %v5704, %v5744
        %v5749 = vld [vmem:[#allocation3 + $0x8] sm:$0xff]
        %v5750 = vld [vmem:[#allocation3 + $0x10] sm:$0xff]
        %v5751 = vld [vmem:[#allocation3 + $0x18] sm:$0x3f]
        %s5752 = scalar_lea.vmem %s5, 80
        %v5753 = vld [vmem:[%s5752] sm:$0xff]
        %v5754 = vld [vmem:[%s5752 + $0x8] sm:$0xff]
        %v5756 = vsel %vm453, %v5749, 0
        %v5759 = vsel %vm453, %v5750, 0
        %v5762 = vsel %vm453, %v5751, 0
        %5764 = vmatpush.msra.mxu0 0.0
        %5765 = vmatpush.msra.mxu0 0.0
        %5766 = vmatpush.msra.mxu0 0.0
        %5767 = vmatpush.msra.mxu0 0.0
        %5768 = vmatpush.msra.mxu0 0.0
        %5769 = vmatpush.msra.mxu0 0.0
        %5770 = vmatpush.msra.mxu0 0.0
        %5771 = vmatpush.msra.mxu0 0.0
        %5772 = vmatpush.msra.mxu0 0.0
        %5773 = vmatpush.msra.mxu0 0.0
        %5774 = vmatpush.msra.mxu0 0.0
        %5775 = vmatpush.msra.mxu0 0.0
        %5776 = vmatpush.msra.mxu0 0.0
        %5777 = vmatpush.msra.mxu0 0.0
        %5778 = vmatpush.msra.mxu0 %v5754
        %5779 = vmatpush.msra.mxu0 %v5753
        %5780 = vmatmul.f32.gmra.mxu0 %v5756
        %v5781 = vpop.f32.mrf.mxu0
        %v5782 = vadd.f32 0.0, %v5781
        %5783 = vmatmul.f32.gmra.mxu0 %v5759
        %v5784 = vpop.f32.mrf.mxu0
        %v5785 = vadd.f32 0.0, %v5784
        %5786 = vmatmul.f32.gmra.mxu0 %v5762
        %v5787 = vpop.f32.mrf.mxu0
        %v5788 = vadd.f32 0.0, %v5787
        %5789 = vdwg.mxu0
        %v5790 = vadd.f32 %v5746, %v5782
        %v5791 = vadd.f32 %v5747, %v5785
        %v5792 = vadd.f32 %v5748, %v5788
        %v5793 = vld [vmem:[#allocation3 + $0xc] sm:$0xff]
        %v5794 = vld [vmem:[#allocation3 + $0x14] sm:$0xff]
        %v5795 = vld [vmem:[#allocation3 + $0x1c] sm:$0x3f]
        %s5796 = scalar_lea.vmem %s5, 96
        %v5797 = vld [vmem:[%s5796] sm:$0xff]
        %v5798 = vld [vmem:[%s5796 + $0x8] sm:$0xff]
        %v5800 = vsel %vm453, %v5793, 0
        %v5803 = vsel %vm453, %v5794, 0
        %v5806 = vsel %vm453, %v5795, 0
        %5808 = vmatpush.msra.mxu0 0.0
        %5809 = vmatpush.msra.mxu0 0.0
        %5810 = vmatpush.msra.mxu0 0.0
        %5811 = vmatpush.msra.mxu0 0.0
        %5812 = vmatpush.msra.mxu0 0.0
        %5813 = vmatpush.msra.mxu0 0.0
        %5814 = vmatpush.msra.mxu0 0.0
        %5815 = vmatpush.msra.mxu0 0.0
        %5816 = vmatpush.msra.mxu0 0.0
        %5817 = vmatpush.msra.mxu0 0.0
        %5818 = vmatpush.msra.mxu0 0.0
        %5819 = vmatpush.msra.mxu0 0.0
        %5820 = vmatpush.msra.mxu0 0.0
        %5821 = vmatpush.msra.mxu0 0.0
        %5822 = vmatpush.msra.mxu0 %v5798
        %5823 = vmatpush.msra.mxu0 %v5797
        %5824 = vmatmul.f32.gmra.mxu0 %v5800
        %v5825 = vpop.f32.mrf.mxu0
        %v5826 = vadd.f32 0.0, %v5825
        %5827 = vmatmul.f32.gmra.mxu0 %v5803
        %v5828 = vpop.f32.mrf.mxu0
        %v5829 = vadd.f32 0.0, %v5828
        %5830 = vmatmul.f32.gmra.mxu0 %v5806
        %v5831 = vpop.f32.mrf.mxu0
        %v5832 = vadd.f32 0.0, %v5831
        %5833 = vdwg.mxu0
        %v5834 = vadd.f32 %v5790, %v5826
        %v5835 = vadd.f32 %v5791, %v5829
        %v5836 = vadd.f32 %v5792, %v5832
        %v5837 = vld [vmem:[#allocation3 + $0xd] sm:$0xff]
        %v5838 = vld [vmem:[#allocation3 + $0x15] sm:$0xff]
        %v5839 = vld [vmem:[#allocation3 + $0x1d] sm:$0x3f]
        %s5840 = scalar_lea.vmem %s5, 112
        %v5841 = vld [vmem:[%s5840] sm:$0xff]
        %v5842 = vld [vmem:[%s5840 + $0x8] sm:$0xff]
        %v5844 = vsel %vm453, %v5837, 0
        %v5847 = vsel %vm453, %v5838, 0
        %v5850 = vsel %vm453, %v5839, 0
        %5852 = vmatpush.msra.mxu0 0.0
        %5853 = vmatpush.msra.mxu0 0.0
        %5854 = vmatpush.msra.mxu0 0.0
        %5855 = vmatpush.msra.mxu0 0.0
        %5856 = vmatpush.msra.mxu0 0.0
        %5857 = vmatpush.msra.mxu0 0.0
        %5858 = vmatpush.msra.mxu0 0.0
        %5859 = vmatpush.msra.mxu0 0.0
        %5860 = vmatpush.msra.mxu0 0.0
        %5861 = vmatpush.msra.mxu0 0.0
        %5862 = vmatpush.msra.mxu0 0.0
        %5863 = vmatpush.msra.mxu0 0.0
        %5864 = vmatpush.msra.mxu0 0.0
        %5865 = vmatpush.msra.mxu0 0.0
        %5866 = vmatpush.msra.mxu0 %v5842
        %5867 = vmatpush.msra.mxu0 %v5841
        %5868 = vmatmul.f32.gmra.mxu0 %v5844
        %v5869 = vpop.f32.mrf.mxu0
        %v5870 = vadd.f32 0.0, %v5869
        %5871 = vmatmul.f32.gmra.mxu0 %v5847
        %v5872 = vpop.f32.mrf.mxu0
        %v5873 = vadd.f32 0.0, %v5872
        %5874 = vmatmul.f32.gmra.mxu0 %v5850
        %v5875 = vpop.f32.mrf.mxu0
        %v5876 = vadd.f32 0.0, %v5875
        %5877 = vdwg.mxu0
        %v5878 = vadd.f32 %v5834, %v5870
        %v5879 = vadd.f32 %v5835, %v5873
        %v5880 = vadd.f32 %v5836, %v5876
        %v5881 = vld [vmem:[#allocation3 + $0xe] sm:$0xff]
        %v5882 = vld [vmem:[#allocation3 + $0x16] sm:$0xff]
        %v5883 = vld [vmem:[#allocation3 + $0x1e] sm:$0x3f]
        %s5884 = scalar_lea.vmem %s5, 128
        %v5885 = vld [vmem:[%s5884] sm:$0xff]
        %v5886 = vld [vmem:[%s5884 + $0x8] sm:$0xff]
        %v5888 = vsel %vm453, %v5881, 0
        %v5891 = vsel %vm453, %v5882, 0
        %v5894 = vsel %vm453, %v5883, 0
        %5896 = vmatpush.msra.mxu0 0.0
        %5897 = vmatpush.msra.mxu0 0.0
        %5898 = vmatpush.msra.mxu0 0.0
        %5899 = vmatpush.msra.mxu0 0.0
        %5900 = vmatpush.msra.mxu0 0.0
        %5901 = vmatpush.msra.mxu0 0.0
        %5902 = vmatpush.msra.mxu0 0.0
        %5903 = vmatpush.msra.mxu0 0.0
        %5904 = vmatpush.msra.mxu0 0.0
        %5905 = vmatpush.msra.mxu0 0.0
        %5906 = vmatpush.msra.mxu0 0.0
        %5907 = vmatpush.msra.mxu0 0.0
        %5908 = vmatpush.msra.mxu0 0.0
        %5909 = vmatpush.msra.mxu0 0.0
        %5910 = vmatpush.msra.mxu0 %v5886
        %5911 = vmatpush.msra.mxu0 %v5885
        %5912 = vmatmul.f32.gmra.mxu0 %v5888
        %v5913 = vpop.f32.mrf.mxu0
        %v5914 = vadd.f32 0.0, %v5913
        %5915 = vmatmul.f32.gmra.mxu0 %v5891
        %v5916 = vpop.f32.mrf.mxu0
        %v5917 = vadd.f32 0.0, %v5916
        %5918 = vmatmul.f32.gmra.mxu0 %v5894
        %v5919 = vpop.f32.mrf.mxu0
        %v5920 = vadd.f32 0.0, %v5919
        %5921 = vdwg.mxu0
        %v5922 = vadd.f32 %v5878, %v5914
        %v5923 = vadd.f32 %v5879, %v5917
        %v5924 = vadd.f32 %v5880, %v5920
        %v5925 = vld [vmem:[%s6] sm:$0x1]
        %v5927 = vperm.slane %v5925, 0
        %v5929 = vadd.f32 %v5922, %v5927
        %v5930 = vadd.f32 %v5923, %v5927
        %v5931 = vadd.f32 %v5924, %v5927
        %v5932 = vmax.f32 %v5929, 0.0
        %s5933 = scalar_lea.vmem [#allocation8], 8
        %vm5934 = vcmask 257024
        %5935 = vst.msk [vmem:[%s5933 + $0x1] sm:$0xf] %vm5934, %v5932
        %v5936 = vmax.f32 %v5930, 0.0
        %s5937 = scalar_lea.vmem [#allocation8], 16
        %vm5938 = vcmask 261126
        %5939 = vst.msk [vmem:[%s5937 - $0x5] sm:$0xc0] %vm5938, %v5932
        %vm5940 = vcmask 254976
        %5941 = vst.msk [vmem:[%s5937 + $0x3] sm:$0x3] %vm5940, %v5936
        %s5942 = scalar_lea.vmem [#allocation8], 24
        %vm5943 = vcmask 261124
        %5944 = vst.msk [vmem:[%s5942 - $0x3] sm:$0xf0] %vm5943, %v5936
        %v5945 = vmax.f32 %v5931, 0.0
        %s5946 = scalar_lea.vmem [#allocation8], 32
        %vm5947 = vcmask 259074
        %5948 = vst.msk [vmem:[%s5946 - $0x1] sm:$0x3c] %vm5947, %v5945
        %v5949 = vld [vmem:[#allocation8] sm:$0x1]
        %v5950 = vld [vmem:[#allocation8 + $0x8] sm:$0x1]
        %v5951 = vld [vmem:[#allocation8 + $0x10] sm:$0x1]
        %v5952 = vld [vmem:[#allocation8 + $0x18] sm:$0x1]
        %v5953 = vld [vmem:[#allocation8 + $0x20] sm:$0x1]
        %v5954 = vld [vmem:[#allocation8 + $0x28] sm:$0x1]
        %v5955 = vld [vmem:[#allocation8 + $0x1] sm:$0x1]
        %v5956 = vld [vmem:[#allocation8 + $0x9] sm:$0x1]
        %v5957 = vld [vmem:[#allocation8 + $0x11] sm:$0x1]
        %v5958 = vld [vmem:[#allocation8 + $0x19] sm:$0x1]
        %v5959 = vld [vmem:[#allocation8 + $0x21] sm:$0x1]
        %v5960 = vld [vmem:[#allocation8 + $0x29] sm:$0x1]
        %v5961 = vld [vmem:[#allocation8 + $0x2] sm:$0x1]
        %v5962 = vld [vmem:[#allocation8 + $0xa] sm:$0x1]
        %v5963 = vld [vmem:[#allocation8 + $0x12] sm:$0x1]
        %v5964 = vld [vmem:[#allocation8 + $0x1a] sm:$0x1]
        %v5965 = vld [vmem:[#allocation8 + $0x22] sm:$0x1]
        %v5966 = vld [vmem:[#allocation8 + $0x2a] sm:$0x1]
        %v5967 = vmax.f32 %v5949, %v5955
        %v5968 = vmax.f32 %v5950, %v5956
        %v5969 = vmax.f32 %v5951, %v5957
        %v5970 = vmax.f32 %v5952, %v5958
        %v5971 = vmax.f32 %v5953, %v5959
        %v5972 = vmax.f32 %v5954, %v5960
        %v5973 = vmax.f32 %v5967, %v5961
        %v5974 = vmax.f32 %v5968, %v5962
        %v5975 = vmax.f32 %v5969, %v5963
        %v5976 = vmax.f32 %v5970, %v5964
        %v5977 = vmax.f32 %v5971, %v5965
        %v5978 = vmax.f32 %v5972, %v5966
        %vm5979 = vcmask 253952
        %5980 = vst.msk [vmem:[#allocation12] sm:$0x1] %vm5979, %v5973
        %5981 = vst.msk [vmem:[#allocation12 + $0x2] sm:$0x1] %vm5979, %v5974
        %5982 = vst.msk [vmem:[#allocation12 + $0x4] sm:$0x1] %vm5979, %v5975
        %5983 = vst.msk [vmem:[#allocation12 + $0x6] sm:$0x1] %vm5979, %v5976
        %5984 = vst.msk [vmem:[#allocation12 + $0x8] sm:$0x1] %vm5979, %v5977
        %5985 = vst.msk [vmem:[#allocation12 + $0xa] sm:$0x1] %vm5979, %v5978
        %v5986 = vld [vmem:[#allocation8 + $0x2] sm:$0x1]
        %v5987 = vld [vmem:[#allocation8 + $0xa] sm:$0x1]
        %v5988 = vld [vmem:[#allocation8 + $0x12] sm:$0x1]
        %v5989 = vld [vmem:[#allocation8 + $0x1a] sm:$0x1]
        %v5990 = vld [vmem:[#allocation8 + $0x22] sm:$0x1]
        %v5991 = vld [vmem:[#allocation8 + $0x2a] sm:$0x1]
        %v5992 = vld [vmem:[#allocation8 + $0x3] sm:$0x1]
        %v5993 = vld [vmem:[#allocation8 + $0xb] sm:$0x1]
        %v5994 = vld [vmem:[#allocation8 + $0x13] sm:$0x1]
        %v5995 = vld [vmem:[#allocation8 + $0x1b] sm:$0x1]
        %v5996 = vld [vmem:[#allocation8 + $0x23] sm:$0x1]
        %v5997 = vld [vmem:[#allocation8 + $0x2b] sm:$0x1]
        %v5998 = vld [vmem:[#allocation8 + $0x4] sm:$0x1]
        %v5999 = vld [vmem:[#allocation8 + $0xc] sm:$0x1]
        %v6000 = vld [vmem:[#allocation8 + $0x14] sm:$0x1]
        %v6001 = vld [vmem:[#allocation8 + $0x1c] sm:$0x1]
        %v6002 = vld [vmem:[#allocation8 + $0x24] sm:$0x1]
        %v6003 = vld [vmem:[#allocation8 + $0x2c] sm:$0x1]
        %v6004 = vmax.f32 %v5986, %v5992
        %v6005 = vmax.f32 %v5987, %v5993
        %v6006 = vmax.f32 %v5988, %v5994
        %v6007 = vmax.f32 %v5989, %v5995
        %v6008 = vmax.f32 %v5990, %v5996
        %v6009 = vmax.f32 %v5991, %v5997
        %v6010 = vmax.f32 %v6004, %v5998
        %v6011 = vmax.f32 %v6005, %v5999
        %v6012 = vmax.f32 %v6006, %v6000
        %v6013 = vmax.f32 %v6007, %v6001
        %v6014 = vmax.f32 %v6008, %v6002
        %v6015 = vmax.f32 %v6009, %v6003
        %6016 = vst.msk [vmem:[#allocation12 + $0x1] sm:$0x1] %vm5979, %v6010
        %6017 = vst.msk [vmem:[#allocation12 + $0x3] sm:$0x1] %vm5979, %v6011
        %6018 = vst.msk [vmem:[#allocation12 + $0x5] sm:$0x1] %vm5979, %v6012
        %6019 = vst.msk [vmem:[#allocation12 + $0x7] sm:$0x1] %vm5979, %v6013
        %6020 = vst.msk [vmem:[#allocation12 + $0x9] sm:$0x1] %vm5979, %v6014
        %6021 = vst.msk [vmem:[#allocation12 + $0xb] sm:$0x1] %vm5979, %v6015
        %v6022 = vld [vmem:[#allocation12] sm:$0x3]
        %s6023 = scalar_lea.vmem [#allocation12], 2
        %v6024 = vld [vmem:[%s6023] sm:$0x3]
        %s6025 = scalar_lea.vmem [#allocation12], 4
        %v6026 = vld [vmem:[%s6025] sm:$0x3]
        %v6027 = vmax.f32 %v6022, %v6024
        %v6028 = vmax.f32 %v6027, %v6026
        %6029 = vst.msk [vmem:[#allocation4 + $0x5] sm:$0x3] %vm5940, %v6028
        %v6030 = vld [vmem:[%s6025] sm:$0x3]
        %s6031 = scalar_lea.vmem [#allocation12], 6
        %v6032 = vld [vmem:[%s6031] sm:$0x3]
        %s6033 = scalar_lea.vmem [#allocation12], 8
        %v6034 = vld [vmem:[%s6033] sm:$0x3]
        %v6035 = vmax.f32 %v6030, %v6032
        %v6036 = vmax.f32 %v6035, %v6034
        %6037 = vst.msk [vmem:[#allocation4 + $0x9] sm:$0x3] %vm5940, %v6036
        %v6038 = vld [vmem:[#allocation4] sm:$0x3f]
        %v6039 = vld [vmem:[%s7] sm:$0xff]
        %v6040 = vld [vmem:[%s7 + $0x8] sm:$0xff]
        %v6041 = vld [vmem:[%s7 + $0x10] sm:$0xff]
        %v6042 = vld [vmem:[%s7 + $0x18] sm:$0xff]
        %v6043 = vld [vmem:[#allocation4 + $0x1] sm:$0x3f]
        %s6044 = scalar_lea.vmem %s7, 32
        %v6045 = vld [vmem:[%s6044] sm:$0xff]
        %v6046 = vld [vmem:[%s6044 + $0x8] sm:$0xff]
        %v6047 = vld [vmem:[%s6044 + $0x10] sm:$0xff]
        %v6048 = vld [vmem:[%s6044 + $0x18] sm:$0xff]
        %v6050 = vsel %vm460, %v6043, 0
        %6052 = vmatpush.msra.mxu0 0.0
        %6053 = vmatpush.msra.mxu0 0.0
        %6054 = vmatpush.msra.mxu0 0.0
        %6055 = vmatpush.msra.mxu0 0.0
        %6056 = vmatpush.msra.mxu0 0.0
        %6057 = vmatpush.msra.mxu0 0.0
        %6058 = vmatpush.msra.mxu0 0.0
        %6059 = vmatpush.msra.mxu0 0.0
        %6060 = vmatpush.msra.mxu0 0.0
        %6061 = vmatpush.msra.mxu0 0.0
        %6062 = vmatpush.msra.mxu0 0.0
        %6063 = vmatpush.msra.mxu0 0.0
        %6064 = vmatpush.msra.mxu0 %v6048
        %6065 = vmatpush.msra.mxu0 %v6047
        %6066 = vmatpush.msra.mxu0 %v6046
        %6067 = vmatpush.msra.mxu0 %v6045
        %6068 = vmatmul.f32.gmra.mxu0 %v6050
        %v6069 = vpop.f32.mrf.mxu0
        %v6070 = vadd.f32 0.0, %v6069
        %6071 = vdwg.mxu0
        %v6073 = vsel %vm460, %v6038, 0
        %6075 = vmatpush.msra.mxu0 0.0
        %6076 = vmatpush.msra.mxu0 0.0
        %6077 = vmatpush.msra.mxu0 0.0
        %6078 = vmatpush.msra.mxu0 0.0
        %6079 = vmatpush.msra.mxu0 0.0
        %6080 = vmatpush.msra.mxu0 0.0
        %6081 = vmatpush.msra.mxu0 0.0
        %6082 = vmatpush.msra.mxu0 0.0
        %6083 = vmatpush.msra.mxu0 0.0
        %6084 = vmatpush.msra.mxu0 0.0
        %6085 = vmatpush.msra.mxu0 0.0
        %6086 = vmatpush.msra.mxu0 0.0
        %6087 = vmatpush.msra.mxu0 %v6042
        %6088 = vmatpush.msra.mxu0 %v6041
        %6089 = vmatpush.msra.mxu0 %v6040
        %6090 = vmatpush.msra.mxu0 %v6039
        %6091 = vmatmul.f32.gmra.mxu0 %v6073
        %v6092 = vpop.f32.mrf.mxu0
        %v6093 = vadd.f32 %v6070, %v6092
        %6094 = vdwg.mxu0
        %v6095 = vld [vmem:[#allocation4 + $0x2] sm:$0x3f]
        %s6096 = scalar_lea.vmem %s7, 64
        %v6097 = vld [vmem:[%s6096] sm:$0xff]
        %v6098 = vld [vmem:[%s6096 + $0x8] sm:$0xff]
        %v6099 = vld [vmem:[%s6096 + $0x10] sm:$0xff]
        %v6100 = vld [vmem:[%s6096 + $0x18] sm:$0xff]
        %v6102 = vsel %vm460, %v6095, 0
        %6104 = vmatpush.msra.mxu0 0.0
        %6105 = vmatpush.msra.mxu0 0.0
        %6106 = vmatpush.msra.mxu0 0.0
        %6107 = vmatpush.msra.mxu0 0.0
        %6108 = vmatpush.msra.mxu0 0.0
        %6109 = vmatpush.msra.mxu0 0.0
        %6110 = vmatpush.msra.mxu0 0.0
        %6111 = vmatpush.msra.mxu0 0.0
        %6112 = vmatpush.msra.mxu0 0.0
        %6113 = vmatpush.msra.mxu0 0.0
        %6114 = vmatpush.msra.mxu0 0.0
        %6115 = vmatpush.msra.mxu0 0.0
        %6116 = vmatpush.msra.mxu0 %v6100
        %6117 = vmatpush.msra.mxu0 %v6099
        %6118 = vmatpush.msra.mxu0 %v6098
        %6119 = vmatpush.msra.mxu0 %v6097
        %6120 = vmatmul.f32.gmra.mxu0 %v6102
        %v6121 = vpop.f32.mrf.mxu0
        %v6122 = vadd.f32 0.0, %v6121
        %6123 = vdwg.mxu0
        %v6124 = vadd.f32 %v6093, %v6122
        %v6125 = vld [vmem:[#allocation4 + $0x4] sm:$0x3f]
        %s6126 = scalar_lea.vmem %s7, 96
        %v6127 = vld [vmem:[%s6126] sm:$0xff]
        %v6128 = vld [vmem:[%s6126 + $0x8] sm:$0xff]
        %v6129 = vld [vmem:[%s6126 + $0x10] sm:$0xff]
        %v6130 = vld [vmem:[%s6126 + $0x18] sm:$0xff]
        %v6132 = vsel %vm460, %v6125, 0
        %6134 = vmatpush.msra.mxu0 0.0
        %6135 = vmatpush.msra.mxu0 0.0
        %6136 = vmatpush.msra.mxu0 0.0
        %6137 = vmatpush.msra.mxu0 0.0
        %6138 = vmatpush.msra.mxu0 0.0
        %6139 = vmatpush.msra.mxu0 0.0
        %6140 = vmatpush.msra.mxu0 0.0
        %6141 = vmatpush.msra.mxu0 0.0
        %6142 = vmatpush.msra.mxu0 0.0
        %6143 = vmatpush.msra.mxu0 0.0
        %6144 = vmatpush.msra.mxu0 0.0
        %6145 = vmatpush.msra.mxu0 0.0
        %6146 = vmatpush.msra.mxu0 %v6130
        %6147 = vmatpush.msra.mxu0 %v6129
        %6148 = vmatpush.msra.mxu0 %v6128
        %6149 = vmatpush.msra.mxu0 %v6127
        %6150 = vmatmul.f32.gmra.mxu0 %v6132
        %v6151 = vpop.f32.mrf.mxu0
        %v6152 = vadd.f32 0.0, %v6151
        %6153 = vdwg.mxu0
        %v6154 = vadd.f32 %v6124, %v6152
        %v6155 = vld [vmem:[#allocation4 + $0x5] sm:$0x3f]
        %s6156 = scalar_lea.vmem %s7, 128
        %v6157 = vld [vmem:[%s6156] sm:$0xff]
        %v6158 = vld [vmem:[%s6156 + $0x8] sm:$0xff]
        %v6159 = vld [vmem:[%s6156 + $0x10] sm:$0xff]
        %v6160 = vld [vmem:[%s6156 + $0x18] sm:$0xff]
        %v6162 = vsel %vm460, %v6155, 0
        %6164 = vmatpush.msra.mxu0 0.0
        %6165 = vmatpush.msra.mxu0 0.0
        %6166 = vmatpush.msra.mxu0 0.0
        %6167 = vmatpush.msra.mxu0 0.0
        %6168 = vmatpush.msra.mxu0 0.0
        %6169 = vmatpush.msra.mxu0 0.0
        %6170 = vmatpush.msra.mxu0 0.0
        %6171 = vmatpush.msra.mxu0 0.0
        %6172 = vmatpush.msra.mxu0 0.0
        %6173 = vmatpush.msra.mxu0 0.0
        %6174 = vmatpush.msra.mxu0 0.0
        %6175 = vmatpush.msra.mxu0 0.0
        %6176 = vmatpush.msra.mxu0 %v6160
        %6177 = vmatpush.msra.mxu0 %v6159
        %6178 = vmatpush.msra.mxu0 %v6158
        %6179 = vmatpush.msra.mxu0 %v6157
        %6180 = vmatmul.f32.gmra.mxu0 %v6162
        %v6181 = vpop.f32.mrf.mxu0
        %v6182 = vadd.f32 0.0, %v6181
        %6183 = vdwg.mxu0
        %v6184 = vadd.f32 %v6154, %v6182
        %v6185 = vld [vmem:[#allocation4 + $0x6] sm:$0x3f]
        %s6186 = scalar_lea.vmem %s7, 160
        %v6187 = vld [vmem:[%s6186] sm:$0xff]
        %v6188 = vld [vmem:[%s6186 + $0x8] sm:$0xff]
        %v6189 = vld [vmem:[%s6186 + $0x10] sm:$0xff]
        %v6190 = vld [vmem:[%s6186 + $0x18] sm:$0xff]
        %v6192 = vsel %vm460, %v6185, 0
        %6194 = vmatpush.msra.mxu0 0.0
        %6195 = vmatpush.msra.mxu0 0.0
        %6196 = vmatpush.msra.mxu0 0.0
        %6197 = vmatpush.msra.mxu0 0.0
        %6198 = vmatpush.msra.mxu0 0.0
        %6199 = vmatpush.msra.mxu0 0.0
        %6200 = vmatpush.msra.mxu0 0.0
        %6201 = vmatpush.msra.mxu0 0.0
        %6202 = vmatpush.msra.mxu0 0.0
        %6203 = vmatpush.msra.mxu0 0.0
        %6204 = vmatpush.msra.mxu0 0.0
        %6205 = vmatpush.msra.mxu0 0.0
        %6206 = vmatpush.msra.mxu0 %v6190
        %6207 = vmatpush.msra.mxu0 %v6189
        %6208 = vmatpush.msra.mxu0 %v6188
        %6209 = vmatpush.msra.mxu0 %v6187
        %6210 = vmatmul.f32.gmra.mxu0 %v6192
        %v6211 = vpop.f32.mrf.mxu0
        %v6212 = vadd.f32 0.0, %v6211
        %6213 = vdwg.mxu0
        %v6214 = vadd.f32 %v6184, %v6212
        %v6215 = vld [vmem:[#allocation4 + $0x8] sm:$0x3f]
        %s6216 = scalar_lea.vmem %s7, 192
        %v6217 = vld [vmem:[%s6216] sm:$0xff]
        %v6218 = vld [vmem:[%s6216 + $0x8] sm:$0xff]
        %v6219 = vld [vmem:[%s6216 + $0x10] sm:$0xff]
        %v6220 = vld [vmem:[%s6216 + $0x18] sm:$0xff]
        %v6222 = vsel %vm460, %v6215, 0
        %6224 = vmatpush.msra.mxu0 0.0
        %6225 = vmatpush.msra.mxu0 0.0
        %6226 = vmatpush.msra.mxu0 0.0
        %6227 = vmatpush.msra.mxu0 0.0
        %6228 = vmatpush.msra.mxu0 0.0
        %6229 = vmatpush.msra.mxu0 0.0
        %6230 = vmatpush.msra.mxu0 0.0
        %6231 = vmatpush.msra.mxu0 0.0
        %6232 = vmatpush.msra.mxu0 0.0
        %6233 = vmatpush.msra.mxu0 0.0
        %6234 = vmatpush.msra.mxu0 0.0
        %6235 = vmatpush.msra.mxu0 0.0
        %6236 = vmatpush.msra.mxu0 %v6220
        %6237 = vmatpush.msra.mxu0 %v6219
        %6238 = vmatpush.msra.mxu0 %v6218
        %6239 = vmatpush.msra.mxu0 %v6217
        %6240 = vmatmul.f32.gmra.mxu0 %v6222
        %v6241 = vpop.f32.mrf.mxu0
        %v6242 = vadd.f32 0.0, %v6241
        %6243 = vdwg.mxu0
        %v6244 = vadd.f32 %v6214, %v6242
        %v6245 = vld [vmem:[#allocation4 + $0x9] sm:$0x3f]
        %s6246 = scalar_lea.vmem %s7, 224
        %v6247 = vld [vmem:[%s6246] sm:$0xff]
        %v6248 = vld [vmem:[%s6246 + $0x8] sm:$0xff]
        %v6249 = vld [vmem:[%s6246 + $0x10] sm:$0xff]
        %v6250 = vld [vmem:[%s6246 + $0x18] sm:$0xff]
        %v6252 = vsel %vm460, %v6245, 0
        %6254 = vmatpush.msra.mxu0 0.0
        %6255 = vmatpush.msra.mxu0 0.0
        %6256 = vmatpush.msra.mxu0 0.0
        %6257 = vmatpush.msra.mxu0 0.0
        %6258 = vmatpush.msra.mxu0 0.0
        %6259 = vmatpush.msra.mxu0 0.0
        %6260 = vmatpush.msra.mxu0 0.0
        %6261 = vmatpush.msra.mxu0 0.0
        %6262 = vmatpush.msra.mxu0 0.0
        %6263 = vmatpush.msra.mxu0 0.0
        %6264 = vmatpush.msra.mxu0 0.0
        %6265 = vmatpush.msra.mxu0 0.0
        %6266 = vmatpush.msra.mxu0 %v6250
        %6267 = vmatpush.msra.mxu0 %v6249
        %6268 = vmatpush.msra.mxu0 %v6248
        %6269 = vmatpush.msra.mxu0 %v6247
        %6270 = vmatmul.f32.gmra.mxu0 %v6252
        %v6271 = vpop.f32.mrf.mxu0
        %v6272 = vadd.f32 0.0, %v6271
        %6273 = vdwg.mxu0
        %v6274 = vadd.f32 %v6244, %v6272
        %v6275 = vld [vmem:[#allocation4 + $0xa] sm:$0x3f]
        %s6276 = scalar_lea.vmem %s7, 256
        %v6277 = vld [vmem:[%s6276] sm:$0xff]
        %v6278 = vld [vmem:[%s6276 + $0x8] sm:$0xff]
        %v6279 = vld [vmem:[%s6276 + $0x10] sm:$0xff]
        %v6280 = vld [vmem:[%s6276 + $0x18] sm:$0xff]
        %v6282 = vsel %vm460, %v6275, 0
        %6284 = vmatpush.msra.mxu0 0.0
        %6285 = vmatpush.msra.mxu0 0.0
        %6286 = vmatpush.msra.mxu0 0.0
        %6287 = vmatpush.msra.mxu0 0.0
        %6288 = vmatpush.msra.mxu0 0.0
        %6289 = vmatpush.msra.mxu0 0.0
        %6290 = vmatpush.msra.mxu0 0.0
        %6291 = vmatpush.msra.mxu0 0.0
        %6292 = vmatpush.msra.mxu0 0.0
        %6293 = vmatpush.msra.mxu0 0.0
        %6294 = vmatpush.msra.mxu0 0.0
        %6295 = vmatpush.msra.mxu0 0.0
        %6296 = vmatpush.msra.mxu0 %v6280
        %6297 = vmatpush.msra.mxu0 %v6279
        %6298 = vmatpush.msra.mxu0 %v6278
        %6299 = vmatpush.msra.mxu0 %v6277
        %6300 = vmatmul.f32.gmra.mxu0 %v6282
        %v6301 = vpop.f32.mrf.mxu0
        %v6302 = vadd.f32 0.0, %v6301
        %6303 = vdwg.mxu0
        %v6304 = vadd.f32 %v6274, %v6302
        %v6305 = vld [vmem:[%s8] sm:$0x1]
        %v6307 = vperm.slane %v6305, 0
        %v6309 = vadd.f32 %v6304, %v6307
        %v6310 = vmax.f32 %v6309, 0.0
        %s6311 = scalar_lea.vmem [#allocation9], 4
        %vm6312 = vcmask 517120
        %6313 = vst.msk [vmem:[%s6311 + $0x1] sm:$0x3] %vm6312, %v6310
        %s6314 = scalar_lea.vmem [#allocation9], 8
        %vm6315 = vcmask 521220
        %6316 = vst.msk [vmem:[%s6314 - $0x3] sm:$0x30] %vm6315, %v6310
        %v6317 = vld [vmem:[#allocation9] sm:$0x1]
        %v6318 = vld [vmem:[#allocation9 + $0x4] sm:$0x1]
        %v6319 = vld [vmem:[#allocation9 + $0x8] sm:$0x1]
        %v6320 = vld [vmem:[#allocation9 + $0xc] sm:$0x1]
        %v6321 = vld [vmem:[#allocation9 + $0x1] sm:$0x1]
        %v6322 = vld [vmem:[#allocation9 + $0x5] sm:$0x1]
        %v6323 = vld [vmem:[#allocation9 + $0x9] sm:$0x1]
        %v6324 = vld [vmem:[#allocation9 + $0xd] sm:$0x1]
        %v6325 = vld [vmem:[#allocation9 + $0x2] sm:$0x1]
        %v6326 = vld [vmem:[#allocation9 + $0x6] sm:$0x1]
        %v6327 = vld [vmem:[#allocation9 + $0xa] sm:$0x1]
        %v6328 = vld [vmem:[#allocation9 + $0xe] sm:$0x1]
        %v6329 = vmax.f32 %v6317, %v6321
        %v6330 = vmax.f32 %v6318, %v6322
        %v6331 = vmax.f32 %v6319, %v6323
        %v6332 = vmax.f32 %v6320, %v6324
        %v6333 = vmax.f32 %v6329, %v6325
        %v6334 = vmax.f32 %v6330, %v6326
        %v6335 = vmax.f32 %v6331, %v6327
        %v6336 = vmax.f32 %v6332, %v6328
        %6337 = vst.msk [vmem:[#allocation13] sm:$0x1] %vm465, %v6333
        %6338 = vst.msk [vmem:[#allocation13 + $0x1] sm:$0x1] %vm465, %v6334
        %6339 = vst.msk [vmem:[#allocation13 + $0x2] sm:$0x1] %vm465, %v6335
        %6340 = vst.msk [vmem:[#allocation13 + $0x3] sm:$0x1] %vm465, %v6336
        %v6341 = vld [vmem:[#allocation13] sm:$0x1]
        %s6342 = scalar_lea.vmem [#allocation13], 1
        %v6343 = vld [vmem:[%s6342] sm:$0x1]
        %s6344 = scalar_lea.vmem [#allocation13], 2
        %v6345 = vld [vmem:[%s6344] sm:$0x1]
        %v6346 = vmax.f32 %v6341, %v6343
        %v6347 = vmax.f32 %v6346, %v6345
        %6348 = vst.msk [vmem:[#allocation5 + $0x4] sm:$0x1] %vm465, %v6347
        %v6349 = vld [vmem:[#allocation5 + $0x4] sm:$0x1]
        %s6350 = scalar_lea.vmem %s9, 256
        %v6351 = vld [vmem:[%s6350] sm:$0xff]
        %v6352 = vld [vmem:[%s6350 + $0x8] sm:$0xff]
        %v6353 = vld [vmem:[%s6350 + $0x10] sm:$0xff]
        %v6354 = vld [vmem:[%s6350 + $0x18] sm:$0xff]
        %v6355 = vld [vmem:[%s6350 + $0x20] sm:$0xff]
        %v6356 = vld [vmem:[%s6350 + $0x28] sm:$0xff]
        %v6357 = vld [vmem:[%s6350 + $0x30] sm:$0xff]
        %v6358 = vld [vmem:[%s6350 + $0x38] sm:$0xff]
        %v6359 = vld [vmem:[%s10] sm:$0x1]
        %v6361 = vsel %vm463, %v6349, 0
        %6363 = vmatpush.msra.mxu0 0.0
        %6364 = vmatpush.msra.mxu0 0.0
        %6365 = vmatpush.msra.mxu0 0.0
        %6366 = vmatpush.msra.mxu0 0.0
        %6367 = vmatpush.msra.mxu0 0.0
        %6368 = vmatpush.msra.mxu0 0.0
        %6369 = vmatpush.msra.mxu0 0.0
        %6370 = vmatpush.msra.mxu0 0.0
        %6371 = vmatpush.msra.mxu0 %v6358
        %6372 = vmatpush.msra.mxu0 %v6357
        %6373 = vmatpush.msra.mxu0 %v6356
        %6374 = vmatpush.msra.mxu0 %v6355
        %6375 = vmatpush.msra.mxu0 %v6354
        %6376 = vmatpush.msra.mxu0 %v6353
        %6377 = vmatpush.msra.mxu0 %v6352
        %6378 = vmatpush.msra.mxu0 %v6351
        %6379 = vmatmul.f32.gmra.mxu0 %v6361
        %v6380 = vpop.f32.mrf.mxu0
        %v6381 = vadd.f32 %v6359, %v6380
        %6382 = vdwg.mxu0
        %v6383 = vadd.f32 %v6381, 0.0
        %v6384 = vadd.f32 %v6383, 0.0
        %v6385 = vmax.f32 %v6384, 0.0
        %v6386 = vld [vmem:[%s11] sm:$0xff]
        %v6387 = vld [vmem:[%s11 + $0x8] sm:$0xff]
        %v6388 = vld [vmem:[%s11 + $0x10] sm:$0xff]
        %v6389 = vld [vmem:[%s11 + $0x18] sm:$0xff]
        %v6390 = vld [vmem:[%s11 + $0x20] sm:$0xff]
        %v6391 = vld [vmem:[%s11 + $0x28] sm:$0xff]
        %v6392 = vld [vmem:[%s11 + $0x30] sm:$0xff]
        %v6393 = vld [vmem:[%s11 + $0x38] sm:$0xff]
        %v6394 = vld [vmem:[%s11 + $0x40] sm:$0xff]
        %v6395 = vld [vmem:[%s11 + $0x48] sm:$0xff]
        %v6396 = vld [vmem:[%s11 + $0x50] sm:$0xff]
        %v6397 = vld [vmem:[%s11 + $0x58] sm:$0xff]
        %v6398 = vld [vmem:[%s11 + $0x60] sm:$0xff]
        %v6399 = vld [vmem:[%s11 + $0x68] sm:$0xff]
        %v6400 = vld [vmem:[%s11 + $0x70] sm:$0xff]
        %v6401 = vld [vmem:[%s11 + $0x78] sm:$0xff]
        %v6402 = vld [vmem:[%s12] sm:$0x1]
        %6403 = vmatpush.msra.mxu0 %v6401
        %6404 = vmatpush.msra.mxu0 %v6400
        %6405 = vmatpush.msra.mxu0 %v6399
        %6406 = vmatpush.msra.mxu0 %v6398
        %6407 = vmatpush.msra.mxu0 %v6397
        %6408 = vmatpush.msra.mxu0 %v6396
        %6409 = vmatpush.msra.mxu0 %v6395
        %6410 = vmatpush.msra.mxu0 %v6394
        %6411 = vmatpush.msra.mxu0 %v6393
        %6412 = vmatpush.msra.mxu0 %v6392
        %6413 = vmatpush.msra.mxu0 %v6391
        %6414 = vmatpush.msra.mxu0 %v6390
        %6415 = vmatpush.msra.mxu0 %v6389
        %6416 = vmatpush.msra.mxu0 %v6388
        %6417 = vmatpush.msra.mxu0 %v6387
        %6418 = vmatpush.msra.mxu0 %v6386
        %6419 = vmatmul.f32.gmra.mxu0 %v6385
        %v6420 = vpop.f32.mrf.mxu0
        %v6421 = vadd.f32 %v6402, %v6420
        %6422 = vdwg.mxu0
        %vm6423 = vcmask 73728
        %6424 = vst.msk [vmem:[%s432] sm:$0x1] %vm6423, %v6421
        %s6425 = sand.u32 %s313, 1
        %s6426 = scalar_lea.sflag [#allocation15], %s6425
        %s6427 = sand.u32 %s313, 1
        %s6428 = scalar_lea.vmem [#allocation14], %s6427
        // Predicated region
        $region73: #{cnn_forward.1} parent=71 // pred_check
          %p6429 = pneg %p323
        $region74: #{cnn_forward.1} parent=71 // pred_check_branch
          %6431 = sbr.rel (%p6429) target = $region76
        $region75: #{cnn_forward.1} parent=71 // pred_region
          %6433 = vsyncadd %s6426, 0
          %s6434 = scalar_lea.hbm %s13, %s27
          %s6436 = sshll.u32 %s6428, 4
          %s6437 = int_to_ptr.vmem [resolvable:$true] %s6436
          %s6438 = sshll.u32 %s6434, 4
          %s6439 = int_to_ptr.hbm [resolvable:$true] %s6438
          %6441 = dma.vmem_to_hbm [thread:$0]  %s6437, 16, %s6439, %s6426
        $region76: #{cnn_forward.1} parent=71 // pred_fallthru
          _
      $region72: #{cnn_forward.1} parent=5 // pred_fallthru
        _
      %p6442 = scmp.le.s32.totalorder 2, %s22
      // Predicated region
      $region77: #{cnn_forward.1} parent=5 // pred_check
        %p6443 = pneg %p6442
      $region78: #{cnn_forward.1} parent=5 // pred_check_branch
        %6445 = sbr.rel (%p6443) target = $region80
      $region79: #{cnn_forward.1} parent=5 // pred_region
        %s6446 = ssub.s32 %s22, 2
        // Predicated region
        $region81: #{cnn_forward.1} parent=79 // pred_check
          %p6447 = pneg %p329
        $region82: #{cnn_forward.1} parent=79 // pred_check_branch
          %6449 = sbr.rel (%p6447) target = $region84
        $region83: #{cnn_forward.1} parent=79 // pred_region
          %s6450 = sand.u32 %s314, 1
          %s6451 = scalar_lea.sflag [#allocation15], %s6450
          %s6452 = sand.u32 %s314, 1
          %s6453 = scalar_lea.vmem [#allocation14], %s6452
          %6455 = dma.done %s6451, 16
        $region84: #{cnn_forward.1} parent=79 // pred_fallthru
          _
      $region80: #{cnn_forward.1} parent=5 // pred_fallthru
        _
    $region6: #{cnn_forward.1} parent=1 // loop_footer
      %s26 = sadd.s32 1, %s22
    $region7: #{cnn_forward.1} parent=1 // loop_footer_branch
      %21 = sbr.rel target = $region3
    $region8: #{cnn_forward.1} parent=1 // loop_exit
      _
    %6456 = vsyncpa [#allocation15], 1
    %s6457 = scalar_lea.sflag [#allocation15], 1
    %6458 = vsyncpa %s6457, 1

</llo_original>
